<compile_context>
chip_gen: v5e
topology: v5e:2x2
jax: 0.10.0
libtpu: 0.0.40
codegen_flags: <defaults>
</compile_context>

<pallas_src>
import jax
import jax.numpy as jnp
from jax.experimental import pallas as pl
from jax.experimental.pallas import tpu as pltpu

HIDDEN = 128
INPUT_SIZE = 4
NUM_CLASSES = 4
NUM_LAYERS = 2
HEAD_HIDDEN = 128
OUT_PAD = 128          # lane-dense padded logits width


def _lstm_cell(gates, c, H):
    # PyTorch gate order: i, f, g, o ; all math in f32 (v5e has no bf16 VPU/EUP).
    i_g = jax.nn.sigmoid(gates[:, 0:H])
    f_g = jax.nn.sigmoid(gates[:, H:2 * H])
    g_g = jnp.tanh(gates[:, 2 * H:3 * H])
    o_g = jax.nn.sigmoid(gates[:, 3 * H:4 * H])
    c_new = f_g * c + i_g * g_g
    h_new = o_g * jnp.tanh(c_new)
    return h_new, c_new


def _fused_kernel(x_ref,
                  w0f_ih, w0f_hh, b0f, w0b_ih, w0b_hh, b0b,
                  w1f_ih, w1f_hh, b1f, w1b_ih, w1b_hh, b1b,
                  wfc1, bfc1, wfc2, bfc2,
                  out_ref,
                  xpf0, xpb0, l0out, xpf1):
    # x_ref: (T*BP, Din) f32, time-major, batch padded to BP (multiple of 8).
    # Weights: wih_t (Din,4H) / (2H,4H), whh_t (H,4H), bias (1,4H) = bih+bhh.
    # out_ref: (BP, 128) padded logits.
    BP = out_ref.shape[0]
    TB = x_ref.shape[0]
    T = TB // BP
    H = w0f_hh.shape[0]
    bf16 = jnp.bfloat16

    # ---- hoisted layer-0 input projections (time-invariant; one tall matmul per direction) ----
    x_all = x_ref[...]                                                    # (T*BP, Din) f32, K=4 kept f32
    xpf0[...] = jnp.dot(x_all, w0f_ih[...], preferred_element_type=jnp.float32) + b0f[...]
    xpb0[...] = jnp.dot(x_all, w0b_ih[...], preferred_element_type=jnp.float32) + b0b[...]

    zeros = jnp.zeros((BP, H), jnp.float32)

    # ---- layer 0: fwd + bwd recurrence fused, fully unrolled over T (static slices) ----
    h_f, c_f, h_b, c_b = zeros, zeros, zeros, zeros
    for t in range(T):
        rf = t * BP                       # forward time index t
        rb = (T - 1 - t) * BP             # backward direction processes time T-1-t
        g_f = xpf0[rf:rf + BP, :] + jnp.dot(
            h_f.astype(bf16), w0f_hh[...], preferred_element_type=jnp.float32)
        h_f, c_f = _lstm_cell(g_f, c_f, H)
        g_b = xpb0[rb:rb + BP, :] + jnp.dot(
            h_b.astype(bf16), w0b_hh[...], preferred_element_type=jnp.float32)
        h_b, c_b = _lstm_cell(g_b, c_b, H)
        l0out[rf:rf + BP, 0:H] = h_f                                      # fwd half
        l0out[rb:rb + BP, H:2 * H] = h_b                                  # bwd half

    # ---- layer 1 forward: hoisted input projection + unrolled recurrence ----
    l0_all = l0out[...].astype(bf16)                                      # (T*BP, 2H)
    xpf1[...] = jnp.dot(l0_all, w1f_ih[...], preferred_element_type=jnp.float32) + b1f[...]

    h_f, c_f = zeros, zeros
    for t in range(T):
        rf = t * BP
        g_f = xpf1[rf:rf + BP, :] + jnp.dot(
            h_f.astype(bf16), w1f_hh[...], preferred_element_type=jnp.float32)
        h_f, c_f = _lstm_cell(g_f, c_f, H)

    # ---- layer 1 backward, time T-1 only: single step from zero state (h @ Whh term vanishes).
    #      That is the only layer-1 bwd state the head (out[:, -1, :]) reads.
    x_last = l0out[(T - 1) * BP:T * BP, :].astype(bf16)                   # (BP, 2H)
    g_b = jnp.dot(x_last, w1b_ih[...], preferred_element_type=jnp.float32) + b1b[...]
    h_b, _ = _lstm_cell(g_b, zeros, H)

    # ---- MLP head (dropout = identity in eval); lane-dense padded output slab ----
    # TODO(synk): train-mode dropout (stochastic masking) omitted; identity in eval mode.
    hid = (jnp.dot(h_f.astype(bf16), wfc1[0:H, :], preferred_element_type=jnp.float32)
           + jnp.dot(h_b.astype(bf16), wfc1[H:2 * H, :], preferred_element_type=jnp.float32)
           + bfc1[...])
    hid = jnp.maximum(hid, 0.0)                                           # ReLU
    out_ref[...] = jnp.dot(hid.astype(bf16), wfc2[...],
                           preferred_element_type=jnp.float32) + bfc2[...]


# ----------------------------- Parameter init (deterministic) -----------------------------
def init_params(key):
    keys = jax.random.split(key, 24)
    it = iter(keys)
    bf16 = jnp.bfloat16
    bound = 1.0 / (HIDDEN ** 0.5)
    weights = []
    for layer in range(NUM_LAYERS):
        din = INPUT_SIZE if layer == 0 else 2 * HIDDEN
        for _direction in range(2):                      # fwd then bwd
            wih = jax.random.uniform(next(it), (4 * HIDDEN, din), jnp.float32, -bound, bound)
            whh = jax.random.uniform(next(it), (4 * HIDDEN, HIDDEN), jnp.float32, -bound, bound)
            bih = jax.random.uniform(next(it), (4 * HIDDEN,), jnp.float32, -bound, bound)
            bhh = jax.random.uniform(next(it), (4 * HIDDEN,), jnp.float32, -bound, bound)
            wih_t = wih.T                                # (din, 4H)
            # layer-0 input projection has K=4: keep f32; big layer-1 Wih goes bf16 for the MXU.
            wih_t = wih_t.astype(jnp.float32) if layer == 0 else wih_t.astype(bf16)
            weights += [wih_t,
                        whh.T.astype(bf16),              # (H, 4H)
                        (bih + bhh).reshape(1, 4 * HIDDEN)]   # f32 combined bias
    # MLP head
    b1f = 1.0 / ((2 * HIDDEN) ** 0.5)
    w1 = jax.random.uniform(next(it), (HEAD_HIDDEN, 2 * HIDDEN), jnp.float32, -b1f, b1f)
    bb1 = jax.random.uniform(next(it), (HEAD_HIDDEN,), jnp.float32, -b1f, b1f)
    b2f = 1.0 / (HEAD_HIDDEN ** 0.5)
    w2 = jax.random.uniform(next(it), (NUM_CLASSES, HEAD_HIDDEN), jnp.float32, -b2f, b2f)
    bb2 = jax.random.uniform(next(it), (NUM_CLASSES,), jnp.float32, -b2f, b2f)
    w2p = jnp.zeros((HEAD_HIDDEN, OUT_PAD), jnp.float32).at[:, :NUM_CLASSES].set(w2.T)
    b2p = jnp.zeros((1, OUT_PAD), jnp.float32).at[0, :NUM_CLASSES].set(bb2)
    weights += [w1.T.astype(bf16),                       # (2H, 128)
                bb1.reshape(1, HEAD_HIDDEN),             # (1, 128) f32
                w2p.astype(bf16),                        # (128, 128) padded
                b2p]                                     # (1, 128) padded f32
    return weights


# ----------------------------- Forward pass (single pallas_call) -----------------------------
def forward(x, weights):
    # x: (B, C, T) -- same as the torch module's input before permute(0, 2, 1).
    B, C, T = x.shape
    BP = ((B + 7) // 8) * 8                              # pad batch to f32 sublane multiple
    x_tbc = jnp.transpose(x, (2, 0, 1))                  # (T, B, C) time-major
    if BP != B:
        x_tbc = jnp.pad(x_tbc, ((0, 0), (0, BP - B), (0, 0)))
    x_flat = x_tbc.reshape(T * BP, C)                    # (T*BP, C): row block t*BP..(t+1)*BP = time t

    out_pad = pl.pallas_call(
        _fused_kernel,
        out_shape=jax.ShapeDtypeStruct((BP, OUT_PAD), jnp.float32),
        in_specs=[pl.BlockSpec(memory_space=pltpu.MemorySpace.VMEM)] * (1 + len(weights)),
        out_specs=pl.BlockSpec(memory_space=pltpu.MemorySpace.VMEM),
        scratch_shapes=[
            pltpu.VMEM((T * BP, 4 * HIDDEN), jnp.float32),   # xpf0: layer-0 fwd x-projection
            pltpu.VMEM((T * BP, 4 * HIDDEN), jnp.float32),   # xpb0: layer-0 bwd x-projection
            pltpu.VMEM((T * BP, 2 * HIDDEN), jnp.float32),   # l0out: layer-0 bidir output
            pltpu.VMEM((T * BP, 4 * HIDDEN), jnp.float32),   # xpf1: layer-1 fwd x-projection
        ],
    )(x_flat, *weights)
    return out_pad[:B, :NUM_CLASSES]


if __name__ == "__main__":
    key = jax.random.PRNGKey(0)
    pkey, xkey = jax.random.split(key)
    weights = init_params(pkey)

    B, C, T = 2, INPUT_SIZE, 8
    x = jax.random.normal(xkey, (B, C, T), dtype=jnp.float32)

    out = forward(x, weights)
    out = jax.block_until_ready(out)
    assert out.shape == (B, NUM_CLASSES), out.shape
    assert jnp.all(jnp.isfinite(out))
    print("KERNEL_OK")
</pallas_src>

<mosaic_0001>
module attributes {stable_mosaic.version = 11 : i64} {
  func.func @_fused_kernel(%arg0: memref<64x4xf32, #tpu.memory_space<vmem>>, %arg1: memref<4x512xf32, #tpu.memory_space<vmem>>, %arg2: memref<128x512xbf16, #tpu.memory_space<vmem>>, %arg3: memref<1x512xf32, #tpu.memory_space<vmem>>, %arg4: memref<4x512xf32, #tpu.memory_space<vmem>>, %arg5: memref<128x512xbf16, #tpu.memory_space<vmem>>, %arg6: memref<1x512xf32, #tpu.memory_space<vmem>>, %arg7: memref<256x512xbf16, #tpu.memory_space<vmem>>, %arg8: memref<128x512xbf16, #tpu.memory_space<vmem>>, %arg9: memref<1x512xf32, #tpu.memory_space<vmem>>, %arg10: memref<256x512xbf16, #tpu.memory_space<vmem>>, %arg11: memref<128x512xbf16, #tpu.memory_space<vmem>>, %arg12: memref<1x512xf32, #tpu.memory_space<vmem>>, %arg13: memref<256x128xbf16, #tpu.memory_space<vmem>>, %arg14: memref<1x128xf32, #tpu.memory_space<vmem>>, %arg15: memref<128x128xbf16, #tpu.memory_space<vmem>>, %arg16: memref<1x128xf32, #tpu.memory_space<vmem>>, %arg17: memref<8x128xf32, #tpu.memory_space<vmem>>, %arg18: memref<64x512xf32, #tpu.memory_space<vmem>>, %arg19: memref<64x512xf32, #tpu.memory_space<vmem>>, %arg20: memref<64x256xf32, #tpu.memory_space<vmem>>, %arg21: memref<64x512xf32, #tpu.memory_space<vmem>>) attributes {dimension_semantics = [], scalar_prefetch = 0 : i64, scratch_operands = 4 : i64, tpu.core_type = #tpu.core_type<tc>} {
    %c0 = arith.constant 0 : index
    %c0_0 = arith.constant 0 : index
    %0 = vector.load %arg0[%c0, %c0_0] : memref<64x4xf32, #tpu.memory_space<vmem>>, vector<64x4xf32>
    %c0_1 = arith.constant 0 : index
    %c0_2 = arith.constant 0 : index
    %1 = vector.load %arg1[%c0_1, %c0_2] : memref<4x512xf32, #tpu.memory_space<vmem>>, vector<4x512xf32>
    %cst = arith.constant dense<0.000000e+00> : vector<64x512xf32>
    %2 = tpu.matmul %0, %1, %cst {dimension_numbers = #tpu.dot_dimension_numbers<[1], [0], [0], [1], [0, 0, 1, 1], [], []>} : vector<64x4xf32>, vector<4x512xf32>, vector<64x512xf32> -> vector<64x512xf32>
    %c0_3 = arith.constant 0 : index
    %c0_4 = arith.constant 0 : index
    %3 = vector.load %arg3[%c0_3, %c0_4] : memref<1x512xf32, #tpu.memory_space<vmem>>, vector<1x512xf32>
    %4 = vector.broadcast %3 : vector<1x512xf32> to vector<64x512xf32>
    %5 = arith.addf %2, %4 : vector<64x512xf32>
    %c0_5 = arith.constant 0 : index
    %c0_6 = arith.constant 0 : index
    %6 = vector.load %arg18[%c0_5, %c0_6] : memref<64x512xf32, #tpu.memory_space<vmem>>, vector<64x512xf32>
    tpu.vector_store %arg18[%c0_5, %c0_6], %5 {strides = array<i32>} : memref<64x512xf32, #tpu.memory_space<vmem>>, vector<64x512xf32>,
    %c0_7 = arith.constant 0 : index
    %c0_8 = arith.constant 0 : index
    %7 = vector.load %arg4[%c0_7, %c0_8] : memref<4x512xf32, #tpu.memory_space<vmem>>, vector<4x512xf32>
    %cst_9 = arith.constant dense<0.000000e+00> : vector<64x512xf32>
    %8 = tpu.matmul %0, %7, %cst_9 {dimension_numbers = #tpu.dot_dimension_numbers<[1], [0], [0], [1], [0, 0, 1, 1], [], []>} : vector<64x4xf32>, vector<4x512xf32>, vector<64x512xf32> -> vector<64x512xf32>
    %c0_10 = arith.constant 0 : index
    %c0_11 = arith.constant 0 : index
    %9 = vector.load %arg6[%c0_10, %c0_11] : memref<1x512xf32, #tpu.memory_space<vmem>>, vector<1x512xf32>
    %10 = vector.broadcast %9 : vector<1x512xf32> to vector<64x512xf32>
    %11 = arith.addf %8, %10 : vector<64x512xf32>
    %c0_12 = arith.constant 0 : index
    %c0_13 = arith.constant 0 : index
    %12 = vector.load %arg19[%c0_12, %c0_13] : memref<64x512xf32, #tpu.memory_space<vmem>>, vector<64x512xf32>
    tpu.vector_store %arg19[%c0_12, %c0_13], %11 {strides = array<i32>} : memref<64x512xf32, #tpu.memory_space<vmem>>, vector<64x512xf32>,
    %cst_14 = arith.constant 0.000000e+00 : f32
    %13 = vector.broadcast %cst_14 : f32 to vector<8x128xf32>
    %c0_15 = arith.constant 0 : index
    %c0_16 = arith.constant 0 : index
    %14 = vector.load %arg18[%c0_15, %c0_16] : memref<64x512xf32, #tpu.memory_space<vmem>>, vector<8x512xf32>
    %15 = arith.truncf %13 : vector<8x128xf32> to vector<8x128xbf16>
    %c0_17 = arith.constant 0 : index
    %c0_18 = arith.constant 0 : index
    %16 = vector.load %arg2[%c0_17, %c0_18] : memref<128x512xbf16, #tpu.memory_space<vmem>>, vector<128x512xbf16>
    %cst_19 = arith.constant dense<0.000000e+00> : vector<8x512xf32>
    %17 = tpu.matmul %15, %16, %cst_19 {dimension_numbers = #tpu.dot_dimension_numbers<[1], [0], [0], [1], [0, 0, 1, 1], [], []>} : vector<8x128xbf16>, vector<128x512xbf16>, vector<8x512xf32> -> vector<8x512xf32>
    %18 = arith.addf %14, %17 : vector<8x512xf32>
    %19 = vector.extract_strided_slice %18 {offsets = [0, 0], sizes = [8, 128], strides = [1, 1]} : vector<8x512xf32> to vector<8x128xf32>
    %20 = arith.negf %19 : vector<8x128xf32>
    %21 = math.exp %20 : vector<8x128xf32>
    %cst_20 = arith.constant 1.000000e+00 : f32
    %22 = vector.broadcast %cst_20 : f32 to vector<8x128xf32>
    %23 = arith.addf %22, %21 : vector<8x128xf32>
    %24 = arith.divf %22, %23 : vector<8x128xf32>
    %25 = vector.extract_strided_slice %18 {offsets = [0, 128], sizes = [8, 128], strides = [1, 1]} : vector<8x512xf32> to vector<8x128xf32>
    %26 = arith.negf %25 : vector<8x128xf32>
    %27 = math.exp %26 : vector<8x128xf32>
    %cst_21 = arith.constant 1.000000e+00 : f32
    %28 = vector.broadcast %cst_21 : f32 to vector<8x128xf32>
    %29 = arith.addf %28, %27 : vector<8x128xf32>
    %30 = arith.divf %28, %29 : vector<8x128xf32>
    %31 = vector.extract_strided_slice %18 {offsets = [0, 256], sizes = [8, 128], strides = [1, 1]} : vector<8x512xf32> to vector<8x128xf32>
    %32 = math.tanh %31 : vector<8x128xf32>
    %33 = vector.extract_strided_slice %18 {offsets = [0, 384], sizes = [8, 128], strides = [1, 1]} : vector<8x512xf32> to vector<8x128xf32>
    %34 = arith.negf %33 : vector<8x128xf32>
    %35 = math.exp %34 : vector<8x128xf32>
    %cst_22 = arith.constant 1.000000e+00 : f32
    %36 = vector.broadcast %cst_22 : f32 to vector<8x128xf32>
    %37 = arith.addf %36, %35 : vector<8x128xf32>
    %38 = arith.divf %36, %37 : vector<8x128xf32>
    %39 = arith.mulf %30, %13 : vector<8x128xf32>
    %40 = arith.mulf %24, %32 : vector<8x128xf32>
    %41 = arith.addf %39, %40 : vector<8x128xf32>
    %42 = math.tanh %41 : vector<8x128xf32>
    %43 = arith.mulf %38, %42 : vector<8x128xf32>
    %c56 = arith.constant 56 : index
    %c0_23 = arith.constant 0 : index
    %44 = vector.load %arg19[%c56, %c0_23] : memref<64x512xf32, #tpu.memory_space<vmem>>, vector<8x512xf32>
    %45 = arith.truncf %13 : vector<8x128xf32> to vector<8x128xbf16>
    %c0_24 = arith.constant 0 : index
    %c0_25 = arith.constant 0 : index
    %46 = vector.load %arg5[%c0_24, %c0_25] : memref<128x512xbf16, #tpu.memory_space<vmem>>, vector<128x512xbf16>
    %cst_26 = arith.constant dense<0.000000e+00> : vector<8x512xf32>
    %47 = tpu.matmul %45, %46, %cst_26 {dimension_numbers = #tpu.dot_dimension_numbers<[1], [0], [0], [1], [0, 0, 1, 1], [], []>} : vector<8x128xbf16>, vector<128x512xbf16>, vector<8x512xf32> -> vector<8x512xf32>
    %48 = arith.addf %44, %47 : vector<8x512xf32>
    %49 = vector.extract_strided_slice %48 {offsets = [0, 0], sizes = [8, 128], strides = [1, 1]} : vector<8x512xf32> to vector<8x128xf32>
    %50 = arith.negf %49 : vector<8x128xf32>
    %51 = math.exp %50 : vector<8x128xf32>
    %cst_27 = arith.constant 1.000000e+00 : f32
    %52 = vector.broadcast %cst_27 : f32 to vector<8x128xf32>
    %53 = arith.addf %52, %51 : vector<8x128xf32>
    %54 = arith.divf %52, %53 : vector<8x128xf32>
    %55 = vector.extract_strided_slice %48 {offsets = [0, 128], sizes = [8, 128], strides = [1, 1]} : vector<8x512xf32> to vector<8x128xf32>
    %56 = arith.negf %55 : vector<8x128xf32>
    %57 = math.exp %56 : vector<8x128xf32>
    %cst_28 = arith.constant 1.000000e+00 : f32
    %58 = vector.broadcast %cst_28 : f32 to vector<8x128xf32>
    %59 = arith.addf %58, %57 : vector<8x128xf32>
    %60 = arith.divf %58, %59 : vector<8x128xf32>
    %61 = vector.extract_strided_slice %48 {offsets = [0, 256], sizes = [8, 128], strides = [1, 1]} : vector<8x512xf32> to vector<8x128xf32>
    %62 = math.tanh %61 : vector<8x128xf32>
    %63 = vector.extract_strided_slice %48 {offsets = [0, 384], sizes = [8, 128], strides = [1, 1]} : vector<8x512xf32> to vector<8x128xf32>
    %64 = arith.negf %63 : vector<8x128xf32>
    %65 = math.exp %64 : vector<8x128xf32>
    %cst_29 = arith.constant 1.000000e+00 : f32
    %66 = vector.broadcast %cst_29 : f32 to vector<8x128xf32>
    %67 = arith.addf %66, %65 : vector<8x128xf32>
    %68 = arith.divf %66, %67 : vector<8x128xf32>
    %69 = arith.mulf %60, %13 : vector<8x128xf32>
    %70 = arith.mulf %54, %62 : vector<8x128xf32>
    %71 = arith.addf %69, %70 : vector<8x128xf32>
    %72 = math.tanh %71 : vector<8x128xf32>
    %73 = arith.mulf %68, %72 : vector<8x128xf32>
    %c0_30 = arith.constant 0 : index
    %c0_31 = arith.constant 0 : index
    %74 = vector.load %arg20[%c0_30, %c0_31] : memref<64x256xf32, #tpu.memory_space<vmem>>, vector<8x128xf32>
    tpu.vector_store %arg20[%c0_30, %c0_31], %43 {strides = array<i32>} : memref<64x256xf32, #tpu.memory_space<vmem>>, vector<8x128xf32>,
    %c56_32 = arith.constant 56 : index
    %c128 = arith.constant 128 : index
    %75 = vector.load %arg20[%c56_32, %c128] : memref<64x256xf32, #tpu.memory_space<vmem>>, vector<8x128xf32>
    tpu.vector_store %arg20[%c56_32, %c128], %73 {strides = array<i32>} : memref<64x256xf32, #tpu.memory_space<vmem>>, vector<8x128xf32>,
    %c8 = arith.constant 8 : index
    %c0_33 = arith.constant 0 : index
    %76 = vector.load %arg18[%c8, %c0_33] : memref<64x512xf32, #tpu.memory_space<vmem>>, vector<8x512xf32>
    %77 = arith.truncf %43 : vector<8x128xf32> to vector<8x128xbf16>
    %c0_34 = arith.constant 0 : index
    %c0_35 = arith.constant 0 : index
    %78 = vector.load %arg2[%c0_34, %c0_35] : memref<128x512xbf16, #tpu.memory_space<vmem>>, vector<128x512xbf16>
    %cst_36 = arith.constant dense<0.000000e+00> : vector<8x512xf32>
    %79 = tpu.matmul %77, %78, %cst_36 {dimension_numbers = #tpu.dot_dimension_numbers<[1], [0], [0], [1], [0, 0, 1, 1], [], []>} : vector<8x128xbf16>, vector<128x512xbf16>, vector<8x512xf32> -> vector<8x512xf32>
    %80 = arith.addf %76, %79 : vector<8x512xf32>
    %81 = vector.extract_strided_slice %80 {offsets = [0, 0], sizes = [8, 128], strides = [1, 1]} : vector<8x512xf32> to vector<8x128xf32>
    %82 = arith.negf %81 : vector<8x128xf32>
    %83 = math.exp %82 : vector<8x128xf32>
    %cst_37 = arith.constant 1.000000e+00 : f32
    %84 = vector.broadcast %cst_37 : f32 to vector<8x128xf32>
    %85 = arith.addf %84, %83 : vector<8x128xf32>
    %86 = arith.divf %84, %85 : vector<8x128xf32>
    %87 = vector.extract_strided_slice %80 {offsets = [0, 128], sizes = [8, 128], strides = [1, 1]} : vector<8x512xf32> to vector<8x128xf32>
    %88 = arith.negf %87 : vector<8x128xf32>
    %89 = math.exp %88 : vector<8x128xf32>
    %cst_38 = arith.constant 1.000000e+00 : f32
    %90 = vector.broadcast %cst_38 : f32 to vector<8x128xf32>
    %91 = arith.addf %90, %89 : vector<8x128xf32>
    %92 = arith.divf %90, %91 : vector<8x128xf32>
    %93 = vector.extract_strided_slice %80 {offsets = [0, 256], sizes = [8, 128], strides = [1, 1]} : vector<8x512xf32> to vector<8x128xf32>
    %94 = math.tanh %93 : vector<8x128xf32>
    %95 = vector.extract_strided_slice %80 {offsets = [0, 384], sizes = [8, 128], strides = [1, 1]} : vector<8x512xf32> to vector<8x128xf32>
    %96 = arith.negf %95 : vector<8x128xf32>
    %97 = math.exp %96 : vector<8x128xf32>
    %cst_39 = arith.constant 1.000000e+00 : f32
    %98 = vector.broadcast %cst_39 : f32 to vector<8x128xf32>
    %99 = arith.addf %98, %97 : vector<8x128xf32>
    %100 = arith.divf %98, %99 : vector<8x128xf32>
    %101 = arith.mulf %92, %41 : vector<8x128xf32>
    %102 = arith.mulf %86, %94 : vector<8x128xf32>
    %103 = arith.addf %101, %102 : vector<8x128xf32>
    %104 = math.tanh %103 : vector<8x128xf32>
    %105 = arith.mulf %100, %104 : vector<8x128xf32>
    %c48 = arith.constant 48 : index
    %c0_40 = arith.constant 0 : index
    %106 = vector.load %arg19[%c48, %c0_40] : memref<64x512xf32, #tpu.memory_space<vmem>>, vector<8x512xf32>
    %107 = arith.truncf %73 : vector<8x128xf32> to vector<8x128xbf16>
    %c0_41 = arith.constant 0 : index
    %c0_42 = arith.constant 0 : index
    %108 = vector.load %arg5[%c0_41, %c0_42] : memref<128x512xbf16, #tpu.memory_space<vmem>>, vector<128x512xbf16>
    %cst_43 = arith.constant dense<0.000000e+00> : vector<8x512xf32>
    %109 = tpu.matmul %107, %108, %cst_43 {dimension_numbers = #tpu.dot_dimension_numbers<[1], [0], [0], [1], [0, 0, 1, 1], [], []>} : vector<8x128xbf16>, vector<128x512xbf16>, vector<8x512xf32> -> vector<8x512xf32>
    %110 = arith.addf %106, %109 : vector<8x512xf32>
    %111 = vector.extract_strided_slice %110 {offsets = [0, 0], sizes = [8, 128], strides = [1, 1]} : vector<8x512xf32> to vector<8x128xf32>
    %112 = arith.negf %111 : vector<8x128xf32>
    %113 = math.exp %112 : vector<8x128xf32>
    %cst_44 = arith.constant 1.000000e+00 : f32
    %114 = vector.broadcast %cst_44 : f32 to vector<8x128xf32>
    %115 = arith.addf %114, %113 : vector<8x128xf32>
    %116 = arith.divf %114, %115 : vector<8x128xf32>
    %117 = vector.extract_strided_slice %110 {offsets = [0, 128], sizes = [8, 128], strides = [1, 1]} : vector<8x512xf32> to vector<8x128xf32>
    %118 = arith.negf %117 : vector<8x128xf32>
    %119 = math.exp %118 : vector<8x128xf32>
    %cst_45 = arith.constant 1.000000e+00 : f32
    %120 = vector.broadcast %cst_45 : f32 to vector<8x128xf32>
    %121 = arith.addf %120, %119 : vector<8x128xf32>
    %122 = arith.divf %120, %121 : vector<8x128xf32>
    %123 = vector.extract_strided_slice %110 {offsets = [0, 256], sizes = [8, 128], strides = [1, 1]} : vector<8x512xf32> to vector<8x128xf32>
    %124 = math.tanh %123 : vector<8x128xf32>
    %125 = vector.extract_strided_slice %110 {offsets = [0, 384], sizes = [8, 128], strides = [1, 1]} : vector<8x512xf32> to vector<8x128xf32>
    %126 = arith.negf %125 : vector<8x128xf32>
    %127 = math.exp %126 : vector<8x128xf32>
    %cst_46 = arith.constant 1.000000e+00 : f32
    %128 = vector.broadcast %cst_46 : f32 to vector<8x128xf32>
    %129 = arith.addf %128, %127 : vector<8x128xf32>
    %130 = arith.divf %128, %129 : vector<8x128xf32>
    %131 = arith.mulf %122, %71 : vector<8x128xf32>
    %132 = arith.mulf %116, %124 : vector<8x128xf32>
    %133 = arith.addf %131, %132 : vector<8x128xf32>
    %134 = math.tanh %133 : vector<8x128xf32>
    %135 = arith.mulf %130, %134 : vector<8x128xf32>
    %c8_47 = arith.constant 8 : index
    %c0_48 = arith.constant 0 : index
    %136 = vector.load %arg20[%c8_47, %c0_48] : memref<64x256xf32, #tpu.memory_space<vmem>>, vector<8x128xf32>
    tpu.vector_store %arg20[%c8_47, %c0_48], %105 {strides = array<i32>} : memref<64x256xf32, #tpu.memory_space<vmem>>, vector<8x128xf32>,
    %c48_49 = arith.constant 48 : index
    %c128_50 = arith.constant 128 : index
    %137 = vector.load %arg20[%c48_49, %c128_50] : memref<64x256xf32, #tpu.memory_space<vmem>>, vector<8x128xf32>
    tpu.vector_store %arg20[%c48_49, %c128_50], %135 {strides = array<i32>} : memref<64x256xf32, #tpu.memory_space<vmem>>, vector<8x128xf32>,
    %c16 = arith.constant 16 : index
    %c0_51 = arith.constant 0 : index
    %138 = vector.load %arg18[%c16, %c0_51] : memref<64x512xf32, #tpu.memory_space<vmem>>, vector<8x512xf32>
    %139 = arith.truncf %105 : vector<8x128xf32> to vector<8x128xbf16>
    %c0_52 = arith.constant 0 : index
    %c0_53 = arith.constant 0 : index
    %140 = vector.load %arg2[%c0_52, %c0_53] : memref<128x512xbf16, #tpu.memory_space<vmem>>, vector<128x512xbf16>
    %cst_54 = arith.constant dense<0.000000e+00> : vector<8x512xf32>
    %141 = tpu.matmul %139, %140, %cst_54 {dimension_numbers = #tpu.dot_dimension_numbers<[1], [0], [0], [1], [0, 0, 1, 1], [], []>} : vector<8x128xbf16>, vector<128x512xbf16>, vector<8x512xf32> -> vector<8x512xf32>
    %142 = arith.addf %138, %141 : vector<8x512xf32>
    %143 = vector.extract_strided_slice %142 {offsets = [0, 0], sizes = [8, 128], strides = [1, 1]} : vector<8x512xf32> to vector<8x128xf32>
    %144 = arith.negf %143 : vector<8x128xf32>
    %145 = math.exp %144 : vector<8x128xf32>
    %cst_55 = arith.constant 1.000000e+00 : f32
    %146 = vector.broadcast %cst_55 : f32 to vector<8x128xf32>
    %147 = arith.addf %146, %145 : vector<8x128xf32>
    %148 = arith.divf %146, %147 : vector<8x128xf32>
    %149 = vector.extract_strided_slice %142 {offsets = [0, 128], sizes = [8, 128], strides = [1, 1]} : vector<8x512xf32> to vector<8x128xf32>
    %150 = arith.negf %149 : vector<8x128xf32>
    %151 = math.exp %150 : vector<8x128xf32>
    %cst_56 = arith.constant 1.000000e+00 : f32
    %152 = vector.broadcast %cst_56 : f32 to vector<8x128xf32>
    %153 = arith.addf %152, %151 : vector<8x128xf32>
    %154 = arith.divf %152, %153 : vector<8x128xf32>
    %155 = vector.extract_strided_slice %142 {offsets = [0, 256], sizes = [8, 128], strides = [1, 1]} : vector<8x512xf32> to vector<8x128xf32>
    %156 = math.tanh %155 : vector<8x128xf32>
    %157 = vector.extract_strided_slice %142 {offsets = [0, 384], sizes = [8, 128], strides = [1, 1]} : vector<8x512xf32> to vector<8x128xf32>
    %158 = arith.negf %157 : vector<8x128xf32>
    %159 = math.exp %158 : vector<8x128xf32>
    %cst_57 = arith.constant 1.000000e+00 : f32
    %160 = vector.broadcast %cst_57 : f32 to vector<8x128xf32>
    %161 = arith.addf %160, %159 : vector<8x128xf32>
    %162 = arith.divf %160, %161 : vector<8x128xf32>
    %163 = arith.mulf %154, %103 : vector<8x128xf32>
    %164 = arith.mulf %148, %156 : vector<8x128xf32>
    %165 = arith.addf %163, %164 : vector<8x128xf32>
    %166 = math.tanh %165 : vector<8x128xf32>
    %167 = arith.mulf %162, %166 : vector<8x128xf32>
    %c40 = arith.constant 40 : index
    %c0_58 = arith.constant 0 : index
    %168 = vector.load %arg19[%c40, %c0_58] : memref<64x512xf32, #tpu.memory_space<vmem>>, vector<8x512xf32>
    %169 = arith.truncf %135 : vector<8x128xf32> to vector<8x128xbf16>
    %c0_59 = arith.constant 0 : index
    %c0_60 = arith.constant 0 : index
    %170 = vector.load %arg5[%c0_59, %c0_60] : memref<128x512xbf16, #tpu.memory_space<vmem>>, vector<128x512xbf16>
    %cst_61 = arith.constant dense<0.000000e+00> : vector<8x512xf32>
    %171 = tpu.matmul %169, %170, %cst_61 {dimension_numbers = #tpu.dot_dimension_numbers<[1], [0], [0], [1], [0, 0, 1, 1], [], []>} : vector<8x128xbf16>, vector<128x512xbf16>, vector<8x512xf32> -> vector<8x512xf32>
    %172 = arith.addf %168, %171 : vector<8x512xf32>
    %173 = vector.extract_strided_slice %172 {offsets = [0, 0], sizes = [8, 128], strides = [1, 1]} : vector<8x512xf32> to vector<8x128xf32>
    %174 = arith.negf %173 : vector<8x128xf32>
    %175 = math.exp %174 : vector<8x128xf32>
    %cst_62 = arith.constant 1.000000e+00 : f32
    %176 = vector.broadcast %cst_62 : f32 to vector<8x128xf32>
    %177 = arith.addf %176, %175 : vector<8x128xf32>
    %178 = arith.divf %176, %177 : vector<8x128xf32>
    %179 = vector.extract_strided_slice %172 {offsets = [0, 128], sizes = [8, 128], strides = [1, 1]} : vector<8x512xf32> to vector<8x128xf32>
    %180 = arith.negf %179 : vector<8x128xf32>
    %181 = math.exp %180 : vector<8x128xf32>
    %cst_63 = arith.constant 1.000000e+00 : f32
    %182 = vector.broadcast %cst_63 : f32 to vector<8x128xf32>
    %183 = arith.addf %182, %181 : vector<8x128xf32>
    %184 = arith.divf %182, %183 : vector<8x128xf32>
    %185 = vector.extract_strided_slice %172 {offsets = [0, 256], sizes = [8, 128], strides = [1, 1]} : vector<8x512xf32> to vector<8x128xf32>
    %186 = math.tanh %185 : vector<8x128xf32>
    %187 = vector.extract_strided_slice %172 {offsets = [0, 384], sizes = [8, 128], strides = [1, 1]} : vector<8x512xf32> to vector<8x128xf32>
    %188 = arith.negf %187 : vector<8x128xf32>
    %189 = math.exp %188 : vector<8x128xf32>
    %cst_64 = arith.constant 1.000000e+00 : f32
    %190 = vector.broadcast %cst_64 : f32 to vector<8x128xf32>
    %191 = arith.addf %190, %189 : vector<8x128xf32>
    %192 = arith.divf %190, %191 : vector<8x128xf32>
    %193 = arith.mulf %184, %133 : vector<8x128xf32>
    %194 = arith.mulf %178, %186 : vector<8x128xf32>
    %195 = arith.addf %193, %194 : vector<8x128xf32>
    %196 = math.tanh %195 : vector<8x128xf32>
    %197 = arith.mulf %192, %196 : vector<8x128xf32>
    %c16_65 = arith.constant 16 : index
    %c0_66 = arith.constant 0 : index
    %198 = vector.load %arg20[%c16_65, %c0_66] : memref<64x256xf32, #tpu.memory_space<vmem>>, vector<8x128xf32>
    tpu.vector_store %arg20[%c16_65, %c0_66], %167 {strides = array<i32>} : memref<64x256xf32, #tpu.memory_space<vmem>>, vector<8x128xf32>,
    %c40_67 = arith.constant 40 : index
    %c128_68 = arith.constant 128 : index
    %199 = vector.load %arg20[%c40_67, %c128_68] : memref<64x256xf32, #tpu.memory_space<vmem>>, vector<8x128xf32>
    tpu.vector_store %arg20[%c40_67, %c128_68], %197 {strides = array<i32>} : memref<64x256xf32, #tpu.memory_space<vmem>>, vector<8x128xf32>,
    %c24 = arith.constant 24 : index
    %c0_69 = arith.constant 0 : index
    %200 = vector.load %arg18[%c24, %c0_69] : memref<64x512xf32, #tpu.memory_space<vmem>>, vector<8x512xf32>
    %201 = arith.truncf %167 : vector<8x128xf32> to vector<8x128xbf16>
    %c0_70 = arith.constant 0 : index
    %c0_71 = arith.constant 0 : index
    %202 = vector.load %arg2[%c0_70, %c0_71] : memref<128x512xbf16, #tpu.memory_space<vmem>>, vector<128x512xbf16>
    %cst_72 = arith.constant dense<0.000000e+00> : vector<8x512xf32>
    %203 = tpu.matmul %201, %202, %cst_72 {dimension_numbers = #tpu.dot_dimension_numbers<[1], [0], [0], [1], [0, 0, 1, 1], [], []>} : vector<8x128xbf16>, vector<128x512xbf16>, vector<8x512xf32> -> vector<8x512xf32>
    %204 = arith.addf %200, %203 : vector<8x512xf32>
    %205 = vector.extract_strided_slice %204 {offsets = [0, 0], sizes = [8, 128], strides = [1, 1]} : vector<8x512xf32> to vector<8x128xf32>
    %206 = arith.negf %205 : vector<8x128xf32>
    %207 = math.exp %206 : vector<8x128xf32>
    %cst_73 = arith.constant 1.000000e+00 : f32
    %208 = vector.broadcast %cst_73 : f32 to vector<8x128xf32>
    %209 = arith.addf %208, %207 : vector<8x128xf32>
    %210 = arith.divf %208, %209 : vector<8x128xf32>
    %211 = vector.extract_strided_slice %204 {offsets = [0, 128], sizes = [8, 128], strides = [1, 1]} : vector<8x512xf32> to vector<8x128xf32>
    %212 = arith.negf %211 : vector<8x128xf32>
    %213 = math.exp %212 : vector<8x128xf32>
    %cst_74 = arith.constant 1.000000e+00 : f32
    %214 = vector.broadcast %cst_74 : f32 to vector<8x128xf32>
    %215 = arith.addf %214, %213 : vector<8x128xf32>
    %216 = arith.divf %214, %215 : vector<8x128xf32>
    %217 = vector.extract_strided_slice %204 {offsets = [0, 256], sizes = [8, 128], strides = [1, 1]} : vector<8x512xf32> to vector<8x128xf32>
    %218 = math.tanh %217 : vector<8x128xf32>
    %219 = vector.extract_strided_slice %204 {offsets = [0, 384], sizes = [8, 128], strides = [1, 1]} : vector<8x512xf32> to vector<8x128xf32>
    %220 = arith.negf %219 : vector<8x128xf32>
    %221 = math.exp %220 : vector<8x128xf32>
    %cst_75 = arith.constant 1.000000e+00 : f32
    %222 = vector.broadcast %cst_75 : f32 to vector<8x128xf32>
    %223 = arith.addf %222, %221 : vector<8x128xf32>
    %224 = arith.divf %222, %223 : vector<8x128xf32>
    %225 = arith.mulf %216, %165 : vector<8x128xf32>
    %226 = arith.mulf %210, %218 : vector<8x128xf32>
    %227 = arith.addf %225, %226 : vector<8x128xf32>
    %228 = math.tanh %227 : vector<8x128xf32>
    %229 = arith.mulf %224, %228 : vector<8x128xf32>
    %c32 = arith.constant 32 : index
    %c0_76 = arith.constant 0 : index
    %230 = vector.load %arg19[%c32, %c0_76] : memref<64x512xf32, #tpu.memory_space<vmem>>, vector<8x512xf32>
    %231 = arith.truncf %197 : vector<8x128xf32> to vector<8x128xbf16>
    %c0_77 = arith.constant 0 : index
    %c0_78 = arith.constant 0 : index
    %232 = vector.load %arg5[%c0_77, %c0_78] : memref<128x512xbf16, #tpu.memory_space<vmem>>, vector<128x512xbf16>
    %cst_79 = arith.constant dense<0.000000e+00> : vector<8x512xf32>
    %233 = tpu.matmul %231, %232, %cst_79 {dimension_numbers = #tpu.dot_dimension_numbers<[1], [0], [0], [1], [0, 0, 1, 1], [], []>} : vector<8x128xbf16>, vector<128x512xbf16>, vector<8x512xf32> -> vector<8x512xf32>
    %234 = arith.addf %230, %233 : vector<8x512xf32>
    %235 = vector.extract_strided_slice %234 {offsets = [0, 0], sizes = [8, 128], strides = [1, 1]} : vector<8x512xf32> to vector<8x128xf32>
    %236 = arith.negf %235 : vector<8x128xf32>
    %237 = math.exp %236 : vector<8x128xf32>
    %cst_80 = arith.constant 1.000000e+00 : f32
    %238 = vector.broadcast %cst_80 : f32 to vector<8x128xf32>
    %239 = arith.addf %238, %237 : vector<8x128xf32>
    %240 = arith.divf %238, %239 : vector<8x128xf32>
    %241 = vector.extract_strided_slice %234 {offsets = [0, 128], sizes = [8, 128], strides = [1, 1]} : vector<8x512xf32> to vector<8x128xf32>
    %242 = arith.negf %241 : vector<8x128xf32>
    %243 = math.exp %242 : vector<8x128xf32>
    %cst_81 = arith.constant 1.000000e+00 : f32
    %244 = vector.broadcast %cst_81 : f32 to vector<8x128xf32>
    %245 = arith.addf %244, %243 : vector<8x128xf32>
    %246 = arith.divf %244, %245 : vector<8x128xf32>
    %247 = vector.extract_strided_slice %234 {offsets = [0, 256], sizes = [8, 128], strides = [1, 1]} : vector<8x512xf32> to vector<8x128xf32>
    %248 = math.tanh %247 : vector<8x128xf32>
    %249 = vector.extract_strided_slice %234 {offsets = [0, 384], sizes = [8, 128], strides = [1, 1]} : vector<8x512xf32> to vector<8x128xf32>
    %250 = arith.negf %249 : vector<8x128xf32>
    %251 = math.exp %250 : vector<8x128xf32>
    %cst_82 = arith.constant 1.000000e+00 : f32
    %252 = vector.broadcast %cst_82 : f32 to vector<8x128xf32>
    %253 = arith.addf %252, %251 : vector<8x128xf32>
    %254 = arith.divf %252, %253 : vector<8x128xf32>
    %255 = arith.mulf %246, %195 : vector<8x128xf32>
    %256 = arith.mulf %240, %248 : vector<8x128xf32>
    %257 = arith.addf %255, %256 : vector<8x128xf32>
    %258 = math.tanh %257 : vector<8x128xf32>
    %259 = arith.mulf %254, %258 : vector<8x128xf32>
    %c24_83 = arith.constant 24 : index
    %c0_84 = arith.constant 0 : index
    %260 = vector.load %arg20[%c24_83, %c0_84] : memref<64x256xf32, #tpu.memory_space<vmem>>, vector<8x128xf32>
    tpu.vector_store %arg20[%c24_83, %c0_84], %229 {strides = array<i32>} : memref<64x256xf32, #tpu.memory_space<vmem>>, vector<8x128xf32>,
    %c32_85 = arith.constant 32 : index
    %c128_86 = arith.constant 128 : index
    %261 = vector.load %arg20[%c32_85, %c128_86] : memref<64x256xf32, #tpu.memory_space<vmem>>, vector<8x128xf32>
    tpu.vector_store %arg20[%c32_85, %c128_86], %259 {strides = array<i32>} : memref<64x256xf32, #tpu.memory_space<vmem>>, vector<8x128xf32>,
    %c32_87 = arith.constant 32 : index
    %c0_88 = arith.constant 0 : index
    %262 = vector.load %arg18[%c32_87, %c0_88] : memref<64x512xf32, #tpu.memory_space<vmem>>, vector<8x512xf32>
    %263 = arith.truncf %229 : vector<8x128xf32> to vector<8x128xbf16>
    %c0_89 = arith.constant 0 : index
    %c0_90 = arith.constant 0 : index
    %264 = vector.load %arg2[%c0_89, %c0_90] : memref<128x512xbf16, #tpu.memory_space<vmem>>, vector<128x512xbf16>
    %cst_91 = arith.constant dense<0.000000e+00> : vector<8x512xf32>
    %265 = tpu.matmul %263, %264, %cst_91 {dimension_numbers = #tpu.dot_dimension_numbers<[1], [0], [0], [1], [0, 0, 1, 1], [], []>} : vector<8x128xbf16>, vector<128x512xbf16>, vector<8x512xf32> -> vector<8x512xf32>
    %266 = arith.addf %262, %265 : vector<8x512xf32>
    %267 = vector.extract_strided_slice %266 {offsets = [0, 0], sizes = [8, 128], strides = [1, 1]} : vector<8x512xf32> to vector<8x128xf32>
    %268 = arith.negf %267 : vector<8x128xf32>
    %269 = math.exp %268 : vector<8x128xf32>
    %cst_92 = arith.constant 1.000000e+00 : f32
    %270 = vector.broadcast %cst_92 : f32 to vector<8x128xf32>
    %271 = arith.addf %270, %269 : vector<8x128xf32>
    %272 = arith.divf %270, %271 : vector<8x128xf32>
    %273 = vector.extract_strided_slice %266 {offsets = [0, 128], sizes = [8, 128], strides = [1, 1]} : vector<8x512xf32> to vector<8x128xf32>
    %274 = arith.negf %273 : vector<8x128xf32>
    %275 = math.exp %274 : vector<8x128xf32>
    %cst_93 = arith.constant 1.000000e+00 : f32
    %276 = vector.broadcast %cst_93 : f32 to vector<8x128xf32>
    %277 = arith.addf %276, %275 : vector<8x128xf32>
    %278 = arith.divf %276, %277 : vector<8x128xf32>
    %279 = vector.extract_strided_slice %266 {offsets = [0, 256], sizes = [8, 128], strides = [1, 1]} : vector<8x512xf32> to vector<8x128xf32>
    %280 = math.tanh %279 : vector<8x128xf32>
    %281 = vector.extract_strided_slice %266 {offsets = [0, 384], sizes = [8, 128], strides = [1, 1]} : vector<8x512xf32> to vector<8x128xf32>
    %282 = arith.negf %281 : vector<8x128xf32>
    %283 = math.exp %282 : vector<8x128xf32>
    %cst_94 = arith.constant 1.000000e+00 : f32
    %284 = vector.broadcast %cst_94 : f32 to vector<8x128xf32>
    %285 = arith.addf %284, %283 : vector<8x128xf32>
    %286 = arith.divf %284, %285 : vector<8x128xf32>
    %287 = arith.mulf %278, %227 : vector<8x128xf32>
    %288 = arith.mulf %272, %280 : vector<8x128xf32>
    %289 = arith.addf %287, %288 : vector<8x128xf32>
    %290 = math.tanh %289 : vector<8x128xf32>
    %291 = arith.mulf %286, %290 : vector<8x128xf32>
    %c24_95 = arith.constant 24 : index
    %c0_96 = arith.constant 0 : index
    %292 = vector.load %arg19[%c24_95, %c0_96] : memref<64x512xf32, #tpu.memory_space<vmem>>, vector<8x512xf32>
    %293 = arith.truncf %259 : vector<8x128xf32> to vector<8x128xbf16>
    %c0_97 = arith.constant 0 : index
    %c0_98 = arith.constant 0 : index
    %294 = vector.load %arg5[%c0_97, %c0_98] : memref<128x512xbf16, #tpu.memory_space<vmem>>, vector<128x512xbf16>
    %cst_99 = arith.constant dense<0.000000e+00> : vector<8x512xf32>
    %295 = tpu.matmul %293, %294, %cst_99 {dimension_numbers = #tpu.dot_dimension_numbers<[1], [0], [0], [1], [0, 0, 1, 1], [], []>} : vector<8x128xbf16>, vector<128x512xbf16>, vector<8x512xf32> -> vector<8x512xf32>
    %296 = arith.addf %292, %295 : vector<8x512xf32>
    %297 = vector.extract_strided_slice %296 {offsets = [0, 0], sizes = [8, 128], strides = [1, 1]} : vector<8x512xf32> to vector<8x128xf32>
    %298 = arith.negf %297 : vector<8x128xf32>
    %299 = math.exp %298 : vector<8x128xf32>
    %cst_100 = arith.constant 1.000000e+00 : f32
    %300 = vector.broadcast %cst_100 : f32 to vector<8x128xf32>
    %301 = arith.addf %300, %299 : vector<8x128xf32>
    %302 = arith.divf %300, %301 : vector<8x128xf32>
    %303 = vector.extract_strided_slice %296 {offsets = [0, 128], sizes = [8, 128], strides = [1, 1]} : vector<8x512xf32> to vector<8x128xf32>
    %304 = arith.negf %303 : vector<8x128xf32>
    %305 = math.exp %304 : vector<8x128xf32>
    %cst_101 = arith.constant 1.000000e+00 : f32
    %306 = vector.broadcast %cst_101 : f32 to vector<8x128xf32>
    %307 = arith.addf %306, %305 : vector<8x128xf32>
    %308 = arith.divf %306, %307 : vector<8x128xf32>
    %309 = vector.extract_strided_slice %296 {offsets = [0, 256], sizes = [8, 128], strides = [1, 1]} : vector<8x512xf32> to vector<8x128xf32>
    %310 = math.tanh %309 : vector<8x128xf32>
    %311 = vector.extract_strided_slice %296 {offsets = [0, 384], sizes = [8, 128], strides = [1, 1]} : vector<8x512xf32> to vector<8x128xf32>
    %312 = arith.negf %311 : vector<8x128xf32>
    %313 = math.exp %312 : vector<8x128xf32>
    %cst_102 = arith.constant 1.000000e+00 : f32
    %314 = vector.broadcast %cst_102 : f32 to vector<8x128xf32>
    %315 = arith.addf %314, %313 : vector<8x128xf32>
    %316 = arith.divf %314, %315 : vector<8x128xf32>
    %317 = arith.mulf %308, %257 : vector<8x128xf32>
    %318 = arith.mulf %302, %310 : vector<8x128xf32>
    %319 = arith.addf %317, %318 : vector<8x128xf32>
    %320 = math.tanh %319 : vector<8x128xf32>
    %321 = arith.mulf %316, %320 : vector<8x128xf32>
    %c32_103 = arith.constant 32 : index
    %c0_104 = arith.constant 0 : index
    %322 = vector.load %arg20[%c32_103, %c0_104] : memref<64x256xf32, #tpu.memory_space<vmem>>, vector<8x128xf32>
    tpu.vector_store %arg20[%c32_103, %c0_104], %291 {strides = array<i32>} : memref<64x256xf32, #tpu.memory_space<vmem>>, vector<8x128xf32>,
    %c24_105 = arith.constant 24 : index
    %c128_106 = arith.constant 128 : index
    %323 = vector.load %arg20[%c24_105, %c128_106] : memref<64x256xf32, #tpu.memory_space<vmem>>, vector<8x128xf32>
    tpu.vector_store %arg20[%c24_105, %c128_106], %321 {strides = array<i32>} : memref<64x256xf32, #tpu.memory_space<vmem>>, vector<8x128xf32>,
    %c40_107 = arith.constant 40 : index
    %c0_108 = arith.constant 0 : index
    %324 = vector.load %arg18[%c40_107, %c0_108] : memref<64x512xf32, #tpu.memory_space<vmem>>, vector<8x512xf32>
    %325 = arith.truncf %291 : vector<8x128xf32> to vector<8x128xbf16>
    %c0_109 = arith.constant 0 : index
    %c0_110 = arith.constant 0 : index
    %326 = vector.load %arg2[%c0_109, %c0_110] : memref<128x512xbf16, #tpu.memory_space<vmem>>, vector<128x512xbf16>
    %cst_111 = arith.constant dense<0.000000e+00> : vector<8x512xf32>
    %327 = tpu.matmul %325, %326, %cst_111 {dimension_numbers = #tpu.dot_dimension_numbers<[1], [0], [0], [1], [0, 0, 1, 1], [], []>} : vector<8x128xbf16>, vector<128x512xbf16>, vector<8x512xf32> -> vector<8x512xf32>
    %328 = arith.addf %324, %327 : vector<8x512xf32>
    %329 = vector.extract_strided_slice %328 {offsets = [0, 0], sizes = [8, 128], strides = [1, 1]} : vector<8x512xf32> to vector<8x128xf32>
    %330 = arith.negf %329 : vector<8x128xf32>
    %331 = math.exp %330 : vector<8x128xf32>
    %cst_112 = arith.constant 1.000000e+00 : f32
    %332 = vector.broadcast %cst_112 : f32 to vector<8x128xf32>
    %333 = arith.addf %332, %331 : vector<8x128xf32>
    %334 = arith.divf %332, %333 : vector<8x128xf32>
    %335 = vector.extract_strided_slice %328 {offsets = [0, 128], sizes = [8, 128], strides = [1, 1]} : vector<8x512xf32> to vector<8x128xf32>
    %336 = arith.negf %335 : vector<8x128xf32>
    %337 = math.exp %336 : vector<8x128xf32>
    %cst_113 = arith.constant 1.000000e+00 : f32
    %338 = vector.broadcast %cst_113 : f32 to vector<8x128xf32>
    %339 = arith.addf %338, %337 : vector<8x128xf32>
    %340 = arith.divf %338, %339 : vector<8x128xf32>
    %341 = vector.extract_strided_slice %328 {offsets = [0, 256], sizes = [8, 128], strides = [1, 1]} : vector<8x512xf32> to vector<8x128xf32>
    %342 = math.tanh %341 : vector<8x128xf32>
    %343 = vector.extract_strided_slice %328 {offsets = [0, 384], sizes = [8, 128], strides = [1, 1]} : vector<8x512xf32> to vector<8x128xf32>
    %344 = arith.negf %343 : vector<8x128xf32>
    %345 = math.exp %344 : vector<8x128xf32>
    %cst_114 = arith.constant 1.000000e+00 : f32
    %346 = vector.broadcast %cst_114 : f32 to vector<8x128xf32>
    %347 = arith.addf %346, %345 : vector<8x128xf32>
    %348 = arith.divf %346, %347 : vector<8x128xf32>
    %349 = arith.mulf %340, %289 : vector<8x128xf32>
    %350 = arith.mulf %334, %342 : vector<8x128xf32>
    %351 = arith.addf %349, %350 : vector<8x128xf32>
    %352 = math.tanh %351 : vector<8x128xf32>
    %353 = arith.mulf %348, %352 : vector<8x128xf32>
    %c16_115 = arith.constant 16 : index
    %c0_116 = arith.constant 0 : index
    %354 = vector.load %arg19[%c16_115, %c0_116] : memref<64x512xf32, #tpu.memory_space<vmem>>, vector<8x512xf32>
    %355 = arith.truncf %321 : vector<8x128xf32> to vector<8x128xbf16>
    %c0_117 = arith.constant 0 : index
    %c0_118 = arith.constant 0 : index
    %356 = vector.load %arg5[%c0_117, %c0_118] : memref<128x512xbf16, #tpu.memory_space<vmem>>, vector<128x512xbf16>
    %cst_119 = arith.constant dense<0.000000e+00> : vector<8x512xf32>
    %357 = tpu.matmul %355, %356, %cst_119 {dimension_numbers = #tpu.dot_dimension_numbers<[1], [0], [0], [1], [0, 0, 1, 1], [], []>} : vector<8x128xbf16>, vector<128x512xbf16>, vector<8x512xf32> -> vector<8x512xf32>
    %358 = arith.addf %354, %357 : vector<8x512xf32>
    %359 = vector.extract_strided_slice %358 {offsets = [0, 0], sizes = [8, 128], strides = [1, 1]} : vector<8x512xf32> to vector<8x128xf32>
    %360 = arith.negf %359 : vector<8x128xf32>
    %361 = math.exp %360 : vector<8x128xf32>
    %cst_120 = arith.constant 1.000000e+00 : f32
    %362 = vector.broadcast %cst_120 : f32 to vector<8x128xf32>
    %363 = arith.addf %362, %361 : vector<8x128xf32>
    %364 = arith.divf %362, %363 : vector<8x128xf32>
    %365 = vector.extract_strided_slice %358 {offsets = [0, 128], sizes = [8, 128], strides = [1, 1]} : vector<8x512xf32> to vector<8x128xf32>
    %366 = arith.negf %365 : vector<8x128xf32>
    %367 = math.exp %366 : vector<8x128xf32>
    %cst_121 = arith.constant 1.000000e+00 : f32
    %368 = vector.broadcast %cst_121 : f32 to vector<8x128xf32>
    %369 = arith.addf %368, %367 : vector<8x128xf32>
    %370 = arith.divf %368, %369 : vector<8x128xf32>
    %371 = vector.extract_strided_slice %358 {offsets = [0, 256], sizes = [8, 128], strides = [1, 1]} : vector<8x512xf32> to vector<8x128xf32>
    %372 = math.tanh %371 : vector<8x128xf32>
    %373 = vector.extract_strided_slice %358 {offsets = [0, 384], sizes = [8, 128], strides = [1, 1]} : vector<8x512xf32> to vector<8x128xf32>
    %374 = arith.negf %373 : vector<8x128xf32>
    %375 = math.exp %374 : vector<8x128xf32>
    %cst_122 = arith.constant 1.000000e+00 : f32
    %376 = vector.broadcast %cst_122 : f32 to vector<8x128xf32>
    %377 = arith.addf %376, %375 : vector<8x128xf32>
    %378 = arith.divf %376, %377 : vector<8x128xf32>
    %379 = arith.mulf %370, %319 : vector<8x128xf32>
    %380 = arith.mulf %364, %372 : vector<8x128xf32>
    %381 = arith.addf %379, %380 : vector<8x128xf32>
    %382 = math.tanh %381 : vector<8x128xf32>
    %383 = arith.mulf %378, %382 : vector<8x128xf32>
    %c40_123 = arith.constant 40 : index
    %c0_124 = arith.constant 0 : index
    %384 = vector.load %arg20[%c40_123, %c0_124] : memref<64x256xf32, #tpu.memory_space<vmem>>, vector<8x128xf32>
    tpu.vector_store %arg20[%c40_123, %c0_124], %353 {strides = array<i32>} : memref<64x256xf32, #tpu.memory_space<vmem>>, vector<8x128xf32>,
    %c16_125 = arith.constant 16 : index
    %c128_126 = arith.constant 128 : index
    %385 = vector.load %arg20[%c16_125, %c128_126] : memref<64x256xf32, #tpu.memory_space<vmem>>, vector<8x128xf32>
    tpu.vector_store %arg20[%c16_125, %c128_126], %383 {strides = array<i32>} : memref<64x256xf32, #tpu.memory_space<vmem>>, vector<8x128xf32>,
    %c48_127 = arith.constant 48 : index
    %c0_128 = arith.constant 0 : index
    %386 = vector.load %arg18[%c48_127, %c0_128] : memref<64x512xf32, #tpu.memory_space<vmem>>, vector<8x512xf32>
    %387 = arith.truncf %353 : vector<8x128xf32> to vector<8x128xbf16>
    %c0_129 = arith.constant 0 : index
    %c0_130 = arith.constant 0 : index
    %388 = vector.load %arg2[%c0_129, %c0_130] : memref<128x512xbf16, #tpu.memory_space<vmem>>, vector<128x512xbf16>
    %cst_131 = arith.constant dense<0.000000e+00> : vector<8x512xf32>
    %389 = tpu.matmul %387, %388, %cst_131 {dimension_numbers = #tpu.dot_dimension_numbers<[1], [0], [0], [1], [0, 0, 1, 1], [], []>} : vector<8x128xbf16>, vector<128x512xbf16>, vector<8x512xf32> -> vector<8x512xf32>
    %390 = arith.addf %386, %389 : vector<8x512xf32>
    %391 = vector.extract_strided_slice %390 {offsets = [0, 0], sizes = [8, 128], strides = [1, 1]} : vector<8x512xf32> to vector<8x128xf32>
    %392 = arith.negf %391 : vector<8x128xf32>
    %393 = math.exp %392 : vector<8x128xf32>
    %cst_132 = arith.constant 1.000000e+00 : f32
    %394 = vector.broadcast %cst_132 : f32 to vector<8x128xf32>
    %395 = arith.addf %394, %393 : vector<8x128xf32>
    %396 = arith.divf %394, %395 : vector<8x128xf32>
    %397 = vector.extract_strided_slice %390 {offsets = [0, 128], sizes = [8, 128], strides = [1, 1]} : vector<8x512xf32> to vector<8x128xf32>
    %398 = arith.negf %397 : vector<8x128xf32>
    %399 = math.exp %398 : vector<8x128xf32>
    %cst_133 = arith.constant 1.000000e+00 : f32
    %400 = vector.broadcast %cst_133 : f32 to vector<8x128xf32>
    %401 = arith.addf %400, %399 : vector<8x128xf32>
    %402 = arith.divf %400, %401 : vector<8x128xf32>
    %403 = vector.extract_strided_slice %390 {offsets = [0, 256], sizes = [8, 128], strides = [1, 1]} : vector<8x512xf32> to vector<8x128xf32>
    %404 = math.tanh %403 : vector<8x128xf32>
    %405 = vector.extract_strided_slice %390 {offsets = [0, 384], sizes = [8, 128], strides = [1, 1]} : vector<8x512xf32> to vector<8x128xf32>
    %406 = arith.negf %405 : vector<8x128xf32>
    %407 = math.exp %406 : vector<8x128xf32>
    %cst_134 = arith.constant 1.000000e+00 : f32
    %408 = vector.broadcast %cst_134 : f32 to vector<8x128xf32>
    %409 = arith.addf %408, %407 : vector<8x128xf32>
    %410 = arith.divf %408, %409 : vector<8x128xf32>
    %411 = arith.mulf %402, %351 : vector<8x128xf32>
    %412 = arith.mulf %396, %404 : vector<8x128xf32>
    %413 = arith.addf %411, %412 : vector<8x128xf32>
    %414 = math.tanh %413 : vector<8x128xf32>
    %415 = arith.mulf %410, %414 : vector<8x128xf32>
    %c8_135 = arith.constant 8 : index
    %c0_136 = arith.constant 0 : index
    %416 = vector.load %arg19[%c8_135, %c0_136] : memref<64x512xf32, #tpu.memory_space<vmem>>, vector<8x512xf32>
    %417 = arith.truncf %383 : vector<8x128xf32> to vector<8x128xbf16>
    %c0_137 = arith.constant 0 : index
    %c0_138 = arith.constant 0 : index
    %418 = vector.load %arg5[%c0_137, %c0_138] : memref<128x512xbf16, #tpu.memory_space<vmem>>, vector<128x512xbf16>
    %cst_139 = arith.constant dense<0.000000e+00> : vector<8x512xf32>
    %419 = tpu.matmul %417, %418, %cst_139 {dimension_numbers = #tpu.dot_dimension_numbers<[1], [0], [0], [1], [0, 0, 1, 1], [], []>} : vector<8x128xbf16>, vector<128x512xbf16>, vector<8x512xf32> -> vector<8x512xf32>
    %420 = arith.addf %416, %419 : vector<8x512xf32>
    %421 = vector.extract_strided_slice %420 {offsets = [0, 0], sizes = [8, 128], strides = [1, 1]} : vector<8x512xf32> to vector<8x128xf32>
    %422 = arith.negf %421 : vector<8x128xf32>
    %423 = math.exp %422 : vector<8x128xf32>
    %cst_140 = arith.constant 1.000000e+00 : f32
    %424 = vector.broadcast %cst_140 : f32 to vector<8x128xf32>
    %425 = arith.addf %424, %423 : vector<8x128xf32>
    %426 = arith.divf %424, %425 : vector<8x128xf32>
    %427 = vector.extract_strided_slice %420 {offsets = [0, 128], sizes = [8, 128], strides = [1, 1]} : vector<8x512xf32> to vector<8x128xf32>
    %428 = arith.negf %427 : vector<8x128xf32>
    %429 = math.exp %428 : vector<8x128xf32>
    %cst_141 = arith.constant 1.000000e+00 : f32
    %430 = vector.broadcast %cst_141 : f32 to vector<8x128xf32>
    %431 = arith.addf %430, %429 : vector<8x128xf32>
    %432 = arith.divf %430, %431 : vector<8x128xf32>
    %433 = vector.extract_strided_slice %420 {offsets = [0, 256], sizes = [8, 128], strides = [1, 1]} : vector<8x512xf32> to vector<8x128xf32>
    %434 = math.tanh %433 : vector<8x128xf32>
    %435 = vector.extract_strided_slice %420 {offsets = [0, 384], sizes = [8, 128], strides = [1, 1]} : vector<8x512xf32> to vector<8x128xf32>
    %436 = arith.negf %435 : vector<8x128xf32>
    %437 = math.exp %436 : vector<8x128xf32>
    %cst_142 = arith.constant 1.000000e+00 : f32
    %438 = vector.broadcast %cst_142 : f32 to vector<8x128xf32>
    %439 = arith.addf %438, %437 : vector<8x128xf32>
    %440 = arith.divf %438, %439 : vector<8x128xf32>
    %441 = arith.mulf %432, %381 : vector<8x128xf32>
    %442 = arith.mulf %426, %434 : vector<8x128xf32>
    %443 = arith.addf %441, %442 : vector<8x128xf32>
    %444 = math.tanh %443 : vector<8x128xf32>
    %445 = arith.mulf %440, %444 : vector<8x128xf32>
    %c48_143 = arith.constant 48 : index
    %c0_144 = arith.constant 0 : index
    %446 = vector.load %arg20[%c48_143, %c0_144] : memref<64x256xf32, #tpu.memory_space<vmem>>, vector<8x128xf32>
    tpu.vector_store %arg20[%c48_143, %c0_144], %415 {strides = array<i32>} : memref<64x256xf32, #tpu.memory_space<vmem>>, vector<8x128xf32>,
    %c8_145 = arith.constant 8 : index
    %c128_146 = arith.constant 128 : index
    %447 = vector.load %arg20[%c8_145, %c128_146] : memref<64x256xf32, #tpu.memory_space<vmem>>, vector<8x128xf32>
    tpu.vector_store %arg20[%c8_145, %c128_146], %445 {strides = array<i32>} : memref<64x256xf32, #tpu.memory_space<vmem>>, vector<8x128xf32>,
    %c56_147 = arith.constant 56 : index
    %c0_148 = arith.constant 0 : index
    %448 = vector.load %arg18[%c56_147, %c0_148] : memref<64x512xf32, #tpu.memory_space<vmem>>, vector<8x512xf32>
    %449 = arith.truncf %415 : vector<8x128xf32> to vector<8x128xbf16>
    %c0_149 = arith.constant 0 : index
    %c0_150 = arith.constant 0 : index
    %450 = vector.load %arg2[%c0_149, %c0_150] : memref<128x512xbf16, #tpu.memory_space<vmem>>, vector<128x512xbf16>
    %cst_151 = arith.constant dense<0.000000e+00> : vector<8x512xf32>
    %451 = tpu.matmul %449, %450, %cst_151 {dimension_numbers = #tpu.dot_dimension_numbers<[1], [0], [0], [1], [0, 0, 1, 1], [], []>} : vector<8x128xbf16>, vector<128x512xbf16>, vector<8x512xf32> -> vector<8x512xf32>
    %452 = arith.addf %448, %451 : vector<8x512xf32>
    %453 = vector.extract_strided_slice %452 {offsets = [0, 0], sizes = [8, 128], strides = [1, 1]} : vector<8x512xf32> to vector<8x128xf32>
    %454 = arith.negf %453 : vector<8x128xf32>
    %455 = math.exp %454 : vector<8x128xf32>
    %cst_152 = arith.constant 1.000000e+00 : f32
    %456 = vector.broadcast %cst_152 : f32 to vector<8x128xf32>
    %457 = arith.addf %456, %455 : vector<8x128xf32>
    %458 = arith.divf %456, %457 : vector<8x128xf32>
    %459 = vector.extract_strided_slice %452 {offsets = [0, 128], sizes = [8, 128], strides = [1, 1]} : vector<8x512xf32> to vector<8x128xf32>
    %460 = arith.negf %459 : vector<8x128xf32>
    %461 = math.exp %460 : vector<8x128xf32>
    %cst_153 = arith.constant 1.000000e+00 : f32
    %462 = vector.broadcast %cst_153 : f32 to vector<8x128xf32>
    %463 = arith.addf %462, %461 : vector<8x128xf32>
    %464 = arith.divf %462, %463 : vector<8x128xf32>
    %465 = vector.extract_strided_slice %452 {offsets = [0, 256], sizes = [8, 128], strides = [1, 1]} : vector<8x512xf32> to vector<8x128xf32>
    %466 = math.tanh %465 : vector<8x128xf32>
    %467 = vector.extract_strided_slice %452 {offsets = [0, 384], sizes = [8, 128], strides = [1, 1]} : vector<8x512xf32> to vector<8x128xf32>
    %468 = arith.negf %467 : vector<8x128xf32>
    %469 = math.exp %468 : vector<8x128xf32>
    %cst_154 = arith.constant 1.000000e+00 : f32
    %470 = vector.broadcast %cst_154 : f32 to vector<8x128xf32>
    %471 = arith.addf %470, %469 : vector<8x128xf32>
    %472 = arith.divf %470, %471 : vector<8x128xf32>
    %473 = arith.mulf %464, %413 : vector<8x128xf32>
    %474 = arith.mulf %458, %466 : vector<8x128xf32>
    %475 = arith.addf %473, %474 : vector<8x128xf32>
    %476 = math.tanh %475 : vector<8x128xf32>
    %477 = arith.mulf %472, %476 : vector<8x128xf32>
    %c0_155 = arith.constant 0 : index
    %c0_156 = arith.constant 0 : index
    %478 = vector.load %arg19[%c0_155, %c0_156] : memref<64x512xf32, #tpu.memory_space<vmem>>, vector<8x512xf32>
    %479 = arith.truncf %445 : vector<8x128xf32> to vector<8x128xbf16>
    %c0_157 = arith.constant 0 : index
    %c0_158 = arith.constant 0 : index
    %480 = vector.load %arg5[%c0_157, %c0_158] : memref<128x512xbf16, #tpu.memory_space<vmem>>, vector<128x512xbf16>
    %cst_159 = arith.constant dense<0.000000e+00> : vector<8x512xf32>
    %481 = tpu.matmul %479, %480, %cst_159 {dimension_numbers = #tpu.dot_dimension_numbers<[1], [0], [0], [1], [0, 0, 1, 1], [], []>} : vector<8x128xbf16>, vector<128x512xbf16>, vector<8x512xf32> -> vector<8x512xf32>
    %482 = arith.addf %478, %481 : vector<8x512xf32>
    %483 = vector.extract_strided_slice %482 {offsets = [0, 0], sizes = [8, 128], strides = [1, 1]} : vector<8x512xf32> to vector<8x128xf32>
    %484 = arith.negf %483 : vector<8x128xf32>
    %485 = math.exp %484 : vector<8x128xf32>
    %cst_160 = arith.constant 1.000000e+00 : f32
    %486 = vector.broadcast %cst_160 : f32 to vector<8x128xf32>
    %487 = arith.addf %486, %485 : vector<8x128xf32>
    %488 = arith.divf %486, %487 : vector<8x128xf32>
    %489 = vector.extract_strided_slice %482 {offsets = [0, 128], sizes = [8, 128], strides = [1, 1]} : vector<8x512xf32> to vector<8x128xf32>
    %490 = arith.negf %489 : vector<8x128xf32>
    %491 = math.exp %490 : vector<8x128xf32>
    %cst_161 = arith.constant 1.000000e+00 : f32
    %492 = vector.broadcast %cst_161 : f32 to vector<8x128xf32>
    %493 = arith.addf %492, %491 : vector<8x128xf32>
    %494 = arith.divf %492, %493 : vector<8x128xf32>
    %495 = vector.extract_strided_slice %482 {offsets = [0, 256], sizes = [8, 128], strides = [1, 1]} : vector<8x512xf32> to vector<8x128xf32>
    %496 = math.tanh %495 : vector<8x128xf32>
    %497 = vector.extract_strided_slice %482 {offsets = [0, 384], sizes = [8, 128], strides = [1, 1]} : vector<8x512xf32> to vector<8x128xf32>
    %498 = arith.negf %497 : vector<8x128xf32>
    %499 = math.exp %498 : vector<8x128xf32>
    %cst_162 = arith.constant 1.000000e+00 : f32
    %500 = vector.broadcast %cst_162 : f32 to vector<8x128xf32>
    %501 = arith.addf %500, %499 : vector<8x128xf32>
    %502 = arith.divf %500, %501 : vector<8x128xf32>
    %503 = arith.mulf %494, %443 : vector<8x128xf32>
    %504 = arith.mulf %488, %496 : vector<8x128xf32>
    %505 = arith.addf %503, %504 : vector<8x128xf32>
    %506 = math.tanh %505 : vector<8x128xf32>
    %507 = arith.mulf %502, %506 : vector<8x128xf32>
    %c56_163 = arith.constant 56 : index
    %c0_164 = arith.constant 0 : index
    %508 = vector.load %arg20[%c56_163, %c0_164] : memref<64x256xf32, #tpu.memory_space<vmem>>, vector<8x128xf32>
    tpu.vector_store %arg20[%c56_163, %c0_164], %477 {strides = array<i32>} : memref<64x256xf32, #tpu.memory_space<vmem>>, vector<8x128xf32>,
    %c0_165 = arith.constant 0 : index
    %c128_166 = arith.constant 128 : index
    %509 = vector.load %arg20[%c0_165, %c128_166] : memref<64x256xf32, #tpu.memory_space<vmem>>, vector<8x128xf32>
    tpu.vector_store %arg20[%c0_165, %c128_166], %507 {strides = array<i32>} : memref<64x256xf32, #tpu.memory_space<vmem>>, vector<8x128xf32>,
    %c0_167 = arith.constant 0 : index
    %c0_168 = arith.constant 0 : index
    %510 = vector.load %arg20[%c0_167, %c0_168] : memref<64x256xf32, #tpu.memory_space<vmem>>, vector<64x256xf32>
    %511 = arith.truncf %510 : vector<64x256xf32> to vector<64x256xbf16>
    %c0_169 = arith.constant 0 : index
    %c0_170 = arith.constant 0 : index
    %512 = vector.load %arg7[%c0_169, %c0_170] : memref<256x512xbf16, #tpu.memory_space<vmem>>, vector<256x512xbf16>
    %cst_171 = arith.constant dense<0.000000e+00> : vector<64x512xf32>
    %513 = tpu.matmul %511, %512, %cst_171 {dimension_numbers = #tpu.dot_dimension_numbers<[1], [0], [0], [1], [0, 0, 1, 1], [], []>} : vector<64x256xbf16>, vector<256x512xbf16>, vector<64x512xf32> -> vector<64x512xf32>
    %c0_172 = arith.constant 0 : index
    %c0_173 = arith.constant 0 : index
    %514 = vector.load %arg9[%c0_172, %c0_173] : memref<1x512xf32, #tpu.memory_space<vmem>>, vector<1x512xf32>
    %515 = vector.broadcast %514 : vector<1x512xf32> to vector<64x512xf32>
    %516 = arith.addf %513, %515 : vector<64x512xf32>
    %c0_174 = arith.constant 0 : index
    %c0_175 = arith.constant 0 : index
    %517 = vector.load %arg21[%c0_174, %c0_175] : memref<64x512xf32, #tpu.memory_space<vmem>>, vector<64x512xf32>
    tpu.vector_store %arg21[%c0_174, %c0_175], %516 {strides = array<i32>} : memref<64x512xf32, #tpu.memory_space<vmem>>, vector<64x512xf32>,
    %c0_176 = arith.constant 0 : index
    %c0_177 = arith.constant 0 : index
    %518 = vector.load %arg21[%c0_176, %c0_177] : memref<64x512xf32, #tpu.memory_space<vmem>>, vector<8x512xf32>
    %519 = arith.truncf %13 : vector<8x128xf32> to vector<8x128xbf16>
    %c0_178 = arith.constant 0 : index
    %c0_179 = arith.constant 0 : index
    %520 = vector.load %arg8[%c0_178, %c0_179] : memref<128x512xbf16, #tpu.memory_space<vmem>>, vector<128x512xbf16>
    %cst_180 = arith.constant dense<0.000000e+00> : vector<8x512xf32>
    %521 = tpu.matmul %519, %520, %cst_180 {dimension_numbers = #tpu.dot_dimension_numbers<[1], [0], [0], [1], [0, 0, 1, 1], [], []>} : vector<8x128xbf16>, vector<128x512xbf16>, vector<8x512xf32> -> vector<8x512xf32>
    %522 = arith.addf %518, %521 : vector<8x512xf32>
    %523 = vector.extract_strided_slice %522 {offsets = [0, 0], sizes = [8, 128], strides = [1, 1]} : vector<8x512xf32> to vector<8x128xf32>
    %524 = arith.negf %523 : vector<8x128xf32>
    %525 = math.exp %524 : vector<8x128xf32>
    %cst_181 = arith.constant 1.000000e+00 : f32
    %526 = vector.broadcast %cst_181 : f32 to vector<8x128xf32>
    %527 = arith.addf %526, %525 : vector<8x128xf32>
    %528 = arith.divf %526, %527 : vector<8x128xf32>
    %529 = vector.extract_strided_slice %522 {offsets = [0, 128], sizes = [8, 128], strides = [1, 1]} : vector<8x512xf32> to vector<8x128xf32>
    %530 = arith.negf %529 : vector<8x128xf32>
    %531 = math.exp %530 : vector<8x128xf32>
    %cst_182 = arith.constant 1.000000e+00 : f32
    %532 = vector.broadcast %cst_182 : f32 to vector<8x128xf32>
    %533 = arith.addf %532, %531 : vector<8x128xf32>
    %534 = arith.divf %532, %533 : vector<8x128xf32>
    %535 = vector.extract_strided_slice %522 {offsets = [0, 256], sizes = [8, 128], strides = [1, 1]} : vector<8x512xf32> to vector<8x128xf32>
    %536 = math.tanh %535 : vector<8x128xf32>
    %537 = vector.extract_strided_slice %522 {offsets = [0, 384], sizes = [8, 128], strides = [1, 1]} : vector<8x512xf32> to vector<8x128xf32>
    %538 = arith.negf %537 : vector<8x128xf32>
    %539 = math.exp %538 : vector<8x128xf32>
    %cst_183 = arith.constant 1.000000e+00 : f32
    %540 = vector.broadcast %cst_183 : f32 to vector<8x128xf32>
    %541 = arith.addf %540, %539 : vector<8x128xf32>
    %542 = arith.divf %540, %541 : vector<8x128xf32>
    %543 = arith.mulf %534, %13 : vector<8x128xf32>
    %544 = arith.mulf %528, %536 : vector<8x128xf32>
    %545 = arith.addf %543, %544 : vector<8x128xf32>
    %546 = math.tanh %545 : vector<8x128xf32>
    %547 = arith.mulf %542, %546 : vector<8x128xf32>
    %c8_184 = arith.constant 8 : index
    %c0_185 = arith.constant 0 : index
    %548 = vector.load %arg21[%c8_184, %c0_185] : memref<64x512xf32, #tpu.memory_space<vmem>>, vector<8x512xf32>
    %549 = arith.truncf %547 : vector<8x128xf32> to vector<8x128xbf16>
    %c0_186 = arith.constant 0 : index
    %c0_187 = arith.constant 0 : index
    %550 = vector.load %arg8[%c0_186, %c0_187] : memref<128x512xbf16, #tpu.memory_space<vmem>>, vector<128x512xbf16>
    %cst_188 = arith.constant dense<0.000000e+00> : vector<8x512xf32>
    %551 = tpu.matmul %549, %550, %cst_188 {dimension_numbers = #tpu.dot_dimension_numbers<[1], [0], [0], [1], [0, 0, 1, 1], [], []>} : vector<8x128xbf16>, vector<128x512xbf16>, vector<8x512xf32> -> vector<8x512xf32>
    %552 = arith.addf %548, %551 : vector<8x512xf32>
    %553 = vector.extract_strided_slice %552 {offsets = [0, 0], sizes = [8, 128], strides = [1, 1]} : vector<8x512xf32> to vector<8x128xf32>
    %554 = arith.negf %553 : vector<8x128xf32>
    %555 = math.exp %554 : vector<8x128xf32>
    %cst_189 = arith.constant 1.000000e+00 : f32
    %556 = vector.broadcast %cst_189 : f32 to vector<8x128xf32>
    %557 = arith.addf %556, %555 : vector<8x128xf32>
    %558 = arith.divf %556, %557 : vector<8x128xf32>
    %559 = vector.extract_strided_slice %552 {offsets = [0, 128], sizes = [8, 128], strides = [1, 1]} : vector<8x512xf32> to vector<8x128xf32>
    %560 = arith.negf %559 : vector<8x128xf32>
    %561 = math.exp %560 : vector<8x128xf32>
    %cst_190 = arith.constant 1.000000e+00 : f32
    %562 = vector.broadcast %cst_190 : f32 to vector<8x128xf32>
    %563 = arith.addf %562, %561 : vector<8x128xf32>
    %564 = arith.divf %562, %563 : vector<8x128xf32>
    %565 = vector.extract_strided_slice %552 {offsets = [0, 256], sizes = [8, 128], strides = [1, 1]} : vector<8x512xf32> to vector<8x128xf32>
    %566 = math.tanh %565 : vector<8x128xf32>
    %567 = vector.extract_strided_slice %552 {offsets = [0, 384], sizes = [8, 128], strides = [1, 1]} : vector<8x512xf32> to vector<8x128xf32>
    %568 = arith.negf %567 : vector<8x128xf32>
    %569 = math.exp %568 : vector<8x128xf32>
    %cst_191 = arith.constant 1.000000e+00 : f32
    %570 = vector.broadcast %cst_191 : f32 to vector<8x128xf32>
    %571 = arith.addf %570, %569 : vector<8x128xf32>
    %572 = arith.divf %570, %571 : vector<8x128xf32>
    %573 = arith.mulf %564, %545 : vector<8x128xf32>
    %574 = arith.mulf %558, %566 : vector<8x128xf32>
    %575 = arith.addf %573, %574 : vector<8x128xf32>
    %576 = math.tanh %575 : vector<8x128xf32>
    %577 = arith.mulf %572, %576 : vector<8x128xf32>
    %c16_192 = arith.constant 16 : index
    %c0_193 = arith.constant 0 : index
    %578 = vector.load %arg21[%c16_192, %c0_193] : memref<64x512xf32, #tpu.memory_space<vmem>>, vector<8x512xf32>
    %579 = arith.truncf %577 : vector<8x128xf32> to vector<8x128xbf16>
    %c0_194 = arith.constant 0 : index
    %c0_195 = arith.constant 0 : index
    %580 = vector.load %arg8[%c0_194, %c0_195] : memref<128x512xbf16, #tpu.memory_space<vmem>>, vector<128x512xbf16>
    %cst_196 = arith.constant dense<0.000000e+00> : vector<8x512xf32>
    %581 = tpu.matmul %579, %580, %cst_196 {dimension_numbers = #tpu.dot_dimension_numbers<[1], [0], [0], [1], [0, 0, 1, 1], [], []>} : vector<8x128xbf16>, vector<128x512xbf16>, vector<8x512xf32> -> vector<8x512xf32>
    %582 = arith.addf %578, %581 : vector<8x512xf32>
    %583 = vector.extract_strided_slice %582 {offsets = [0, 0], sizes = [8, 128], strides = [1, 1]} : vector<8x512xf32> to vector<8x128xf32>
    %584 = arith.negf %583 : vector<8x128xf32>
    %585 = math.exp %584 : vector<8x128xf32>
    %cst_197 = arith.constant 1.000000e+00 : f32
    %586 = vector.broadcast %cst_197 : f32 to vector<8x128xf32>
    %587 = arith.addf %586, %585 : vector<8x128xf32>
    %588 = arith.divf %586, %587 : vector<8x128xf32>
    %589 = vector.extract_strided_slice %582 {offsets = [0, 128], sizes = [8, 128], strides = [1, 1]} : vector<8x512xf32> to vector<8x128xf32>
    %590 = arith.negf %589 : vector<8x128xf32>
    %591 = math.exp %590 : vector<8x128xf32>
    %cst_198 = arith.constant 1.000000e+00 : f32
    %592 = vector.broadcast %cst_198 : f32 to vector<8x128xf32>
    %593 = arith.addf %592, %591 : vector<8x128xf32>
    %594 = arith.divf %592, %593 : vector<8x128xf32>
    %595 = vector.extract_strided_slice %582 {offsets = [0, 256], sizes = [8, 128], strides = [1, 1]} : vector<8x512xf32> to vector<8x128xf32>
    %596 = math.tanh %595 : vector<8x128xf32>
    %597 = vector.extract_strided_slice %582 {offsets = [0, 384], sizes = [8, 128], strides = [1, 1]} : vector<8x512xf32> to vector<8x128xf32>
    %598 = arith.negf %597 : vector<8x128xf32>
    %599 = math.exp %598 : vector<8x128xf32>
    %cst_199 = arith.constant 1.000000e+00 : f32
    %600 = vector.broadcast %cst_199 : f32 to vector<8x128xf32>
    %601 = arith.addf %600, %599 : vector<8x128xf32>
    %602 = arith.divf %600, %601 : vector<8x128xf32>
    %603 = arith.mulf %594, %575 : vector<8x128xf32>
    %604 = arith.mulf %588, %596 : vector<8x128xf32>
    %605 = arith.addf %603, %604 : vector<8x128xf32>
    %606 = math.tanh %605 : vector<8x128xf32>
    %607 = arith.mulf %602, %606 : vector<8x128xf32>
    %c24_200 = arith.constant 24 : index
    %c0_201 = arith.constant 0 : index
    %608 = vector.load %arg21[%c24_200, %c0_201] : memref<64x512xf32, #tpu.memory_space<vmem>>, vector<8x512xf32>
    %609 = arith.truncf %607 : vector<8x128xf32> to vector<8x128xbf16>
    %c0_202 = arith.constant 0 : index
    %c0_203 = arith.constant 0 : index
    %610 = vector.load %arg8[%c0_202, %c0_203] : memref<128x512xbf16, #tpu.memory_space<vmem>>, vector<128x512xbf16>
    %cst_204 = arith.constant dense<0.000000e+00> : vector<8x512xf32>
    %611 = tpu.matmul %609, %610, %cst_204 {dimension_numbers = #tpu.dot_dimension_numbers<[1], [0], [0], [1], [0, 0, 1, 1], [], []>} : vector<8x128xbf16>, vector<128x512xbf16>, vector<8x512xf32> -> vector<8x512xf32>
    %612 = arith.addf %608, %611 : vector<8x512xf32>
    %613 = vector.extract_strided_slice %612 {offsets = [0, 0], sizes = [8, 128], strides = [1, 1]} : vector<8x512xf32> to vector<8x128xf32>
    %614 = arith.negf %613 : vector<8x128xf32>
    %615 = math.exp %614 : vector<8x128xf32>
    %cst_205 = arith.constant 1.000000e+00 : f32
    %616 = vector.broadcast %cst_205 : f32 to vector<8x128xf32>
    %617 = arith.addf %616, %615 : vector<8x128xf32>
    %618 = arith.divf %616, %617 : vector<8x128xf32>
    %619 = vector.extract_strided_slice %612 {offsets = [0, 128], sizes = [8, 128], strides = [1, 1]} : vector<8x512xf32> to vector<8x128xf32>
    %620 = arith.negf %619 : vector<8x128xf32>
    %621 = math.exp %620 : vector<8x128xf32>
    %cst_206 = arith.constant 1.000000e+00 : f32
    %622 = vector.broadcast %cst_206 : f32 to vector<8x128xf32>
    %623 = arith.addf %622, %621 : vector<8x128xf32>
    %624 = arith.divf %622, %623 : vector<8x128xf32>
    %625 = vector.extract_strided_slice %612 {offsets = [0, 256], sizes = [8, 128], strides = [1, 1]} : vector<8x512xf32> to vector<8x128xf32>
    %626 = math.tanh %625 : vector<8x128xf32>
    %627 = vector.extract_strided_slice %612 {offsets = [0, 384], sizes = [8, 128], strides = [1, 1]} : vector<8x512xf32> to vector<8x128xf32>
    %628 = arith.negf %627 : vector<8x128xf32>
    %629 = math.exp %628 : vector<8x128xf32>
    %cst_207 = arith.constant 1.000000e+00 : f32
    %630 = vector.broadcast %cst_207 : f32 to vector<8x128xf32>
    %631 = arith.addf %630, %629 : vector<8x128xf32>
    %632 = arith.divf %630, %631 : vector<8x128xf32>
    %633 = arith.mulf %624, %605 : vector<8x128xf32>
    %634 = arith.mulf %618, %626 : vector<8x128xf32>
    %635 = arith.addf %633, %634 : vector<8x128xf32>
    %636 = math.tanh %635 : vector<8x128xf32>
    %637 = arith.mulf %632, %636 : vector<8x128xf32>
    %c32_208 = arith.constant 32 : index
    %c0_209 = arith.constant 0 : index
    %638 = vector.load %arg21[%c32_208, %c0_209] : memref<64x512xf32, #tpu.memory_space<vmem>>, vector<8x512xf32>
    %639 = arith.truncf %637 : vector<8x128xf32> to vector<8x128xbf16>
    %c0_210 = arith.constant 0 : index
    %c0_211 = arith.constant 0 : index
    %640 = vector.load %arg8[%c0_210, %c0_211] : memref<128x512xbf16, #tpu.memory_space<vmem>>, vector<128x512xbf16>
    %cst_212 = arith.constant dense<0.000000e+00> : vector<8x512xf32>
    %641 = tpu.matmul %639, %640, %cst_212 {dimension_numbers = #tpu.dot_dimension_numbers<[1], [0], [0], [1], [0, 0, 1, 1], [], []>} : vector<8x128xbf16>, vector<128x512xbf16>, vector<8x512xf32> -> vector<8x512xf32>
    %642 = arith.addf %638, %641 : vector<8x512xf32>
    %643 = vector.extract_strided_slice %642 {offsets = [0, 0], sizes = [8, 128], strides = [1, 1]} : vector<8x512xf32> to vector<8x128xf32>
    %644 = arith.negf %643 : vector<8x128xf32>
    %645 = math.exp %644 : vector<8x128xf32>
    %cst_213 = arith.constant 1.000000e+00 : f32
    %646 = vector.broadcast %cst_213 : f32 to vector<8x128xf32>
    %647 = arith.addf %646, %645 : vector<8x128xf32>
    %648 = arith.divf %646, %647 : vector<8x128xf32>
    %649 = vector.extract_strided_slice %642 {offsets = [0, 128], sizes = [8, 128], strides = [1, 1]} : vector<8x512xf32> to vector<8x128xf32>
    %650 = arith.negf %649 : vector<8x128xf32>
    %651 = math.exp %650 : vector<8x128xf32>
    %cst_214 = arith.constant 1.000000e+00 : f32
    %652 = vector.broadcast %cst_214 : f32 to vector<8x128xf32>
    %653 = arith.addf %652, %651 : vector<8x128xf32>
    %654 = arith.divf %652, %653 : vector<8x128xf32>
    %655 = vector.extract_strided_slice %642 {offsets = [0, 256], sizes = [8, 128], strides = [1, 1]} : vector<8x512xf32> to vector<8x128xf32>
    %656 = math.tanh %655 : vector<8x128xf32>
    %657 = vector.extract_strided_slice %642 {offsets = [0, 384], sizes = [8, 128], strides = [1, 1]} : vector<8x512xf32> to vector<8x128xf32>
    %658 = arith.negf %657 : vector<8x128xf32>
    %659 = math.exp %658 : vector<8x128xf32>
    %cst_215 = arith.constant 1.000000e+00 : f32
    %660 = vector.broadcast %cst_215 : f32 to vector<8x128xf32>
    %661 = arith.addf %660, %659 : vector<8x128xf32>
    %662 = arith.divf %660, %661 : vector<8x128xf32>
    %663 = arith.mulf %654, %635 : vector<8x128xf32>
    %664 = arith.mulf %648, %656 : vector<8x128xf32>
    %665 = arith.addf %663, %664 : vector<8x128xf32>
    %666 = math.tanh %665 : vector<8x128xf32>
    %667 = arith.mulf %662, %666 : vector<8x128xf32>
    %c40_216 = arith.constant 40 : index
    %c0_217 = arith.constant 0 : index
    %668 = vector.load %arg21[%c40_216, %c0_217] : memref<64x512xf32, #tpu.memory_space<vmem>>, vector<8x512xf32>
    %669 = arith.truncf %667 : vector<8x128xf32> to vector<8x128xbf16>
    %c0_218 = arith.constant 0 : index
    %c0_219 = arith.constant 0 : index
    %670 = vector.load %arg8[%c0_218, %c0_219] : memref<128x512xbf16, #tpu.memory_space<vmem>>, vector<128x512xbf16>
    %cst_220 = arith.constant dense<0.000000e+00> : vector<8x512xf32>
    %671 = tpu.matmul %669, %670, %cst_220 {dimension_numbers = #tpu.dot_dimension_numbers<[1], [0], [0], [1], [0, 0, 1, 1], [], []>} : vector<8x128xbf16>, vector<128x512xbf16>, vector<8x512xf32> -> vector<8x512xf32>
    %672 = arith.addf %668, %671 : vector<8x512xf32>
    %673 = vector.extract_strided_slice %672 {offsets = [0, 0], sizes = [8, 128], strides = [1, 1]} : vector<8x512xf32> to vector<8x128xf32>
    %674 = arith.negf %673 : vector<8x128xf32>
    %675 = math.exp %674 : vector<8x128xf32>
    %cst_221 = arith.constant 1.000000e+00 : f32
    %676 = vector.broadcast %cst_221 : f32 to vector<8x128xf32>
    %677 = arith.addf %676, %675 : vector<8x128xf32>
    %678 = arith.divf %676, %677 : vector<8x128xf32>
    %679 = vector.extract_strided_slice %672 {offsets = [0, 128], sizes = [8, 128], strides = [1, 1]} : vector<8x512xf32> to vector<8x128xf32>
    %680 = arith.negf %679 : vector<8x128xf32>
    %681 = math.exp %680 : vector<8x128xf32>
    %cst_222 = arith.constant 1.000000e+00 : f32
    %682 = vector.broadcast %cst_222 : f32 to vector<8x128xf32>
    %683 = arith.addf %682, %681 : vector<8x128xf32>
    %684 = arith.divf %682, %683 : vector<8x128xf32>
    %685 = vector.extract_strided_slice %672 {offsets = [0, 256], sizes = [8, 128], strides = [1, 1]} : vector<8x512xf32> to vector<8x128xf32>
    %686 = math.tanh %685 : vector<8x128xf32>
    %687 = vector.extract_strided_slice %672 {offsets = [0, 384], sizes = [8, 128], strides = [1, 1]} : vector<8x512xf32> to vector<8x128xf32>
    %688 = arith.negf %687 : vector<8x128xf32>
    %689 = math.exp %688 : vector<8x128xf32>
    %cst_223 = arith.constant 1.000000e+00 : f32
    %690 = vector.broadcast %cst_223 : f32 to vector<8x128xf32>
    %691 = arith.addf %690, %689 : vector<8x128xf32>
    %692 = arith.divf %690, %691 : vector<8x128xf32>
    %693 = arith.mulf %684, %665 : vector<8x128xf32>
    %694 = arith.mulf %678, %686 : vector<8x128xf32>
    %695 = arith.addf %693, %694 : vector<8x128xf32>
    %696 = math.tanh %695 : vector<8x128xf32>
    %697 = arith.mulf %692, %696 : vector<8x128xf32>
    %c48_224 = arith.constant 48 : index
    %c0_225 = arith.constant 0 : index
    %698 = vector.load %arg21[%c48_224, %c0_225] : memref<64x512xf32, #tpu.memory_space<vmem>>, vector<8x512xf32>
    %699 = arith.truncf %697 : vector<8x128xf32> to vector<8x128xbf16>
    %c0_226 = arith.constant 0 : index
    %c0_227 = arith.constant 0 : index
    %700 = vector.load %arg8[%c0_226, %c0_227] : memref<128x512xbf16, #tpu.memory_space<vmem>>, vector<128x512xbf16>
    %cst_228 = arith.constant dense<0.000000e+00> : vector<8x512xf32>
    %701 = tpu.matmul %699, %700, %cst_228 {dimension_numbers = #tpu.dot_dimension_numbers<[1], [0], [0], [1], [0, 0, 1, 1], [], []>} : vector<8x128xbf16>, vector<128x512xbf16>, vector<8x512xf32> -> vector<8x512xf32>
    %702 = arith.addf %698, %701 : vector<8x512xf32>
    %703 = vector.extract_strided_slice %702 {offsets = [0, 0], sizes = [8, 128], strides = [1, 1]} : vector<8x512xf32> to vector<8x128xf32>
    %704 = arith.negf %703 : vector<8x128xf32>
    %705 = math.exp %704 : vector<8x128xf32>
    %cst_229 = arith.constant 1.000000e+00 : f32
    %706 = vector.broadcast %cst_229 : f32 to vector<8x128xf32>
    %707 = arith.addf %706, %705 : vector<8x128xf32>
    %708 = arith.divf %706, %707 : vector<8x128xf32>
    %709 = vector.extract_strided_slice %702 {offsets = [0, 128], sizes = [8, 128], strides = [1, 1]} : vector<8x512xf32> to vector<8x128xf32>
    %710 = arith.negf %709 : vector<8x128xf32>
    %711 = math.exp %710 : vector<8x128xf32>
    %cst_230 = arith.constant 1.000000e+00 : f32
    %712 = vector.broadcast %cst_230 : f32 to vector<8x128xf32>
    %713 = arith.addf %712, %711 : vector<8x128xf32>
    %714 = arith.divf %712, %713 : vector<8x128xf32>
    %715 = vector.extract_strided_slice %702 {offsets = [0, 256], sizes = [8, 128], strides = [1, 1]} : vector<8x512xf32> to vector<8x128xf32>
    %716 = math.tanh %715 : vector<8x128xf32>
    %717 = vector.extract_strided_slice %702 {offsets = [0, 384], sizes = [8, 128], strides = [1, 1]} : vector<8x512xf32> to vector<8x128xf32>
    %718 = arith.negf %717 : vector<8x128xf32>
    %719 = math.exp %718 : vector<8x128xf32>
    %cst_231 = arith.constant 1.000000e+00 : f32
    %720 = vector.broadcast %cst_231 : f32 to vector<8x128xf32>
    %721 = arith.addf %720, %719 : vector<8x128xf32>
    %722 = arith.divf %720, %721 : vector<8x128xf32>
    %723 = arith.mulf %714, %695 : vector<8x128xf32>
    %724 = arith.mulf %708, %716 : vector<8x128xf32>
    %725 = arith.addf %723, %724 : vector<8x128xf32>
    %726 = math.tanh %725 : vector<8x128xf32>
    %727 = arith.mulf %722, %726 : vector<8x128xf32>
    %c56_232 = arith.constant 56 : index
    %c0_233 = arith.constant 0 : index
    %728 = vector.load %arg21[%c56_232, %c0_233] : memref<64x512xf32, #tpu.memory_space<vmem>>, vector<8x512xf32>
    %729 = arith.truncf %727 : vector<8x128xf32> to vector<8x128xbf16>
    %c0_234 = arith.constant 0 : index
    %c0_235 = arith.constant 0 : index
    %730 = vector.load %arg8[%c0_234, %c0_235] : memref<128x512xbf16, #tpu.memory_space<vmem>>, vector<128x512xbf16>
    %cst_236 = arith.constant dense<0.000000e+00> : vector<8x512xf32>
    %731 = tpu.matmul %729, %730, %cst_236 {dimension_numbers = #tpu.dot_dimension_numbers<[1], [0], [0], [1], [0, 0, 1, 1], [], []>} : vector<8x128xbf16>, vector<128x512xbf16>, vector<8x512xf32> -> vector<8x512xf32>
    %732 = arith.addf %728, %731 : vector<8x512xf32>
    %733 = vector.extract_strided_slice %732 {offsets = [0, 0], sizes = [8, 128], strides = [1, 1]} : vector<8x512xf32> to vector<8x128xf32>
    %734 = arith.negf %733 : vector<8x128xf32>
    %735 = math.exp %734 : vector<8x128xf32>
    %cst_237 = arith.constant 1.000000e+00 : f32
    %736 = vector.broadcast %cst_237 : f32 to vector<8x128xf32>
    %737 = arith.addf %736, %735 : vector<8x128xf32>
    %738 = arith.divf %736, %737 : vector<8x128xf32>
    %739 = vector.extract_strided_slice %732 {offsets = [0, 128], sizes = [8, 128], strides = [1, 1]} : vector<8x512xf32> to vector<8x128xf32>
    %740 = arith.negf %739 : vector<8x128xf32>
    %741 = math.exp %740 : vector<8x128xf32>
    %cst_238 = arith.constant 1.000000e+00 : f32
    %742 = vector.broadcast %cst_238 : f32 to vector<8x128xf32>
    %743 = arith.addf %742, %741 : vector<8x128xf32>
    %744 = arith.divf %742, %743 : vector<8x128xf32>
    %745 = vector.extract_strided_slice %732 {offsets = [0, 256], sizes = [8, 128], strides = [1, 1]} : vector<8x512xf32> to vector<8x128xf32>
    %746 = math.tanh %745 : vector<8x128xf32>
    %747 = vector.extract_strided_slice %732 {offsets = [0, 384], sizes = [8, 128], strides = [1, 1]} : vector<8x512xf32> to vector<8x128xf32>
    %748 = arith.negf %747 : vector<8x128xf32>
    %749 = math.exp %748 : vector<8x128xf32>
    %cst_239 = arith.constant 1.000000e+00 : f32
    %750 = vector.broadcast %cst_239 : f32 to vector<8x128xf32>
    %751 = arith.addf %750, %749 : vector<8x128xf32>
    %752 = arith.divf %750, %751 : vector<8x128xf32>
    %753 = arith.mulf %744, %725 : vector<8x128xf32>
    %754 = arith.mulf %738, %746 : vector<8x128xf32>
    %755 = arith.addf %753, %754 : vector<8x128xf32>
    %756 = math.tanh %755 : vector<8x128xf32>
    %757 = arith.mulf %752, %756 : vector<8x128xf32>
    %c56_240 = arith.constant 56 : index
    %c0_241 = arith.constant 0 : index
    %758 = vector.load %arg20[%c56_240, %c0_241] : memref<64x256xf32, #tpu.memory_space<vmem>>, vector<8x256xf32>
    %759 = arith.truncf %758 : vector<8x256xf32> to vector<8x256xbf16>
    %c0_242 = arith.constant 0 : index
    %c0_243 = arith.constant 0 : index
    %760 = vector.load %arg10[%c0_242, %c0_243] : memref<256x512xbf16, #tpu.memory_space<vmem>>, vector<256x512xbf16>
    %cst_244 = arith.constant dense<0.000000e+00> : vector<8x512xf32>
    %761 = tpu.matmul %759, %760, %cst_244 {dimension_numbers = #tpu.dot_dimension_numbers<[1], [0], [0], [1], [0, 0, 1, 1], [], []>} : vector<8x256xbf16>, vector<256x512xbf16>, vector<8x512xf32> -> vector<8x512xf32>
    %c0_245 = arith.constant 0 : index
    %c0_246 = arith.constant 0 : index
    %762 = vector.load %arg12[%c0_245, %c0_246] : memref<1x512xf32, #tpu.memory_space<vmem>>, vector<1x512xf32>
    %763 = vector.broadcast %762 : vector<1x512xf32> to vector<8x512xf32>
    %764 = arith.addf %761, %763 : vector<8x512xf32>
    %765 = vector.extract_strided_slice %764 {offsets = [0, 0], sizes = [8, 128], strides = [1, 1]} : vector<8x512xf32> to vector<8x128xf32>
    %766 = arith.negf %765 : vector<8x128xf32>
    %767 = math.exp %766 : vector<8x128xf32>
    %cst_247 = arith.constant 1.000000e+00 : f32
    %768 = vector.broadcast %cst_247 : f32 to vector<8x128xf32>
    %769 = arith.addf %768, %767 : vector<8x128xf32>
    %770 = arith.divf %768, %769 : vector<8x128xf32>
    %771 = vector.extract_strided_slice %764 {offsets = [0, 128], sizes = [8, 128], strides = [1, 1]} : vector<8x512xf32> to vector<8x128xf32>
    %772 = arith.negf %771 : vector<8x128xf32>
    %773 = math.exp %772 : vector<8x128xf32>
    %cst_248 = arith.constant 1.000000e+00 : f32
    %774 = vector.broadcast %cst_248 : f32 to vector<8x128xf32>
    %775 = arith.addf %774, %773 : vector<8x128xf32>
    %776 = arith.divf %774, %775 : vector<8x128xf32>
    %777 = vector.extract_strided_slice %764 {offsets = [0, 256], sizes = [8, 128], strides = [1, 1]} : vector<8x512xf32> to vector<8x128xf32>
    %778 = math.tanh %777 : vector<8x128xf32>
    %779 = vector.extract_strided_slice %764 {offsets = [0, 384], sizes = [8, 128], strides = [1, 1]} : vector<8x512xf32> to vector<8x128xf32>
    %780 = arith.negf %779 : vector<8x128xf32>
    %781 = math.exp %780 : vector<8x128xf32>
    %cst_249 = arith.constant 1.000000e+00 : f32
    %782 = vector.broadcast %cst_249 : f32 to vector<8x128xf32>
    %783 = arith.addf %782, %781 : vector<8x128xf32>
    %784 = arith.divf %782, %783 : vector<8x128xf32>
    %785 = arith.mulf %776, %13 : vector<8x128xf32>
    %786 = arith.mulf %770, %778 : vector<8x128xf32>
    %787 = arith.addf %785, %786 : vector<8x128xf32>
    %788 = math.tanh %787 : vector<8x128xf32>
    %789 = arith.mulf %784, %788 : vector<8x128xf32>
    %790 = arith.truncf %757 : vector<8x128xf32> to vector<8x128xbf16>
    %c0_250 = arith.constant 0 : index
    %c0_251 = arith.constant 0 : index
    %791 = vector.load %arg13[%c0_250, %c0_251] : memref<256x128xbf16, #tpu.memory_space<vmem>>, vector<128x128xbf16>
    %cst_252 = arith.constant dense<0.000000e+00> : vector<8x128xf32>
    %792 = tpu.matmul %790, %791, %cst_252 {dimension_numbers = #tpu.dot_dimension_numbers<[1], [0], [0], [1], [0, 0, 1, 1], [], []>} : vector<8x128xbf16>, vector<128x128xbf16>, vector<8x128xf32> -> vector<8x128xf32>
    %793 = arith.truncf %789 : vector<8x128xf32> to vector<8x128xbf16>
    %c128_253 = arith.constant 128 : index
    %c0_254 = arith.constant 0 : index
    %794 = vector.load %arg13[%c128_253, %c0_254] : memref<256x128xbf16, #tpu.memory_space<vmem>>, vector<128x128xbf16>
    %cst_255 = arith.constant dense<0.000000e+00> : vector<8x128xf32>
    %795 = tpu.matmul %793, %794, %cst_255 {dimension_numbers = #tpu.dot_dimension_numbers<[1], [0], [0], [1], [0, 0, 1, 1], [], []>} : vector<8x128xbf16>, vector<128x128xbf16>, vector<8x128xf32> -> vector<8x128xf32>
    %796 = arith.addf %792, %795 : vector<8x128xf32>
    %c0_256 = arith.constant 0 : index
    %c0_257 = arith.constant 0 : index
    %797 = vector.load %arg14[%c0_256, %c0_257] : memref<1x128xf32, #tpu.memory_space<vmem>>, vector<1x128xf32>
    %798 = vector.broadcast %797 : vector<1x128xf32> to vector<8x128xf32>
    %799 = arith.addf %796, %798 : vector<8x128xf32>
    %cst_258 = arith.constant 0.000000e+00 : f32
    %800 = vector.broadcast %cst_258 : f32 to vector<8x128xf32>
    %801 = arith.maximumf %799, %800 : vector<8x128xf32>
    %802 = arith.truncf %801 : vector<8x128xf32> to vector<8x128xbf16>
    %c0_259 = arith.constant 0 : index
    %c0_260 = arith.constant 0 : index
    %803 = vector.load %arg15[%c0_259, %c0_260] : memref<128x128xbf16, #tpu.memory_space<vmem>>, vector<128x128xbf16>
    %cst_261 = arith.constant dense<0.000000e+00> : vector<8x128xf32>
    %804 = tpu.matmul %802, %803, %cst_261 {dimension_numbers = #tpu.dot_dimension_numbers<[1], [0], [0], [1], [0, 0, 1, 1], [], []>} : vector<8x128xbf16>, vector<128x128xbf16>, vector<8x128xf32> -> vector<8x128xf32>
    %c0_262 = arith.constant 0 : index
    %c0_263 = arith.constant 0 : index
    %805 = vector.load %arg16[%c0_262, %c0_263] : memref<1x128xf32, #tpu.memory_space<vmem>>, vector<1x128xf32>
    %806 = vector.broadcast %805 : vector<1x128xf32> to vector<8x128xf32>
    %807 = arith.addf %804, %806 : vector<8x128xf32>
    %c0_264 = arith.constant 0 : index
    %c0_265 = arith.constant 0 : index
    %808 = vector.load %arg17[%c0_264, %c0_265] : memref<8x128xf32, #tpu.memory_space<vmem>>, vector<8x128xf32>
    tpu.vector_store %arg17[%c0_264, %c0_265], %807 {strides = array<i32>} : memref<8x128xf32, #tpu.memory_space<vmem>>, vector<8x128xf32>,
    return
  }
}

</mosaic_0001>

<llo_original>
// kernel: tpu_custom_call.1
$region0: #{tpu_custom_call.1}
  #allocation0 [shape = 'u32[]', space=smem, size = 0x4, offset = 0x4, fixed_abs, tag = 'smem constant byte address 0x4 - core index']
  #allocation1 [shape = 'u32[72,128]{1,0:T(1,128)}', space=vmem, size = 0x9000, scoped, tag = 'internal scratch']
  #allocation2 [shape = 'f32[64,512]{1,0:T(8,128)}', space=vmem, size = 0x20000, scoped, tag = 'scratch operand']
  #allocation3 [shape = 'f32[64,512]{1,0:T(8,128)}', space=vmem, size = 0x20000, scoped, tag = 'scratch operand']
  #allocation4 [shape = 'f32[64,256]{1,0:T(8,128)}', space=vmem, size = 0x10000, scoped, tag = 'scratch operand']
  #allocation5 [shape = 'f32[64,512]{1,0:T(8,128)}', space=vmem, size = 0x20000, scoped, tag = 'scratch operand']
  %s0 = inlined_call_operand.vmem [shape: f32[64,4], index: 0, kind: input, shape index: {}]
  %s1 = inlined_call_operand.vmem [shape: f32[4,512], index: 1, kind: input, shape index: {}]
  %s2 = inlined_call_operand.hbm [shape: bf16[128,512], index: 2, kind: input, shape index: {}]
  %s3 = inlined_call_operand.hbm [shape: f32[1,512], index: 3, kind: input, shape index: {}]
  %s4 = inlined_call_operand.hbm [shape: f32[4,512], index: 4, kind: input, shape index: {}]
  %s5 = inlined_call_operand.hbm [shape: bf16[128,512], index: 5, kind: input, shape index: {}]
  %s6 = inlined_call_operand.hbm [shape: f32[1,512], index: 6, kind: input, shape index: {}]
  %s7 = inlined_call_operand.hbm [shape: bf16[256,512], index: 7, kind: input, shape index: {}]
  %s8 = inlined_call_operand.hbm [shape: bf16[128,512], index: 8, kind: input, shape index: {}]
  %s9 = inlined_call_operand.hbm [shape: f32[1,512], index: 9, kind: input, shape index: {}]
  %s10 = inlined_call_operand.hbm [shape: bf16[256,512], index: 10, kind: input, shape index: {}]
  %s11 = inlined_call_operand.hbm [shape: bf16[128,512], index: 11, kind: input, shape index: {}]
  %s12 = inlined_call_operand.hbm [shape: f32[1,512], index: 12, kind: input, shape index: {}]
  %s13 = inlined_call_operand.hbm [shape: bf16[256,128], index: 13, kind: input, shape index: {}]
  %s14 = inlined_call_operand.vmem [shape: f32[1,128], index: 14, kind: input, shape index: {}]
  %s15 = inlined_call_operand.vmem [shape: bf16[128,128], index: 15, kind: input, shape index: {}]
  %s16 = inlined_call_operand.vmem [shape: f32[1,128], index: 16, kind: input, shape index: {}]
  %s17 = inlined_call_operand.hbm [shape: f32[8,128], index: 17, kind: output, shape index: {}]
  %s18 = sld [smem:[#allocation0]]
  $region126: #{tpu_custom_call.1} parent=0
    _
  %s20 = ssub.s32 1, %s18
  %s21 = scalar_select 0, %s20, %s18
  $region1: #{tpu_custom_call.1} parent=0
    #allocation6 [shape = 'u8[131072]{0}', space=vmem, size = 0x20000, scoped, tag = 'input window, operand 2, single buffered']
    #allocation7 [shape = 's32[1]{0}', space=sflag, size = 0x4, scoped, tag = 'scoped memory for tpu_custom_call.1']
    #allocation8 [shape = 's32[1]{0}', space=sflag, size = 0x4, scoped, tag = 'scoped memory for tpu_custom_call.1']
    #allocation9 [shape = 'u8[2048]{0}', space=vmem, size = 0x800, scoped, tag = 'input window, operand 3, single buffered']
    #allocation10 [shape = 's32[1]{0}', space=sflag, size = 0x4, scoped, tag = 'scoped memory for tpu_custom_call.1']
    #allocation11 [shape = 'u8[8192]{0}', space=vmem, size = 0x2000, scoped, tag = 'input window, operand 4, single buffered']
    #allocation12 [shape = 'u8[131072]{0}', space=vmem, size = 0x20000, scoped, tag = 'input window, operand 5, single buffered']
    #allocation13 [shape = 's32[1]{0}', space=sflag, size = 0x4, scoped, tag = 'scoped memory for tpu_custom_call.1']
    #allocation14 [shape = 'u8[2048]{0}', space=vmem, size = 0x800, scoped, tag = 'input window, operand 6, single buffered']
    #allocation15 [shape = 'u8[262144]{0}', space=vmem, size = 0x40000, scoped, tag = 'input window, operand 7, single buffered']
    #allocation16 [shape = 's32[1]{0}', space=sflag, size = 0x4, scoped, tag = 'scoped memory for tpu_custom_call.1']
    #allocation17 [shape = 'u8[131072]{0}', space=vmem, size = 0x20000, scoped, tag = 'input window, operand 8, single buffered']
    #allocation18 [shape = 'u8[2048]{0}', space=vmem, size = 0x800, scoped, tag = 'input window, operand 9, single buffered']
    #allocation19 [shape = 's32[1]{0}', space=sflag, size = 0x4, scoped, tag = 'scoped memory for tpu_custom_call.1']
    #allocation20 [shape = 'u8[262144]{0}', space=vmem, size = 0x40000, scoped, tag = 'input window, operand 10, single buffered']
    #allocation21 [shape = 'u8[131072]{0}', space=vmem, size = 0x20000, scoped, tag = 'input window, operand 11, single buffered']
    #allocation22 [shape = 's32[1]{0}', space=sflag, size = 0x4, scoped, tag = 'scoped memory for tpu_custom_call.1']
    #allocation23 [shape = 'u8[2048]{0}', space=vmem, size = 0x800, scoped, tag = 'input window, operand 12, single buffered']
    #allocation24 [shape = 'u8[65536]{0}', space=vmem, size = 0x10000, scoped, tag = 'input window, operand 13, single buffered']
    #allocation25 [shape = 's32[1]{0}', space=sflag, size = 0x4, scoped, tag = 'scoped memory for tpu_custom_call.1']
    #allocation26 [shape = 'u8[4096]{0}', space=vmem, size = 0x1000, scoped, tag = 'output window, operand 0, single buffered']
    %22 = vsyncpa [#allocation7], 0
    %23 = vsyncpa [#allocation10], 0
    %24 = vsyncpa [#allocation13], 0
    %25 = vsyncpa [#allocation16], 0
    %26 = vsyncpa [#allocation19], 0
    %27 = vsyncpa [#allocation22], 0
    %28 = vsyncpa [#allocation25], 0
    %29 = vsyncpa [#allocation8], 0
    // Predicated region
    $region2: #{tpu_custom_call.1} parent=1 // pred_check
      _
    $region3: #{tpu_custom_call.1} parent=1 // pred_check_branch
      %31 = sbr.rel (0) target = $region5
    $region4: #{tpu_custom_call.1} parent=1 // pred_region
      _
    $region5: #{tpu_custom_call.1} parent=1 // pred_fallthru
      _
    // Predicated region
    $region6: #{tpu_custom_call.1} parent=1 // pred_check
      _
    $region7: #{tpu_custom_call.1} parent=1 // pred_check_branch
      %33 = sbr.rel (0) target = $region9
    $region8: #{tpu_custom_call.1} parent=1 // pred_region
      _
    $region9: #{tpu_custom_call.1} parent=1 // pred_fallthru
      _
    // Predicated region
    $region10: #{tpu_custom_call.1} parent=1 // pred_check
      _
    $region11: #{tpu_custom_call.1} parent=1 // pred_check_branch
      %35 = sbr.rel (0) target = $region13
    $region12: #{tpu_custom_call.1} parent=1 // pred_region
      %37 = vsyncadd [#allocation7], 0
      %s38 = sshll.u32 %s2, 4
      %s39 = int_to_ptr.hbm [resolvable:$true] %s38
      %s40 = sshll.u32 [#allocation6], 4
      %s41 = int_to_ptr.vmem [resolvable:$true] %s40
      %46 = dma.hbm_to_vmem [thread:$0]  %s39, 4096, %s41, [#allocation7], 256, 256, 16
    $region13: #{tpu_custom_call.1} parent=1 // pred_fallthru
      _
    // Predicated region
    $region14: #{tpu_custom_call.1} parent=1 // pred_check
      _
    $region15: #{tpu_custom_call.1} parent=1 // pred_check_branch
      %48 = sbr.rel (0) target = $region17
    $region16: #{tpu_custom_call.1} parent=1 // pred_region
      %50 = vsyncadd [#allocation10], 0
      %s52 = sshll.u32 %s3, 4
      %s53 = int_to_ptr.hbm [resolvable:$true] %s52
      %s54 = sshll.u32 [#allocation9], 4
      %s55 = int_to_ptr.vmem [resolvable:$true] %s54
      %57 = dma.hbm_to_vmem [thread:$0]  %s53, 64, %s55, [#allocation10]
    $region17: #{tpu_custom_call.1} parent=1 // pred_fallthru
      _
    // Predicated region
    $region18: #{tpu_custom_call.1} parent=1 // pred_check
      _
    $region19: #{tpu_custom_call.1} parent=1 // pred_check_branch
      %59 = sbr.rel (0) target = $region21
    $region20: #{tpu_custom_call.1} parent=1 // pred_region
      %61 = vsyncadd [#allocation10], 0
      %s63 = sshll.u32 %s4, 4
      %s64 = int_to_ptr.hbm [resolvable:$true] %s63
      %s65 = sshll.u32 [#allocation11], 4
      %s66 = int_to_ptr.vmem [resolvable:$true] %s65
      %68 = dma.hbm_to_vmem [thread:$0]  %s64, 256, %s66, [#allocation10]
    $region21: #{tpu_custom_call.1} parent=1 // pred_fallthru
      _
    // Predicated region
    $region22: #{tpu_custom_call.1} parent=1 // pred_check
      _
    $region23: #{tpu_custom_call.1} parent=1 // pred_check_branch
      %70 = sbr.rel (0) target = $region25
    $region24: #{tpu_custom_call.1} parent=1 // pred_region
      %72 = vsyncadd [#allocation13], 0
      %s73 = sshll.u32 %s5, 4
      %s74 = int_to_ptr.hbm [resolvable:$true] %s73
      %s75 = sshll.u32 [#allocation12], 4
      %s76 = int_to_ptr.vmem [resolvable:$true] %s75
      %81 = dma.hbm_to_vmem [thread:$0]  %s74, 4096, %s76, [#allocation13], 256, 256, 16
    $region25: #{tpu_custom_call.1} parent=1 // pred_fallthru
      _
    // Predicated region
    $region26: #{tpu_custom_call.1} parent=1 // pred_check
      _
    $region27: #{tpu_custom_call.1} parent=1 // pred_check_branch
      %83 = sbr.rel (0) target = $region29
    $region28: #{tpu_custom_call.1} parent=1 // pred_region
      %85 = vsyncadd [#allocation13], 0
      %s87 = sshll.u32 %s6, 4
      %s88 = int_to_ptr.hbm [resolvable:$true] %s87
      %s89 = sshll.u32 [#allocation14], 4
      %s90 = int_to_ptr.vmem [resolvable:$true] %s89
      %92 = dma.hbm_to_vmem [thread:$0]  %s88, 64, %s90, [#allocation13]
    $region29: #{tpu_custom_call.1} parent=1 // pred_fallthru
      _
    // Predicated region
    $region30: #{tpu_custom_call.1} parent=1 // pred_check
      _
    $region31: #{tpu_custom_call.1} parent=1 // pred_check_branch
      %94 = sbr.rel (0) target = $region33
    $region32: #{tpu_custom_call.1} parent=1 // pred_region
      %96 = vsyncadd [#allocation16], 0
      %s97 = sshll.u32 %s7, 4
      %s98 = int_to_ptr.hbm [resolvable:$true] %s97
      %s99 = sshll.u32 [#allocation15], 4
      %s100 = int_to_ptr.vmem [resolvable:$true] %s99
      %105 = dma.hbm_to_vmem [thread:$0]  %s98, 8192, %s100, [#allocation16], 256, 256, 16
    $region33: #{tpu_custom_call.1} parent=1 // pred_fallthru
      _
    // Predicated region
    $region34: #{tpu_custom_call.1} parent=1 // pred_check
      _
    $region35: #{tpu_custom_call.1} parent=1 // pred_check_branch
      %107 = sbr.rel (0) target = $region37
    $region36: #{tpu_custom_call.1} parent=1 // pred_region
      %109 = vsyncadd [#allocation16], 0
      %s110 = sshll.u32 %s8, 4
      %s111 = int_to_ptr.hbm [resolvable:$true] %s110
      %s112 = sshll.u32 [#allocation17], 4
      %s113 = int_to_ptr.vmem [resolvable:$true] %s112
      %118 = dma.hbm_to_vmem [thread:$0]  %s111, 4096, %s113, [#allocation16], 256, 256, 16
    $region37: #{tpu_custom_call.1} parent=1 // pred_fallthru
      _
    // Predicated region
    $region38: #{tpu_custom_call.1} parent=1 // pred_check
      _
    $region39: #{tpu_custom_call.1} parent=1 // pred_check_branch
      %120 = sbr.rel (0) target = $region41
    $region40: #{tpu_custom_call.1} parent=1 // pred_region
      %122 = vsyncadd [#allocation19], 0
      %s124 = sshll.u32 %s9, 4
      %s125 = int_to_ptr.hbm [resolvable:$true] %s124
      %s126 = sshll.u32 [#allocation18], 4
      %s127 = int_to_ptr.vmem [resolvable:$true] %s126
      %129 = dma.hbm_to_vmem [thread:$0]  %s125, 64, %s127, [#allocation19]
    $region41: #{tpu_custom_call.1} parent=1 // pred_fallthru
      _
    // Predicated region
    $region42: #{tpu_custom_call.1} parent=1 // pred_check
      _
    $region43: #{tpu_custom_call.1} parent=1 // pred_check_branch
      %131 = sbr.rel (0) target = $region45
    $region44: #{tpu_custom_call.1} parent=1 // pred_region
      %133 = vsyncadd [#allocation19], 0
      %s134 = sshll.u32 %s10, 4
      %s135 = int_to_ptr.hbm [resolvable:$true] %s134
      %s136 = sshll.u32 [#allocation20], 4
      %s137 = int_to_ptr.vmem [resolvable:$true] %s136
      %142 = dma.hbm_to_vmem [thread:$0]  %s135, 8192, %s137, [#allocation19], 256, 256, 16
    $region45: #{tpu_custom_call.1} parent=1 // pred_fallthru
      _
    // Predicated region
    $region46: #{tpu_custom_call.1} parent=1 // pred_check
      _
    $region47: #{tpu_custom_call.1} parent=1 // pred_check_branch
      %144 = sbr.rel (0) target = $region49
    $region48: #{tpu_custom_call.1} parent=1 // pred_region
      %146 = vsyncadd [#allocation22], 0
      %s147 = sshll.u32 %s11, 4
      %s148 = int_to_ptr.hbm [resolvable:$true] %s147
      %s149 = sshll.u32 [#allocation21], 4
      %s150 = int_to_ptr.vmem [resolvable:$true] %s149
      %155 = dma.hbm_to_vmem [thread:$0]  %s148, 4096, %s150, [#allocation22], 256, 256, 16
    $region49: #{tpu_custom_call.1} parent=1 // pred_fallthru
      _
    // Predicated region
    $region50: #{tpu_custom_call.1} parent=1 // pred_check
      _
    $region51: #{tpu_custom_call.1} parent=1 // pred_check_branch
      %157 = sbr.rel (0) target = $region53
    $region52: #{tpu_custom_call.1} parent=1 // pred_region
      %159 = vsyncadd [#allocation22], 0
      %s161 = sshll.u32 %s12, 4
      %s162 = int_to_ptr.hbm [resolvable:$true] %s161
      %s163 = sshll.u32 [#allocation23], 4
      %s164 = int_to_ptr.vmem [resolvable:$true] %s163
      %166 = dma.hbm_to_vmem [thread:$0]  %s162, 64, %s164, [#allocation22]
    $region53: #{tpu_custom_call.1} parent=1 // pred_fallthru
      _
    // Predicated region
    $region54: #{tpu_custom_call.1} parent=1 // pred_check
      _
    $region55: #{tpu_custom_call.1} parent=1 // pred_check_branch
      %168 = sbr.rel (0) target = $region57
    $region56: #{tpu_custom_call.1} parent=1 // pred_region
      %170 = vsyncadd [#allocation25], 0
      %s171 = sshll.u32 %s13, 4
      %s172 = int_to_ptr.hbm [resolvable:$true] %s171
      %s173 = sshll.u32 [#allocation24], 4
      %s174 = int_to_ptr.vmem [resolvable:$true] %s173
      %179 = dma.hbm_to_vmem [thread:$0]  %s172, 2048, %s174, [#allocation25], 64, 64, 4
    $region57: #{tpu_custom_call.1} parent=1 // pred_fallthru
      _
    // Predicated region
    $region58: #{tpu_custom_call.1} parent=1 // pred_check
      _
    $region59: #{tpu_custom_call.1} parent=1 // pred_check_branch
      %181 = sbr.rel (0) target = $region61
    $region60: #{tpu_custom_call.1} parent=1 // pred_region
      _
    $region61: #{tpu_custom_call.1} parent=1 // pred_fallthru
      _
    // Predicated region
    $region62: #{tpu_custom_call.1} parent=1 // pred_check
      _
    $region63: #{tpu_custom_call.1} parent=1 // pred_check_branch
      %183 = sbr.rel (0) target = $region65
    $region64: #{tpu_custom_call.1} parent=1 // pred_region
      _
    $region65: #{tpu_custom_call.1} parent=1 // pred_fallthru
      _
    // Predicated region
    $region66: #{tpu_custom_call.1} parent=1 // pred_check
      _
    $region67: #{tpu_custom_call.1} parent=1 // pred_check_branch
      %185 = sbr.rel (0) target = $region69
    $region68: #{tpu_custom_call.1} parent=1 // pred_region
      _
    $region69: #{tpu_custom_call.1} parent=1 // pred_fallthru
      _
    // Predicated region
    $region70: #{tpu_custom_call.1} parent=1 // pred_check
      _
    $region71: #{tpu_custom_call.1} parent=1 // pred_check_branch
      %187 = sbr.rel (0) target = $region73
    $region72: #{tpu_custom_call.1} parent=1 // pred_region
      %189 = dma.done [#allocation7], 4096
    $region73: #{tpu_custom_call.1} parent=1 // pred_fallthru
      _
    // Predicated region
    $region74: #{tpu_custom_call.1} parent=1 // pred_check
      _
    $region75: #{tpu_custom_call.1} parent=1 // pred_check_branch
      %191 = sbr.rel (0) target = $region77
    $region76: #{tpu_custom_call.1} parent=1 // pred_region
      %193 = dma.done [#allocation10], 64
    $region77: #{tpu_custom_call.1} parent=1 // pred_fallthru
      _
    // Predicated region
    $region78: #{tpu_custom_call.1} parent=1 // pred_check
      _
    $region79: #{tpu_custom_call.1} parent=1 // pred_check_branch
      %195 = sbr.rel (0) target = $region81
    $region80: #{tpu_custom_call.1} parent=1 // pred_region
      %197 = dma.done [#allocation10], 256
    $region81: #{tpu_custom_call.1} parent=1 // pred_fallthru
      _
    // Predicated region
    $region82: #{tpu_custom_call.1} parent=1 // pred_check
      _
    $region83: #{tpu_custom_call.1} parent=1 // pred_check_branch
      %199 = sbr.rel (0) target = $region85
    $region84: #{tpu_custom_call.1} parent=1 // pred_region
      %201 = dma.done [#allocation13], 4096
    $region85: #{tpu_custom_call.1} parent=1 // pred_fallthru
      _
    // Predicated region
    $region86: #{tpu_custom_call.1} parent=1 // pred_check
      _
    $region87: #{tpu_custom_call.1} parent=1 // pred_check_branch
      %203 = sbr.rel (0) target = $region89
    $region88: #{tpu_custom_call.1} parent=1 // pred_region
      %205 = dma.done [#allocation13], 64
    $region89: #{tpu_custom_call.1} parent=1 // pred_fallthru
      _
    // Predicated region
    $region90: #{tpu_custom_call.1} parent=1 // pred_check
      _
    $region91: #{tpu_custom_call.1} parent=1 // pred_check_branch
      %207 = sbr.rel (0) target = $region93
    $region92: #{tpu_custom_call.1} parent=1 // pred_region
      %209 = dma.done [#allocation16], 8192
    $region93: #{tpu_custom_call.1} parent=1 // pred_fallthru
      _
    // Predicated region
    $region94: #{tpu_custom_call.1} parent=1 // pred_check
      _
    $region95: #{tpu_custom_call.1} parent=1 // pred_check_branch
      %211 = sbr.rel (0) target = $region97
    $region96: #{tpu_custom_call.1} parent=1 // pred_region
      %213 = dma.done [#allocation16], 4096
    $region97: #{tpu_custom_call.1} parent=1 // pred_fallthru
      _
    // Predicated region
    $region98: #{tpu_custom_call.1} parent=1 // pred_check
      _
    $region99: #{tpu_custom_call.1} parent=1 // pred_check_branch
      %215 = sbr.rel (0) target = $region101
    $region100: #{tpu_custom_call.1} parent=1 // pred_region
      %217 = dma.done [#allocation19], 64
    $region101: #{tpu_custom_call.1} parent=1 // pred_fallthru
      _
    // Predicated region
    $region102: #{tpu_custom_call.1} parent=1 // pred_check
      _
    $region103: #{tpu_custom_call.1} parent=1 // pred_check_branch
      %219 = sbr.rel (0) target = $region105
    $region104: #{tpu_custom_call.1} parent=1 // pred_region
      %221 = dma.done [#allocation19], 8192
    $region105: #{tpu_custom_call.1} parent=1 // pred_fallthru
      _
    // Predicated region
    $region106: #{tpu_custom_call.1} parent=1 // pred_check
      _
    $region107: #{tpu_custom_call.1} parent=1 // pred_check_branch
      %223 = sbr.rel (0) target = $region109
    $region108: #{tpu_custom_call.1} parent=1 // pred_region
      %225 = dma.done [#allocation22], 4096
    $region109: #{tpu_custom_call.1} parent=1 // pred_fallthru
      _
    // Predicated region
    $region110: #{tpu_custom_call.1} parent=1 // pred_check
      _
    $region111: #{tpu_custom_call.1} parent=1 // pred_check_branch
      %227 = sbr.rel (0) target = $region113
    $region112: #{tpu_custom_call.1} parent=1 // pred_region
      %229 = dma.done [#allocation22], 64
    $region113: #{tpu_custom_call.1} parent=1 // pred_fallthru
      _
    // Predicated region
    $region114: #{tpu_custom_call.1} parent=1 // pred_check
      _
    $region115: #{tpu_custom_call.1} parent=1 // pred_check_branch
      %231 = sbr.rel (0) target = $region117
    $region116: #{tpu_custom_call.1} parent=1 // pred_region
      %233 = dma.done [#allocation25], 2048
    $region117: #{tpu_custom_call.1} parent=1 // pred_fallthru
      _
    %v235 = vld [vmem:[%s0] sm:$0xff]
    %v236 = vld [vmem:[%s0 + $0x8] sm:$0xff]
    %v237 = vld [vmem:[%s0 + $0x10] sm:$0xff]
    %v238 = vld [vmem:[%s0 + $0x18] sm:$0xff]
    %v239 = vld [vmem:[%s0 + $0x20] sm:$0xff]
    %v240 = vld [vmem:[%s0 + $0x28] sm:$0xff]
    %v241 = vld [vmem:[%s0 + $0x30] sm:$0xff]
    %v242 = vld [vmem:[%s0 + $0x38] sm:$0xff]
    %v243 = vld [vmem:[%s1] sm:$0xff]
    %v244 = vld [vmem:[%s1 + $0x8] sm:$0xff]
    %v245 = vld [vmem:[#allocation9] sm:$0xf]
    %v247 = vperm.slane %v245, 0
    %v248 = vperm.slane %v245, 1
    %v249 = vperm.slane %v245, 2
    %v250 = vperm.slane %v245, 3
    %257 = vst [vmem:[#allocation1] ss:$2 sm:$0xff] %v243
    %s258 = scalar_lea.vmem [#allocation1], 16
    %259 = vst [vmem:[%s258] ss:$2 sm:$0xff] %v244
    %v260 = vld.sshfl [vmem:[#allocation1] sm:$0xff pattern:$0x75316420]
    %v261 = vld.sshfl [vmem:[#allocation1 + $0x8] sm:$0xff pattern:$0x75316420]
    %v262 = vld.sshfl [vmem:[#allocation1 + $0x10] sm:$0xff pattern:$0x75316420]
    %v263 = vld.sshfl [vmem:[#allocation1 + $0x18] sm:$0xff pattern:$0x75316420]
    %vm264 = vcmask 31744
    %v266 = vsel %vm264, %v235, 0
    %v269 = vsel %vm264, %v236, 0
    %v272 = vsel %vm264, %v237, 0
    %v275 = vsel %vm264, %v238, 0
    %v278 = vsel %vm264, %v239, 0
    %v281 = vsel %vm264, %v240, 0
    %v284 = vsel %vm264, %v241, 0
    %v287 = vsel %vm264, %v242, 0
    %vm289 = vcmask 1043456
    %v290 = vsel %vm289, %v260, 0
    %v292 = vsel %vm289, %v261, 0
    %v294 = vsel %vm289, %v262, 0
    %v296 = vsel %vm289, %v263, 0
    %298 = vmatpush.msra.mxu0 0.0
    %299 = vmatpush.msra.mxu0 0.0
    %300 = vmatpush.msra.mxu0 0.0
    %301 = vmatpush.msra.mxu0 0.0
    %302 = vmatpush.msra.mxu0 0.0
    %303 = vmatpush.msra.mxu0 0.0
    %304 = vmatpush.msra.mxu0 0.0
    %305 = vmatpush.msra.mxu0 0.0
    %306 = vmatpush.msra.mxu0 0.0
    %307 = vmatpush.msra.mxu0 0.0
    %308 = vmatpush.msra.mxu0 0.0
    %309 = vmatpush.msra.mxu0 0.0
    %310 = vmatpush.msra.mxu0 0.0
    %311 = vmatpush.msra.mxu0 0.0
    %312 = vmatpush.msra.mxu0 0.0
    %313 = vmatpush.msra.mxu0 %v290
    %314 = vmatmul.f32.gmra.mxu0 %v266
    %v315 = vpop.f32.mrf.mxu0
    %v316 = vadd.f32 %v247, %v315
    %317 = vmatmul.f32.gmra.mxu0 %v269
    %v318 = vpop.f32.mrf.mxu0
    %v319 = vadd.f32 %v247, %v318
    %320 = vmatmul.f32.gmra.mxu0 %v272
    %v321 = vpop.f32.mrf.mxu0
    %v322 = vadd.f32 %v247, %v321
    %323 = vmatmul.f32.gmra.mxu0 %v275
    %v324 = vpop.f32.mrf.mxu0
    %v325 = vadd.f32 %v247, %v324
    %326 = vmatmul.f32.gmra.mxu0 %v278
    %v327 = vpop.f32.mrf.mxu0
    %v328 = vadd.f32 %v247, %v327
    %329 = vmatmul.f32.gmra.mxu0 %v281
    %v330 = vpop.f32.mrf.mxu0
    %v331 = vadd.f32 %v247, %v330
    %332 = vmatmul.f32.gmra.mxu0 %v284
    %v333 = vpop.f32.mrf.mxu0
    %v334 = vadd.f32 %v247, %v333
    %335 = vmatmul.f32.gmra.mxu0 %v287
    %v336 = vpop.f32.mrf.mxu0
    %v337 = vadd.f32 %v247, %v336
    %338 = vdwg.mxu0
    %339 = vmatpush.msra.mxu0 0.0
    %340 = vmatpush.msra.mxu0 0.0
    %341 = vmatpush.msra.mxu0 0.0
    %342 = vmatpush.msra.mxu0 0.0
    %343 = vmatpush.msra.mxu0 0.0
    %344 = vmatpush.msra.mxu0 0.0
    %345 = vmatpush.msra.mxu0 0.0
    %346 = vmatpush.msra.mxu0 0.0
    %347 = vmatpush.msra.mxu0 0.0
    %348 = vmatpush.msra.mxu0 0.0
    %349 = vmatpush.msra.mxu0 0.0
    %350 = vmatpush.msra.mxu0 0.0
    %351 = vmatpush.msra.mxu0 0.0
    %352 = vmatpush.msra.mxu0 0.0
    %353 = vmatpush.msra.mxu0 0.0
    %354 = vmatpush.msra.mxu0 %v292
    %355 = vmatmul.f32.gmra.mxu0 %v266
    %v356 = vpop.f32.mrf.mxu0
    %v357 = vadd.f32 %v248, %v356
    %358 = vmatmul.f32.gmra.mxu0 %v269
    %v359 = vpop.f32.mrf.mxu0
    %v360 = vadd.f32 %v248, %v359
    %361 = vmatmul.f32.gmra.mxu0 %v272
    %v362 = vpop.f32.mrf.mxu0
    %v363 = vadd.f32 %v248, %v362
    %364 = vmatmul.f32.gmra.mxu0 %v275
    %v365 = vpop.f32.mrf.mxu0
    %v366 = vadd.f32 %v248, %v365
    %367 = vmatmul.f32.gmra.mxu0 %v278
    %v368 = vpop.f32.mrf.mxu0
    %v369 = vadd.f32 %v248, %v368
    %370 = vmatmul.f32.gmra.mxu0 %v281
    %v371 = vpop.f32.mrf.mxu0
    %v372 = vadd.f32 %v248, %v371
    %373 = vmatmul.f32.gmra.mxu0 %v284
    %v374 = vpop.f32.mrf.mxu0
    %v375 = vadd.f32 %v248, %v374
    %376 = vmatmul.f32.gmra.mxu0 %v287
    %v377 = vpop.f32.mrf.mxu0
    %v378 = vadd.f32 %v248, %v377
    %379 = vdwg.mxu0
    %380 = vmatpush.msra.mxu0 0.0
    %381 = vmatpush.msra.mxu0 0.0
    %382 = vmatpush.msra.mxu0 0.0
    %383 = vmatpush.msra.mxu0 0.0
    %384 = vmatpush.msra.mxu0 0.0
    %385 = vmatpush.msra.mxu0 0.0
    %386 = vmatpush.msra.mxu0 0.0
    %387 = vmatpush.msra.mxu0 0.0
    %388 = vmatpush.msra.mxu0 0.0
    %389 = vmatpush.msra.mxu0 0.0
    %390 = vmatpush.msra.mxu0 0.0
    %391 = vmatpush.msra.mxu0 0.0
    %392 = vmatpush.msra.mxu0 0.0
    %393 = vmatpush.msra.mxu0 0.0
    %394 = vmatpush.msra.mxu0 0.0
    %395 = vmatpush.msra.mxu0 %v294
    %396 = vmatmul.f32.gmra.mxu0 %v266
    %v397 = vpop.f32.mrf.mxu0
    %v398 = vadd.f32 %v249, %v397
    %399 = vmatmul.f32.gmra.mxu0 %v269
    %v400 = vpop.f32.mrf.mxu0
    %v401 = vadd.f32 %v249, %v400
    %402 = vmatmul.f32.gmra.mxu0 %v272
    %v403 = vpop.f32.mrf.mxu0
    %v404 = vadd.f32 %v249, %v403
    %405 = vmatmul.f32.gmra.mxu0 %v275
    %v406 = vpop.f32.mrf.mxu0
    %v407 = vadd.f32 %v249, %v406
    %408 = vmatmul.f32.gmra.mxu0 %v278
    %v409 = vpop.f32.mrf.mxu0
    %v410 = vadd.f32 %v249, %v409
    %411 = vmatmul.f32.gmra.mxu0 %v281
    %v412 = vpop.f32.mrf.mxu0
    %v413 = vadd.f32 %v249, %v412
    %414 = vmatmul.f32.gmra.mxu0 %v284
    %v415 = vpop.f32.mrf.mxu0
    %v416 = vadd.f32 %v249, %v415
    %417 = vmatmul.f32.gmra.mxu0 %v287
    %v418 = vpop.f32.mrf.mxu0
    %v419 = vadd.f32 %v249, %v418
    %420 = vdwg.mxu0
    %421 = vmatpush.msra.mxu0 0.0
    %422 = vmatpush.msra.mxu0 0.0
    %423 = vmatpush.msra.mxu0 0.0
    %424 = vmatpush.msra.mxu0 0.0
    %425 = vmatpush.msra.mxu0 0.0
    %426 = vmatpush.msra.mxu0 0.0
    %427 = vmatpush.msra.mxu0 0.0
    %428 = vmatpush.msra.mxu0 0.0
    %429 = vmatpush.msra.mxu0 0.0
    %430 = vmatpush.msra.mxu0 0.0
    %431 = vmatpush.msra.mxu0 0.0
    %432 = vmatpush.msra.mxu0 0.0
    %433 = vmatpush.msra.mxu0 0.0
    %434 = vmatpush.msra.mxu0 0.0
    %435 = vmatpush.msra.mxu0 0.0
    %436 = vmatpush.msra.mxu0 %v296
    %437 = vmatmul.f32.gmra.mxu0 %v266
    %v438 = vpop.f32.mrf.mxu0
    %v439 = vadd.f32 %v250, %v438
    %440 = vmatmul.f32.gmra.mxu0 %v269
    %v441 = vpop.f32.mrf.mxu0
    %v442 = vadd.f32 %v250, %v441
    %443 = vmatmul.f32.gmra.mxu0 %v272
    %v444 = vpop.f32.mrf.mxu0
    %v445 = vadd.f32 %v250, %v444
    %446 = vmatmul.f32.gmra.mxu0 %v275
    %v447 = vpop.f32.mrf.mxu0
    %v448 = vadd.f32 %v250, %v447
    %449 = vmatmul.f32.gmra.mxu0 %v278
    %v450 = vpop.f32.mrf.mxu0
    %v451 = vadd.f32 %v250, %v450
    %452 = vmatmul.f32.gmra.mxu0 %v281
    %v453 = vpop.f32.mrf.mxu0
    %v454 = vadd.f32 %v250, %v453
    %455 = vmatmul.f32.gmra.mxu0 %v284
    %v456 = vpop.f32.mrf.mxu0
    %v457 = vadd.f32 %v250, %v456
    %458 = vmatmul.f32.gmra.mxu0 %v287
    %v459 = vpop.f32.mrf.mxu0
    %v460 = vadd.f32 %v250, %v459
    %461 = vdwg.mxu0
    %462 = vst [vmem:[#allocation2] sm:$0xff] %v316
    %463 = vst [vmem:[#allocation2 + $0x8] sm:$0xff] %v357
    %464 = vst [vmem:[#allocation2 + $0x10] sm:$0xff] %v398
    %465 = vst [vmem:[#allocation2 + $0x18] sm:$0xff] %v439
    %466 = vst [vmem:[#allocation2 + $0x20] sm:$0xff] %v319
    %467 = vst [vmem:[#allocation2 + $0x28] sm:$0xff] %v360
    %468 = vst [vmem:[#allocation2 + $0x30] sm:$0xff] %v401
    %469 = vst [vmem:[#allocation2 + $0x38] sm:$0xff] %v442
    %470 = vst [vmem:[#allocation2 + $0x40] sm:$0xff] %v322
    %471 = vst [vmem:[#allocation2 + $0x48] sm:$0xff] %v363
    %472 = vst [vmem:[#allocation2 + $0x50] sm:$0xff] %v404
    %473 = vst [vmem:[#allocation2 + $0x58] sm:$0xff] %v445
    %474 = vst [vmem:[#allocation2 + $0x60] sm:$0xff] %v325
    %475 = vst [vmem:[#allocation2 + $0x68] sm:$0xff] %v366
    %476 = vst [vmem:[#allocation2 + $0x70] sm:$0xff] %v407
    %477 = vst [vmem:[#allocation2 + $0x78] sm:$0xff] %v448
    %478 = vst [vmem:[#allocation2 + $0x80] sm:$0xff] %v328
    %479 = vst [vmem:[#allocation2 + $0x88] sm:$0xff] %v369
    %480 = vst [vmem:[#allocation2 + $0x90] sm:$0xff] %v410
    %481 = vst [vmem:[#allocation2 + $0x98] sm:$0xff] %v451
    %482 = vst [vmem:[#allocation2 + $0xa0] sm:$0xff] %v331
    %483 = vst [vmem:[#allocation2 + $0xa8] sm:$0xff] %v372
    %484 = vst [vmem:[#allocation2 + $0xb0] sm:$0xff] %v413
    %485 = vst [vmem:[#allocation2 + $0xb8] sm:$0xff] %v454
    %486 = vst [vmem:[#allocation2 + $0xc0] sm:$0xff] %v334
    %487 = vst [vmem:[#allocation2 + $0xc8] sm:$0xff] %v375
    %488 = vst [vmem:[#allocation2 + $0xd0] sm:$0xff] %v416
    %489 = vst [vmem:[#allocation2 + $0xd8] sm:$0xff] %v457
    %490 = vst [vmem:[#allocation2 + $0xe0] sm:$0xff] %v337
    %491 = vst [vmem:[#allocation2 + $0xe8] sm:$0xff] %v378
    %492 = vst [vmem:[#allocation2 + $0xf0] sm:$0xff] %v419
    %493 = vst [vmem:[#allocation2 + $0xf8] sm:$0xff] %v460
    %v494 = vld [vmem:[#allocation11] sm:$0xff]
    %v495 = vld [vmem:[#allocation11 + $0x8] sm:$0xff]
    %v496 = vld [vmem:[#allocation14] sm:$0xf]
    %v498 = vperm.slane %v496, 0
    %v499 = vperm.slane %v496, 1
    %v500 = vperm.slane %v496, 2
    %v501 = vperm.slane %v496, 3
    %508 = vst [vmem:[#allocation1] ss:$2 sm:$0xff] %v494
    %s509 = scalar_lea.vmem [#allocation1], 16
    %510 = vst [vmem:[%s509] ss:$2 sm:$0xff] %v495
    %v511 = vld.sshfl [vmem:[#allocation1] sm:$0xff pattern:$0x75316420]
    %v512 = vld.sshfl [vmem:[#allocation1 + $0x8] sm:$0xff pattern:$0x75316420]
    %v513 = vld.sshfl [vmem:[#allocation1 + $0x10] sm:$0xff pattern:$0x75316420]
    %v514 = vld.sshfl [vmem:[#allocation1 + $0x18] sm:$0xff pattern:$0x75316420]
    %v515 = vsel %vm289, %v511, 0
    %v517 = vsel %vm289, %v512, 0
    %v519 = vsel %vm289, %v513, 0
    %v521 = vsel %vm289, %v514, 0
    %523 = vmatpush.msra.mxu0 0.0
    %524 = vmatpush.msra.mxu0 0.0
    %525 = vmatpush.msra.mxu0 0.0
    %526 = vmatpush.msra.mxu0 0.0
    %527 = vmatpush.msra.mxu0 0.0
    %528 = vmatpush.msra.mxu0 0.0
    %529 = vmatpush.msra.mxu0 0.0
    %530 = vmatpush.msra.mxu0 0.0
    %531 = vmatpush.msra.mxu0 0.0
    %532 = vmatpush.msra.mxu0 0.0
    %533 = vmatpush.msra.mxu0 0.0
    %534 = vmatpush.msra.mxu0 0.0
    %535 = vmatpush.msra.mxu0 0.0
    %536 = vmatpush.msra.mxu0 0.0
    %537 = vmatpush.msra.mxu0 0.0
    %538 = vmatpush.msra.mxu0 %v515
    %539 = vmatmul.f32.gmra.mxu0 %v266
    %v540 = vpop.f32.mrf.mxu0
    %v541 = vadd.f32 %v498, %v540
    %542 = vmatmul.f32.gmra.mxu0 %v269
    %v543 = vpop.f32.mrf.mxu0
    %v544 = vadd.f32 %v498, %v543
    %545 = vmatmul.f32.gmra.mxu0 %v272
    %v546 = vpop.f32.mrf.mxu0
    %v547 = vadd.f32 %v498, %v546
    %548 = vmatmul.f32.gmra.mxu0 %v275
    %v549 = vpop.f32.mrf.mxu0
    %v550 = vadd.f32 %v498, %v549
    %551 = vmatmul.f32.gmra.mxu0 %v278
    %v552 = vpop.f32.mrf.mxu0
    %v553 = vadd.f32 %v498, %v552
    %554 = vmatmul.f32.gmra.mxu0 %v281
    %v555 = vpop.f32.mrf.mxu0
    %v556 = vadd.f32 %v498, %v555
    %557 = vmatmul.f32.gmra.mxu0 %v284
    %v558 = vpop.f32.mrf.mxu0
    %v559 = vadd.f32 %v498, %v558
    %560 = vmatmul.f32.gmra.mxu0 %v287
    %v561 = vpop.f32.mrf.mxu0
    %v562 = vadd.f32 %v498, %v561
    %563 = vdwg.mxu0
    %564 = vmatpush.msra.mxu0 0.0
    %565 = vmatpush.msra.mxu0 0.0
    %566 = vmatpush.msra.mxu0 0.0
    %567 = vmatpush.msra.mxu0 0.0
    %568 = vmatpush.msra.mxu0 0.0
    %569 = vmatpush.msra.mxu0 0.0
    %570 = vmatpush.msra.mxu0 0.0
    %571 = vmatpush.msra.mxu0 0.0
    %572 = vmatpush.msra.mxu0 0.0
    %573 = vmatpush.msra.mxu0 0.0
    %574 = vmatpush.msra.mxu0 0.0
    %575 = vmatpush.msra.mxu0 0.0
    %576 = vmatpush.msra.mxu0 0.0
    %577 = vmatpush.msra.mxu0 0.0
    %578 = vmatpush.msra.mxu0 0.0
    %579 = vmatpush.msra.mxu0 %v517
    %580 = vmatmul.f32.gmra.mxu0 %v266
    %v581 = vpop.f32.mrf.mxu0
    %v582 = vadd.f32 %v499, %v581
    %583 = vmatmul.f32.gmra.mxu0 %v269
    %v584 = vpop.f32.mrf.mxu0
    %v585 = vadd.f32 %v499, %v584
    %586 = vmatmul.f32.gmra.mxu0 %v272
    %v587 = vpop.f32.mrf.mxu0
    %v588 = vadd.f32 %v499, %v587
    %589 = vmatmul.f32.gmra.mxu0 %v275
    %v590 = vpop.f32.mrf.mxu0
    %v591 = vadd.f32 %v499, %v590
    %592 = vmatmul.f32.gmra.mxu0 %v278
    %v593 = vpop.f32.mrf.mxu0
    %v594 = vadd.f32 %v499, %v593
    %595 = vmatmul.f32.gmra.mxu0 %v281
    %v596 = vpop.f32.mrf.mxu0
    %v597 = vadd.f32 %v499, %v596
    %598 = vmatmul.f32.gmra.mxu0 %v284
    %v599 = vpop.f32.mrf.mxu0
    %v600 = vadd.f32 %v499, %v599
    %601 = vmatmul.f32.gmra.mxu0 %v287
    %v602 = vpop.f32.mrf.mxu0
    %v603 = vadd.f32 %v499, %v602
    %604 = vdwg.mxu0
    %605 = vmatpush.msra.mxu0 0.0
    %606 = vmatpush.msra.mxu0 0.0
    %607 = vmatpush.msra.mxu0 0.0
    %608 = vmatpush.msra.mxu0 0.0
    %609 = vmatpush.msra.mxu0 0.0
    %610 = vmatpush.msra.mxu0 0.0
    %611 = vmatpush.msra.mxu0 0.0
    %612 = vmatpush.msra.mxu0 0.0
    %613 = vmatpush.msra.mxu0 0.0
    %614 = vmatpush.msra.mxu0 0.0
    %615 = vmatpush.msra.mxu0 0.0
    %616 = vmatpush.msra.mxu0 0.0
    %617 = vmatpush.msra.mxu0 0.0
    %618 = vmatpush.msra.mxu0 0.0
    %619 = vmatpush.msra.mxu0 0.0
    %620 = vmatpush.msra.mxu0 %v519
    %621 = vmatmul.f32.gmra.mxu0 %v266
    %v622 = vpop.f32.mrf.mxu0
    %v623 = vadd.f32 %v500, %v622
    %624 = vmatmul.f32.gmra.mxu0 %v269
    %v625 = vpop.f32.mrf.mxu0
    %v626 = vadd.f32 %v500, %v625
    %627 = vmatmul.f32.gmra.mxu0 %v272
    %v628 = vpop.f32.mrf.mxu0
    %v629 = vadd.f32 %v500, %v628
    %630 = vmatmul.f32.gmra.mxu0 %v275
    %v631 = vpop.f32.mrf.mxu0
    %v632 = vadd.f32 %v500, %v631
    %633 = vmatmul.f32.gmra.mxu0 %v278
    %v634 = vpop.f32.mrf.mxu0
    %v635 = vadd.f32 %v500, %v634
    %636 = vmatmul.f32.gmra.mxu0 %v281
    %v637 = vpop.f32.mrf.mxu0
    %v638 = vadd.f32 %v500, %v637
    %639 = vmatmul.f32.gmra.mxu0 %v284
    %v640 = vpop.f32.mrf.mxu0
    %v641 = vadd.f32 %v500, %v640
    %642 = vmatmul.f32.gmra.mxu0 %v287
    %v643 = vpop.f32.mrf.mxu0
    %v644 = vadd.f32 %v500, %v643
    %645 = vdwg.mxu0
    %646 = vmatpush.msra.mxu0 0.0
    %647 = vmatpush.msra.mxu0 0.0
    %648 = vmatpush.msra.mxu0 0.0
    %649 = vmatpush.msra.mxu0 0.0
    %650 = vmatpush.msra.mxu0 0.0
    %651 = vmatpush.msra.mxu0 0.0
    %652 = vmatpush.msra.mxu0 0.0
    %653 = vmatpush.msra.mxu0 0.0
    %654 = vmatpush.msra.mxu0 0.0
    %655 = vmatpush.msra.mxu0 0.0
    %656 = vmatpush.msra.mxu0 0.0
    %657 = vmatpush.msra.mxu0 0.0
    %658 = vmatpush.msra.mxu0 0.0
    %659 = vmatpush.msra.mxu0 0.0
    %660 = vmatpush.msra.mxu0 0.0
    %661 = vmatpush.msra.mxu0 %v521
    %662 = vmatmul.f32.gmra.mxu0 %v266
    %v663 = vpop.f32.mrf.mxu0
    %v664 = vadd.f32 %v501, %v663
    %665 = vmatmul.f32.gmra.mxu0 %v269
    %v666 = vpop.f32.mrf.mxu0
    %v667 = vadd.f32 %v501, %v666
    %668 = vmatmul.f32.gmra.mxu0 %v272
    %v669 = vpop.f32.mrf.mxu0
    %v670 = vadd.f32 %v501, %v669
    %671 = vmatmul.f32.gmra.mxu0 %v275
    %v672 = vpop.f32.mrf.mxu0
    %v673 = vadd.f32 %v501, %v672
    %674 = vmatmul.f32.gmra.mxu0 %v278
    %v675 = vpop.f32.mrf.mxu0
    %v676 = vadd.f32 %v501, %v675
    %677 = vmatmul.f32.gmra.mxu0 %v281
    %v678 = vpop.f32.mrf.mxu0
    %v679 = vadd.f32 %v501, %v678
    %680 = vmatmul.f32.gmra.mxu0 %v284
    %v681 = vpop.f32.mrf.mxu0
    %v682 = vadd.f32 %v501, %v681
    %683 = vmatmul.f32.gmra.mxu0 %v287
    %v684 = vpop.f32.mrf.mxu0
    %v685 = vadd.f32 %v501, %v684
    %686 = vdwg.mxu0
    %687 = vst [vmem:[#allocation3] sm:$0xff] %v541
    %688 = vst [vmem:[#allocation3 + $0x8] sm:$0xff] %v582
    %689 = vst [vmem:[#allocation3 + $0x10] sm:$0xff] %v623
    %690 = vst [vmem:[#allocation3 + $0x18] sm:$0xff] %v664
    %691 = vst [vmem:[#allocation3 + $0x20] sm:$0xff] %v544
    %692 = vst [vmem:[#allocation3 + $0x28] sm:$0xff] %v585
    %693 = vst [vmem:[#allocation3 + $0x30] sm:$0xff] %v626
    %694 = vst [vmem:[#allocation3 + $0x38] sm:$0xff] %v667
    %695 = vst [vmem:[#allocation3 + $0x40] sm:$0xff] %v547
    %696 = vst [vmem:[#allocation3 + $0x48] sm:$0xff] %v588
    %697 = vst [vmem:[#allocation3 + $0x50] sm:$0xff] %v629
    %698 = vst [vmem:[#allocation3 + $0x58] sm:$0xff] %v670
    %699 = vst [vmem:[#allocation3 + $0x60] sm:$0xff] %v550
    %700 = vst [vmem:[#allocation3 + $0x68] sm:$0xff] %v591
    %701 = vst [vmem:[#allocation3 + $0x70] sm:$0xff] %v632
    %702 = vst [vmem:[#allocation3 + $0x78] sm:$0xff] %v673
    %703 = vst [vmem:[#allocation3 + $0x80] sm:$0xff] %v553
    %704 = vst [vmem:[#allocation3 + $0x88] sm:$0xff] %v594
    %705 = vst [vmem:[#allocation3 + $0x90] sm:$0xff] %v635
    %706 = vst [vmem:[#allocation3 + $0x98] sm:$0xff] %v676
    %707 = vst [vmem:[#allocation3 + $0xa0] sm:$0xff] %v556
    %708 = vst [vmem:[#allocation3 + $0xa8] sm:$0xff] %v597
    %709 = vst [vmem:[#allocation3 + $0xb0] sm:$0xff] %v638
    %710 = vst [vmem:[#allocation3 + $0xb8] sm:$0xff] %v679
    %711 = vst [vmem:[#allocation3 + $0xc0] sm:$0xff] %v559
    %712 = vst [vmem:[#allocation3 + $0xc8] sm:$0xff] %v600
    %713 = vst [vmem:[#allocation3 + $0xd0] sm:$0xff] %v641
    %714 = vst [vmem:[#allocation3 + $0xd8] sm:$0xff] %v682
    %715 = vst [vmem:[#allocation3 + $0xe0] sm:$0xff] %v562
    %716 = vst [vmem:[#allocation3 + $0xe8] sm:$0xff] %v603
    %717 = vst [vmem:[#allocation3 + $0xf0] sm:$0xff] %v644
    %718 = vst [vmem:[#allocation3 + $0xf8] sm:$0xff] %v685
    %v719 = vld [vmem:[#allocation2] sm:$0xff]
    %v720 = vld [vmem:[#allocation2 + $0x8] sm:$0xff]
    %v721 = vld [vmem:[#allocation2 + $0x10] sm:$0xff]
    %v722 = vld [vmem:[#allocation2 + $0x18] sm:$0xff]
    %v723 = vld [vmem:[#allocation6] sm:$0xff]
    %v724 = vld [vmem:[#allocation6 + $0x8] sm:$0xff]
    %v725 = vld [vmem:[#allocation6 + $0x10] sm:$0xff]
    %v726 = vld [vmem:[#allocation6 + $0x18] sm:$0xff]
    %v727 = vld [vmem:[#allocation6 + $0x20] sm:$0xff]
    %v728 = vld [vmem:[#allocation6 + $0x28] sm:$0xff]
    %v729 = vld [vmem:[#allocation6 + $0x30] sm:$0xff]
    %v730 = vld [vmem:[#allocation6 + $0x38] sm:$0xff]
    %v731 = vld [vmem:[#allocation6 + $0x40] sm:$0xff]
    %v732 = vld [vmem:[#allocation6 + $0x48] sm:$0xff]
    %v733 = vld [vmem:[#allocation6 + $0x50] sm:$0xff]
    %v734 = vld [vmem:[#allocation6 + $0x58] sm:$0xff]
    %v735 = vld [vmem:[#allocation6 + $0x60] sm:$0xff]
    %v736 = vld [vmem:[#allocation6 + $0x68] sm:$0xff]
    %v737 = vld [vmem:[#allocation6 + $0x70] sm:$0xff]
    %v738 = vld [vmem:[#allocation6 + $0x78] sm:$0xff]
    %v739 = vld [vmem:[#allocation6 + $0x80] sm:$0xff]
    %v740 = vld [vmem:[#allocation6 + $0x88] sm:$0xff]
    %v741 = vld [vmem:[#allocation6 + $0x90] sm:$0xff]
    %v742 = vld [vmem:[#allocation6 + $0x98] sm:$0xff]
    %v743 = vld [vmem:[#allocation6 + $0xa0] sm:$0xff]
    %v744 = vld [vmem:[#allocation6 + $0xa8] sm:$0xff]
    %v745 = vld [vmem:[#allocation6 + $0xb0] sm:$0xff]
    %v746 = vld [vmem:[#allocation6 + $0xb8] sm:$0xff]
    %v747 = vld [vmem:[#allocation6 + $0xc0] sm:$0xff]
    %v748 = vld [vmem:[#allocation6 + $0xc8] sm:$0xff]
    %v749 = vld [vmem:[#allocation6 + $0xd0] sm:$0xff]
    %v750 = vld [vmem:[#allocation6 + $0xd8] sm:$0xff]
    %v751 = vld [vmem:[#allocation6 + $0xe0] sm:$0xff]
    %v752 = vld [vmem:[#allocation6 + $0xe8] sm:$0xff]
    %v753 = vld [vmem:[#allocation6 + $0xf0] sm:$0xff]
    %v754 = vld [vmem:[#allocation6 + $0xf8] sm:$0xff]
    %v787 = vunpack.c.l.b16 %v723
    %v788 = vunpack.c.h.b16 %v723
    %v789 = vunpack.c.l.b16 %v724
    %v790 = vunpack.c.h.b16 %v724
    %v791 = vunpack.c.l.b16 %v725
    %v792 = vunpack.c.h.b16 %v725
    %v793 = vunpack.c.l.b16 %v726
    %v794 = vunpack.c.h.b16 %v726
    %v795 = vunpack.c.l.b16 %v727
    %v796 = vunpack.c.h.b16 %v727
    %v797 = vunpack.c.l.b16 %v728
    %v798 = vunpack.c.h.b16 %v728
    %v799 = vunpack.c.l.b16 %v729
    %v800 = vunpack.c.h.b16 %v729
    %v801 = vunpack.c.l.b16 %v730
    %v802 = vunpack.c.h.b16 %v730
    %v803 = vunpack.c.l.b16 %v731
    %v804 = vunpack.c.h.b16 %v731
    %v805 = vunpack.c.l.b16 %v732
    %v806 = vunpack.c.h.b16 %v732
    %v807 = vunpack.c.l.b16 %v733
    %v808 = vunpack.c.h.b16 %v733
    %v809 = vunpack.c.l.b16 %v734
    %v810 = vunpack.c.h.b16 %v734
    %v811 = vunpack.c.l.b16 %v735
    %v812 = vunpack.c.h.b16 %v735
    %v813 = vunpack.c.l.b16 %v736
    %v814 = vunpack.c.h.b16 %v736
    %v815 = vunpack.c.l.b16 %v737
    %v816 = vunpack.c.h.b16 %v737
    %v817 = vunpack.c.l.b16 %v738
    %v818 = vunpack.c.h.b16 %v738
    %v819 = vunpack.c.l.b16 %v739
    %v820 = vunpack.c.h.b16 %v739
    %v821 = vunpack.c.l.b16 %v740
    %v822 = vunpack.c.h.b16 %v740
    %v823 = vunpack.c.l.b16 %v741
    %v824 = vunpack.c.h.b16 %v741
    %v825 = vunpack.c.l.b16 %v742
    %v826 = vunpack.c.h.b16 %v742
    %v827 = vunpack.c.l.b16 %v743
    %v828 = vunpack.c.h.b16 %v743
    %v829 = vunpack.c.l.b16 %v744
    %v830 = vunpack.c.h.b16 %v744
    %v831 = vunpack.c.l.b16 %v745
    %v832 = vunpack.c.h.b16 %v745
    %v833 = vunpack.c.l.b16 %v746
    %v834 = vunpack.c.h.b16 %v746
    %v835 = vunpack.c.l.b16 %v747
    %v836 = vunpack.c.h.b16 %v747
    %v837 = vunpack.c.l.b16 %v748
    %v838 = vunpack.c.h.b16 %v748
    %v839 = vunpack.c.l.b16 %v749
    %v840 = vunpack.c.h.b16 %v749
    %v841 = vunpack.c.l.b16 %v750
    %v842 = vunpack.c.h.b16 %v750
    %v843 = vunpack.c.l.b16 %v751
    %v844 = vunpack.c.h.b16 %v751
    %v845 = vunpack.c.l.b16 %v752
    %v846 = vunpack.c.h.b16 %v752
    %v847 = vunpack.c.l.b16 %v753
    %v848 = vunpack.c.h.b16 %v753
    %v849 = vunpack.c.l.b16 %v754
    %v850 = vunpack.c.h.b16 %v754
    %v851 = vpack.c.b16 %v791, %v787
    %v852 = vpack.c.b16 %v792, %v788
    %v853 = vpack.c.b16 %v793, %v789
    %v854 = vpack.c.b16 %v794, %v790
    %v855 = vpack.c.b16 %v799, %v795
    %v856 = vpack.c.b16 %v800, %v796
    %v857 = vpack.c.b16 %v801, %v797
    %v858 = vpack.c.b16 %v802, %v798
    %v859 = vpack.c.b16 %v807, %v803
    %v860 = vpack.c.b16 %v808, %v804
    %v861 = vpack.c.b16 %v809, %v805
    %v862 = vpack.c.b16 %v810, %v806
    %v863 = vpack.c.b16 %v815, %v811
    %v864 = vpack.c.b16 %v816, %v812
    %v865 = vpack.c.b16 %v817, %v813
    %v866 = vpack.c.b16 %v818, %v814
    %v867 = vpack.c.b16 %v823, %v819
    %v868 = vpack.c.b16 %v824, %v820
    %v869 = vpack.c.b16 %v825, %v821
    %v870 = vpack.c.b16 %v826, %v822
    %v871 = vpack.c.b16 %v831, %v827
    %v872 = vpack.c.b16 %v832, %v828
    %v873 = vpack.c.b16 %v833, %v829
    %v874 = vpack.c.b16 %v834, %v830
    %v875 = vpack.c.b16 %v839, %v835
    %v876 = vpack.c.b16 %v840, %v836
    %v877 = vpack.c.b16 %v841, %v837
    %v878 = vpack.c.b16 %v842, %v838
    %v879 = vpack.c.b16 %v847, %v843
    %v880 = vpack.c.b16 %v848, %v844
    %v881 = vpack.c.b16 %v849, %v845
    %v882 = vpack.c.b16 %v850, %v846
    %915 = vmatpush.bf16.msra.mxu0 %v879
    %916 = vmatpush.bf16.msra.mxu0 %v875
    %917 = vmatpush.bf16.msra.mxu0 %v871
    %918 = vmatpush.bf16.msra.mxu0 %v867
    %919 = vmatpush.bf16.msra.mxu0 %v863
    %920 = vmatpush.bf16.msra.mxu0 %v859
    %921 = vmatpush.bf16.msra.mxu0 %v855
    %922 = vmatpush.bf16.msra.mxu0 %v851
    %923 = vmatmul.bf16.gmra.mxu0 0
    %v924 = vpop.f32.mrf.mxu0
    %v925 = vadd.f32 0.0, %v924
    %v926 = vpop.f32.mrf.mxu0
    %927 = vdwg.mxu0
    %928 = vmatpush.bf16.msra.mxu0 %v880
    %929 = vmatpush.bf16.msra.mxu0 %v876
    %930 = vmatpush.bf16.msra.mxu0 %v872
    %931 = vmatpush.bf16.msra.mxu0 %v868
    %932 = vmatpush.bf16.msra.mxu0 %v864
    %933 = vmatpush.bf16.msra.mxu0 %v860
    %934 = vmatpush.bf16.msra.mxu0 %v856
    %935 = vmatpush.bf16.msra.mxu0 %v852
    %936 = vmatmul.bf16.gmra.mxu0 0
    %v937 = vpop.f32.mrf.mxu0
    %v938 = vadd.f32 0.0, %v937
    %v939 = vpop.f32.mrf.mxu0
    %940 = vdwg.mxu0
    %941 = vmatpush.bf16.msra.mxu0 %v881
    %942 = vmatpush.bf16.msra.mxu0 %v877
    %943 = vmatpush.bf16.msra.mxu0 %v873
    %944 = vmatpush.bf16.msra.mxu0 %v869
    %945 = vmatpush.bf16.msra.mxu0 %v865
    %946 = vmatpush.bf16.msra.mxu0 %v861
    %947 = vmatpush.bf16.msra.mxu0 %v857
    %948 = vmatpush.bf16.msra.mxu0 %v853
    %949 = vmatmul.bf16.gmra.mxu0 0
    %v950 = vpop.f32.mrf.mxu0
    %v951 = vadd.f32 0.0, %v950
    %v952 = vpop.f32.mrf.mxu0
    %953 = vdwg.mxu0
    %954 = vmatpush.bf16.msra.mxu0 %v882
    %955 = vmatpush.bf16.msra.mxu0 %v878
    %956 = vmatpush.bf16.msra.mxu0 %v874
    %957 = vmatpush.bf16.msra.mxu0 %v870
    %958 = vmatpush.bf16.msra.mxu0 %v866
    %959 = vmatpush.bf16.msra.mxu0 %v862
    %960 = vmatpush.bf16.msra.mxu0 %v858
    %961 = vmatpush.bf16.msra.mxu0 %v854
    %962 = vmatmul.bf16.gmra.mxu0 0
    %v963 = vpop.f32.mrf.mxu0
    %v964 = vadd.f32 0.0, %v963
    %v965 = vpop.f32.mrf.mxu0
    %966 = vdwg.mxu0
    %v967 = vadd.f32 %v719, %v925
    %v968 = vadd.f32 %v720, %v938
    %v969 = vadd.f32 %v721, %v951
    %v970 = vadd.f32 %v722, %v964
    %v971 = vxor.u32 %v967, 2147483648
    %v972 = vmul.f32 %v971, 1.442695
    %v973 = vpow.pop %v972
    %v974 = vadd.f32 %v973, 1.0
    %v975 = vrcp.pop %v974
    %v976 = vmul.f32 %v974, %v975
    %v977 = vsub.f32 1.0, %v976
    %v978 = vmul.f32 %v975, %v977
    %v979 = vadd.f32 %v975, %v978
    %vm980 = vweird.f32 %v974
    %vm981 = vweird.f32 %v975
    %vm982 = vmor %vm980, %vm981
    %v983 = vsel %vm982, %v975, %v979
    %v984 = vand.u32 2147483647, %v974
    %vm985 = vcmp.eq.f32.partialorder %v984, 8.507059e+37
    %v986 = vand.u32 %v974, 2147483648
    %v987 = vor.u32 1.1754944e-38, %v986
    %v988 = vsel %vm985, %v987, %v983
    %v989 = vmul.f32 1.0, %v988
    %v990 = vxor.u32 %v968, 2147483648
    %v991 = vmul.f32 %v990, 1.442695
    %v992 = vpow.pop %v991
    %v993 = vadd.f32 %v992, 1.0
    %v994 = vrcp.pop %v993
    %v995 = vmul.f32 %v993, %v994
    %v996 = vsub.f32 1.0, %v995
    %v997 = vmul.f32 %v994, %v996
    %v998 = vadd.f32 %v994, %v997
    %vm999 = vweird.f32 %v993
    %vm1000 = vweird.f32 %v994
    %vm1001 = vmor %vm999, %vm1000
    %v1002 = vsel %vm1001, %v994, %v998
    %v1003 = vand.u32 2147483647, %v993
    %vm1004 = vcmp.eq.f32.partialorder %v1003, 8.507059e+37
    %v1005 = vand.u32 %v993, 2147483648
    %v1006 = vor.u32 1.1754944e-38, %v1005
    %v1007 = vsel %vm1004, %v1006, %v1002
    %v1008 = vmul.f32 1.0, %v1007
    %v1009 = vtanh.pop %v969
    %v1010 = vxor.u32 %v970, 2147483648
    %v1011 = vmul.f32 %v1010, 1.442695
    %v1012 = vpow.pop %v1011
    %v1013 = vadd.f32 %v1012, 1.0
    %v1014 = vrcp.pop %v1013
    %v1015 = vmul.f32 %v1013, %v1014
    %v1016 = vsub.f32 1.0, %v1015
    %v1017 = vmul.f32 %v1014, %v1016
    %v1018 = vadd.f32 %v1014, %v1017
    %vm1019 = vweird.f32 %v1013
    %vm1020 = vweird.f32 %v1014
    %vm1021 = vmor %vm1019, %vm1020
    %v1022 = vsel %vm1021, %v1014, %v1018
    %v1023 = vand.u32 2147483647, %v1013
    %vm1024 = vcmp.eq.f32.partialorder %v1023, 8.507059e+37
    %v1025 = vand.u32 %v1013, 2147483648
    %v1026 = vor.u32 1.1754944e-38, %v1025
    %v1027 = vsel %vm1024, %v1026, %v1022
    %v1028 = vmul.f32 1.0, %v1027
    %v1029 = vmul.f32 %v1008, 0.0
    %v1030 = vmul.f32 %v989, %v1009
    %v1031 = vadd.f32 %v1029, %v1030
    %v1032 = vtanh.pop %v1031
    %v1033 = vmul.f32 %v1028, %v1032
    %v1034 = vld [vmem:[#allocation3 + $0xe0] sm:$0xff]
    %v1035 = vld [vmem:[#allocation3 + $0xe8] sm:$0xff]
    %v1036 = vld [vmem:[#allocation3 + $0xf0] sm:$0xff]
    %v1037 = vld [vmem:[#allocation3 + $0xf8] sm:$0xff]
    %v1038 = vld [vmem:[#allocation12] sm:$0xff]
    %v1039 = vld [vmem:[#allocation12 + $0x8] sm:$0xff]
    %v1040 = vld [vmem:[#allocation12 + $0x10] sm:$0xff]
    %v1041 = vld [vmem:[#allocation12 + $0x18] sm:$0xff]
    %v1042 = vld [vmem:[#allocation12 + $0x20] sm:$0xff]
    %v1043 = vld [vmem:[#allocation12 + $0x28] sm:$0xff]
    %v1044 = vld [vmem:[#allocation12 + $0x30] sm:$0xff]
    %v1045 = vld [vmem:[#allocation12 + $0x38] sm:$0xff]
    %v1046 = vld [vmem:[#allocation12 + $0x40] sm:$0xff]
    %v1047 = vld [vmem:[#allocation12 + $0x48] sm:$0xff]
    %v1048 = vld [vmem:[#allocation12 + $0x50] sm:$0xff]
    %v1049 = vld [vmem:[#allocation12 + $0x58] sm:$0xff]
    %v1050 = vld [vmem:[#allocation12 + $0x60] sm:$0xff]
    %v1051 = vld [vmem:[#allocation12 + $0x68] sm:$0xff]
    %v1052 = vld [vmem:[#allocation12 + $0x70] sm:$0xff]
    %v1053 = vld [vmem:[#allocation12 + $0x78] sm:$0xff]
    %v1054 = vld [vmem:[#allocation12 + $0x80] sm:$0xff]
    %v1055 = vld [vmem:[#allocation12 + $0x88] sm:$0xff]
    %v1056 = vld [vmem:[#allocation12 + $0x90] sm:$0xff]
    %v1057 = vld [vmem:[#allocation12 + $0x98] sm:$0xff]
    %v1058 = vld [vmem:[#allocation12 + $0xa0] sm:$0xff]
    %v1059 = vld [vmem:[#allocation12 + $0xa8] sm:$0xff]
    %v1060 = vld [vmem:[#allocation12 + $0xb0] sm:$0xff]
    %v1061 = vld [vmem:[#allocation12 + $0xb8] sm:$0xff]
    %v1062 = vld [vmem:[#allocation12 + $0xc0] sm:$0xff]
    %v1063 = vld [vmem:[#allocation12 + $0xc8] sm:$0xff]
    %v1064 = vld [vmem:[#allocation12 + $0xd0] sm:$0xff]
    %v1065 = vld [vmem:[#allocation12 + $0xd8] sm:$0xff]
    %v1066 = vld [vmem:[#allocation12 + $0xe0] sm:$0xff]
    %v1067 = vld [vmem:[#allocation12 + $0xe8] sm:$0xff]
    %v1068 = vld [vmem:[#allocation12 + $0xf0] sm:$0xff]
    %v1069 = vld [vmem:[#allocation12 + $0xf8] sm:$0xff]
    %v1102 = vunpack.c.l.b16 %v1038
    %v1103 = vunpack.c.h.b16 %v1038
    %v1104 = vunpack.c.l.b16 %v1039
    %v1105 = vunpack.c.h.b16 %v1039
    %v1106 = vunpack.c.l.b16 %v1040
    %v1107 = vunpack.c.h.b16 %v1040
    %v1108 = vunpack.c.l.b16 %v1041
    %v1109 = vunpack.c.h.b16 %v1041
    %v1110 = vunpack.c.l.b16 %v1042
    %v1111 = vunpack.c.h.b16 %v1042
    %v1112 = vunpack.c.l.b16 %v1043
    %v1113 = vunpack.c.h.b16 %v1043
    %v1114 = vunpack.c.l.b16 %v1044
    %v1115 = vunpack.c.h.b16 %v1044
    %v1116 = vunpack.c.l.b16 %v1045
    %v1117 = vunpack.c.h.b16 %v1045
    %v1118 = vunpack.c.l.b16 %v1046
    %v1119 = vunpack.c.h.b16 %v1046
    %v1120 = vunpack.c.l.b16 %v1047
    %v1121 = vunpack.c.h.b16 %v1047
    %v1122 = vunpack.c.l.b16 %v1048
    %v1123 = vunpack.c.h.b16 %v1048
    %v1124 = vunpack.c.l.b16 %v1049
    %v1125 = vunpack.c.h.b16 %v1049
    %v1126 = vunpack.c.l.b16 %v1050
    %v1127 = vunpack.c.h.b16 %v1050
    %v1128 = vunpack.c.l.b16 %v1051
    %v1129 = vunpack.c.h.b16 %v1051
    %v1130 = vunpack.c.l.b16 %v1052
    %v1131 = vunpack.c.h.b16 %v1052
    %v1132 = vunpack.c.l.b16 %v1053
    %v1133 = vunpack.c.h.b16 %v1053
    %v1134 = vunpack.c.l.b16 %v1054
    %v1135 = vunpack.c.h.b16 %v1054
    %v1136 = vunpack.c.l.b16 %v1055
    %v1137 = vunpack.c.h.b16 %v1055
    %v1138 = vunpack.c.l.b16 %v1056
    %v1139 = vunpack.c.h.b16 %v1056
    %v1140 = vunpack.c.l.b16 %v1057
    %v1141 = vunpack.c.h.b16 %v1057
    %v1142 = vunpack.c.l.b16 %v1058
    %v1143 = vunpack.c.h.b16 %v1058
    %v1144 = vunpack.c.l.b16 %v1059
    %v1145 = vunpack.c.h.b16 %v1059
    %v1146 = vunpack.c.l.b16 %v1060
    %v1147 = vunpack.c.h.b16 %v1060
    %v1148 = vunpack.c.l.b16 %v1061
    %v1149 = vunpack.c.h.b16 %v1061
    %v1150 = vunpack.c.l.b16 %v1062
    %v1151 = vunpack.c.h.b16 %v1062
    %v1152 = vunpack.c.l.b16 %v1063
    %v1153 = vunpack.c.h.b16 %v1063
    %v1154 = vunpack.c.l.b16 %v1064
    %v1155 = vunpack.c.h.b16 %v1064
    %v1156 = vunpack.c.l.b16 %v1065
    %v1157 = vunpack.c.h.b16 %v1065
    %v1158 = vunpack.c.l.b16 %v1066
    %v1159 = vunpack.c.h.b16 %v1066
    %v1160 = vunpack.c.l.b16 %v1067
    %v1161 = vunpack.c.h.b16 %v1067
    %v1162 = vunpack.c.l.b16 %v1068
    %v1163 = vunpack.c.h.b16 %v1068
    %v1164 = vunpack.c.l.b16 %v1069
    %v1165 = vunpack.c.h.b16 %v1069
    %v1166 = vpack.c.b16 %v1106, %v1102
    %v1167 = vpack.c.b16 %v1107, %v1103
    %v1168 = vpack.c.b16 %v1108, %v1104
    %v1169 = vpack.c.b16 %v1109, %v1105
    %v1170 = vpack.c.b16 %v1114, %v1110
    %v1171 = vpack.c.b16 %v1115, %v1111
    %v1172 = vpack.c.b16 %v1116, %v1112
    %v1173 = vpack.c.b16 %v1117, %v1113
    %v1174 = vpack.c.b16 %v1122, %v1118
    %v1175 = vpack.c.b16 %v1123, %v1119
    %v1176 = vpack.c.b16 %v1124, %v1120
    %v1177 = vpack.c.b16 %v1125, %v1121
    %v1178 = vpack.c.b16 %v1130, %v1126
    %v1179 = vpack.c.b16 %v1131, %v1127
    %v1180 = vpack.c.b16 %v1132, %v1128
    %v1181 = vpack.c.b16 %v1133, %v1129
    %v1182 = vpack.c.b16 %v1138, %v1134
    %v1183 = vpack.c.b16 %v1139, %v1135
    %v1184 = vpack.c.b16 %v1140, %v1136
    %v1185 = vpack.c.b16 %v1141, %v1137
    %v1186 = vpack.c.b16 %v1146, %v1142
    %v1187 = vpack.c.b16 %v1147, %v1143
    %v1188 = vpack.c.b16 %v1148, %v1144
    %v1189 = vpack.c.b16 %v1149, %v1145
    %v1190 = vpack.c.b16 %v1154, %v1150
    %v1191 = vpack.c.b16 %v1155, %v1151
    %v1192 = vpack.c.b16 %v1156, %v1152
    %v1193 = vpack.c.b16 %v1157, %v1153
    %v1194 = vpack.c.b16 %v1162, %v1158
    %v1195 = vpack.c.b16 %v1163, %v1159
    %v1196 = vpack.c.b16 %v1164, %v1160
    %v1197 = vpack.c.b16 %v1165, %v1161
    %1230 = vmatpush.bf16.msra.mxu0 %v1194
    %1231 = vmatpush.bf16.msra.mxu0 %v1190
    %1232 = vmatpush.bf16.msra.mxu0 %v1186
    %1233 = vmatpush.bf16.msra.mxu0 %v1182
    %1234 = vmatpush.bf16.msra.mxu0 %v1178
    %1235 = vmatpush.bf16.msra.mxu0 %v1174
    %1236 = vmatpush.bf16.msra.mxu0 %v1170
    %1237 = vmatpush.bf16.msra.mxu0 %v1166
    %1238 = vmatmul.bf16.gmra.mxu0 0
    %v1239 = vpop.f32.mrf.mxu0
    %v1240 = vadd.f32 0.0, %v1239
    %v1241 = vpop.f32.mrf.mxu0
    %1242 = vdwg.mxu0
    %1243 = vmatpush.bf16.msra.mxu0 %v1195
    %1244 = vmatpush.bf16.msra.mxu0 %v1191
    %1245 = vmatpush.bf16.msra.mxu0 %v1187
    %1246 = vmatpush.bf16.msra.mxu0 %v1183
    %1247 = vmatpush.bf16.msra.mxu0 %v1179
    %1248 = vmatpush.bf16.msra.mxu0 %v1175
    %1249 = vmatpush.bf16.msra.mxu0 %v1171
    %1250 = vmatpush.bf16.msra.mxu0 %v1167
    %1251 = vmatmul.bf16.gmra.mxu0 0
    %v1252 = vpop.f32.mrf.mxu0
    %v1253 = vadd.f32 0.0, %v1252
    %v1254 = vpop.f32.mrf.mxu0
    %1255 = vdwg.mxu0
    %1256 = vmatpush.bf16.msra.mxu0 %v1196
    %1257 = vmatpush.bf16.msra.mxu0 %v1192
    %1258 = vmatpush.bf16.msra.mxu0 %v1188
    %1259 = vmatpush.bf16.msra.mxu0 %v1184
    %1260 = vmatpush.bf16.msra.mxu0 %v1180
    %1261 = vmatpush.bf16.msra.mxu0 %v1176
    %1262 = vmatpush.bf16.msra.mxu0 %v1172
    %1263 = vmatpush.bf16.msra.mxu0 %v1168
    %1264 = vmatmul.bf16.gmra.mxu0 0
    %v1265 = vpop.f32.mrf.mxu0
    %v1266 = vadd.f32 0.0, %v1265
    %v1267 = vpop.f32.mrf.mxu0
    %1268 = vdwg.mxu0
    %1269 = vmatpush.bf16.msra.mxu0 %v1197
    %1270 = vmatpush.bf16.msra.mxu0 %v1193
    %1271 = vmatpush.bf16.msra.mxu0 %v1189
    %1272 = vmatpush.bf16.msra.mxu0 %v1185
    %1273 = vmatpush.bf16.msra.mxu0 %v1181
    %1274 = vmatpush.bf16.msra.mxu0 %v1177
    %1275 = vmatpush.bf16.msra.mxu0 %v1173
    %1276 = vmatpush.bf16.msra.mxu0 %v1169
    %1277 = vmatmul.bf16.gmra.mxu0 0
    %v1278 = vpop.f32.mrf.mxu0
    %v1279 = vadd.f32 0.0, %v1278
    %v1280 = vpop.f32.mrf.mxu0
    %1281 = vdwg.mxu0
    %v1282 = vadd.f32 %v1034, %v1240
    %v1283 = vadd.f32 %v1035, %v1253
    %v1284 = vadd.f32 %v1036, %v1266
    %v1285 = vadd.f32 %v1037, %v1279
    %v1286 = vxor.u32 %v1282, 2147483648
    %v1287 = vmul.f32 %v1286, 1.442695
    %v1288 = vpow.pop %v1287
    %v1289 = vadd.f32 %v1288, 1.0
    %v1290 = vrcp.pop %v1289
    %v1291 = vmul.f32 %v1289, %v1290
    %v1292 = vsub.f32 1.0, %v1291
    %v1293 = vmul.f32 %v1290, %v1292
    %v1294 = vadd.f32 %v1290, %v1293
    %vm1295 = vweird.f32 %v1289
    %vm1296 = vweird.f32 %v1290
    %vm1297 = vmor %vm1295, %vm1296
    %v1298 = vsel %vm1297, %v1290, %v1294
    %v1299 = vand.u32 2147483647, %v1289
    %vm1300 = vcmp.eq.f32.partialorder %v1299, 8.507059e+37
    %v1301 = vand.u32 %v1289, 2147483648
    %v1302 = vor.u32 1.1754944e-38, %v1301
    %v1303 = vsel %vm1300, %v1302, %v1298
    %v1304 = vmul.f32 1.0, %v1303
    %v1305 = vxor.u32 %v1283, 2147483648
    %v1306 = vmul.f32 %v1305, 1.442695
    %v1307 = vpow.pop %v1306
    %v1308 = vadd.f32 %v1307, 1.0
    %v1309 = vrcp.pop %v1308
    %v1310 = vmul.f32 %v1308, %v1309
    %v1311 = vsub.f32 1.0, %v1310
    %v1312 = vmul.f32 %v1309, %v1311
    %v1313 = vadd.f32 %v1309, %v1312
    %vm1314 = vweird.f32 %v1308
    %vm1315 = vweird.f32 %v1309
    %vm1316 = vmor %vm1314, %vm1315
    %v1317 = vsel %vm1316, %v1309, %v1313
    %v1318 = vand.u32 2147483647, %v1308
    %vm1319 = vcmp.eq.f32.partialorder %v1318, 8.507059e+37
    %v1320 = vand.u32 %v1308, 2147483648
    %v1321 = vor.u32 1.1754944e-38, %v1320
    %v1322 = vsel %vm1319, %v1321, %v1317
    %v1323 = vmul.f32 1.0, %v1322
    %v1324 = vtanh.pop %v1284
    %v1325 = vxor.u32 %v1285, 2147483648
    %v1326 = vmul.f32 %v1325, 1.442695
    %v1327 = vpow.pop %v1326
    %v1328 = vadd.f32 %v1327, 1.0
    %v1329 = vrcp.pop %v1328
    %v1330 = vmul.f32 %v1328, %v1329
    %v1331 = vsub.f32 1.0, %v1330
    %v1332 = vmul.f32 %v1329, %v1331
    %v1333 = vadd.f32 %v1329, %v1332
    %vm1334 = vweird.f32 %v1328
    %vm1335 = vweird.f32 %v1329
    %vm1336 = vmor %vm1334, %vm1335
    %v1337 = vsel %vm1336, %v1329, %v1333
    %v1338 = vand.u32 2147483647, %v1328
    %vm1339 = vcmp.eq.f32.partialorder %v1338, 8.507059e+37
    %v1340 = vand.u32 %v1328, 2147483648
    %v1341 = vor.u32 1.1754944e-38, %v1340
    %v1342 = vsel %vm1339, %v1341, %v1337
    %v1343 = vmul.f32 1.0, %v1342
    %v1344 = vmul.f32 %v1323, 0.0
    %v1345 = vmul.f32 %v1304, %v1324
    %v1346 = vadd.f32 %v1344, %v1345
    %v1347 = vtanh.pop %v1346
    %v1348 = vmul.f32 %v1343, %v1347
    %1349 = vst [vmem:[#allocation4] sm:$0xff] %v1033
    %1350 = vst [vmem:[#allocation4 + $0x78] sm:$0xff] %v1348
    %v1351 = vld [vmem:[#allocation2 + $0x20] sm:$0xff]
    %v1352 = vld [vmem:[#allocation2 + $0x28] sm:$0xff]
    %v1353 = vld [vmem:[#allocation2 + $0x30] sm:$0xff]
    %v1354 = vld [vmem:[#allocation2 + $0x38] sm:$0xff]
    %v1355 = vpack.c.bf16 %v1033, %v1033
    %v1356 = vld [vmem:[#allocation6] sm:$0xff]
    %v1357 = vld [vmem:[#allocation6 + $0x8] sm:$0xff]
    %v1358 = vld [vmem:[#allocation6 + $0x10] sm:$0xff]
    %v1359 = vld [vmem:[#allocation6 + $0x18] sm:$0xff]
    %v1360 = vld [vmem:[#allocation6 + $0x20] sm:$0xff]
    %v1361 = vld [vmem:[#allocation6 + $0x28] sm:$0xff]
    %v1362 = vld [vmem:[#allocation6 + $0x30] sm:$0xff]
    %v1363 = vld [vmem:[#allocation6 + $0x38] sm:$0xff]
    %v1364 = vld [vmem:[#allocation6 + $0x40] sm:$0xff]
    %v1365 = vld [vmem:[#allocation6 + $0x48] sm:$0xff]
    %v1366 = vld [vmem:[#allocation6 + $0x50] sm:$0xff]
    %v1367 = vld [vmem:[#allocation6 + $0x58] sm:$0xff]
    %v1368 = vld [vmem:[#allocation6 + $0x60] sm:$0xff]
    %v1369 = vld [vmem:[#allocation6 + $0x68] sm:$0xff]
    %v1370 = vld [vmem:[#allocation6 + $0x70] sm:$0xff]
    %v1371 = vld [vmem:[#allocation6 + $0x78] sm:$0xff]
    %v1372 = vld [vmem:[#allocation6 + $0x80] sm:$0xff]
    %v1373 = vld [vmem:[#allocation6 + $0x88] sm:$0xff]
    %v1374 = vld [vmem:[#allocation6 + $0x90] sm:$0xff]
    %v1375 = vld [vmem:[#allocation6 + $0x98] sm:$0xff]
    %v1376 = vld [vmem:[#allocation6 + $0xa0] sm:$0xff]
    %v1377 = vld [vmem:[#allocation6 + $0xa8] sm:$0xff]
    %v1378 = vld [vmem:[#allocation6 + $0xb0] sm:$0xff]
    %v1379 = vld [vmem:[#allocation6 + $0xb8] sm:$0xff]
    %v1380 = vld [vmem:[#allocation6 + $0xc0] sm:$0xff]
    %v1381 = vld [vmem:[#allocation6 + $0xc8] sm:$0xff]
    %v1382 = vld [vmem:[#allocation6 + $0xd0] sm:$0xff]
    %v1383 = vld [vmem:[#allocation6 + $0xd8] sm:$0xff]
    %v1384 = vld [vmem:[#allocation6 + $0xe0] sm:$0xff]
    %v1385 = vld [vmem:[#allocation6 + $0xe8] sm:$0xff]
    %v1386 = vld [vmem:[#allocation6 + $0xf0] sm:$0xff]
    %v1387 = vld [vmem:[#allocation6 + $0xf8] sm:$0xff]
    %v1420 = vunpack.c.l.b16 %v1356
    %v1421 = vunpack.c.h.b16 %v1356
    %v1422 = vunpack.c.l.b16 %v1357
    %v1423 = vunpack.c.h.b16 %v1357
    %v1424 = vunpack.c.l.b16 %v1358
    %v1425 = vunpack.c.h.b16 %v1358
    %v1426 = vunpack.c.l.b16 %v1359
    %v1427 = vunpack.c.h.b16 %v1359
    %v1428 = vunpack.c.l.b16 %v1360
    %v1429 = vunpack.c.h.b16 %v1360
    %v1430 = vunpack.c.l.b16 %v1361
    %v1431 = vunpack.c.h.b16 %v1361
    %v1432 = vunpack.c.l.b16 %v1362
    %v1433 = vunpack.c.h.b16 %v1362
    %v1434 = vunpack.c.l.b16 %v1363
    %v1435 = vunpack.c.h.b16 %v1363
    %v1436 = vunpack.c.l.b16 %v1364
    %v1437 = vunpack.c.h.b16 %v1364
    %v1438 = vunpack.c.l.b16 %v1365
    %v1439 = vunpack.c.h.b16 %v1365
    %v1440 = vunpack.c.l.b16 %v1366
    %v1441 = vunpack.c.h.b16 %v1366
    %v1442 = vunpack.c.l.b16 %v1367
    %v1443 = vunpack.c.h.b16 %v1367
    %v1444 = vunpack.c.l.b16 %v1368
    %v1445 = vunpack.c.h.b16 %v1368
    %v1446 = vunpack.c.l.b16 %v1369
    %v1447 = vunpack.c.h.b16 %v1369
    %v1448 = vunpack.c.l.b16 %v1370
    %v1449 = vunpack.c.h.b16 %v1370
    %v1450 = vunpack.c.l.b16 %v1371
    %v1451 = vunpack.c.h.b16 %v1371
    %v1452 = vunpack.c.l.b16 %v1372
    %v1453 = vunpack.c.h.b16 %v1372
    %v1454 = vunpack.c.l.b16 %v1373
    %v1455 = vunpack.c.h.b16 %v1373
    %v1456 = vunpack.c.l.b16 %v1374
    %v1457 = vunpack.c.h.b16 %v1374
    %v1458 = vunpack.c.l.b16 %v1375
    %v1459 = vunpack.c.h.b16 %v1375
    %v1460 = vunpack.c.l.b16 %v1376
    %v1461 = vunpack.c.h.b16 %v1376
    %v1462 = vunpack.c.l.b16 %v1377
    %v1463 = vunpack.c.h.b16 %v1377
    %v1464 = vunpack.c.l.b16 %v1378
    %v1465 = vunpack.c.h.b16 %v1378
    %v1466 = vunpack.c.l.b16 %v1379
    %v1467 = vunpack.c.h.b16 %v1379
    %v1468 = vunpack.c.l.b16 %v1380
    %v1469 = vunpack.c.h.b16 %v1380
    %v1470 = vunpack.c.l.b16 %v1381
    %v1471 = vunpack.c.h.b16 %v1381
    %v1472 = vunpack.c.l.b16 %v1382
    %v1473 = vunpack.c.h.b16 %v1382
    %v1474 = vunpack.c.l.b16 %v1383
    %v1475 = vunpack.c.h.b16 %v1383
    %v1476 = vunpack.c.l.b16 %v1384
    %v1477 = vunpack.c.h.b16 %v1384
    %v1478 = vunpack.c.l.b16 %v1385
    %v1479 = vunpack.c.h.b16 %v1385
    %v1480 = vunpack.c.l.b16 %v1386
    %v1481 = vunpack.c.h.b16 %v1386
    %v1482 = vunpack.c.l.b16 %v1387
    %v1483 = vunpack.c.h.b16 %v1387
    %v1484 = vpack.c.b16 %v1424, %v1420
    %v1485 = vpack.c.b16 %v1425, %v1421
    %v1486 = vpack.c.b16 %v1426, %v1422
    %v1487 = vpack.c.b16 %v1427, %v1423
    %v1488 = vpack.c.b16 %v1432, %v1428
    %v1489 = vpack.c.b16 %v1433, %v1429
    %v1490 = vpack.c.b16 %v1434, %v1430
    %v1491 = vpack.c.b16 %v1435, %v1431
    %v1492 = vpack.c.b16 %v1440, %v1436
    %v1493 = vpack.c.b16 %v1441, %v1437
    %v1494 = vpack.c.b16 %v1442, %v1438
    %v1495 = vpack.c.b16 %v1443, %v1439
    %v1496 = vpack.c.b16 %v1448, %v1444
    %v1497 = vpack.c.b16 %v1449, %v1445
    %v1498 = vpack.c.b16 %v1450, %v1446
    %v1499 = vpack.c.b16 %v1451, %v1447
    %v1500 = vpack.c.b16 %v1456, %v1452
    %v1501 = vpack.c.b16 %v1457, %v1453
    %v1502 = vpack.c.b16 %v1458, %v1454
    %v1503 = vpack.c.b16 %v1459, %v1455
    %v1504 = vpack.c.b16 %v1464, %v1460
    %v1505 = vpack.c.b16 %v1465, %v1461
    %v1506 = vpack.c.b16 %v1466, %v1462
    %v1507 = vpack.c.b16 %v1467, %v1463
    %v1508 = vpack.c.b16 %v1472, %v1468
    %v1509 = vpack.c.b16 %v1473, %v1469
    %v1510 = vpack.c.b16 %v1474, %v1470
    %v1511 = vpack.c.b16 %v1475, %v1471
    %v1512 = vpack.c.b16 %v1480, %v1476
    %v1513 = vpack.c.b16 %v1481, %v1477
    %v1514 = vpack.c.b16 %v1482, %v1478
    %v1515 = vpack.c.b16 %v1483, %v1479
    %1548 = vmatpush.bf16.msra.mxu0 %v1512
    %1549 = vmatpush.bf16.msra.mxu0 %v1508
    %1550 = vmatpush.bf16.msra.mxu0 %v1504
    %1551 = vmatpush.bf16.msra.mxu0 %v1500
    %1552 = vmatpush.bf16.msra.mxu0 %v1496
    %1553 = vmatpush.bf16.msra.mxu0 %v1492
    %1554 = vmatpush.bf16.msra.mxu0 %v1488
    %1555 = vmatpush.bf16.msra.mxu0 %v1484
    %1556 = vmatmul.bf16.gmra.mxu0 %v1355
    %v1557 = vpop.f32.mrf.mxu0
    %v1558 = vadd.f32 0.0, %v1557
    %v1559 = vpop.f32.mrf.mxu0
    %1560 = vdwg.mxu0
    %1561 = vmatpush.bf16.msra.mxu0 %v1513
    %1562 = vmatpush.bf16.msra.mxu0 %v1509
    %1563 = vmatpush.bf16.msra.mxu0 %v1505
    %1564 = vmatpush.bf16.msra.mxu0 %v1501
    %1565 = vmatpush.bf16.msra.mxu0 %v1497
    %1566 = vmatpush.bf16.msra.mxu0 %v1493
    %1567 = vmatpush.bf16.msra.mxu0 %v1489
    %1568 = vmatpush.bf16.msra.mxu0 %v1485
    %1569 = vmatmul.bf16.gmra.mxu0 %v1355
    %v1570 = vpop.f32.mrf.mxu0
    %v1571 = vadd.f32 0.0, %v1570
    %v1572 = vpop.f32.mrf.mxu0
    %1573 = vdwg.mxu0
    %1574 = vmatpush.bf16.msra.mxu0 %v1514
    %1575 = vmatpush.bf16.msra.mxu0 %v1510
    %1576 = vmatpush.bf16.msra.mxu0 %v1506
    %1577 = vmatpush.bf16.msra.mxu0 %v1502
    %1578 = vmatpush.bf16.msra.mxu0 %v1498
    %1579 = vmatpush.bf16.msra.mxu0 %v1494
    %1580 = vmatpush.bf16.msra.mxu0 %v1490
    %1581 = vmatpush.bf16.msra.mxu0 %v1486
    %1582 = vmatmul.bf16.gmra.mxu0 %v1355
    %v1583 = vpop.f32.mrf.mxu0
    %v1584 = vadd.f32 0.0, %v1583
    %v1585 = vpop.f32.mrf.mxu0
    %1586 = vdwg.mxu0
    %1587 = vmatpush.bf16.msra.mxu0 %v1515
    %1588 = vmatpush.bf16.msra.mxu0 %v1511
    %1589 = vmatpush.bf16.msra.mxu0 %v1507
    %1590 = vmatpush.bf16.msra.mxu0 %v1503
    %1591 = vmatpush.bf16.msra.mxu0 %v1499
    %1592 = vmatpush.bf16.msra.mxu0 %v1495
    %1593 = vmatpush.bf16.msra.mxu0 %v1491
    %1594 = vmatpush.bf16.msra.mxu0 %v1487
    %1595 = vmatmul.bf16.gmra.mxu0 %v1355
    %v1596 = vpop.f32.mrf.mxu0
    %v1597 = vadd.f32 0.0, %v1596
    %v1598 = vpop.f32.mrf.mxu0
    %1599 = vdwg.mxu0
    %v1600 = vadd.f32 %v1351, %v1558
    %v1601 = vadd.f32 %v1352, %v1571
    %v1602 = vadd.f32 %v1353, %v1584
    %v1603 = vadd.f32 %v1354, %v1597
    %v1604 = vxor.u32 %v1600, 2147483648
    %v1605 = vmul.f32 %v1604, 1.442695
    %v1606 = vpow.pop %v1605
    %v1607 = vadd.f32 %v1606, 1.0
    %v1608 = vrcp.pop %v1607
    %v1609 = vmul.f32 %v1607, %v1608
    %v1610 = vsub.f32 1.0, %v1609
    %v1611 = vmul.f32 %v1608, %v1610
    %v1612 = vadd.f32 %v1608, %v1611
    %vm1613 = vweird.f32 %v1607
    %vm1614 = vweird.f32 %v1608
    %vm1615 = vmor %vm1613, %vm1614
    %v1616 = vsel %vm1615, %v1608, %v1612
    %v1617 = vand.u32 2147483647, %v1607
    %vm1618 = vcmp.eq.f32.partialorder %v1617, 8.507059e+37
    %v1619 = vand.u32 %v1607, 2147483648
    %v1620 = vor.u32 1.1754944e-38, %v1619
    %v1621 = vsel %vm1618, %v1620, %v1616
    %v1622 = vmul.f32 1.0, %v1621
    %v1623 = vxor.u32 %v1601, 2147483648
    %v1624 = vmul.f32 %v1623, 1.442695
    %v1625 = vpow.pop %v1624
    %v1626 = vadd.f32 %v1625, 1.0
    %v1627 = vrcp.pop %v1626
    %v1628 = vmul.f32 %v1626, %v1627
    %v1629 = vsub.f32 1.0, %v1628
    %v1630 = vmul.f32 %v1627, %v1629
    %v1631 = vadd.f32 %v1627, %v1630
    %vm1632 = vweird.f32 %v1626
    %vm1633 = vweird.f32 %v1627
    %vm1634 = vmor %vm1632, %vm1633
    %v1635 = vsel %vm1634, %v1627, %v1631
    %v1636 = vand.u32 2147483647, %v1626
    %vm1637 = vcmp.eq.f32.partialorder %v1636, 8.507059e+37
    %v1638 = vand.u32 %v1626, 2147483648
    %v1639 = vor.u32 1.1754944e-38, %v1638
    %v1640 = vsel %vm1637, %v1639, %v1635
    %v1641 = vmul.f32 1.0, %v1640
    %v1642 = vtanh.pop %v1602
    %v1643 = vxor.u32 %v1603, 2147483648
    %v1644 = vmul.f32 %v1643, 1.442695
    %v1645 = vpow.pop %v1644
    %v1646 = vadd.f32 %v1645, 1.0
    %v1647 = vrcp.pop %v1646
    %v1648 = vmul.f32 %v1646, %v1647
    %v1649 = vsub.f32 1.0, %v1648
    %v1650 = vmul.f32 %v1647, %v1649
    %v1651 = vadd.f32 %v1647, %v1650
    %vm1652 = vweird.f32 %v1646
    %vm1653 = vweird.f32 %v1647
    %vm1654 = vmor %vm1652, %vm1653
    %v1655 = vsel %vm1654, %v1647, %v1651
    %v1656 = vand.u32 2147483647, %v1646
    %vm1657 = vcmp.eq.f32.partialorder %v1656, 8.507059e+37
    %v1658 = vand.u32 %v1646, 2147483648
    %v1659 = vor.u32 1.1754944e-38, %v1658
    %v1660 = vsel %vm1657, %v1659, %v1655
    %v1661 = vmul.f32 1.0, %v1660
    %v1662 = vmul.f32 %v1641, %v1031
    %v1663 = vmul.f32 %v1622, %v1642
    %v1664 = vadd.f32 %v1662, %v1663
    %v1665 = vtanh.pop %v1664
    %v1666 = vmul.f32 %v1661, %v1665
    %v1667 = vld [vmem:[#allocation3 + $0xc0] sm:$0xff]
    %v1668 = vld [vmem:[#allocation3 + $0xc8] sm:$0xff]
    %v1669 = vld [vmem:[#allocation3 + $0xd0] sm:$0xff]
    %v1670 = vld [vmem:[#allocation3 + $0xd8] sm:$0xff]
    %v1671 = vpack.c.bf16 %v1348, %v1348
    %v1672 = vld [vmem:[#allocation12] sm:$0xff]
    %v1673 = vld [vmem:[#allocation12 + $0x8] sm:$0xff]
    %v1674 = vld [vmem:[#allocation12 + $0x10] sm:$0xff]
    %v1675 = vld [vmem:[#allocation12 + $0x18] sm:$0xff]
    %v1676 = vld [vmem:[#allocation12 + $0x20] sm:$0xff]
    %v1677 = vld [vmem:[#allocation12 + $0x28] sm:$0xff]
    %v1678 = vld [vmem:[#allocation12 + $0x30] sm:$0xff]
    %v1679 = vld [vmem:[#allocation12 + $0x38] sm:$0xff]
    %v1680 = vld [vmem:[#allocation12 + $0x40] sm:$0xff]
    %v1681 = vld [vmem:[#allocation12 + $0x48] sm:$0xff]
    %v1682 = vld [vmem:[#allocation12 + $0x50] sm:$0xff]
    %v1683 = vld [vmem:[#allocation12 + $0x58] sm:$0xff]
    %v1684 = vld [vmem:[#allocation12 + $0x60] sm:$0xff]
    %v1685 = vld [vmem:[#allocation12 + $0x68] sm:$0xff]
    %v1686 = vld [vmem:[#allocation12 + $0x70] sm:$0xff]
    %v1687 = vld [vmem:[#allocation12 + $0x78] sm:$0xff]
    %v1688 = vld [vmem:[#allocation12 + $0x80] sm:$0xff]
    %v1689 = vld [vmem:[#allocation12 + $0x88] sm:$0xff]
    %v1690 = vld [vmem:[#allocation12 + $0x90] sm:$0xff]
    %v1691 = vld [vmem:[#allocation12 + $0x98] sm:$0xff]
    %v1692 = vld [vmem:[#allocation12 + $0xa0] sm:$0xff]
    %v1693 = vld [vmem:[#allocation12 + $0xa8] sm:$0xff]
    %v1694 = vld [vmem:[#allocation12 + $0xb0] sm:$0xff]
    %v1695 = vld [vmem:[#allocation12 + $0xb8] sm:$0xff]
    %v1696 = vld [vmem:[#allocation12 + $0xc0] sm:$0xff]
    %v1697 = vld [vmem:[#allocation12 + $0xc8] sm:$0xff]
    %v1698 = vld [vmem:[#allocation12 + $0xd0] sm:$0xff]
    %v1699 = vld [vmem:[#allocation12 + $0xd8] sm:$0xff]
    %v1700 = vld [vmem:[#allocation12 + $0xe0] sm:$0xff]
    %v1701 = vld [vmem:[#allocation12 + $0xe8] sm:$0xff]
    %v1702 = vld [vmem:[#allocation12 + $0xf0] sm:$0xff]
    %v1703 = vld [vmem:[#allocation12 + $0xf8] sm:$0xff]
    %v1736 = vunpack.c.l.b16 %v1672
    %v1737 = vunpack.c.h.b16 %v1672
    %v1738 = vunpack.c.l.b16 %v1673
    %v1739 = vunpack.c.h.b16 %v1673
    %v1740 = vunpack.c.l.b16 %v1674
    %v1741 = vunpack.c.h.b16 %v1674
    %v1742 = vunpack.c.l.b16 %v1675
    %v1743 = vunpack.c.h.b16 %v1675
    %v1744 = vunpack.c.l.b16 %v1676
    %v1745 = vunpack.c.h.b16 %v1676
    %v1746 = vunpack.c.l.b16 %v1677
    %v1747 = vunpack.c.h.b16 %v1677
    %v1748 = vunpack.c.l.b16 %v1678
    %v1749 = vunpack.c.h.b16 %v1678
    %v1750 = vunpack.c.l.b16 %v1679
    %v1751 = vunpack.c.h.b16 %v1679
    %v1752 = vunpack.c.l.b16 %v1680
    %v1753 = vunpack.c.h.b16 %v1680
    %v1754 = vunpack.c.l.b16 %v1681
    %v1755 = vunpack.c.h.b16 %v1681
    %v1756 = vunpack.c.l.b16 %v1682
    %v1757 = vunpack.c.h.b16 %v1682
    %v1758 = vunpack.c.l.b16 %v1683
    %v1759 = vunpack.c.h.b16 %v1683
    %v1760 = vunpack.c.l.b16 %v1684
    %v1761 = vunpack.c.h.b16 %v1684
    %v1762 = vunpack.c.l.b16 %v1685
    %v1763 = vunpack.c.h.b16 %v1685
    %v1764 = vunpack.c.l.b16 %v1686
    %v1765 = vunpack.c.h.b16 %v1686
    %v1766 = vunpack.c.l.b16 %v1687
    %v1767 = vunpack.c.h.b16 %v1687
    %v1768 = vunpack.c.l.b16 %v1688
    %v1769 = vunpack.c.h.b16 %v1688
    %v1770 = vunpack.c.l.b16 %v1689
    %v1771 = vunpack.c.h.b16 %v1689
    %v1772 = vunpack.c.l.b16 %v1690
    %v1773 = vunpack.c.h.b16 %v1690
    %v1774 = vunpack.c.l.b16 %v1691
    %v1775 = vunpack.c.h.b16 %v1691
    %v1776 = vunpack.c.l.b16 %v1692
    %v1777 = vunpack.c.h.b16 %v1692
    %v1778 = vunpack.c.l.b16 %v1693
    %v1779 = vunpack.c.h.b16 %v1693
    %v1780 = vunpack.c.l.b16 %v1694
    %v1781 = vunpack.c.h.b16 %v1694
    %v1782 = vunpack.c.l.b16 %v1695
    %v1783 = vunpack.c.h.b16 %v1695
    %v1784 = vunpack.c.l.b16 %v1696
    %v1785 = vunpack.c.h.b16 %v1696
    %v1786 = vunpack.c.l.b16 %v1697
    %v1787 = vunpack.c.h.b16 %v1697
    %v1788 = vunpack.c.l.b16 %v1698
    %v1789 = vunpack.c.h.b16 %v1698
    %v1790 = vunpack.c.l.b16 %v1699
    %v1791 = vunpack.c.h.b16 %v1699
    %v1792 = vunpack.c.l.b16 %v1700
    %v1793 = vunpack.c.h.b16 %v1700
    %v1794 = vunpack.c.l.b16 %v1701
    %v1795 = vunpack.c.h.b16 %v1701
    %v1796 = vunpack.c.l.b16 %v1702
    %v1797 = vunpack.c.h.b16 %v1702
    %v1798 = vunpack.c.l.b16 %v1703
    %v1799 = vunpack.c.h.b16 %v1703
    %v1800 = vpack.c.b16 %v1740, %v1736
    %v1801 = vpack.c.b16 %v1741, %v1737
    %v1802 = vpack.c.b16 %v1742, %v1738
    %v1803 = vpack.c.b16 %v1743, %v1739
    %v1804 = vpack.c.b16 %v1748, %v1744
    %v1805 = vpack.c.b16 %v1749, %v1745
    %v1806 = vpack.c.b16 %v1750, %v1746
    %v1807 = vpack.c.b16 %v1751, %v1747
    %v1808 = vpack.c.b16 %v1756, %v1752
    %v1809 = vpack.c.b16 %v1757, %v1753
    %v1810 = vpack.c.b16 %v1758, %v1754
    %v1811 = vpack.c.b16 %v1759, %v1755
    %v1812 = vpack.c.b16 %v1764, %v1760
    %v1813 = vpack.c.b16 %v1765, %v1761
    %v1814 = vpack.c.b16 %v1766, %v1762
    %v1815 = vpack.c.b16 %v1767, %v1763
    %v1816 = vpack.c.b16 %v1772, %v1768
    %v1817 = vpack.c.b16 %v1773, %v1769
    %v1818 = vpack.c.b16 %v1774, %v1770
    %v1819 = vpack.c.b16 %v1775, %v1771
    %v1820 = vpack.c.b16 %v1780, %v1776
    %v1821 = vpack.c.b16 %v1781, %v1777
    %v1822 = vpack.c.b16 %v1782, %v1778
    %v1823 = vpack.c.b16 %v1783, %v1779
    %v1824 = vpack.c.b16 %v1788, %v1784
    %v1825 = vpack.c.b16 %v1789, %v1785
    %v1826 = vpack.c.b16 %v1790, %v1786
    %v1827 = vpack.c.b16 %v1791, %v1787
    %v1828 = vpack.c.b16 %v1796, %v1792
    %v1829 = vpack.c.b16 %v1797, %v1793
    %v1830 = vpack.c.b16 %v1798, %v1794
    %v1831 = vpack.c.b16 %v1799, %v1795
    %1864 = vmatpush.bf16.msra.mxu0 %v1828
    %1865 = vmatpush.bf16.msra.mxu0 %v1824
    %1866 = vmatpush.bf16.msra.mxu0 %v1820
    %1867 = vmatpush.bf16.msra.mxu0 %v1816
    %1868 = vmatpush.bf16.msra.mxu0 %v1812
    %1869 = vmatpush.bf16.msra.mxu0 %v1808
    %1870 = vmatpush.bf16.msra.mxu0 %v1804
    %1871 = vmatpush.bf16.msra.mxu0 %v1800
    %1872 = vmatmul.bf16.gmra.mxu0 %v1671
    %v1873 = vpop.f32.mrf.mxu0
    %v1874 = vadd.f32 0.0, %v1873
    %v1875 = vpop.f32.mrf.mxu0
    %1876 = vdwg.mxu0
    %1877 = vmatpush.bf16.msra.mxu0 %v1829
    %1878 = vmatpush.bf16.msra.mxu0 %v1825
    %1879 = vmatpush.bf16.msra.mxu0 %v1821
    %1880 = vmatpush.bf16.msra.mxu0 %v1817
    %1881 = vmatpush.bf16.msra.mxu0 %v1813
    %1882 = vmatpush.bf16.msra.mxu0 %v1809
    %1883 = vmatpush.bf16.msra.mxu0 %v1805
    %1884 = vmatpush.bf16.msra.mxu0 %v1801
    %1885 = vmatmul.bf16.gmra.mxu0 %v1671
    %v1886 = vpop.f32.mrf.mxu0
    %v1887 = vadd.f32 0.0, %v1886
    %v1888 = vpop.f32.mrf.mxu0
    %1889 = vdwg.mxu0
    %1890 = vmatpush.bf16.msra.mxu0 %v1830
    %1891 = vmatpush.bf16.msra.mxu0 %v1826
    %1892 = vmatpush.bf16.msra.mxu0 %v1822
    %1893 = vmatpush.bf16.msra.mxu0 %v1818
    %1894 = vmatpush.bf16.msra.mxu0 %v1814
    %1895 = vmatpush.bf16.msra.mxu0 %v1810
    %1896 = vmatpush.bf16.msra.mxu0 %v1806
    %1897 = vmatpush.bf16.msra.mxu0 %v1802
    %1898 = vmatmul.bf16.gmra.mxu0 %v1671
    %v1899 = vpop.f32.mrf.mxu0
    %v1900 = vadd.f32 0.0, %v1899
    %v1901 = vpop.f32.mrf.mxu0
    %1902 = vdwg.mxu0
    %1903 = vmatpush.bf16.msra.mxu0 %v1831
    %1904 = vmatpush.bf16.msra.mxu0 %v1827
    %1905 = vmatpush.bf16.msra.mxu0 %v1823
    %1906 = vmatpush.bf16.msra.mxu0 %v1819
    %1907 = vmatpush.bf16.msra.mxu0 %v1815
    %1908 = vmatpush.bf16.msra.mxu0 %v1811
    %1909 = vmatpush.bf16.msra.mxu0 %v1807
    %1910 = vmatpush.bf16.msra.mxu0 %v1803
    %1911 = vmatmul.bf16.gmra.mxu0 %v1671
    %v1912 = vpop.f32.mrf.mxu0
    %v1913 = vadd.f32 0.0, %v1912
    %v1914 = vpop.f32.mrf.mxu0
    %1915 = vdwg.mxu0
    %v1916 = vadd.f32 %v1667, %v1874
    %v1917 = vadd.f32 %v1668, %v1887
    %v1918 = vadd.f32 %v1669, %v1900
    %v1919 = vadd.f32 %v1670, %v1913
    %v1920 = vxor.u32 %v1916, 2147483648
    %v1921 = vmul.f32 %v1920, 1.442695
    %v1922 = vpow.pop %v1921
    %v1923 = vadd.f32 %v1922, 1.0
    %v1924 = vrcp.pop %v1923
    %v1925 = vmul.f32 %v1923, %v1924
    %v1926 = vsub.f32 1.0, %v1925
    %v1927 = vmul.f32 %v1924, %v1926
    %v1928 = vadd.f32 %v1924, %v1927
    %vm1929 = vweird.f32 %v1923
    %vm1930 = vweird.f32 %v1924
    %vm1931 = vmor %vm1929, %vm1930
    %v1932 = vsel %vm1931, %v1924, %v1928
    %v1933 = vand.u32 2147483647, %v1923
    %vm1934 = vcmp.eq.f32.partialorder %v1933, 8.507059e+37
    %v1935 = vand.u32 %v1923, 2147483648
    %v1936 = vor.u32 1.1754944e-38, %v1935
    %v1937 = vsel %vm1934, %v1936, %v1932
    %v1938 = vmul.f32 1.0, %v1937
    %v1939 = vxor.u32 %v1917, 2147483648
    %v1940 = vmul.f32 %v1939, 1.442695
    %v1941 = vpow.pop %v1940
    %v1942 = vadd.f32 %v1941, 1.0
    %v1943 = vrcp.pop %v1942
    %v1944 = vmul.f32 %v1942, %v1943
    %v1945 = vsub.f32 1.0, %v1944
    %v1946 = vmul.f32 %v1943, %v1945
    %v1947 = vadd.f32 %v1943, %v1946
    %vm1948 = vweird.f32 %v1942
    %vm1949 = vweird.f32 %v1943
    %vm1950 = vmor %vm1948, %vm1949
    %v1951 = vsel %vm1950, %v1943, %v1947
    %v1952 = vand.u32 2147483647, %v1942
    %vm1953 = vcmp.eq.f32.partialorder %v1952, 8.507059e+37
    %v1954 = vand.u32 %v1942, 2147483648
    %v1955 = vor.u32 1.1754944e-38, %v1954
    %v1956 = vsel %vm1953, %v1955, %v1951
    %v1957 = vmul.f32 1.0, %v1956
    %v1958 = vtanh.pop %v1918
    %v1959 = vxor.u32 %v1919, 2147483648
    %v1960 = vmul.f32 %v1959, 1.442695
    %v1961 = vpow.pop %v1960
    %v1962 = vadd.f32 %v1961, 1.0
    %v1963 = vrcp.pop %v1962
    %v1964 = vmul.f32 %v1962, %v1963
    %v1965 = vsub.f32 1.0, %v1964
    %v1966 = vmul.f32 %v1963, %v1965
    %v1967 = vadd.f32 %v1963, %v1966
    %vm1968 = vweird.f32 %v1962
    %vm1969 = vweird.f32 %v1963
    %vm1970 = vmor %vm1968, %vm1969
    %v1971 = vsel %vm1970, %v1963, %v1967
    %v1972 = vand.u32 2147483647, %v1962
    %vm1973 = vcmp.eq.f32.partialorder %v1972, 8.507059e+37
    %v1974 = vand.u32 %v1962, 2147483648
    %v1975 = vor.u32 1.1754944e-38, %v1974
    %v1976 = vsel %vm1973, %v1975, %v1971
    %v1977 = vmul.f32 1.0, %v1976
    %v1978 = vmul.f32 %v1957, %v1346
    %v1979 = vmul.f32 %v1938, %v1958
    %v1980 = vadd.f32 %v1978, %v1979
    %v1981 = vtanh.pop %v1980
    %v1982 = vmul.f32 %v1977, %v1981
    %1983 = vst [vmem:[#allocation4 + $0x10] sm:$0xff] %v1666
    %1984 = vst [vmem:[#allocation4 + $0x68] sm:$0xff] %v1982
    %v1985 = vld [vmem:[#allocation2 + $0x40] sm:$0xff]
    %v1986 = vld [vmem:[#allocation2 + $0x48] sm:$0xff]
    %v1987 = vld [vmem:[#allocation2 + $0x50] sm:$0xff]
    %v1988 = vld [vmem:[#allocation2 + $0x58] sm:$0xff]
    %v1989 = vpack.c.bf16 %v1666, %v1666
    %v1990 = vld [vmem:[#allocation6] sm:$0xff]
    %v1991 = vld [vmem:[#allocation6 + $0x8] sm:$0xff]
    %v1992 = vld [vmem:[#allocation6 + $0x10] sm:$0xff]
    %v1993 = vld [vmem:[#allocation6 + $0x18] sm:$0xff]
    %v1994 = vld [vmem:[#allocation6 + $0x20] sm:$0xff]
    %v1995 = vld [vmem:[#allocation6 + $0x28] sm:$0xff]
    %v1996 = vld [vmem:[#allocation6 + $0x30] sm:$0xff]
    %v1997 = vld [vmem:[#allocation6 + $0x38] sm:$0xff]
    %v1998 = vld [vmem:[#allocation6 + $0x40] sm:$0xff]
    %v1999 = vld [vmem:[#allocation6 + $0x48] sm:$0xff]
    %v2000 = vld [vmem:[#allocation6 + $0x50] sm:$0xff]
    %v2001 = vld [vmem:[#allocation6 + $0x58] sm:$0xff]
    %v2002 = vld [vmem:[#allocation6 + $0x60] sm:$0xff]
    %v2003 = vld [vmem:[#allocation6 + $0x68] sm:$0xff]
    %v2004 = vld [vmem:[#allocation6 + $0x70] sm:$0xff]
    %v2005 = vld [vmem:[#allocation6 + $0x78] sm:$0xff]
    %v2006 = vld [vmem:[#allocation6 + $0x80] sm:$0xff]
    %v2007 = vld [vmem:[#allocation6 + $0x88] sm:$0xff]
    %v2008 = vld [vmem:[#allocation6 + $0x90] sm:$0xff]
    %v2009 = vld [vmem:[#allocation6 + $0x98] sm:$0xff]
    %v2010 = vld [vmem:[#allocation6 + $0xa0] sm:$0xff]
    %v2011 = vld [vmem:[#allocation6 + $0xa8] sm:$0xff]
    %v2012 = vld [vmem:[#allocation6 + $0xb0] sm:$0xff]
    %v2013 = vld [vmem:[#allocation6 + $0xb8] sm:$0xff]
    %v2014 = vld [vmem:[#allocation6 + $0xc0] sm:$0xff]
    %v2015 = vld [vmem:[#allocation6 + $0xc8] sm:$0xff]
    %v2016 = vld [vmem:[#allocation6 + $0xd0] sm:$0xff]
    %v2017 = vld [vmem:[#allocation6 + $0xd8] sm:$0xff]
    %v2018 = vld [vmem:[#allocation6 + $0xe0] sm:$0xff]
    %v2019 = vld [vmem:[#allocation6 + $0xe8] sm:$0xff]
    %v2020 = vld [vmem:[#allocation6 + $0xf0] sm:$0xff]
    %v2021 = vld [vmem:[#allocation6 + $0xf8] sm:$0xff]
    %v2054 = vunpack.c.l.b16 %v1990
    %v2055 = vunpack.c.h.b16 %v1990
    %v2056 = vunpack.c.l.b16 %v1991
    %v2057 = vunpack.c.h.b16 %v1991
    %v2058 = vunpack.c.l.b16 %v1992
    %v2059 = vunpack.c.h.b16 %v1992
    %v2060 = vunpack.c.l.b16 %v1993
    %v2061 = vunpack.c.h.b16 %v1993
    %v2062 = vunpack.c.l.b16 %v1994
    %v2063 = vunpack.c.h.b16 %v1994
    %v2064 = vunpack.c.l.b16 %v1995
    %v2065 = vunpack.c.h.b16 %v1995
    %v2066 = vunpack.c.l.b16 %v1996
    %v2067 = vunpack.c.h.b16 %v1996
    %v2068 = vunpack.c.l.b16 %v1997
    %v2069 = vunpack.c.h.b16 %v1997
    %v2070 = vunpack.c.l.b16 %v1998
    %v2071 = vunpack.c.h.b16 %v1998
    %v2072 = vunpack.c.l.b16 %v1999
    %v2073 = vunpack.c.h.b16 %v1999
    %v2074 = vunpack.c.l.b16 %v2000
    %v2075 = vunpack.c.h.b16 %v2000
    %v2076 = vunpack.c.l.b16 %v2001
    %v2077 = vunpack.c.h.b16 %v2001
    %v2078 = vunpack.c.l.b16 %v2002
    %v2079 = vunpack.c.h.b16 %v2002
    %v2080 = vunpack.c.l.b16 %v2003
    %v2081 = vunpack.c.h.b16 %v2003
    %v2082 = vunpack.c.l.b16 %v2004
    %v2083 = vunpack.c.h.b16 %v2004
    %v2084 = vunpack.c.l.b16 %v2005
    %v2085 = vunpack.c.h.b16 %v2005
    %v2086 = vunpack.c.l.b16 %v2006
    %v2087 = vunpack.c.h.b16 %v2006
    %v2088 = vunpack.c.l.b16 %v2007
    %v2089 = vunpack.c.h.b16 %v2007
    %v2090 = vunpack.c.l.b16 %v2008
    %v2091 = vunpack.c.h.b16 %v2008
    %v2092 = vunpack.c.l.b16 %v2009
    %v2093 = vunpack.c.h.b16 %v2009
    %v2094 = vunpack.c.l.b16 %v2010
    %v2095 = vunpack.c.h.b16 %v2010
    %v2096 = vunpack.c.l.b16 %v2011
    %v2097 = vunpack.c.h.b16 %v2011
    %v2098 = vunpack.c.l.b16 %v2012
    %v2099 = vunpack.c.h.b16 %v2012
    %v2100 = vunpack.c.l.b16 %v2013
    %v2101 = vunpack.c.h.b16 %v2013
    %v2102 = vunpack.c.l.b16 %v2014
    %v2103 = vunpack.c.h.b16 %v2014
    %v2104 = vunpack.c.l.b16 %v2015
    %v2105 = vunpack.c.h.b16 %v2015
    %v2106 = vunpack.c.l.b16 %v2016
    %v2107 = vunpack.c.h.b16 %v2016
    %v2108 = vunpack.c.l.b16 %v2017
    %v2109 = vunpack.c.h.b16 %v2017
    %v2110 = vunpack.c.l.b16 %v2018
    %v2111 = vunpack.c.h.b16 %v2018
    %v2112 = vunpack.c.l.b16 %v2019
    %v2113 = vunpack.c.h.b16 %v2019
    %v2114 = vunpack.c.l.b16 %v2020
    %v2115 = vunpack.c.h.b16 %v2020
    %v2116 = vunpack.c.l.b16 %v2021
    %v2117 = vunpack.c.h.b16 %v2021
    %v2118 = vpack.c.b16 %v2058, %v2054
    %v2119 = vpack.c.b16 %v2059, %v2055
    %v2120 = vpack.c.b16 %v2060, %v2056
    %v2121 = vpack.c.b16 %v2061, %v2057
    %v2122 = vpack.c.b16 %v2066, %v2062
    %v2123 = vpack.c.b16 %v2067, %v2063
    %v2124 = vpack.c.b16 %v2068, %v2064
    %v2125 = vpack.c.b16 %v2069, %v2065
    %v2126 = vpack.c.b16 %v2074, %v2070
    %v2127 = vpack.c.b16 %v2075, %v2071
    %v2128 = vpack.c.b16 %v2076, %v2072
    %v2129 = vpack.c.b16 %v2077, %v2073
    %v2130 = vpack.c.b16 %v2082, %v2078
    %v2131 = vpack.c.b16 %v2083, %v2079
    %v2132 = vpack.c.b16 %v2084, %v2080
    %v2133 = vpack.c.b16 %v2085, %v2081
    %v2134 = vpack.c.b16 %v2090, %v2086
    %v2135 = vpack.c.b16 %v2091, %v2087
    %v2136 = vpack.c.b16 %v2092, %v2088
    %v2137 = vpack.c.b16 %v2093, %v2089
    %v2138 = vpack.c.b16 %v2098, %v2094
    %v2139 = vpack.c.b16 %v2099, %v2095
    %v2140 = vpack.c.b16 %v2100, %v2096
    %v2141 = vpack.c.b16 %v2101, %v2097
    %v2142 = vpack.c.b16 %v2106, %v2102
    %v2143 = vpack.c.b16 %v2107, %v2103
    %v2144 = vpack.c.b16 %v2108, %v2104
    %v2145 = vpack.c.b16 %v2109, %v2105
    %v2146 = vpack.c.b16 %v2114, %v2110
    %v2147 = vpack.c.b16 %v2115, %v2111
    %v2148 = vpack.c.b16 %v2116, %v2112
    %v2149 = vpack.c.b16 %v2117, %v2113
    %2182 = vmatpush.bf16.msra.mxu0 %v2146
    %2183 = vmatpush.bf16.msra.mxu0 %v2142
    %2184 = vmatpush.bf16.msra.mxu0 %v2138
    %2185 = vmatpush.bf16.msra.mxu0 %v2134
    %2186 = vmatpush.bf16.msra.mxu0 %v2130
    %2187 = vmatpush.bf16.msra.mxu0 %v2126
    %2188 = vmatpush.bf16.msra.mxu0 %v2122
    %2189 = vmatpush.bf16.msra.mxu0 %v2118
    %2190 = vmatmul.bf16.gmra.mxu0 %v1989
    %v2191 = vpop.f32.mrf.mxu0
    %v2192 = vadd.f32 0.0, %v2191
    %v2193 = vpop.f32.mrf.mxu0
    %2194 = vdwg.mxu0
    %2195 = vmatpush.bf16.msra.mxu0 %v2147
    %2196 = vmatpush.bf16.msra.mxu0 %v2143
    %2197 = vmatpush.bf16.msra.mxu0 %v2139
    %2198 = vmatpush.bf16.msra.mxu0 %v2135
    %2199 = vmatpush.bf16.msra.mxu0 %v2131
    %2200 = vmatpush.bf16.msra.mxu0 %v2127
    %2201 = vmatpush.bf16.msra.mxu0 %v2123
    %2202 = vmatpush.bf16.msra.mxu0 %v2119
    %2203 = vmatmul.bf16.gmra.mxu0 %v1989
    %v2204 = vpop.f32.mrf.mxu0
    %v2205 = vadd.f32 0.0, %v2204
    %v2206 = vpop.f32.mrf.mxu0
    %2207 = vdwg.mxu0
    %2208 = vmatpush.bf16.msra.mxu0 %v2148
    %2209 = vmatpush.bf16.msra.mxu0 %v2144
    %2210 = vmatpush.bf16.msra.mxu0 %v2140
    %2211 = vmatpush.bf16.msra.mxu0 %v2136
    %2212 = vmatpush.bf16.msra.mxu0 %v2132
    %2213 = vmatpush.bf16.msra.mxu0 %v2128
    %2214 = vmatpush.bf16.msra.mxu0 %v2124
    %2215 = vmatpush.bf16.msra.mxu0 %v2120
    %2216 = vmatmul.bf16.gmra.mxu0 %v1989
    %v2217 = vpop.f32.mrf.mxu0
    %v2218 = vadd.f32 0.0, %v2217
    %v2219 = vpop.f32.mrf.mxu0
    %2220 = vdwg.mxu0
    %2221 = vmatpush.bf16.msra.mxu0 %v2149
    %2222 = vmatpush.bf16.msra.mxu0 %v2145
    %2223 = vmatpush.bf16.msra.mxu0 %v2141
    %2224 = vmatpush.bf16.msra.mxu0 %v2137
    %2225 = vmatpush.bf16.msra.mxu0 %v2133
    %2226 = vmatpush.bf16.msra.mxu0 %v2129
    %2227 = vmatpush.bf16.msra.mxu0 %v2125
    %2228 = vmatpush.bf16.msra.mxu0 %v2121
    %2229 = vmatmul.bf16.gmra.mxu0 %v1989
    %v2230 = vpop.f32.mrf.mxu0
    %v2231 = vadd.f32 0.0, %v2230
    %v2232 = vpop.f32.mrf.mxu0
    %2233 = vdwg.mxu0
    %v2234 = vadd.f32 %v1985, %v2192
    %v2235 = vadd.f32 %v1986, %v2205
    %v2236 = vadd.f32 %v1987, %v2218
    %v2237 = vadd.f32 %v1988, %v2231
    %v2238 = vxor.u32 %v2234, 2147483648
    %v2239 = vmul.f32 %v2238, 1.442695
    %v2240 = vpow.pop %v2239
    %v2241 = vadd.f32 %v2240, 1.0
    %v2242 = vrcp.pop %v2241
    %v2243 = vmul.f32 %v2241, %v2242
    %v2244 = vsub.f32 1.0, %v2243
    %v2245 = vmul.f32 %v2242, %v2244
    %v2246 = vadd.f32 %v2242, %v2245
    %vm2247 = vweird.f32 %v2241
    %vm2248 = vweird.f32 %v2242
    %vm2249 = vmor %vm2247, %vm2248
    %v2250 = vsel %vm2249, %v2242, %v2246
    %v2251 = vand.u32 2147483647, %v2241
    %vm2252 = vcmp.eq.f32.partialorder %v2251, 8.507059e+37
    %v2253 = vand.u32 %v2241, 2147483648
    %v2254 = vor.u32 1.1754944e-38, %v2253
    %v2255 = vsel %vm2252, %v2254, %v2250
    %v2256 = vmul.f32 1.0, %v2255
    %v2257 = vxor.u32 %v2235, 2147483648
    %v2258 = vmul.f32 %v2257, 1.442695
    %v2259 = vpow.pop %v2258
    %v2260 = vadd.f32 %v2259, 1.0
    %v2261 = vrcp.pop %v2260
    %v2262 = vmul.f32 %v2260, %v2261
    %v2263 = vsub.f32 1.0, %v2262
    %v2264 = vmul.f32 %v2261, %v2263
    %v2265 = vadd.f32 %v2261, %v2264
    %vm2266 = vweird.f32 %v2260
    %vm2267 = vweird.f32 %v2261
    %vm2268 = vmor %vm2266, %vm2267
    %v2269 = vsel %vm2268, %v2261, %v2265
    %v2270 = vand.u32 2147483647, %v2260
    %vm2271 = vcmp.eq.f32.partialorder %v2270, 8.507059e+37
    %v2272 = vand.u32 %v2260, 2147483648
    %v2273 = vor.u32 1.1754944e-38, %v2272
    %v2274 = vsel %vm2271, %v2273, %v2269
    %v2275 = vmul.f32 1.0, %v2274
    %v2276 = vtanh.pop %v2236
    %v2277 = vxor.u32 %v2237, 2147483648
    %v2278 = vmul.f32 %v2277, 1.442695
    %v2279 = vpow.pop %v2278
    %v2280 = vadd.f32 %v2279, 1.0
    %v2281 = vrcp.pop %v2280
    %v2282 = vmul.f32 %v2280, %v2281
    %v2283 = vsub.f32 1.0, %v2282
    %v2284 = vmul.f32 %v2281, %v2283
    %v2285 = vadd.f32 %v2281, %v2284
    %vm2286 = vweird.f32 %v2280
    %vm2287 = vweird.f32 %v2281
    %vm2288 = vmor %vm2286, %vm2287
    %v2289 = vsel %vm2288, %v2281, %v2285
    %v2290 = vand.u32 2147483647, %v2280
    %vm2291 = vcmp.eq.f32.partialorder %v2290, 8.507059e+37
    %v2292 = vand.u32 %v2280, 2147483648
    %v2293 = vor.u32 1.1754944e-38, %v2292
    %v2294 = vsel %vm2291, %v2293, %v2289
    %v2295 = vmul.f32 1.0, %v2294
    %v2296 = vmul.f32 %v2275, %v1664
    %v2297 = vmul.f32 %v2256, %v2276
    %v2298 = vadd.f32 %v2296, %v2297
    %v2299 = vtanh.pop %v2298
    %v2300 = vmul.f32 %v2295, %v2299
    %v2301 = vld [vmem:[#allocation3 + $0xa0] sm:$0xff]
    %v2302 = vld [vmem:[#allocation3 + $0xa8] sm:$0xff]
    %v2303 = vld [vmem:[#allocation3 + $0xb0] sm:$0xff]
    %v2304 = vld [vmem:[#allocation3 + $0xb8] sm:$0xff]
    %v2305 = vpack.c.bf16 %v1982, %v1982
    %v2306 = vld [vmem:[#allocation12] sm:$0xff]
    %v2307 = vld [vmem:[#allocation12 + $0x8] sm:$0xff]
    %v2308 = vld [vmem:[#allocation12 + $0x10] sm:$0xff]
    %v2309 = vld [vmem:[#allocation12 + $0x18] sm:$0xff]
    %v2310 = vld [vmem:[#allocation12 + $0x20] sm:$0xff]
    %v2311 = vld [vmem:[#allocation12 + $0x28] sm:$0xff]
    %v2312 = vld [vmem:[#allocation12 + $0x30] sm:$0xff]
    %v2313 = vld [vmem:[#allocation12 + $0x38] sm:$0xff]
    %v2314 = vld [vmem:[#allocation12 + $0x40] sm:$0xff]
    %v2315 = vld [vmem:[#allocation12 + $0x48] sm:$0xff]
    %v2316 = vld [vmem:[#allocation12 + $0x50] sm:$0xff]
    %v2317 = vld [vmem:[#allocation12 + $0x58] sm:$0xff]
    %v2318 = vld [vmem:[#allocation12 + $0x60] sm:$0xff]
    %v2319 = vld [vmem:[#allocation12 + $0x68] sm:$0xff]
    %v2320 = vld [vmem:[#allocation12 + $0x70] sm:$0xff]
    %v2321 = vld [vmem:[#allocation12 + $0x78] sm:$0xff]
    %v2322 = vld [vmem:[#allocation12 + $0x80] sm:$0xff]
    %v2323 = vld [vmem:[#allocation12 + $0x88] sm:$0xff]
    %v2324 = vld [vmem:[#allocation12 + $0x90] sm:$0xff]
    %v2325 = vld [vmem:[#allocation12 + $0x98] sm:$0xff]
    %v2326 = vld [vmem:[#allocation12 + $0xa0] sm:$0xff]
    %v2327 = vld [vmem:[#allocation12 + $0xa8] sm:$0xff]
    %v2328 = vld [vmem:[#allocation12 + $0xb0] sm:$0xff]
    %v2329 = vld [vmem:[#allocation12 + $0xb8] sm:$0xff]
    %v2330 = vld [vmem:[#allocation12 + $0xc0] sm:$0xff]
    %v2331 = vld [vmem:[#allocation12 + $0xc8] sm:$0xff]
    %v2332 = vld [vmem:[#allocation12 + $0xd0] sm:$0xff]
    %v2333 = vld [vmem:[#allocation12 + $0xd8] sm:$0xff]
    %v2334 = vld [vmem:[#allocation12 + $0xe0] sm:$0xff]
    %v2335 = vld [vmem:[#allocation12 + $0xe8] sm:$0xff]
    %v2336 = vld [vmem:[#allocation12 + $0xf0] sm:$0xff]
    %v2337 = vld [vmem:[#allocation12 + $0xf8] sm:$0xff]
    %v2370 = vunpack.c.l.b16 %v2306
    %v2371 = vunpack.c.h.b16 %v2306
    %v2372 = vunpack.c.l.b16 %v2307
    %v2373 = vunpack.c.h.b16 %v2307
    %v2374 = vunpack.c.l.b16 %v2308
    %v2375 = vunpack.c.h.b16 %v2308
    %v2376 = vunpack.c.l.b16 %v2309
    %v2377 = vunpack.c.h.b16 %v2309
    %v2378 = vunpack.c.l.b16 %v2310
    %v2379 = vunpack.c.h.b16 %v2310
    %v2380 = vunpack.c.l.b16 %v2311
    %v2381 = vunpack.c.h.b16 %v2311
    %v2382 = vunpack.c.l.b16 %v2312
    %v2383 = vunpack.c.h.b16 %v2312
    %v2384 = vunpack.c.l.b16 %v2313
    %v2385 = vunpack.c.h.b16 %v2313
    %v2386 = vunpack.c.l.b16 %v2314
    %v2387 = vunpack.c.h.b16 %v2314
    %v2388 = vunpack.c.l.b16 %v2315
    %v2389 = vunpack.c.h.b16 %v2315
    %v2390 = vunpack.c.l.b16 %v2316
    %v2391 = vunpack.c.h.b16 %v2316
    %v2392 = vunpack.c.l.b16 %v2317
    %v2393 = vunpack.c.h.b16 %v2317
    %v2394 = vunpack.c.l.b16 %v2318
    %v2395 = vunpack.c.h.b16 %v2318
    %v2396 = vunpack.c.l.b16 %v2319
    %v2397 = vunpack.c.h.b16 %v2319
    %v2398 = vunpack.c.l.b16 %v2320
    %v2399 = vunpack.c.h.b16 %v2320
    %v2400 = vunpack.c.l.b16 %v2321
    %v2401 = vunpack.c.h.b16 %v2321
    %v2402 = vunpack.c.l.b16 %v2322
    %v2403 = vunpack.c.h.b16 %v2322
    %v2404 = vunpack.c.l.b16 %v2323
    %v2405 = vunpack.c.h.b16 %v2323
    %v2406 = vunpack.c.l.b16 %v2324
    %v2407 = vunpack.c.h.b16 %v2324
    %v2408 = vunpack.c.l.b16 %v2325
    %v2409 = vunpack.c.h.b16 %v2325
    %v2410 = vunpack.c.l.b16 %v2326
    %v2411 = vunpack.c.h.b16 %v2326
    %v2412 = vunpack.c.l.b16 %v2327
    %v2413 = vunpack.c.h.b16 %v2327
    %v2414 = vunpack.c.l.b16 %v2328
    %v2415 = vunpack.c.h.b16 %v2328
    %v2416 = vunpack.c.l.b16 %v2329
    %v2417 = vunpack.c.h.b16 %v2329
    %v2418 = vunpack.c.l.b16 %v2330
    %v2419 = vunpack.c.h.b16 %v2330
    %v2420 = vunpack.c.l.b16 %v2331
    %v2421 = vunpack.c.h.b16 %v2331
    %v2422 = vunpack.c.l.b16 %v2332
    %v2423 = vunpack.c.h.b16 %v2332
    %v2424 = vunpack.c.l.b16 %v2333
    %v2425 = vunpack.c.h.b16 %v2333
    %v2426 = vunpack.c.l.b16 %v2334
    %v2427 = vunpack.c.h.b16 %v2334
    %v2428 = vunpack.c.l.b16 %v2335
    %v2429 = vunpack.c.h.b16 %v2335
    %v2430 = vunpack.c.l.b16 %v2336
    %v2431 = vunpack.c.h.b16 %v2336
    %v2432 = vunpack.c.l.b16 %v2337
    %v2433 = vunpack.c.h.b16 %v2337
    %v2434 = vpack.c.b16 %v2374, %v2370
    %v2435 = vpack.c.b16 %v2375, %v2371
    %v2436 = vpack.c.b16 %v2376, %v2372
    %v2437 = vpack.c.b16 %v2377, %v2373
    %v2438 = vpack.c.b16 %v2382, %v2378
    %v2439 = vpack.c.b16 %v2383, %v2379
    %v2440 = vpack.c.b16 %v2384, %v2380
    %v2441 = vpack.c.b16 %v2385, %v2381
    %v2442 = vpack.c.b16 %v2390, %v2386
    %v2443 = vpack.c.b16 %v2391, %v2387
    %v2444 = vpack.c.b16 %v2392, %v2388
    %v2445 = vpack.c.b16 %v2393, %v2389
    %v2446 = vpack.c.b16 %v2398, %v2394
    %v2447 = vpack.c.b16 %v2399, %v2395
    %v2448 = vpack.c.b16 %v2400, %v2396
    %v2449 = vpack.c.b16 %v2401, %v2397
    %v2450 = vpack.c.b16 %v2406, %v2402
    %v2451 = vpack.c.b16 %v2407, %v2403
    %v2452 = vpack.c.b16 %v2408, %v2404
    %v2453 = vpack.c.b16 %v2409, %v2405
    %v2454 = vpack.c.b16 %v2414, %v2410
    %v2455 = vpack.c.b16 %v2415, %v2411
    %v2456 = vpack.c.b16 %v2416, %v2412
    %v2457 = vpack.c.b16 %v2417, %v2413
    %v2458 = vpack.c.b16 %v2422, %v2418
    %v2459 = vpack.c.b16 %v2423, %v2419
    %v2460 = vpack.c.b16 %v2424, %v2420
    %v2461 = vpack.c.b16 %v2425, %v2421
    %v2462 = vpack.c.b16 %v2430, %v2426
    %v2463 = vpack.c.b16 %v2431, %v2427
    %v2464 = vpack.c.b16 %v2432, %v2428
    %v2465 = vpack.c.b16 %v2433, %v2429
    %2498 = vmatpush.bf16.msra.mxu0 %v2462
    %2499 = vmatpush.bf16.msra.mxu0 %v2458
    %2500 = vmatpush.bf16.msra.mxu0 %v2454
    %2501 = vmatpush.bf16.msra.mxu0 %v2450
    %2502 = vmatpush.bf16.msra.mxu0 %v2446
    %2503 = vmatpush.bf16.msra.mxu0 %v2442
    %2504 = vmatpush.bf16.msra.mxu0 %v2438
    %2505 = vmatpush.bf16.msra.mxu0 %v2434
    %2506 = vmatmul.bf16.gmra.mxu0 %v2305
    %v2507 = vpop.f32.mrf.mxu0
    %v2508 = vadd.f32 0.0, %v2507
    %v2509 = vpop.f32.mrf.mxu0
    %2510 = vdwg.mxu0
    %2511 = vmatpush.bf16.msra.mxu0 %v2463
    %2512 = vmatpush.bf16.msra.mxu0 %v2459
    %2513 = vmatpush.bf16.msra.mxu0 %v2455
    %2514 = vmatpush.bf16.msra.mxu0 %v2451
    %2515 = vmatpush.bf16.msra.mxu0 %v2447
    %2516 = vmatpush.bf16.msra.mxu0 %v2443
    %2517 = vmatpush.bf16.msra.mxu0 %v2439
    %2518 = vmatpush.bf16.msra.mxu0 %v2435
    %2519 = vmatmul.bf16.gmra.mxu0 %v2305
    %v2520 = vpop.f32.mrf.mxu0
    %v2521 = vadd.f32 0.0, %v2520
    %v2522 = vpop.f32.mrf.mxu0
    %2523 = vdwg.mxu0
    %2524 = vmatpush.bf16.msra.mxu0 %v2464
    %2525 = vmatpush.bf16.msra.mxu0 %v2460
    %2526 = vmatpush.bf16.msra.mxu0 %v2456
    %2527 = vmatpush.bf16.msra.mxu0 %v2452
    %2528 = vmatpush.bf16.msra.mxu0 %v2448
    %2529 = vmatpush.bf16.msra.mxu0 %v2444
    %2530 = vmatpush.bf16.msra.mxu0 %v2440
    %2531 = vmatpush.bf16.msra.mxu0 %v2436
    %2532 = vmatmul.bf16.gmra.mxu0 %v2305
    %v2533 = vpop.f32.mrf.mxu0
    %v2534 = vadd.f32 0.0, %v2533
    %v2535 = vpop.f32.mrf.mxu0
    %2536 = vdwg.mxu0
    %2537 = vmatpush.bf16.msra.mxu0 %v2465
    %2538 = vmatpush.bf16.msra.mxu0 %v2461
    %2539 = vmatpush.bf16.msra.mxu0 %v2457
    %2540 = vmatpush.bf16.msra.mxu0 %v2453
    %2541 = vmatpush.bf16.msra.mxu0 %v2449
    %2542 = vmatpush.bf16.msra.mxu0 %v2445
    %2543 = vmatpush.bf16.msra.mxu0 %v2441
    %2544 = vmatpush.bf16.msra.mxu0 %v2437
    %2545 = vmatmul.bf16.gmra.mxu0 %v2305
    %v2546 = vpop.f32.mrf.mxu0
    %v2547 = vadd.f32 0.0, %v2546
    %v2548 = vpop.f32.mrf.mxu0
    %2549 = vdwg.mxu0
    %v2550 = vadd.f32 %v2301, %v2508
    %v2551 = vadd.f32 %v2302, %v2521
    %v2552 = vadd.f32 %v2303, %v2534
    %v2553 = vadd.f32 %v2304, %v2547
    %v2554 = vxor.u32 %v2550, 2147483648
    %v2555 = vmul.f32 %v2554, 1.442695
    %v2556 = vpow.pop %v2555
    %v2557 = vadd.f32 %v2556, 1.0
    %v2558 = vrcp.pop %v2557
    %v2559 = vmul.f32 %v2557, %v2558
    %v2560 = vsub.f32 1.0, %v2559
    %v2561 = vmul.f32 %v2558, %v2560
    %v2562 = vadd.f32 %v2558, %v2561
    %vm2563 = vweird.f32 %v2557
    %vm2564 = vweird.f32 %v2558
    %vm2565 = vmor %vm2563, %vm2564
    %v2566 = vsel %vm2565, %v2558, %v2562
    %v2567 = vand.u32 2147483647, %v2557
    %vm2568 = vcmp.eq.f32.partialorder %v2567, 8.507059e+37
    %v2569 = vand.u32 %v2557, 2147483648
    %v2570 = vor.u32 1.1754944e-38, %v2569
    %v2571 = vsel %vm2568, %v2570, %v2566
    %v2572 = vmul.f32 1.0, %v2571
    %v2573 = vxor.u32 %v2551, 2147483648
    %v2574 = vmul.f32 %v2573, 1.442695
    %v2575 = vpow.pop %v2574
    %v2576 = vadd.f32 %v2575, 1.0
    %v2577 = vrcp.pop %v2576
    %v2578 = vmul.f32 %v2576, %v2577
    %v2579 = vsub.f32 1.0, %v2578
    %v2580 = vmul.f32 %v2577, %v2579
    %v2581 = vadd.f32 %v2577, %v2580
    %vm2582 = vweird.f32 %v2576
    %vm2583 = vweird.f32 %v2577
    %vm2584 = vmor %vm2582, %vm2583
    %v2585 = vsel %vm2584, %v2577, %v2581
    %v2586 = vand.u32 2147483647, %v2576
    %vm2587 = vcmp.eq.f32.partialorder %v2586, 8.507059e+37
    %v2588 = vand.u32 %v2576, 2147483648
    %v2589 = vor.u32 1.1754944e-38, %v2588
    %v2590 = vsel %vm2587, %v2589, %v2585
    %v2591 = vmul.f32 1.0, %v2590
    %v2592 = vtanh.pop %v2552
    %v2593 = vxor.u32 %v2553, 2147483648
    %v2594 = vmul.f32 %v2593, 1.442695
    %v2595 = vpow.pop %v2594
    %v2596 = vadd.f32 %v2595, 1.0
    %v2597 = vrcp.pop %v2596
    %v2598 = vmul.f32 %v2596, %v2597
    %v2599 = vsub.f32 1.0, %v2598
    %v2600 = vmul.f32 %v2597, %v2599
    %v2601 = vadd.f32 %v2597, %v2600
    %vm2602 = vweird.f32 %v2596
    %vm2603 = vweird.f32 %v2597
    %vm2604 = vmor %vm2602, %vm2603
    %v2605 = vsel %vm2604, %v2597, %v2601
    %v2606 = vand.u32 2147483647, %v2596
    %vm2607 = vcmp.eq.f32.partialorder %v2606, 8.507059e+37
    %v2608 = vand.u32 %v2596, 2147483648
    %v2609 = vor.u32 1.1754944e-38, %v2608
    %v2610 = vsel %vm2607, %v2609, %v2605
    %v2611 = vmul.f32 1.0, %v2610
    %v2612 = vmul.f32 %v2591, %v1980
    %v2613 = vmul.f32 %v2572, %v2592
    %v2614 = vadd.f32 %v2612, %v2613
    %v2615 = vtanh.pop %v2614
    %v2616 = vmul.f32 %v2611, %v2615
    %2617 = vst [vmem:[#allocation4 + $0x20] sm:$0xff] %v2300
    %2618 = vst [vmem:[#allocation4 + $0x58] sm:$0xff] %v2616
    %v2619 = vld [vmem:[#allocation2 + $0x60] sm:$0xff]
    %v2620 = vld [vmem:[#allocation2 + $0x68] sm:$0xff]
    %v2621 = vld [vmem:[#allocation2 + $0x70] sm:$0xff]
    %v2622 = vld [vmem:[#allocation2 + $0x78] sm:$0xff]
    %v2623 = vpack.c.bf16 %v2300, %v2300
    %v2624 = vld [vmem:[#allocation6] sm:$0xff]
    %v2625 = vld [vmem:[#allocation6 + $0x8] sm:$0xff]
    %v2626 = vld [vmem:[#allocation6 + $0x10] sm:$0xff]
    %v2627 = vld [vmem:[#allocation6 + $0x18] sm:$0xff]
    %v2628 = vld [vmem:[#allocation6 + $0x20] sm:$0xff]
    %v2629 = vld [vmem:[#allocation6 + $0x28] sm:$0xff]
    %v2630 = vld [vmem:[#allocation6 + $0x30] sm:$0xff]
    %v2631 = vld [vmem:[#allocation6 + $0x38] sm:$0xff]
    %v2632 = vld [vmem:[#allocation6 + $0x40] sm:$0xff]
    %v2633 = vld [vmem:[#allocation6 + $0x48] sm:$0xff]
    %v2634 = vld [vmem:[#allocation6 + $0x50] sm:$0xff]
    %v2635 = vld [vmem:[#allocation6 + $0x58] sm:$0xff]
    %v2636 = vld [vmem:[#allocation6 + $0x60] sm:$0xff]
    %v2637 = vld [vmem:[#allocation6 + $0x68] sm:$0xff]
    %v2638 = vld [vmem:[#allocation6 + $0x70] sm:$0xff]
    %v2639 = vld [vmem:[#allocation6 + $0x78] sm:$0xff]
    %v2640 = vld [vmem:[#allocation6 + $0x80] sm:$0xff]
    %v2641 = vld [vmem:[#allocation6 + $0x88] sm:$0xff]
    %v2642 = vld [vmem:[#allocation6 + $0x90] sm:$0xff]
    %v2643 = vld [vmem:[#allocation6 + $0x98] sm:$0xff]
    %v2644 = vld [vmem:[#allocation6 + $0xa0] sm:$0xff]
    %v2645 = vld [vmem:[#allocation6 + $0xa8] sm:$0xff]
    %v2646 = vld [vmem:[#allocation6 + $0xb0] sm:$0xff]
    %v2647 = vld [vmem:[#allocation6 + $0xb8] sm:$0xff]
    %v2648 = vld [vmem:[#allocation6 + $0xc0] sm:$0xff]
    %v2649 = vld [vmem:[#allocation6 + $0xc8] sm:$0xff]
    %v2650 = vld [vmem:[#allocation6 + $0xd0] sm:$0xff]
    %v2651 = vld [vmem:[#allocation6 + $0xd8] sm:$0xff]
    %v2652 = vld [vmem:[#allocation6 + $0xe0] sm:$0xff]
    %v2653 = vld [vmem:[#allocation6 + $0xe8] sm:$0xff]
    %v2654 = vld [vmem:[#allocation6 + $0xf0] sm:$0xff]
    %v2655 = vld [vmem:[#allocation6 + $0xf8] sm:$0xff]
    %v2688 = vunpack.c.l.b16 %v2624
    %v2689 = vunpack.c.h.b16 %v2624
    %v2690 = vunpack.c.l.b16 %v2625
    %v2691 = vunpack.c.h.b16 %v2625
    %v2692 = vunpack.c.l.b16 %v2626
    %v2693 = vunpack.c.h.b16 %v2626
    %v2694 = vunpack.c.l.b16 %v2627
    %v2695 = vunpack.c.h.b16 %v2627
    %v2696 = vunpack.c.l.b16 %v2628
    %v2697 = vunpack.c.h.b16 %v2628
    %v2698 = vunpack.c.l.b16 %v2629
    %v2699 = vunpack.c.h.b16 %v2629
    %v2700 = vunpack.c.l.b16 %v2630
    %v2701 = vunpack.c.h.b16 %v2630
    %v2702 = vunpack.c.l.b16 %v2631
    %v2703 = vunpack.c.h.b16 %v2631
    %v2704 = vunpack.c.l.b16 %v2632
    %v2705 = vunpack.c.h.b16 %v2632
    %v2706 = vunpack.c.l.b16 %v2633
    %v2707 = vunpack.c.h.b16 %v2633
    %v2708 = vunpack.c.l.b16 %v2634
    %v2709 = vunpack.c.h.b16 %v2634
    %v2710 = vunpack.c.l.b16 %v2635
    %v2711 = vunpack.c.h.b16 %v2635
    %v2712 = vunpack.c.l.b16 %v2636
    %v2713 = vunpack.c.h.b16 %v2636
    %v2714 = vunpack.c.l.b16 %v2637
    %v2715 = vunpack.c.h.b16 %v2637
    %v2716 = vunpack.c.l.b16 %v2638
    %v2717 = vunpack.c.h.b16 %v2638
    %v2718 = vunpack.c.l.b16 %v2639
    %v2719 = vunpack.c.h.b16 %v2639
    %v2720 = vunpack.c.l.b16 %v2640
    %v2721 = vunpack.c.h.b16 %v2640
    %v2722 = vunpack.c.l.b16 %v2641
    %v2723 = vunpack.c.h.b16 %v2641
    %v2724 = vunpack.c.l.b16 %v2642
    %v2725 = vunpack.c.h.b16 %v2642
    %v2726 = vunpack.c.l.b16 %v2643
    %v2727 = vunpack.c.h.b16 %v2643
    %v2728 = vunpack.c.l.b16 %v2644
    %v2729 = vunpack.c.h.b16 %v2644
    %v2730 = vunpack.c.l.b16 %v2645
    %v2731 = vunpack.c.h.b16 %v2645
    %v2732 = vunpack.c.l.b16 %v2646
    %v2733 = vunpack.c.h.b16 %v2646
    %v2734 = vunpack.c.l.b16 %v2647
    %v2735 = vunpack.c.h.b16 %v2647
    %v2736 = vunpack.c.l.b16 %v2648
    %v2737 = vunpack.c.h.b16 %v2648
    %v2738 = vunpack.c.l.b16 %v2649
    %v2739 = vunpack.c.h.b16 %v2649
    %v2740 = vunpack.c.l.b16 %v2650
    %v2741 = vunpack.c.h.b16 %v2650
    %v2742 = vunpack.c.l.b16 %v2651
    %v2743 = vunpack.c.h.b16 %v2651
    %v2744 = vunpack.c.l.b16 %v2652
    %v2745 = vunpack.c.h.b16 %v2652
    %v2746 = vunpack.c.l.b16 %v2653
    %v2747 = vunpack.c.h.b16 %v2653
    %v2748 = vunpack.c.l.b16 %v2654
    %v2749 = vunpack.c.h.b16 %v2654
    %v2750 = vunpack.c.l.b16 %v2655
    %v2751 = vunpack.c.h.b16 %v2655
    %v2752 = vpack.c.b16 %v2692, %v2688
    %v2753 = vpack.c.b16 %v2693, %v2689
    %v2754 = vpack.c.b16 %v2694, %v2690
    %v2755 = vpack.c.b16 %v2695, %v2691
    %v2756 = vpack.c.b16 %v2700, %v2696
    %v2757 = vpack.c.b16 %v2701, %v2697
    %v2758 = vpack.c.b16 %v2702, %v2698
    %v2759 = vpack.c.b16 %v2703, %v2699
    %v2760 = vpack.c.b16 %v2708, %v2704
    %v2761 = vpack.c.b16 %v2709, %v2705
    %v2762 = vpack.c.b16 %v2710, %v2706
    %v2763 = vpack.c.b16 %v2711, %v2707
    %v2764 = vpack.c.b16 %v2716, %v2712
    %v2765 = vpack.c.b16 %v2717, %v2713
    %v2766 = vpack.c.b16 %v2718, %v2714
    %v2767 = vpack.c.b16 %v2719, %v2715
    %v2768 = vpack.c.b16 %v2724, %v2720
    %v2769 = vpack.c.b16 %v2725, %v2721
    %v2770 = vpack.c.b16 %v2726, %v2722
    %v2771 = vpack.c.b16 %v2727, %v2723
    %v2772 = vpack.c.b16 %v2732, %v2728
    %v2773 = vpack.c.b16 %v2733, %v2729
    %v2774 = vpack.c.b16 %v2734, %v2730
    %v2775 = vpack.c.b16 %v2735, %v2731
    %v2776 = vpack.c.b16 %v2740, %v2736
    %v2777 = vpack.c.b16 %v2741, %v2737
    %v2778 = vpack.c.b16 %v2742, %v2738
    %v2779 = vpack.c.b16 %v2743, %v2739
    %v2780 = vpack.c.b16 %v2748, %v2744
    %v2781 = vpack.c.b16 %v2749, %v2745
    %v2782 = vpack.c.b16 %v2750, %v2746
    %v2783 = vpack.c.b16 %v2751, %v2747
    %2816 = vmatpush.bf16.msra.mxu0 %v2780
    %2817 = vmatpush.bf16.msra.mxu0 %v2776
    %2818 = vmatpush.bf16.msra.mxu0 %v2772
    %2819 = vmatpush.bf16.msra.mxu0 %v2768
    %2820 = vmatpush.bf16.msra.mxu0 %v2764
    %2821 = vmatpush.bf16.msra.mxu0 %v2760
    %2822 = vmatpush.bf16.msra.mxu0 %v2756
    %2823 = vmatpush.bf16.msra.mxu0 %v2752
    %2824 = vmatmul.bf16.gmra.mxu0 %v2623
    %v2825 = vpop.f32.mrf.mxu0
    %v2826 = vadd.f32 0.0, %v2825
    %v2827 = vpop.f32.mrf.mxu0
    %2828 = vdwg.mxu0
    %2829 = vmatpush.bf16.msra.mxu0 %v2781
    %2830 = vmatpush.bf16.msra.mxu0 %v2777
    %2831 = vmatpush.bf16.msra.mxu0 %v2773
    %2832 = vmatpush.bf16.msra.mxu0 %v2769
    %2833 = vmatpush.bf16.msra.mxu0 %v2765
    %2834 = vmatpush.bf16.msra.mxu0 %v2761
    %2835 = vmatpush.bf16.msra.mxu0 %v2757
    %2836 = vmatpush.bf16.msra.mxu0 %v2753
    %2837 = vmatmul.bf16.gmra.mxu0 %v2623
    %v2838 = vpop.f32.mrf.mxu0
    %v2839 = vadd.f32 0.0, %v2838
    %v2840 = vpop.f32.mrf.mxu0
    %2841 = vdwg.mxu0
    %2842 = vmatpush.bf16.msra.mxu0 %v2782
    %2843 = vmatpush.bf16.msra.mxu0 %v2778
    %2844 = vmatpush.bf16.msra.mxu0 %v2774
    %2845 = vmatpush.bf16.msra.mxu0 %v2770
    %2846 = vmatpush.bf16.msra.mxu0 %v2766
    %2847 = vmatpush.bf16.msra.mxu0 %v2762
    %2848 = vmatpush.bf16.msra.mxu0 %v2758
    %2849 = vmatpush.bf16.msra.mxu0 %v2754
    %2850 = vmatmul.bf16.gmra.mxu0 %v2623
    %v2851 = vpop.f32.mrf.mxu0
    %v2852 = vadd.f32 0.0, %v2851
    %v2853 = vpop.f32.mrf.mxu0
    %2854 = vdwg.mxu0
    %2855 = vmatpush.bf16.msra.mxu0 %v2783
    %2856 = vmatpush.bf16.msra.mxu0 %v2779
    %2857 = vmatpush.bf16.msra.mxu0 %v2775
    %2858 = vmatpush.bf16.msra.mxu0 %v2771
    %2859 = vmatpush.bf16.msra.mxu0 %v2767
    %2860 = vmatpush.bf16.msra.mxu0 %v2763
    %2861 = vmatpush.bf16.msra.mxu0 %v2759
    %2862 = vmatpush.bf16.msra.mxu0 %v2755
    %2863 = vmatmul.bf16.gmra.mxu0 %v2623
    %v2864 = vpop.f32.mrf.mxu0
    %v2865 = vadd.f32 0.0, %v2864
    %v2866 = vpop.f32.mrf.mxu0
    %2867 = vdwg.mxu0
    %v2868 = vadd.f32 %v2619, %v2826
    %v2869 = vadd.f32 %v2620, %v2839
    %v2870 = vadd.f32 %v2621, %v2852
    %v2871 = vadd.f32 %v2622, %v2865
    %v2872 = vxor.u32 %v2868, 2147483648
    %v2873 = vmul.f32 %v2872, 1.442695
    %v2874 = vpow.pop %v2873
    %v2875 = vadd.f32 %v2874, 1.0
    %v2876 = vrcp.pop %v2875
    %v2877 = vmul.f32 %v2875, %v2876
    %v2878 = vsub.f32 1.0, %v2877
    %v2879 = vmul.f32 %v2876, %v2878
    %v2880 = vadd.f32 %v2876, %v2879
    %vm2881 = vweird.f32 %v2875
    %vm2882 = vweird.f32 %v2876
    %vm2883 = vmor %vm2881, %vm2882
    %v2884 = vsel %vm2883, %v2876, %v2880
    %v2885 = vand.u32 2147483647, %v2875
    %vm2886 = vcmp.eq.f32.partialorder %v2885, 8.507059e+37
    %v2887 = vand.u32 %v2875, 2147483648
    %v2888 = vor.u32 1.1754944e-38, %v2887
    %v2889 = vsel %vm2886, %v2888, %v2884
    %v2890 = vmul.f32 1.0, %v2889
    %v2891 = vxor.u32 %v2869, 2147483648
    %v2892 = vmul.f32 %v2891, 1.442695
    %v2893 = vpow.pop %v2892
    %v2894 = vadd.f32 %v2893, 1.0
    %v2895 = vrcp.pop %v2894
    %v2896 = vmul.f32 %v2894, %v2895
    %v2897 = vsub.f32 1.0, %v2896
    %v2898 = vmul.f32 %v2895, %v2897
    %v2899 = vadd.f32 %v2895, %v2898
    %vm2900 = vweird.f32 %v2894
    %vm2901 = vweird.f32 %v2895
    %vm2902 = vmor %vm2900, %vm2901
    %v2903 = vsel %vm2902, %v2895, %v2899
    %v2904 = vand.u32 2147483647, %v2894
    %vm2905 = vcmp.eq.f32.partialorder %v2904, 8.507059e+37
    %v2906 = vand.u32 %v2894, 2147483648
    %v2907 = vor.u32 1.1754944e-38, %v2906
    %v2908 = vsel %vm2905, %v2907, %v2903
    %v2909 = vmul.f32 1.0, %v2908
    %v2910 = vtanh.pop %v2870
    %v2911 = vxor.u32 %v2871, 2147483648
    %v2912 = vmul.f32 %v2911, 1.442695
    %v2913 = vpow.pop %v2912
    %v2914 = vadd.f32 %v2913, 1.0
    %v2915 = vrcp.pop %v2914
    %v2916 = vmul.f32 %v2914, %v2915
    %v2917 = vsub.f32 1.0, %v2916
    %v2918 = vmul.f32 %v2915, %v2917
    %v2919 = vadd.f32 %v2915, %v2918
    %vm2920 = vweird.f32 %v2914
    %vm2921 = vweird.f32 %v2915
    %vm2922 = vmor %vm2920, %vm2921
    %v2923 = vsel %vm2922, %v2915, %v2919
    %v2924 = vand.u32 2147483647, %v2914
    %vm2925 = vcmp.eq.f32.partialorder %v2924, 8.507059e+37
    %v2926 = vand.u32 %v2914, 2147483648
    %v2927 = vor.u32 1.1754944e-38, %v2926
    %v2928 = vsel %vm2925, %v2927, %v2923
    %v2929 = vmul.f32 1.0, %v2928
    %v2930 = vmul.f32 %v2909, %v2298
    %v2931 = vmul.f32 %v2890, %v2910
    %v2932 = vadd.f32 %v2930, %v2931
    %v2933 = vtanh.pop %v2932
    %v2934 = vmul.f32 %v2929, %v2933
    %v2935 = vld [vmem:[#allocation3 + $0x80] sm:$0xff]
    %v2936 = vld [vmem:[#allocation3 + $0x88] sm:$0xff]
    %v2937 = vld [vmem:[#allocation3 + $0x90] sm:$0xff]
    %v2938 = vld [vmem:[#allocation3 + $0x98] sm:$0xff]
    %v2939 = vpack.c.bf16 %v2616, %v2616
    %v2940 = vld [vmem:[#allocation12] sm:$0xff]
    %v2941 = vld [vmem:[#allocation12 + $0x8] sm:$0xff]
    %v2942 = vld [vmem:[#allocation12 + $0x10] sm:$0xff]
    %v2943 = vld [vmem:[#allocation12 + $0x18] sm:$0xff]
    %v2944 = vld [vmem:[#allocation12 + $0x20] sm:$0xff]
    %v2945 = vld [vmem:[#allocation12 + $0x28] sm:$0xff]
    %v2946 = vld [vmem:[#allocation12 + $0x30] sm:$0xff]
    %v2947 = vld [vmem:[#allocation12 + $0x38] sm:$0xff]
    %v2948 = vld [vmem:[#allocation12 + $0x40] sm:$0xff]
    %v2949 = vld [vmem:[#allocation12 + $0x48] sm:$0xff]
    %v2950 = vld [vmem:[#allocation12 + $0x50] sm:$0xff]
    %v2951 = vld [vmem:[#allocation12 + $0x58] sm:$0xff]
    %v2952 = vld [vmem:[#allocation12 + $0x60] sm:$0xff]
    %v2953 = vld [vmem:[#allocation12 + $0x68] sm:$0xff]
    %v2954 = vld [vmem:[#allocation12 + $0x70] sm:$0xff]
    %v2955 = vld [vmem:[#allocation12 + $0x78] sm:$0xff]
    %v2956 = vld [vmem:[#allocation12 + $0x80] sm:$0xff]
    %v2957 = vld [vmem:[#allocation12 + $0x88] sm:$0xff]
    %v2958 = vld [vmem:[#allocation12 + $0x90] sm:$0xff]
    %v2959 = vld [vmem:[#allocation12 + $0x98] sm:$0xff]
    %v2960 = vld [vmem:[#allocation12 + $0xa0] sm:$0xff]
    %v2961 = vld [vmem:[#allocation12 + $0xa8] sm:$0xff]
    %v2962 = vld [vmem:[#allocation12 + $0xb0] sm:$0xff]
    %v2963 = vld [vmem:[#allocation12 + $0xb8] sm:$0xff]
    %v2964 = vld [vmem:[#allocation12 + $0xc0] sm:$0xff]
    %v2965 = vld [vmem:[#allocation12 + $0xc8] sm:$0xff]
    %v2966 = vld [vmem:[#allocation12 + $0xd0] sm:$0xff]
    %v2967 = vld [vmem:[#allocation12 + $0xd8] sm:$0xff]
    %v2968 = vld [vmem:[#allocation12 + $0xe0] sm:$0xff]
    %v2969 = vld [vmem:[#allocation12 + $0xe8] sm:$0xff]
    %v2970 = vld [vmem:[#allocation12 + $0xf0] sm:$0xff]
    %v2971 = vld [vmem:[#allocation12 + $0xf8] sm:$0xff]
    %v3004 = vunpack.c.l.b16 %v2940
    %v3005 = vunpack.c.h.b16 %v2940
    %v3006 = vunpack.c.l.b16 %v2941
    %v3007 = vunpack.c.h.b16 %v2941
    %v3008 = vunpack.c.l.b16 %v2942
    %v3009 = vunpack.c.h.b16 %v2942
    %v3010 = vunpack.c.l.b16 %v2943
    %v3011 = vunpack.c.h.b16 %v2943
    %v3012 = vunpack.c.l.b16 %v2944
    %v3013 = vunpack.c.h.b16 %v2944
    %v3014 = vunpack.c.l.b16 %v2945
    %v3015 = vunpack.c.h.b16 %v2945
    %v3016 = vunpack.c.l.b16 %v2946
    %v3017 = vunpack.c.h.b16 %v2946
    %v3018 = vunpack.c.l.b16 %v2947
    %v3019 = vunpack.c.h.b16 %v2947
    %v3020 = vunpack.c.l.b16 %v2948
    %v3021 = vunpack.c.h.b16 %v2948
    %v3022 = vunpack.c.l.b16 %v2949
    %v3023 = vunpack.c.h.b16 %v2949
    %v3024 = vunpack.c.l.b16 %v2950
    %v3025 = vunpack.c.h.b16 %v2950
    %v3026 = vunpack.c.l.b16 %v2951
    %v3027 = vunpack.c.h.b16 %v2951
    %v3028 = vunpack.c.l.b16 %v2952
    %v3029 = vunpack.c.h.b16 %v2952
    %v3030 = vunpack.c.l.b16 %v2953
    %v3031 = vunpack.c.h.b16 %v2953
    %v3032 = vunpack.c.l.b16 %v2954
    %v3033 = vunpack.c.h.b16 %v2954
    %v3034 = vunpack.c.l.b16 %v2955
    %v3035 = vunpack.c.h.b16 %v2955
    %v3036 = vunpack.c.l.b16 %v2956
    %v3037 = vunpack.c.h.b16 %v2956
    %v3038 = vunpack.c.l.b16 %v2957
    %v3039 = vunpack.c.h.b16 %v2957
    %v3040 = vunpack.c.l.b16 %v2958
    %v3041 = vunpack.c.h.b16 %v2958
    %v3042 = vunpack.c.l.b16 %v2959
    %v3043 = vunpack.c.h.b16 %v2959
    %v3044 = vunpack.c.l.b16 %v2960
    %v3045 = vunpack.c.h.b16 %v2960
    %v3046 = vunpack.c.l.b16 %v2961
    %v3047 = vunpack.c.h.b16 %v2961
    %v3048 = vunpack.c.l.b16 %v2962
    %v3049 = vunpack.c.h.b16 %v2962
    %v3050 = vunpack.c.l.b16 %v2963
    %v3051 = vunpack.c.h.b16 %v2963
    %v3052 = vunpack.c.l.b16 %v2964
    %v3053 = vunpack.c.h.b16 %v2964
    %v3054 = vunpack.c.l.b16 %v2965
    %v3055 = vunpack.c.h.b16 %v2965
    %v3056 = vunpack.c.l.b16 %v2966
    %v3057 = vunpack.c.h.b16 %v2966
    %v3058 = vunpack.c.l.b16 %v2967
    %v3059 = vunpack.c.h.b16 %v2967
    %v3060 = vunpack.c.l.b16 %v2968
    %v3061 = vunpack.c.h.b16 %v2968
    %v3062 = vunpack.c.l.b16 %v2969
    %v3063 = vunpack.c.h.b16 %v2969
    %v3064 = vunpack.c.l.b16 %v2970
    %v3065 = vunpack.c.h.b16 %v2970
    %v3066 = vunpack.c.l.b16 %v2971
    %v3067 = vunpack.c.h.b16 %v2971
    %v3068 = vpack.c.b16 %v3008, %v3004
    %v3069 = vpack.c.b16 %v3009, %v3005
    %v3070 = vpack.c.b16 %v3010, %v3006
    %v3071 = vpack.c.b16 %v3011, %v3007
    %v3072 = vpack.c.b16 %v3016, %v3012
    %v3073 = vpack.c.b16 %v3017, %v3013
    %v3074 = vpack.c.b16 %v3018, %v3014
    %v3075 = vpack.c.b16 %v3019, %v3015
    %v3076 = vpack.c.b16 %v3024, %v3020
    %v3077 = vpack.c.b16 %v3025, %v3021
    %v3078 = vpack.c.b16 %v3026, %v3022
    %v3079 = vpack.c.b16 %v3027, %v3023
    %v3080 = vpack.c.b16 %v3032, %v3028
    %v3081 = vpack.c.b16 %v3033, %v3029
    %v3082 = vpack.c.b16 %v3034, %v3030
    %v3083 = vpack.c.b16 %v3035, %v3031
    %v3084 = vpack.c.b16 %v3040, %v3036
    %v3085 = vpack.c.b16 %v3041, %v3037
    %v3086 = vpack.c.b16 %v3042, %v3038
    %v3087 = vpack.c.b16 %v3043, %v3039
    %v3088 = vpack.c.b16 %v3048, %v3044
    %v3089 = vpack.c.b16 %v3049, %v3045
    %v3090 = vpack.c.b16 %v3050, %v3046
    %v3091 = vpack.c.b16 %v3051, %v3047
    %v3092 = vpack.c.b16 %v3056, %v3052
    %v3093 = vpack.c.b16 %v3057, %v3053
    %v3094 = vpack.c.b16 %v3058, %v3054
    %v3095 = vpack.c.b16 %v3059, %v3055
    %v3096 = vpack.c.b16 %v3064, %v3060
    %v3097 = vpack.c.b16 %v3065, %v3061
    %v3098 = vpack.c.b16 %v3066, %v3062
    %v3099 = vpack.c.b16 %v3067, %v3063
    %3132 = vmatpush.bf16.msra.mxu0 %v3096
    %3133 = vmatpush.bf16.msra.mxu0 %v3092
    %3134 = vmatpush.bf16.msra.mxu0 %v3088
    %3135 = vmatpush.bf16.msra.mxu0 %v3084
    %3136 = vmatpush.bf16.msra.mxu0 %v3080
    %3137 = vmatpush.bf16.msra.mxu0 %v3076
    %3138 = vmatpush.bf16.msra.mxu0 %v3072
    %3139 = vmatpush.bf16.msra.mxu0 %v3068
    %3140 = vmatmul.bf16.gmra.mxu0 %v2939
    %v3141 = vpop.f32.mrf.mxu0
    %v3142 = vadd.f32 0.0, %v3141
    %v3143 = vpop.f32.mrf.mxu0
    %3144 = vdwg.mxu0
    %3145 = vmatpush.bf16.msra.mxu0 %v3097
    %3146 = vmatpush.bf16.msra.mxu0 %v3093
    %3147 = vmatpush.bf16.msra.mxu0 %v3089
    %3148 = vmatpush.bf16.msra.mxu0 %v3085
    %3149 = vmatpush.bf16.msra.mxu0 %v3081
    %3150 = vmatpush.bf16.msra.mxu0 %v3077
    %3151 = vmatpush.bf16.msra.mxu0 %v3073
    %3152 = vmatpush.bf16.msra.mxu0 %v3069
    %3153 = vmatmul.bf16.gmra.mxu0 %v2939
    %v3154 = vpop.f32.mrf.mxu0
    %v3155 = vadd.f32 0.0, %v3154
    %v3156 = vpop.f32.mrf.mxu0
    %3157 = vdwg.mxu0
    %3158 = vmatpush.bf16.msra.mxu0 %v3098
    %3159 = vmatpush.bf16.msra.mxu0 %v3094
    %3160 = vmatpush.bf16.msra.mxu0 %v3090
    %3161 = vmatpush.bf16.msra.mxu0 %v3086
    %3162 = vmatpush.bf16.msra.mxu0 %v3082
    %3163 = vmatpush.bf16.msra.mxu0 %v3078
    %3164 = vmatpush.bf16.msra.mxu0 %v3074
    %3165 = vmatpush.bf16.msra.mxu0 %v3070
    %3166 = vmatmul.bf16.gmra.mxu0 %v2939
    %v3167 = vpop.f32.mrf.mxu0
    %v3168 = vadd.f32 0.0, %v3167
    %v3169 = vpop.f32.mrf.mxu0
    %3170 = vdwg.mxu0
    %3171 = vmatpush.bf16.msra.mxu0 %v3099
    %3172 = vmatpush.bf16.msra.mxu0 %v3095
    %3173 = vmatpush.bf16.msra.mxu0 %v3091
    %3174 = vmatpush.bf16.msra.mxu0 %v3087
    %3175 = vmatpush.bf16.msra.mxu0 %v3083
    %3176 = vmatpush.bf16.msra.mxu0 %v3079
    %3177 = vmatpush.bf16.msra.mxu0 %v3075
    %3178 = vmatpush.bf16.msra.mxu0 %v3071
    %3179 = vmatmul.bf16.gmra.mxu0 %v2939
    %v3180 = vpop.f32.mrf.mxu0
    %v3181 = vadd.f32 0.0, %v3180
    %v3182 = vpop.f32.mrf.mxu0
    %3183 = vdwg.mxu0
    %v3184 = vadd.f32 %v2935, %v3142
    %v3185 = vadd.f32 %v2936, %v3155
    %v3186 = vadd.f32 %v2937, %v3168
    %v3187 = vadd.f32 %v2938, %v3181
    %v3188 = vxor.u32 %v3184, 2147483648
    %v3189 = vmul.f32 %v3188, 1.442695
    %v3190 = vpow.pop %v3189
    %v3191 = vadd.f32 %v3190, 1.0
    %v3192 = vrcp.pop %v3191
    %v3193 = vmul.f32 %v3191, %v3192
    %v3194 = vsub.f32 1.0, %v3193
    %v3195 = vmul.f32 %v3192, %v3194
    %v3196 = vadd.f32 %v3192, %v3195
    %vm3197 = vweird.f32 %v3191
    %vm3198 = vweird.f32 %v3192
    %vm3199 = vmor %vm3197, %vm3198
    %v3200 = vsel %vm3199, %v3192, %v3196
    %v3201 = vand.u32 2147483647, %v3191
    %vm3202 = vcmp.eq.f32.partialorder %v3201, 8.507059e+37
    %v3203 = vand.u32 %v3191, 2147483648
    %v3204 = vor.u32 1.1754944e-38, %v3203
    %v3205 = vsel %vm3202, %v3204, %v3200
    %v3206 = vmul.f32 1.0, %v3205
    %v3207 = vxor.u32 %v3185, 2147483648
    %v3208 = vmul.f32 %v3207, 1.442695
    %v3209 = vpow.pop %v3208
    %v3210 = vadd.f32 %v3209, 1.0
    %v3211 = vrcp.pop %v3210
    %v3212 = vmul.f32 %v3210, %v3211
    %v3213 = vsub.f32 1.0, %v3212
    %v3214 = vmul.f32 %v3211, %v3213
    %v3215 = vadd.f32 %v3211, %v3214
    %vm3216 = vweird.f32 %v3210
    %vm3217 = vweird.f32 %v3211
    %vm3218 = vmor %vm3216, %vm3217
    %v3219 = vsel %vm3218, %v3211, %v3215
    %v3220 = vand.u32 2147483647, %v3210
    %vm3221 = vcmp.eq.f32.partialorder %v3220, 8.507059e+37
    %v3222 = vand.u32 %v3210, 2147483648
    %v3223 = vor.u32 1.1754944e-38, %v3222
    %v3224 = vsel %vm3221, %v3223, %v3219
    %v3225 = vmul.f32 1.0, %v3224
    %v3226 = vtanh.pop %v3186
    %v3227 = vxor.u32 %v3187, 2147483648
    %v3228 = vmul.f32 %v3227, 1.442695
    %v3229 = vpow.pop %v3228
    %v3230 = vadd.f32 %v3229, 1.0
    %v3231 = vrcp.pop %v3230
    %v3232 = vmul.f32 %v3230, %v3231
    %v3233 = vsub.f32 1.0, %v3232
    %v3234 = vmul.f32 %v3231, %v3233
    %v3235 = vadd.f32 %v3231, %v3234
    %vm3236 = vweird.f32 %v3230
    %vm3237 = vweird.f32 %v3231
    %vm3238 = vmor %vm3236, %vm3237
    %v3239 = vsel %vm3238, %v3231, %v3235
    %v3240 = vand.u32 2147483647, %v3230
    %vm3241 = vcmp.eq.f32.partialorder %v3240, 8.507059e+37
    %v3242 = vand.u32 %v3230, 2147483648
    %v3243 = vor.u32 1.1754944e-38, %v3242
    %v3244 = vsel %vm3241, %v3243, %v3239
    %v3245 = vmul.f32 1.0, %v3244
    %v3246 = vmul.f32 %v3225, %v2614
    %v3247 = vmul.f32 %v3206, %v3226
    %v3248 = vadd.f32 %v3246, %v3247
    %v3249 = vtanh.pop %v3248
    %v3250 = vmul.f32 %v3245, %v3249
    %3251 = vst [vmem:[#allocation4 + $0x30] sm:$0xff] %v2934
    %3252 = vst [vmem:[#allocation4 + $0x48] sm:$0xff] %v3250
    %v3253 = vld [vmem:[#allocation2 + $0x80] sm:$0xff]
    %v3254 = vld [vmem:[#allocation2 + $0x88] sm:$0xff]
    %v3255 = vld [vmem:[#allocation2 + $0x90] sm:$0xff]
    %v3256 = vld [vmem:[#allocation2 + $0x98] sm:$0xff]
    %v3257 = vpack.c.bf16 %v2934, %v2934
    %v3258 = vld [vmem:[#allocation6] sm:$0xff]
    %v3259 = vld [vmem:[#allocation6 + $0x8] sm:$0xff]
    %v3260 = vld [vmem:[#allocation6 + $0x10] sm:$0xff]
    %v3261 = vld [vmem:[#allocation6 + $0x18] sm:$0xff]
    %v3262 = vld [vmem:[#allocation6 + $0x20] sm:$0xff]
    %v3263 = vld [vmem:[#allocation6 + $0x28] sm:$0xff]
    %v3264 = vld [vmem:[#allocation6 + $0x30] sm:$0xff]
    %v3265 = vld [vmem:[#allocation6 + $0x38] sm:$0xff]
    %v3266 = vld [vmem:[#allocation6 + $0x40] sm:$0xff]
    %v3267 = vld [vmem:[#allocation6 + $0x48] sm:$0xff]
    %v3268 = vld [vmem:[#allocation6 + $0x50] sm:$0xff]
    %v3269 = vld [vmem:[#allocation6 + $0x58] sm:$0xff]
    %v3270 = vld [vmem:[#allocation6 + $0x60] sm:$0xff]
    %v3271 = vld [vmem:[#allocation6 + $0x68] sm:$0xff]
    %v3272 = vld [vmem:[#allocation6 + $0x70] sm:$0xff]
    %v3273 = vld [vmem:[#allocation6 + $0x78] sm:$0xff]
    %v3274 = vld [vmem:[#allocation6 + $0x80] sm:$0xff]
    %v3275 = vld [vmem:[#allocation6 + $0x88] sm:$0xff]
    %v3276 = vld [vmem:[#allocation6 + $0x90] sm:$0xff]
    %v3277 = vld [vmem:[#allocation6 + $0x98] sm:$0xff]
    %v3278 = vld [vmem:[#allocation6 + $0xa0] sm:$0xff]
    %v3279 = vld [vmem:[#allocation6 + $0xa8] sm:$0xff]
    %v3280 = vld [vmem:[#allocation6 + $0xb0] sm:$0xff]
    %v3281 = vld [vmem:[#allocation6 + $0xb8] sm:$0xff]
    %v3282 = vld [vmem:[#allocation6 + $0xc0] sm:$0xff]
    %v3283 = vld [vmem:[#allocation6 + $0xc8] sm:$0xff]
    %v3284 = vld [vmem:[#allocation6 + $0xd0] sm:$0xff]
    %v3285 = vld [vmem:[#allocation6 + $0xd8] sm:$0xff]
    %v3286 = vld [vmem:[#allocation6 + $0xe0] sm:$0xff]
    %v3287 = vld [vmem:[#allocation6 + $0xe8] sm:$0xff]
    %v3288 = vld [vmem:[#allocation6 + $0xf0] sm:$0xff]
    %v3289 = vld [vmem:[#allocation6 + $0xf8] sm:$0xff]
    %v3322 = vunpack.c.l.b16 %v3258
    %v3323 = vunpack.c.h.b16 %v3258
    %v3324 = vunpack.c.l.b16 %v3259
    %v3325 = vunpack.c.h.b16 %v3259
    %v3326 = vunpack.c.l.b16 %v3260
    %v3327 = vunpack.c.h.b16 %v3260
    %v3328 = vunpack.c.l.b16 %v3261
    %v3329 = vunpack.c.h.b16 %v3261
    %v3330 = vunpack.c.l.b16 %v3262
    %v3331 = vunpack.c.h.b16 %v3262
    %v3332 = vunpack.c.l.b16 %v3263
    %v3333 = vunpack.c.h.b16 %v3263
    %v3334 = vunpack.c.l.b16 %v3264
    %v3335 = vunpack.c.h.b16 %v3264
    %v3336 = vunpack.c.l.b16 %v3265
    %v3337 = vunpack.c.h.b16 %v3265
    %v3338 = vunpack.c.l.b16 %v3266
    %v3339 = vunpack.c.h.b16 %v3266
    %v3340 = vunpack.c.l.b16 %v3267
    %v3341 = vunpack.c.h.b16 %v3267
    %v3342 = vunpack.c.l.b16 %v3268
    %v3343 = vunpack.c.h.b16 %v3268
    %v3344 = vunpack.c.l.b16 %v3269
    %v3345 = vunpack.c.h.b16 %v3269
    %v3346 = vunpack.c.l.b16 %v3270
    %v3347 = vunpack.c.h.b16 %v3270
    %v3348 = vunpack.c.l.b16 %v3271
    %v3349 = vunpack.c.h.b16 %v3271
    %v3350 = vunpack.c.l.b16 %v3272
    %v3351 = vunpack.c.h.b16 %v3272
    %v3352 = vunpack.c.l.b16 %v3273
    %v3353 = vunpack.c.h.b16 %v3273
    %v3354 = vunpack.c.l.b16 %v3274
    %v3355 = vunpack.c.h.b16 %v3274
    %v3356 = vunpack.c.l.b16 %v3275
    %v3357 = vunpack.c.h.b16 %v3275
    %v3358 = vunpack.c.l.b16 %v3276
    %v3359 = vunpack.c.h.b16 %v3276
    %v3360 = vunpack.c.l.b16 %v3277
    %v3361 = vunpack.c.h.b16 %v3277
    %v3362 = vunpack.c.l.b16 %v3278
    %v3363 = vunpack.c.h.b16 %v3278
    %v3364 = vunpack.c.l.b16 %v3279
    %v3365 = vunpack.c.h.b16 %v3279
    %v3366 = vunpack.c.l.b16 %v3280
    %v3367 = vunpack.c.h.b16 %v3280
    %v3368 = vunpack.c.l.b16 %v3281
    %v3369 = vunpack.c.h.b16 %v3281
    %v3370 = vunpack.c.l.b16 %v3282
    %v3371 = vunpack.c.h.b16 %v3282
    %v3372 = vunpack.c.l.b16 %v3283
    %v3373 = vunpack.c.h.b16 %v3283
    %v3374 = vunpack.c.l.b16 %v3284
    %v3375 = vunpack.c.h.b16 %v3284
    %v3376 = vunpack.c.l.b16 %v3285
    %v3377 = vunpack.c.h.b16 %v3285
    %v3378 = vunpack.c.l.b16 %v3286
    %v3379 = vunpack.c.h.b16 %v3286
    %v3380 = vunpack.c.l.b16 %v3287
    %v3381 = vunpack.c.h.b16 %v3287
    %v3382 = vunpack.c.l.b16 %v3288
    %v3383 = vunpack.c.h.b16 %v3288
    %v3384 = vunpack.c.l.b16 %v3289
    %v3385 = vunpack.c.h.b16 %v3289
    %v3386 = vpack.c.b16 %v3326, %v3322
    %v3387 = vpack.c.b16 %v3327, %v3323
    %v3388 = vpack.c.b16 %v3328, %v3324
    %v3389 = vpack.c.b16 %v3329, %v3325
    %v3390 = vpack.c.b16 %v3334, %v3330
    %v3391 = vpack.c.b16 %v3335, %v3331
    %v3392 = vpack.c.b16 %v3336, %v3332
    %v3393 = vpack.c.b16 %v3337, %v3333
    %v3394 = vpack.c.b16 %v3342, %v3338
    %v3395 = vpack.c.b16 %v3343, %v3339
    %v3396 = vpack.c.b16 %v3344, %v3340
    %v3397 = vpack.c.b16 %v3345, %v3341
    %v3398 = vpack.c.b16 %v3350, %v3346
    %v3399 = vpack.c.b16 %v3351, %v3347
    %v3400 = vpack.c.b16 %v3352, %v3348
    %v3401 = vpack.c.b16 %v3353, %v3349
    %v3402 = vpack.c.b16 %v3358, %v3354
    %v3403 = vpack.c.b16 %v3359, %v3355
    %v3404 = vpack.c.b16 %v3360, %v3356
    %v3405 = vpack.c.b16 %v3361, %v3357
    %v3406 = vpack.c.b16 %v3366, %v3362
    %v3407 = vpack.c.b16 %v3367, %v3363
    %v3408 = vpack.c.b16 %v3368, %v3364
    %v3409 = vpack.c.b16 %v3369, %v3365
    %v3410 = vpack.c.b16 %v3374, %v3370
    %v3411 = vpack.c.b16 %v3375, %v3371
    %v3412 = vpack.c.b16 %v3376, %v3372
    %v3413 = vpack.c.b16 %v3377, %v3373
    %v3414 = vpack.c.b16 %v3382, %v3378
    %v3415 = vpack.c.b16 %v3383, %v3379
    %v3416 = vpack.c.b16 %v3384, %v3380
    %v3417 = vpack.c.b16 %v3385, %v3381
    %3450 = vmatpush.bf16.msra.mxu0 %v3414
    %3451 = vmatpush.bf16.msra.mxu0 %v3410
    %3452 = vmatpush.bf16.msra.mxu0 %v3406
    %3453 = vmatpush.bf16.msra.mxu0 %v3402
    %3454 = vmatpush.bf16.msra.mxu0 %v3398
    %3455 = vmatpush.bf16.msra.mxu0 %v3394
    %3456 = vmatpush.bf16.msra.mxu0 %v3390
    %3457 = vmatpush.bf16.msra.mxu0 %v3386
    %3458 = vmatmul.bf16.gmra.mxu0 %v3257
    %v3459 = vpop.f32.mrf.mxu0
    %v3460 = vadd.f32 0.0, %v3459
    %v3461 = vpop.f32.mrf.mxu0
    %3462 = vdwg.mxu0
    %3463 = vmatpush.bf16.msra.mxu0 %v3415
    %3464 = vmatpush.bf16.msra.mxu0 %v3411
    %3465 = vmatpush.bf16.msra.mxu0 %v3407
    %3466 = vmatpush.bf16.msra.mxu0 %v3403
    %3467 = vmatpush.bf16.msra.mxu0 %v3399
    %3468 = vmatpush.bf16.msra.mxu0 %v3395
    %3469 = vmatpush.bf16.msra.mxu0 %v3391
    %3470 = vmatpush.bf16.msra.mxu0 %v3387
    %3471 = vmatmul.bf16.gmra.mxu0 %v3257
    %v3472 = vpop.f32.mrf.mxu0
    %v3473 = vadd.f32 0.0, %v3472
    %v3474 = vpop.f32.mrf.mxu0
    %3475 = vdwg.mxu0
    %3476 = vmatpush.bf16.msra.mxu0 %v3416
    %3477 = vmatpush.bf16.msra.mxu0 %v3412
    %3478 = vmatpush.bf16.msra.mxu0 %v3408
    %3479 = vmatpush.bf16.msra.mxu0 %v3404
    %3480 = vmatpush.bf16.msra.mxu0 %v3400
    %3481 = vmatpush.bf16.msra.mxu0 %v3396
    %3482 = vmatpush.bf16.msra.mxu0 %v3392
    %3483 = vmatpush.bf16.msra.mxu0 %v3388
    %3484 = vmatmul.bf16.gmra.mxu0 %v3257
    %v3485 = vpop.f32.mrf.mxu0
    %v3486 = vadd.f32 0.0, %v3485
    %v3487 = vpop.f32.mrf.mxu0
    %3488 = vdwg.mxu0
    %3489 = vmatpush.bf16.msra.mxu0 %v3417
    %3490 = vmatpush.bf16.msra.mxu0 %v3413
    %3491 = vmatpush.bf16.msra.mxu0 %v3409
    %3492 = vmatpush.bf16.msra.mxu0 %v3405
    %3493 = vmatpush.bf16.msra.mxu0 %v3401
    %3494 = vmatpush.bf16.msra.mxu0 %v3397
    %3495 = vmatpush.bf16.msra.mxu0 %v3393
    %3496 = vmatpush.bf16.msra.mxu0 %v3389
    %3497 = vmatmul.bf16.gmra.mxu0 %v3257
    %v3498 = vpop.f32.mrf.mxu0
    %v3499 = vadd.f32 0.0, %v3498
    %v3500 = vpop.f32.mrf.mxu0
    %3501 = vdwg.mxu0
    %v3502 = vadd.f32 %v3253, %v3460
    %v3503 = vadd.f32 %v3254, %v3473
    %v3504 = vadd.f32 %v3255, %v3486
    %v3505 = vadd.f32 %v3256, %v3499
    %v3506 = vxor.u32 %v3502, 2147483648
    %v3507 = vmul.f32 %v3506, 1.442695
    %v3508 = vpow.pop %v3507
    %v3509 = vadd.f32 %v3508, 1.0
    %v3510 = vrcp.pop %v3509
    %v3511 = vmul.f32 %v3509, %v3510
    %v3512 = vsub.f32 1.0, %v3511
    %v3513 = vmul.f32 %v3510, %v3512
    %v3514 = vadd.f32 %v3510, %v3513
    %vm3515 = vweird.f32 %v3509
    %vm3516 = vweird.f32 %v3510
    %vm3517 = vmor %vm3515, %vm3516
    %v3518 = vsel %vm3517, %v3510, %v3514
    %v3519 = vand.u32 2147483647, %v3509
    %vm3520 = vcmp.eq.f32.partialorder %v3519, 8.507059e+37
    %v3521 = vand.u32 %v3509, 2147483648
    %v3522 = vor.u32 1.1754944e-38, %v3521
    %v3523 = vsel %vm3520, %v3522, %v3518
    %v3524 = vmul.f32 1.0, %v3523
    %v3525 = vxor.u32 %v3503, 2147483648
    %v3526 = vmul.f32 %v3525, 1.442695
    %v3527 = vpow.pop %v3526
    %v3528 = vadd.f32 %v3527, 1.0
    %v3529 = vrcp.pop %v3528
    %v3530 = vmul.f32 %v3528, %v3529
    %v3531 = vsub.f32 1.0, %v3530
    %v3532 = vmul.f32 %v3529, %v3531
    %v3533 = vadd.f32 %v3529, %v3532
    %vm3534 = vweird.f32 %v3528
    %vm3535 = vweird.f32 %v3529
    %vm3536 = vmor %vm3534, %vm3535
    %v3537 = vsel %vm3536, %v3529, %v3533
    %v3538 = vand.u32 2147483647, %v3528
    %vm3539 = vcmp.eq.f32.partialorder %v3538, 8.507059e+37
    %v3540 = vand.u32 %v3528, 2147483648
    %v3541 = vor.u32 1.1754944e-38, %v3540
    %v3542 = vsel %vm3539, %v3541, %v3537
    %v3543 = vmul.f32 1.0, %v3542
    %v3544 = vtanh.pop %v3504
    %v3545 = vxor.u32 %v3505, 2147483648
    %v3546 = vmul.f32 %v3545, 1.442695
    %v3547 = vpow.pop %v3546
    %v3548 = vadd.f32 %v3547, 1.0
    %v3549 = vrcp.pop %v3548
    %v3550 = vmul.f32 %v3548, %v3549
    %v3551 = vsub.f32 1.0, %v3550
    %v3552 = vmul.f32 %v3549, %v3551
    %v3553 = vadd.f32 %v3549, %v3552
    %vm3554 = vweird.f32 %v3548
    %vm3555 = vweird.f32 %v3549
    %vm3556 = vmor %vm3554, %vm3555
    %v3557 = vsel %vm3556, %v3549, %v3553
    %v3558 = vand.u32 2147483647, %v3548
    %vm3559 = vcmp.eq.f32.partialorder %v3558, 8.507059e+37
    %v3560 = vand.u32 %v3548, 2147483648
    %v3561 = vor.u32 1.1754944e-38, %v3560
    %v3562 = vsel %vm3559, %v3561, %v3557
    %v3563 = vmul.f32 1.0, %v3562
    %v3564 = vmul.f32 %v3543, %v2932
    %v3565 = vmul.f32 %v3524, %v3544
    %v3566 = vadd.f32 %v3564, %v3565
    %v3567 = vtanh.pop %v3566
    %v3568 = vmul.f32 %v3563, %v3567
    %v3569 = vld [vmem:[#allocation3 + $0x60] sm:$0xff]
    %v3570 = vld [vmem:[#allocation3 + $0x68] sm:$0xff]
    %v3571 = vld [vmem:[#allocation3 + $0x70] sm:$0xff]
    %v3572 = vld [vmem:[#allocation3 + $0x78] sm:$0xff]
    %v3573 = vpack.c.bf16 %v3250, %v3250
    %v3574 = vld [vmem:[#allocation12] sm:$0xff]
    %v3575 = vld [vmem:[#allocation12 + $0x8] sm:$0xff]
    %v3576 = vld [vmem:[#allocation12 + $0x10] sm:$0xff]
    %v3577 = vld [vmem:[#allocation12 + $0x18] sm:$0xff]
    %v3578 = vld [vmem:[#allocation12 + $0x20] sm:$0xff]
    %v3579 = vld [vmem:[#allocation12 + $0x28] sm:$0xff]
    %v3580 = vld [vmem:[#allocation12 + $0x30] sm:$0xff]
    %v3581 = vld [vmem:[#allocation12 + $0x38] sm:$0xff]
    %v3582 = vld [vmem:[#allocation12 + $0x40] sm:$0xff]
    %v3583 = vld [vmem:[#allocation12 + $0x48] sm:$0xff]
    %v3584 = vld [vmem:[#allocation12 + $0x50] sm:$0xff]
    %v3585 = vld [vmem:[#allocation12 + $0x58] sm:$0xff]
    %v3586 = vld [vmem:[#allocation12 + $0x60] sm:$0xff]
    %v3587 = vld [vmem:[#allocation12 + $0x68] sm:$0xff]
    %v3588 = vld [vmem:[#allocation12 + $0x70] sm:$0xff]
    %v3589 = vld [vmem:[#allocation12 + $0x78] sm:$0xff]
    %v3590 = vld [vmem:[#allocation12 + $0x80] sm:$0xff]
    %v3591 = vld [vmem:[#allocation12 + $0x88] sm:$0xff]
    %v3592 = vld [vmem:[#allocation12 + $0x90] sm:$0xff]
    %v3593 = vld [vmem:[#allocation12 + $0x98] sm:$0xff]
    %v3594 = vld [vmem:[#allocation12 + $0xa0] sm:$0xff]
    %v3595 = vld [vmem:[#allocation12 + $0xa8] sm:$0xff]
    %v3596 = vld [vmem:[#allocation12 + $0xb0] sm:$0xff]
    %v3597 = vld [vmem:[#allocation12 + $0xb8] sm:$0xff]
    %v3598 = vld [vmem:[#allocation12 + $0xc0] sm:$0xff]
    %v3599 = vld [vmem:[#allocation12 + $0xc8] sm:$0xff]
    %v3600 = vld [vmem:[#allocation12 + $0xd0] sm:$0xff]
    %v3601 = vld [vmem:[#allocation12 + $0xd8] sm:$0xff]
    %v3602 = vld [vmem:[#allocation12 + $0xe0] sm:$0xff]
    %v3603 = vld [vmem:[#allocation12 + $0xe8] sm:$0xff]
    %v3604 = vld [vmem:[#allocation12 + $0xf0] sm:$0xff]
    %v3605 = vld [vmem:[#allocation12 + $0xf8] sm:$0xff]
    %v3638 = vunpack.c.l.b16 %v3574
    %v3639 = vunpack.c.h.b16 %v3574
    %v3640 = vunpack.c.l.b16 %v3575
    %v3641 = vunpack.c.h.b16 %v3575
    %v3642 = vunpack.c.l.b16 %v3576
    %v3643 = vunpack.c.h.b16 %v3576
    %v3644 = vunpack.c.l.b16 %v3577
    %v3645 = vunpack.c.h.b16 %v3577
    %v3646 = vunpack.c.l.b16 %v3578
    %v3647 = vunpack.c.h.b16 %v3578
    %v3648 = vunpack.c.l.b16 %v3579
    %v3649 = vunpack.c.h.b16 %v3579
    %v3650 = vunpack.c.l.b16 %v3580
    %v3651 = vunpack.c.h.b16 %v3580
    %v3652 = vunpack.c.l.b16 %v3581
    %v3653 = vunpack.c.h.b16 %v3581
    %v3654 = vunpack.c.l.b16 %v3582
    %v3655 = vunpack.c.h.b16 %v3582
    %v3656 = vunpack.c.l.b16 %v3583
    %v3657 = vunpack.c.h.b16 %v3583
    %v3658 = vunpack.c.l.b16 %v3584
    %v3659 = vunpack.c.h.b16 %v3584
    %v3660 = vunpack.c.l.b16 %v3585
    %v3661 = vunpack.c.h.b16 %v3585
    %v3662 = vunpack.c.l.b16 %v3586
    %v3663 = vunpack.c.h.b16 %v3586
    %v3664 = vunpack.c.l.b16 %v3587
    %v3665 = vunpack.c.h.b16 %v3587
    %v3666 = vunpack.c.l.b16 %v3588
    %v3667 = vunpack.c.h.b16 %v3588
    %v3668 = vunpack.c.l.b16 %v3589
    %v3669 = vunpack.c.h.b16 %v3589
    %v3670 = vunpack.c.l.b16 %v3590
    %v3671 = vunpack.c.h.b16 %v3590
    %v3672 = vunpack.c.l.b16 %v3591
    %v3673 = vunpack.c.h.b16 %v3591
    %v3674 = vunpack.c.l.b16 %v3592
    %v3675 = vunpack.c.h.b16 %v3592
    %v3676 = vunpack.c.l.b16 %v3593
    %v3677 = vunpack.c.h.b16 %v3593
    %v3678 = vunpack.c.l.b16 %v3594
    %v3679 = vunpack.c.h.b16 %v3594
    %v3680 = vunpack.c.l.b16 %v3595
    %v3681 = vunpack.c.h.b16 %v3595
    %v3682 = vunpack.c.l.b16 %v3596
    %v3683 = vunpack.c.h.b16 %v3596
    %v3684 = vunpack.c.l.b16 %v3597
    %v3685 = vunpack.c.h.b16 %v3597
    %v3686 = vunpack.c.l.b16 %v3598
    %v3687 = vunpack.c.h.b16 %v3598
    %v3688 = vunpack.c.l.b16 %v3599
    %v3689 = vunpack.c.h.b16 %v3599
    %v3690 = vunpack.c.l.b16 %v3600
    %v3691 = vunpack.c.h.b16 %v3600
    %v3692 = vunpack.c.l.b16 %v3601
    %v3693 = vunpack.c.h.b16 %v3601
    %v3694 = vunpack.c.l.b16 %v3602
    %v3695 = vunpack.c.h.b16 %v3602
    %v3696 = vunpack.c.l.b16 %v3603
    %v3697 = vunpack.c.h.b16 %v3603
    %v3698 = vunpack.c.l.b16 %v3604
    %v3699 = vunpack.c.h.b16 %v3604
    %v3700 = vunpack.c.l.b16 %v3605
    %v3701 = vunpack.c.h.b16 %v3605
    %v3702 = vpack.c.b16 %v3642, %v3638
    %v3703 = vpack.c.b16 %v3643, %v3639
    %v3704 = vpack.c.b16 %v3644, %v3640
    %v3705 = vpack.c.b16 %v3645, %v3641
    %v3706 = vpack.c.b16 %v3650, %v3646
    %v3707 = vpack.c.b16 %v3651, %v3647
    %v3708 = vpack.c.b16 %v3652, %v3648
    %v3709 = vpack.c.b16 %v3653, %v3649
    %v3710 = vpack.c.b16 %v3658, %v3654
    %v3711 = vpack.c.b16 %v3659, %v3655
    %v3712 = vpack.c.b16 %v3660, %v3656
    %v3713 = vpack.c.b16 %v3661, %v3657
    %v3714 = vpack.c.b16 %v3666, %v3662
    %v3715 = vpack.c.b16 %v3667, %v3663
    %v3716 = vpack.c.b16 %v3668, %v3664
    %v3717 = vpack.c.b16 %v3669, %v3665
    %v3718 = vpack.c.b16 %v3674, %v3670
    %v3719 = vpack.c.b16 %v3675, %v3671
    %v3720 = vpack.c.b16 %v3676, %v3672
    %v3721 = vpack.c.b16 %v3677, %v3673
    %v3722 = vpack.c.b16 %v3682, %v3678
    %v3723 = vpack.c.b16 %v3683, %v3679
    %v3724 = vpack.c.b16 %v3684, %v3680
    %v3725 = vpack.c.b16 %v3685, %v3681
    %v3726 = vpack.c.b16 %v3690, %v3686
    %v3727 = vpack.c.b16 %v3691, %v3687
    %v3728 = vpack.c.b16 %v3692, %v3688
    %v3729 = vpack.c.b16 %v3693, %v3689
    %v3730 = vpack.c.b16 %v3698, %v3694
    %v3731 = vpack.c.b16 %v3699, %v3695
    %v3732 = vpack.c.b16 %v3700, %v3696
    %v3733 = vpack.c.b16 %v3701, %v3697
    %3766 = vmatpush.bf16.msra.mxu0 %v3730
    %3767 = vmatpush.bf16.msra.mxu0 %v3726
    %3768 = vmatpush.bf16.msra.mxu0 %v3722
    %3769 = vmatpush.bf16.msra.mxu0 %v3718
    %3770 = vmatpush.bf16.msra.mxu0 %v3714
    %3771 = vmatpush.bf16.msra.mxu0 %v3710
    %3772 = vmatpush.bf16.msra.mxu0 %v3706
    %3773 = vmatpush.bf16.msra.mxu0 %v3702
    %3774 = vmatmul.bf16.gmra.mxu0 %v3573
    %v3775 = vpop.f32.mrf.mxu0
    %v3776 = vadd.f32 0.0, %v3775
    %v3777 = vpop.f32.mrf.mxu0
    %3778 = vdwg.mxu0
    %3779 = vmatpush.bf16.msra.mxu0 %v3731
    %3780 = vmatpush.bf16.msra.mxu0 %v3727
    %3781 = vmatpush.bf16.msra.mxu0 %v3723
    %3782 = vmatpush.bf16.msra.mxu0 %v3719
    %3783 = vmatpush.bf16.msra.mxu0 %v3715
    %3784 = vmatpush.bf16.msra.mxu0 %v3711
    %3785 = vmatpush.bf16.msra.mxu0 %v3707
    %3786 = vmatpush.bf16.msra.mxu0 %v3703
    %3787 = vmatmul.bf16.gmra.mxu0 %v3573
    %v3788 = vpop.f32.mrf.mxu0
    %v3789 = vadd.f32 0.0, %v3788
    %v3790 = vpop.f32.mrf.mxu0
    %3791 = vdwg.mxu0
    %3792 = vmatpush.bf16.msra.mxu0 %v3732
    %3793 = vmatpush.bf16.msra.mxu0 %v3728
    %3794 = vmatpush.bf16.msra.mxu0 %v3724
    %3795 = vmatpush.bf16.msra.mxu0 %v3720
    %3796 = vmatpush.bf16.msra.mxu0 %v3716
    %3797 = vmatpush.bf16.msra.mxu0 %v3712
    %3798 = vmatpush.bf16.msra.mxu0 %v3708
    %3799 = vmatpush.bf16.msra.mxu0 %v3704
    %3800 = vmatmul.bf16.gmra.mxu0 %v3573
    %v3801 = vpop.f32.mrf.mxu0
    %v3802 = vadd.f32 0.0, %v3801
    %v3803 = vpop.f32.mrf.mxu0
    %3804 = vdwg.mxu0
    %3805 = vmatpush.bf16.msra.mxu0 %v3733
    %3806 = vmatpush.bf16.msra.mxu0 %v3729
    %3807 = vmatpush.bf16.msra.mxu0 %v3725
    %3808 = vmatpush.bf16.msra.mxu0 %v3721
    %3809 = vmatpush.bf16.msra.mxu0 %v3717
    %3810 = vmatpush.bf16.msra.mxu0 %v3713
    %3811 = vmatpush.bf16.msra.mxu0 %v3709
    %3812 = vmatpush.bf16.msra.mxu0 %v3705
    %3813 = vmatmul.bf16.gmra.mxu0 %v3573
    %v3814 = vpop.f32.mrf.mxu0
    %v3815 = vadd.f32 0.0, %v3814
    %v3816 = vpop.f32.mrf.mxu0
    %3817 = vdwg.mxu0
    %v3818 = vadd.f32 %v3569, %v3776
    %v3819 = vadd.f32 %v3570, %v3789
    %v3820 = vadd.f32 %v3571, %v3802
    %v3821 = vadd.f32 %v3572, %v3815
    %v3822 = vxor.u32 %v3818, 2147483648
    %v3823 = vmul.f32 %v3822, 1.442695
    %v3824 = vpow.pop %v3823
    %v3825 = vadd.f32 %v3824, 1.0
    %v3826 = vrcp.pop %v3825
    %v3827 = vmul.f32 %v3825, %v3826
    %v3828 = vsub.f32 1.0, %v3827
    %v3829 = vmul.f32 %v3826, %v3828
    %v3830 = vadd.f32 %v3826, %v3829
    %vm3831 = vweird.f32 %v3825
    %vm3832 = vweird.f32 %v3826
    %vm3833 = vmor %vm3831, %vm3832
    %v3834 = vsel %vm3833, %v3826, %v3830
    %v3835 = vand.u32 2147483647, %v3825
    %vm3836 = vcmp.eq.f32.partialorder %v3835, 8.507059e+37
    %v3837 = vand.u32 %v3825, 2147483648
    %v3838 = vor.u32 1.1754944e-38, %v3837
    %v3839 = vsel %vm3836, %v3838, %v3834
    %v3840 = vmul.f32 1.0, %v3839
    %v3841 = vxor.u32 %v3819, 2147483648
    %v3842 = vmul.f32 %v3841, 1.442695
    %v3843 = vpow.pop %v3842
    %v3844 = vadd.f32 %v3843, 1.0
    %v3845 = vrcp.pop %v3844
    %v3846 = vmul.f32 %v3844, %v3845
    %v3847 = vsub.f32 1.0, %v3846
    %v3848 = vmul.f32 %v3845, %v3847
    %v3849 = vadd.f32 %v3845, %v3848
    %vm3850 = vweird.f32 %v3844
    %vm3851 = vweird.f32 %v3845
    %vm3852 = vmor %vm3850, %vm3851
    %v3853 = vsel %vm3852, %v3845, %v3849
    %v3854 = vand.u32 2147483647, %v3844
    %vm3855 = vcmp.eq.f32.partialorder %v3854, 8.507059e+37
    %v3856 = vand.u32 %v3844, 2147483648
    %v3857 = vor.u32 1.1754944e-38, %v3856
    %v3858 = vsel %vm3855, %v3857, %v3853
    %v3859 = vmul.f32 1.0, %v3858
    %v3860 = vtanh.pop %v3820
    %v3861 = vxor.u32 %v3821, 2147483648
    %v3862 = vmul.f32 %v3861, 1.442695
    %v3863 = vpow.pop %v3862
    %v3864 = vadd.f32 %v3863, 1.0
    %v3865 = vrcp.pop %v3864
    %v3866 = vmul.f32 %v3864, %v3865
    %v3867 = vsub.f32 1.0, %v3866
    %v3868 = vmul.f32 %v3865, %v3867
    %v3869 = vadd.f32 %v3865, %v3868
    %vm3870 = vweird.f32 %v3864
    %vm3871 = vweird.f32 %v3865
    %vm3872 = vmor %vm3870, %vm3871
    %v3873 = vsel %vm3872, %v3865, %v3869
    %v3874 = vand.u32 2147483647, %v3864
    %vm3875 = vcmp.eq.f32.partialorder %v3874, 8.507059e+37
    %v3876 = vand.u32 %v3864, 2147483648
    %v3877 = vor.u32 1.1754944e-38, %v3876
    %v3878 = vsel %vm3875, %v3877, %v3873
    %v3879 = vmul.f32 1.0, %v3878
    %v3880 = vmul.f32 %v3859, %v3248
    %v3881 = vmul.f32 %v3840, %v3860
    %v3882 = vadd.f32 %v3880, %v3881
    %v3883 = vtanh.pop %v3882
    %v3884 = vmul.f32 %v3879, %v3883
    %3885 = vst [vmem:[#allocation4 + $0x40] sm:$0xff] %v3568
    %3886 = vst [vmem:[#allocation4 + $0x38] sm:$0xff] %v3884
    %v3887 = vld [vmem:[#allocation2 + $0xa0] sm:$0xff]
    %v3888 = vld [vmem:[#allocation2 + $0xa8] sm:$0xff]
    %v3889 = vld [vmem:[#allocation2 + $0xb0] sm:$0xff]
    %v3890 = vld [vmem:[#allocation2 + $0xb8] sm:$0xff]
    %v3891 = vpack.c.bf16 %v3568, %v3568
    %v3892 = vld [vmem:[#allocation6] sm:$0xff]
    %v3893 = vld [vmem:[#allocation6 + $0x8] sm:$0xff]
    %v3894 = vld [vmem:[#allocation6 + $0x10] sm:$0xff]
    %v3895 = vld [vmem:[#allocation6 + $0x18] sm:$0xff]
    %v3896 = vld [vmem:[#allocation6 + $0x20] sm:$0xff]
    %v3897 = vld [vmem:[#allocation6 + $0x28] sm:$0xff]
    %v3898 = vld [vmem:[#allocation6 + $0x30] sm:$0xff]
    %v3899 = vld [vmem:[#allocation6 + $0x38] sm:$0xff]
    %v3900 = vld [vmem:[#allocation6 + $0x40] sm:$0xff]
    %v3901 = vld [vmem:[#allocation6 + $0x48] sm:$0xff]
    %v3902 = vld [vmem:[#allocation6 + $0x50] sm:$0xff]
    %v3903 = vld [vmem:[#allocation6 + $0x58] sm:$0xff]
    %v3904 = vld [vmem:[#allocation6 + $0x60] sm:$0xff]
    %v3905 = vld [vmem:[#allocation6 + $0x68] sm:$0xff]
    %v3906 = vld [vmem:[#allocation6 + $0x70] sm:$0xff]
    %v3907 = vld [vmem:[#allocation6 + $0x78] sm:$0xff]
    %v3908 = vld [vmem:[#allocation6 + $0x80] sm:$0xff]
    %v3909 = vld [vmem:[#allocation6 + $0x88] sm:$0xff]
    %v3910 = vld [vmem:[#allocation6 + $0x90] sm:$0xff]
    %v3911 = vld [vmem:[#allocation6 + $0x98] sm:$0xff]
    %v3912 = vld [vmem:[#allocation6 + $0xa0] sm:$0xff]
    %v3913 = vld [vmem:[#allocation6 + $0xa8] sm:$0xff]
    %v3914 = vld [vmem:[#allocation6 + $0xb0] sm:$0xff]
    %v3915 = vld [vmem:[#allocation6 + $0xb8] sm:$0xff]
    %v3916 = vld [vmem:[#allocation6 + $0xc0] sm:$0xff]
    %v3917 = vld [vmem:[#allocation6 + $0xc8] sm:$0xff]
    %v3918 = vld [vmem:[#allocation6 + $0xd0] sm:$0xff]
    %v3919 = vld [vmem:[#allocation6 + $0xd8] sm:$0xff]
    %v3920 = vld [vmem:[#allocation6 + $0xe0] sm:$0xff]
    %v3921 = vld [vmem:[#allocation6 + $0xe8] sm:$0xff]
    %v3922 = vld [vmem:[#allocation6 + $0xf0] sm:$0xff]
    %v3923 = vld [vmem:[#allocation6 + $0xf8] sm:$0xff]
    %v3956 = vunpack.c.l.b16 %v3892
    %v3957 = vunpack.c.h.b16 %v3892
    %v3958 = vunpack.c.l.b16 %v3893
    %v3959 = vunpack.c.h.b16 %v3893
    %v3960 = vunpack.c.l.b16 %v3894
    %v3961 = vunpack.c.h.b16 %v3894
    %v3962 = vunpack.c.l.b16 %v3895
    %v3963 = vunpack.c.h.b16 %v3895
    %v3964 = vunpack.c.l.b16 %v3896
    %v3965 = vunpack.c.h.b16 %v3896
    %v3966 = vunpack.c.l.b16 %v3897
    %v3967 = vunpack.c.h.b16 %v3897
    %v3968 = vunpack.c.l.b16 %v3898
    %v3969 = vunpack.c.h.b16 %v3898
    %v3970 = vunpack.c.l.b16 %v3899
    %v3971 = vunpack.c.h.b16 %v3899
    %v3972 = vunpack.c.l.b16 %v3900
    %v3973 = vunpack.c.h.b16 %v3900
    %v3974 = vunpack.c.l.b16 %v3901
    %v3975 = vunpack.c.h.b16 %v3901
    %v3976 = vunpack.c.l.b16 %v3902
    %v3977 = vunpack.c.h.b16 %v3902
    %v3978 = vunpack.c.l.b16 %v3903
    %v3979 = vunpack.c.h.b16 %v3903
    %v3980 = vunpack.c.l.b16 %v3904
    %v3981 = vunpack.c.h.b16 %v3904
    %v3982 = vunpack.c.l.b16 %v3905
    %v3983 = vunpack.c.h.b16 %v3905
    %v3984 = vunpack.c.l.b16 %v3906
    %v3985 = vunpack.c.h.b16 %v3906
    %v3986 = vunpack.c.l.b16 %v3907
    %v3987 = vunpack.c.h.b16 %v3907
    %v3988 = vunpack.c.l.b16 %v3908
    %v3989 = vunpack.c.h.b16 %v3908
    %v3990 = vunpack.c.l.b16 %v3909
    %v3991 = vunpack.c.h.b16 %v3909
    %v3992 = vunpack.c.l.b16 %v3910
    %v3993 = vunpack.c.h.b16 %v3910
    %v3994 = vunpack.c.l.b16 %v3911
    %v3995 = vunpack.c.h.b16 %v3911
    %v3996 = vunpack.c.l.b16 %v3912
    %v3997 = vunpack.c.h.b16 %v3912
    %v3998 = vunpack.c.l.b16 %v3913
    %v3999 = vunpack.c.h.b16 %v3913
    %v4000 = vunpack.c.l.b16 %v3914
    %v4001 = vunpack.c.h.b16 %v3914
    %v4002 = vunpack.c.l.b16 %v3915
    %v4003 = vunpack.c.h.b16 %v3915
    %v4004 = vunpack.c.l.b16 %v3916
    %v4005 = vunpack.c.h.b16 %v3916
    %v4006 = vunpack.c.l.b16 %v3917
    %v4007 = vunpack.c.h.b16 %v3917
    %v4008 = vunpack.c.l.b16 %v3918
    %v4009 = vunpack.c.h.b16 %v3918
    %v4010 = vunpack.c.l.b16 %v3919
    %v4011 = vunpack.c.h.b16 %v3919
    %v4012 = vunpack.c.l.b16 %v3920
    %v4013 = vunpack.c.h.b16 %v3920
    %v4014 = vunpack.c.l.b16 %v3921
    %v4015 = vunpack.c.h.b16 %v3921
    %v4016 = vunpack.c.l.b16 %v3922
    %v4017 = vunpack.c.h.b16 %v3922
    %v4018 = vunpack.c.l.b16 %v3923
    %v4019 = vunpack.c.h.b16 %v3923
    %v4020 = vpack.c.b16 %v3960, %v3956
    %v4021 = vpack.c.b16 %v3961, %v3957
    %v4022 = vpack.c.b16 %v3962, %v3958
    %v4023 = vpack.c.b16 %v3963, %v3959
    %v4024 = vpack.c.b16 %v3968, %v3964
    %v4025 = vpack.c.b16 %v3969, %v3965
    %v4026 = vpack.c.b16 %v3970, %v3966
    %v4027 = vpack.c.b16 %v3971, %v3967
    %v4028 = vpack.c.b16 %v3976, %v3972
    %v4029 = vpack.c.b16 %v3977, %v3973
    %v4030 = vpack.c.b16 %v3978, %v3974
    %v4031 = vpack.c.b16 %v3979, %v3975
    %v4032 = vpack.c.b16 %v3984, %v3980
    %v4033 = vpack.c.b16 %v3985, %v3981
    %v4034 = vpack.c.b16 %v3986, %v3982
    %v4035 = vpack.c.b16 %v3987, %v3983
    %v4036 = vpack.c.b16 %v3992, %v3988
    %v4037 = vpack.c.b16 %v3993, %v3989
    %v4038 = vpack.c.b16 %v3994, %v3990
    %v4039 = vpack.c.b16 %v3995, %v3991
    %v4040 = vpack.c.b16 %v4000, %v3996
    %v4041 = vpack.c.b16 %v4001, %v3997
    %v4042 = vpack.c.b16 %v4002, %v3998
    %v4043 = vpack.c.b16 %v4003, %v3999
    %v4044 = vpack.c.b16 %v4008, %v4004
    %v4045 = vpack.c.b16 %v4009, %v4005
    %v4046 = vpack.c.b16 %v4010, %v4006
    %v4047 = vpack.c.b16 %v4011, %v4007
    %v4048 = vpack.c.b16 %v4016, %v4012
    %v4049 = vpack.c.b16 %v4017, %v4013
    %v4050 = vpack.c.b16 %v4018, %v4014
    %v4051 = vpack.c.b16 %v4019, %v4015
    %4084 = vmatpush.bf16.msra.mxu0 %v4048
    %4085 = vmatpush.bf16.msra.mxu0 %v4044
    %4086 = vmatpush.bf16.msra.mxu0 %v4040
    %4087 = vmatpush.bf16.msra.mxu0 %v4036
    %4088 = vmatpush.bf16.msra.mxu0 %v4032
    %4089 = vmatpush.bf16.msra.mxu0 %v4028
    %4090 = vmatpush.bf16.msra.mxu0 %v4024
    %4091 = vmatpush.bf16.msra.mxu0 %v4020
    %4092 = vmatmul.bf16.gmra.mxu0 %v3891
    %v4093 = vpop.f32.mrf.mxu0
    %v4094 = vadd.f32 0.0, %v4093
    %v4095 = vpop.f32.mrf.mxu0
    %4096 = vdwg.mxu0
    %4097 = vmatpush.bf16.msra.mxu0 %v4049
    %4098 = vmatpush.bf16.msra.mxu0 %v4045
    %4099 = vmatpush.bf16.msra.mxu0 %v4041
    %4100 = vmatpush.bf16.msra.mxu0 %v4037
    %4101 = vmatpush.bf16.msra.mxu0 %v4033
    %4102 = vmatpush.bf16.msra.mxu0 %v4029
    %4103 = vmatpush.bf16.msra.mxu0 %v4025
    %4104 = vmatpush.bf16.msra.mxu0 %v4021
    %4105 = vmatmul.bf16.gmra.mxu0 %v3891
    %v4106 = vpop.f32.mrf.mxu0
    %v4107 = vadd.f32 0.0, %v4106
    %v4108 = vpop.f32.mrf.mxu0
    %4109 = vdwg.mxu0
    %4110 = vmatpush.bf16.msra.mxu0 %v4050
    %4111 = vmatpush.bf16.msra.mxu0 %v4046
    %4112 = vmatpush.bf16.msra.mxu0 %v4042
    %4113 = vmatpush.bf16.msra.mxu0 %v4038
    %4114 = vmatpush.bf16.msra.mxu0 %v4034
    %4115 = vmatpush.bf16.msra.mxu0 %v4030
    %4116 = vmatpush.bf16.msra.mxu0 %v4026
    %4117 = vmatpush.bf16.msra.mxu0 %v4022
    %4118 = vmatmul.bf16.gmra.mxu0 %v3891
    %v4119 = vpop.f32.mrf.mxu0
    %v4120 = vadd.f32 0.0, %v4119
    %v4121 = vpop.f32.mrf.mxu0
    %4122 = vdwg.mxu0
    %4123 = vmatpush.bf16.msra.mxu0 %v4051
    %4124 = vmatpush.bf16.msra.mxu0 %v4047
    %4125 = vmatpush.bf16.msra.mxu0 %v4043
    %4126 = vmatpush.bf16.msra.mxu0 %v4039
    %4127 = vmatpush.bf16.msra.mxu0 %v4035
    %4128 = vmatpush.bf16.msra.mxu0 %v4031
    %4129 = vmatpush.bf16.msra.mxu0 %v4027
    %4130 = vmatpush.bf16.msra.mxu0 %v4023
    %4131 = vmatmul.bf16.gmra.mxu0 %v3891
    %v4132 = vpop.f32.mrf.mxu0
    %v4133 = vadd.f32 0.0, %v4132
    %v4134 = vpop.f32.mrf.mxu0
    %4135 = vdwg.mxu0
    %v4136 = vadd.f32 %v3887, %v4094
    %v4137 = vadd.f32 %v3888, %v4107
    %v4138 = vadd.f32 %v3889, %v4120
    %v4139 = vadd.f32 %v3890, %v4133
    %v4140 = vxor.u32 %v4136, 2147483648
    %v4141 = vmul.f32 %v4140, 1.442695
    %v4142 = vpow.pop %v4141
    %v4143 = vadd.f32 %v4142, 1.0
    %v4144 = vrcp.pop %v4143
    %v4145 = vmul.f32 %v4143, %v4144
    %v4146 = vsub.f32 1.0, %v4145
    %v4147 = vmul.f32 %v4144, %v4146
    %v4148 = vadd.f32 %v4144, %v4147
    %vm4149 = vweird.f32 %v4143
    %vm4150 = vweird.f32 %v4144
    %vm4151 = vmor %vm4149, %vm4150
    %v4152 = vsel %vm4151, %v4144, %v4148
    %v4153 = vand.u32 2147483647, %v4143
    %vm4154 = vcmp.eq.f32.partialorder %v4153, 8.507059e+37
    %v4155 = vand.u32 %v4143, 2147483648
    %v4156 = vor.u32 1.1754944e-38, %v4155
    %v4157 = vsel %vm4154, %v4156, %v4152
    %v4158 = vmul.f32 1.0, %v4157
    %v4159 = vxor.u32 %v4137, 2147483648
    %v4160 = vmul.f32 %v4159, 1.442695
    %v4161 = vpow.pop %v4160
    %v4162 = vadd.f32 %v4161, 1.0
    %v4163 = vrcp.pop %v4162
    %v4164 = vmul.f32 %v4162, %v4163
    %v4165 = vsub.f32 1.0, %v4164
    %v4166 = vmul.f32 %v4163, %v4165
    %v4167 = vadd.f32 %v4163, %v4166
    %vm4168 = vweird.f32 %v4162
    %vm4169 = vweird.f32 %v4163
    %vm4170 = vmor %vm4168, %vm4169
    %v4171 = vsel %vm4170, %v4163, %v4167
    %v4172 = vand.u32 2147483647, %v4162
    %vm4173 = vcmp.eq.f32.partialorder %v4172, 8.507059e+37
    %v4174 = vand.u32 %v4162, 2147483648
    %v4175 = vor.u32 1.1754944e-38, %v4174
    %v4176 = vsel %vm4173, %v4175, %v4171
    %v4177 = vmul.f32 1.0, %v4176
    %v4178 = vtanh.pop %v4138
    %v4179 = vxor.u32 %v4139, 2147483648
    %v4180 = vmul.f32 %v4179, 1.442695
    %v4181 = vpow.pop %v4180
    %v4182 = vadd.f32 %v4181, 1.0
    %v4183 = vrcp.pop %v4182
    %v4184 = vmul.f32 %v4182, %v4183
    %v4185 = vsub.f32 1.0, %v4184
    %v4186 = vmul.f32 %v4183, %v4185
    %v4187 = vadd.f32 %v4183, %v4186
    %vm4188 = vweird.f32 %v4182
    %vm4189 = vweird.f32 %v4183
    %vm4190 = vmor %vm4188, %vm4189
    %v4191 = vsel %vm4190, %v4183, %v4187
    %v4192 = vand.u32 2147483647, %v4182
    %vm4193 = vcmp.eq.f32.partialorder %v4192, 8.507059e+37
    %v4194 = vand.u32 %v4182, 2147483648
    %v4195 = vor.u32 1.1754944e-38, %v4194
    %v4196 = vsel %vm4193, %v4195, %v4191
    %v4197 = vmul.f32 1.0, %v4196
    %v4198 = vmul.f32 %v4177, %v3566
    %v4199 = vmul.f32 %v4158, %v4178
    %v4200 = vadd.f32 %v4198, %v4199
    %v4201 = vtanh.pop %v4200
    %v4202 = vmul.f32 %v4197, %v4201
    %v4203 = vld [vmem:[#allocation3 + $0x40] sm:$0xff]
    %v4204 = vld [vmem:[#allocation3 + $0x48] sm:$0xff]
    %v4205 = vld [vmem:[#allocation3 + $0x50] sm:$0xff]
    %v4206 = vld [vmem:[#allocation3 + $0x58] sm:$0xff]
    %v4207 = vpack.c.bf16 %v3884, %v3884
    %v4208 = vld [vmem:[#allocation12] sm:$0xff]
    %v4209 = vld [vmem:[#allocation12 + $0x8] sm:$0xff]
    %v4210 = vld [vmem:[#allocation12 + $0x10] sm:$0xff]
    %v4211 = vld [vmem:[#allocation12 + $0x18] sm:$0xff]
    %v4212 = vld [vmem:[#allocation12 + $0x20] sm:$0xff]
    %v4213 = vld [vmem:[#allocation12 + $0x28] sm:$0xff]
    %v4214 = vld [vmem:[#allocation12 + $0x30] sm:$0xff]
    %v4215 = vld [vmem:[#allocation12 + $0x38] sm:$0xff]
    %v4216 = vld [vmem:[#allocation12 + $0x40] sm:$0xff]
    %v4217 = vld [vmem:[#allocation12 + $0x48] sm:$0xff]
    %v4218 = vld [vmem:[#allocation12 + $0x50] sm:$0xff]
    %v4219 = vld [vmem:[#allocation12 + $0x58] sm:$0xff]
    %v4220 = vld [vmem:[#allocation12 + $0x60] sm:$0xff]
    %v4221 = vld [vmem:[#allocation12 + $0x68] sm:$0xff]
    %v4222 = vld [vmem:[#allocation12 + $0x70] sm:$0xff]
    %v4223 = vld [vmem:[#allocation12 + $0x78] sm:$0xff]
    %v4224 = vld [vmem:[#allocation12 + $0x80] sm:$0xff]
    %v4225 = vld [vmem:[#allocation12 + $0x88] sm:$0xff]
    %v4226 = vld [vmem:[#allocation12 + $0x90] sm:$0xff]
    %v4227 = vld [vmem:[#allocation12 + $0x98] sm:$0xff]
    %v4228 = vld [vmem:[#allocation12 + $0xa0] sm:$0xff]
    %v4229 = vld [vmem:[#allocation12 + $0xa8] sm:$0xff]
    %v4230 = vld [vmem:[#allocation12 + $0xb0] sm:$0xff]
    %v4231 = vld [vmem:[#allocation12 + $0xb8] sm:$0xff]
    %v4232 = vld [vmem:[#allocation12 + $0xc0] sm:$0xff]
    %v4233 = vld [vmem:[#allocation12 + $0xc8] sm:$0xff]
    %v4234 = vld [vmem:[#allocation12 + $0xd0] sm:$0xff]
    %v4235 = vld [vmem:[#allocation12 + $0xd8] sm:$0xff]
    %v4236 = vld [vmem:[#allocation12 + $0xe0] sm:$0xff]
    %v4237 = vld [vmem:[#allocation12 + $0xe8] sm:$0xff]
    %v4238 = vld [vmem:[#allocation12 + $0xf0] sm:$0xff]
    %v4239 = vld [vmem:[#allocation12 + $0xf8] sm:$0xff]
    %v4272 = vunpack.c.l.b16 %v4208
    %v4273 = vunpack.c.h.b16 %v4208
    %v4274 = vunpack.c.l.b16 %v4209
    %v4275 = vunpack.c.h.b16 %v4209
    %v4276 = vunpack.c.l.b16 %v4210
    %v4277 = vunpack.c.h.b16 %v4210
    %v4278 = vunpack.c.l.b16 %v4211
    %v4279 = vunpack.c.h.b16 %v4211
    %v4280 = vunpack.c.l.b16 %v4212
    %v4281 = vunpack.c.h.b16 %v4212
    %v4282 = vunpack.c.l.b16 %v4213
    %v4283 = vunpack.c.h.b16 %v4213
    %v4284 = vunpack.c.l.b16 %v4214
    %v4285 = vunpack.c.h.b16 %v4214
    %v4286 = vunpack.c.l.b16 %v4215
    %v4287 = vunpack.c.h.b16 %v4215
    %v4288 = vunpack.c.l.b16 %v4216
    %v4289 = vunpack.c.h.b16 %v4216
    %v4290 = vunpack.c.l.b16 %v4217
    %v4291 = vunpack.c.h.b16 %v4217
    %v4292 = vunpack.c.l.b16 %v4218
    %v4293 = vunpack.c.h.b16 %v4218
    %v4294 = vunpack.c.l.b16 %v4219
    %v4295 = vunpack.c.h.b16 %v4219
    %v4296 = vunpack.c.l.b16 %v4220
    %v4297 = vunpack.c.h.b16 %v4220
    %v4298 = vunpack.c.l.b16 %v4221
    %v4299 = vunpack.c.h.b16 %v4221
    %v4300 = vunpack.c.l.b16 %v4222
    %v4301 = vunpack.c.h.b16 %v4222
    %v4302 = vunpack.c.l.b16 %v4223
    %v4303 = vunpack.c.h.b16 %v4223
    %v4304 = vunpack.c.l.b16 %v4224
    %v4305 = vunpack.c.h.b16 %v4224
    %v4306 = vunpack.c.l.b16 %v4225
    %v4307 = vunpack.c.h.b16 %v4225
    %v4308 = vunpack.c.l.b16 %v4226
    %v4309 = vunpack.c.h.b16 %v4226
    %v4310 = vunpack.c.l.b16 %v4227
    %v4311 = vunpack.c.h.b16 %v4227
    %v4312 = vunpack.c.l.b16 %v4228
    %v4313 = vunpack.c.h.b16 %v4228
    %v4314 = vunpack.c.l.b16 %v4229
    %v4315 = vunpack.c.h.b16 %v4229
    %v4316 = vunpack.c.l.b16 %v4230
    %v4317 = vunpack.c.h.b16 %v4230
    %v4318 = vunpack.c.l.b16 %v4231
    %v4319 = vunpack.c.h.b16 %v4231
    %v4320 = vunpack.c.l.b16 %v4232
    %v4321 = vunpack.c.h.b16 %v4232
    %v4322 = vunpack.c.l.b16 %v4233
    %v4323 = vunpack.c.h.b16 %v4233
    %v4324 = vunpack.c.l.b16 %v4234
    %v4325 = vunpack.c.h.b16 %v4234
    %v4326 = vunpack.c.l.b16 %v4235
    %v4327 = vunpack.c.h.b16 %v4235
    %v4328 = vunpack.c.l.b16 %v4236
    %v4329 = vunpack.c.h.b16 %v4236
    %v4330 = vunpack.c.l.b16 %v4237
    %v4331 = vunpack.c.h.b16 %v4237
    %v4332 = vunpack.c.l.b16 %v4238
    %v4333 = vunpack.c.h.b16 %v4238
    %v4334 = vunpack.c.l.b16 %v4239
    %v4335 = vunpack.c.h.b16 %v4239
    %v4336 = vpack.c.b16 %v4276, %v4272
    %v4337 = vpack.c.b16 %v4277, %v4273
    %v4338 = vpack.c.b16 %v4278, %v4274
    %v4339 = vpack.c.b16 %v4279, %v4275
    %v4340 = vpack.c.b16 %v4284, %v4280
    %v4341 = vpack.c.b16 %v4285, %v4281
    %v4342 = vpack.c.b16 %v4286, %v4282
    %v4343 = vpack.c.b16 %v4287, %v4283
    %v4344 = vpack.c.b16 %v4292, %v4288
    %v4345 = vpack.c.b16 %v4293, %v4289
    %v4346 = vpack.c.b16 %v4294, %v4290
    %v4347 = vpack.c.b16 %v4295, %v4291
    %v4348 = vpack.c.b16 %v4300, %v4296
    %v4349 = vpack.c.b16 %v4301, %v4297
    %v4350 = vpack.c.b16 %v4302, %v4298
    %v4351 = vpack.c.b16 %v4303, %v4299
    %v4352 = vpack.c.b16 %v4308, %v4304
    %v4353 = vpack.c.b16 %v4309, %v4305
    %v4354 = vpack.c.b16 %v4310, %v4306
    %v4355 = vpack.c.b16 %v4311, %v4307
    %v4356 = vpack.c.b16 %v4316, %v4312
    %v4357 = vpack.c.b16 %v4317, %v4313
    %v4358 = vpack.c.b16 %v4318, %v4314
    %v4359 = vpack.c.b16 %v4319, %v4315
    %v4360 = vpack.c.b16 %v4324, %v4320
    %v4361 = vpack.c.b16 %v4325, %v4321
    %v4362 = vpack.c.b16 %v4326, %v4322
    %v4363 = vpack.c.b16 %v4327, %v4323
    %v4364 = vpack.c.b16 %v4332, %v4328
    %v4365 = vpack.c.b16 %v4333, %v4329
    %v4366 = vpack.c.b16 %v4334, %v4330
    %v4367 = vpack.c.b16 %v4335, %v4331
    %4400 = vmatpush.bf16.msra.mxu0 %v4364
    %4401 = vmatpush.bf16.msra.mxu0 %v4360
    %4402 = vmatpush.bf16.msra.mxu0 %v4356
    %4403 = vmatpush.bf16.msra.mxu0 %v4352
    %4404 = vmatpush.bf16.msra.mxu0 %v4348
    %4405 = vmatpush.bf16.msra.mxu0 %v4344
    %4406 = vmatpush.bf16.msra.mxu0 %v4340
    %4407 = vmatpush.bf16.msra.mxu0 %v4336
    %4408 = vmatmul.bf16.gmra.mxu0 %v4207
    %v4409 = vpop.f32.mrf.mxu0
    %v4410 = vadd.f32 0.0, %v4409
    %v4411 = vpop.f32.mrf.mxu0
    %4412 = vdwg.mxu0
    %4413 = vmatpush.bf16.msra.mxu0 %v4365
    %4414 = vmatpush.bf16.msra.mxu0 %v4361
    %4415 = vmatpush.bf16.msra.mxu0 %v4357
    %4416 = vmatpush.bf16.msra.mxu0 %v4353
    %4417 = vmatpush.bf16.msra.mxu0 %v4349
    %4418 = vmatpush.bf16.msra.mxu0 %v4345
    %4419 = vmatpush.bf16.msra.mxu0 %v4341
    %4420 = vmatpush.bf16.msra.mxu0 %v4337
    %4421 = vmatmul.bf16.gmra.mxu0 %v4207
    %v4422 = vpop.f32.mrf.mxu0
    %v4423 = vadd.f32 0.0, %v4422
    %v4424 = vpop.f32.mrf.mxu0
    %4425 = vdwg.mxu0
    %4426 = vmatpush.bf16.msra.mxu0 %v4366
    %4427 = vmatpush.bf16.msra.mxu0 %v4362
    %4428 = vmatpush.bf16.msra.mxu0 %v4358
    %4429 = vmatpush.bf16.msra.mxu0 %v4354
    %4430 = vmatpush.bf16.msra.mxu0 %v4350
    %4431 = vmatpush.bf16.msra.mxu0 %v4346
    %4432 = vmatpush.bf16.msra.mxu0 %v4342
    %4433 = vmatpush.bf16.msra.mxu0 %v4338
    %4434 = vmatmul.bf16.gmra.mxu0 %v4207
    %v4435 = vpop.f32.mrf.mxu0
    %v4436 = vadd.f32 0.0, %v4435
    %v4437 = vpop.f32.mrf.mxu0
    %4438 = vdwg.mxu0
    %4439 = vmatpush.bf16.msra.mxu0 %v4367
    %4440 = vmatpush.bf16.msra.mxu0 %v4363
    %4441 = vmatpush.bf16.msra.mxu0 %v4359
    %4442 = vmatpush.bf16.msra.mxu0 %v4355
    %4443 = vmatpush.bf16.msra.mxu0 %v4351
    %4444 = vmatpush.bf16.msra.mxu0 %v4347
    %4445 = vmatpush.bf16.msra.mxu0 %v4343
    %4446 = vmatpush.bf16.msra.mxu0 %v4339
    %4447 = vmatmul.bf16.gmra.mxu0 %v4207
    %v4448 = vpop.f32.mrf.mxu0
    %v4449 = vadd.f32 0.0, %v4448
    %v4450 = vpop.f32.mrf.mxu0
    %4451 = vdwg.mxu0
    %v4452 = vadd.f32 %v4203, %v4410
    %v4453 = vadd.f32 %v4204, %v4423
    %v4454 = vadd.f32 %v4205, %v4436
    %v4455 = vadd.f32 %v4206, %v4449
    %v4456 = vxor.u32 %v4452, 2147483648
    %v4457 = vmul.f32 %v4456, 1.442695
    %v4458 = vpow.pop %v4457
    %v4459 = vadd.f32 %v4458, 1.0
    %v4460 = vrcp.pop %v4459
    %v4461 = vmul.f32 %v4459, %v4460
    %v4462 = vsub.f32 1.0, %v4461
    %v4463 = vmul.f32 %v4460, %v4462
    %v4464 = vadd.f32 %v4460, %v4463
    %vm4465 = vweird.f32 %v4459
    %vm4466 = vweird.f32 %v4460
    %vm4467 = vmor %vm4465, %vm4466
    %v4468 = vsel %vm4467, %v4460, %v4464
    %v4469 = vand.u32 2147483647, %v4459
    %vm4470 = vcmp.eq.f32.partialorder %v4469, 8.507059e+37
    %v4471 = vand.u32 %v4459, 2147483648
    %v4472 = vor.u32 1.1754944e-38, %v4471
    %v4473 = vsel %vm4470, %v4472, %v4468
    %v4474 = vmul.f32 1.0, %v4473
    %v4475 = vxor.u32 %v4453, 2147483648
    %v4476 = vmul.f32 %v4475, 1.442695
    %v4477 = vpow.pop %v4476
    %v4478 = vadd.f32 %v4477, 1.0
    %v4479 = vrcp.pop %v4478
    %v4480 = vmul.f32 %v4478, %v4479
    %v4481 = vsub.f32 1.0, %v4480
    %v4482 = vmul.f32 %v4479, %v4481
    %v4483 = vadd.f32 %v4479, %v4482
    %vm4484 = vweird.f32 %v4478
    %vm4485 = vweird.f32 %v4479
    %vm4486 = vmor %vm4484, %vm4485
    %v4487 = vsel %vm4486, %v4479, %v4483
    %v4488 = vand.u32 2147483647, %v4478
    %vm4489 = vcmp.eq.f32.partialorder %v4488, 8.507059e+37
    %v4490 = vand.u32 %v4478, 2147483648
    %v4491 = vor.u32 1.1754944e-38, %v4490
    %v4492 = vsel %vm4489, %v4491, %v4487
    %v4493 = vmul.f32 1.0, %v4492
    %v4494 = vtanh.pop %v4454
    %v4495 = vxor.u32 %v4455, 2147483648
    %v4496 = vmul.f32 %v4495, 1.442695
    %v4497 = vpow.pop %v4496
    %v4498 = vadd.f32 %v4497, 1.0
    %v4499 = vrcp.pop %v4498
    %v4500 = vmul.f32 %v4498, %v4499
    %v4501 = vsub.f32 1.0, %v4500
    %v4502 = vmul.f32 %v4499, %v4501
    %v4503 = vadd.f32 %v4499, %v4502
    %vm4504 = vweird.f32 %v4498
    %vm4505 = vweird.f32 %v4499
    %vm4506 = vmor %vm4504, %vm4505
    %v4507 = vsel %vm4506, %v4499, %v4503
    %v4508 = vand.u32 2147483647, %v4498
    %vm4509 = vcmp.eq.f32.partialorder %v4508, 8.507059e+37
    %v4510 = vand.u32 %v4498, 2147483648
    %v4511 = vor.u32 1.1754944e-38, %v4510
    %v4512 = vsel %vm4509, %v4511, %v4507
    %v4513 = vmul.f32 1.0, %v4512
    %v4514 = vmul.f32 %v4493, %v3882
    %v4515 = vmul.f32 %v4474, %v4494
    %v4516 = vadd.f32 %v4514, %v4515
    %v4517 = vtanh.pop %v4516
    %v4518 = vmul.f32 %v4513, %v4517
    %4519 = vst [vmem:[#allocation4 + $0x50] sm:$0xff] %v4202
    %4520 = vst [vmem:[#allocation4 + $0x28] sm:$0xff] %v4518
    %v4521 = vld [vmem:[#allocation2 + $0xc0] sm:$0xff]
    %v4522 = vld [vmem:[#allocation2 + $0xc8] sm:$0xff]
    %v4523 = vld [vmem:[#allocation2 + $0xd0] sm:$0xff]
    %v4524 = vld [vmem:[#allocation2 + $0xd8] sm:$0xff]
    %v4525 = vpack.c.bf16 %v4202, %v4202
    %v4526 = vld [vmem:[#allocation6] sm:$0xff]
    %v4527 = vld [vmem:[#allocation6 + $0x8] sm:$0xff]
    %v4528 = vld [vmem:[#allocation6 + $0x10] sm:$0xff]
    %v4529 = vld [vmem:[#allocation6 + $0x18] sm:$0xff]
    %v4530 = vld [vmem:[#allocation6 + $0x20] sm:$0xff]
    %v4531 = vld [vmem:[#allocation6 + $0x28] sm:$0xff]
    %v4532 = vld [vmem:[#allocation6 + $0x30] sm:$0xff]
    %v4533 = vld [vmem:[#allocation6 + $0x38] sm:$0xff]
    %v4534 = vld [vmem:[#allocation6 + $0x40] sm:$0xff]
    %v4535 = vld [vmem:[#allocation6 + $0x48] sm:$0xff]
    %v4536 = vld [vmem:[#allocation6 + $0x50] sm:$0xff]
    %v4537 = vld [vmem:[#allocation6 + $0x58] sm:$0xff]
    %v4538 = vld [vmem:[#allocation6 + $0x60] sm:$0xff]
    %v4539 = vld [vmem:[#allocation6 + $0x68] sm:$0xff]
    %v4540 = vld [vmem:[#allocation6 + $0x70] sm:$0xff]
    %v4541 = vld [vmem:[#allocation6 + $0x78] sm:$0xff]
    %v4542 = vld [vmem:[#allocation6 + $0x80] sm:$0xff]
    %v4543 = vld [vmem:[#allocation6 + $0x88] sm:$0xff]
    %v4544 = vld [vmem:[#allocation6 + $0x90] sm:$0xff]
    %v4545 = vld [vmem:[#allocation6 + $0x98] sm:$0xff]
    %v4546 = vld [vmem:[#allocation6 + $0xa0] sm:$0xff]
    %v4547 = vld [vmem:[#allocation6 + $0xa8] sm:$0xff]
    %v4548 = vld [vmem:[#allocation6 + $0xb0] sm:$0xff]
    %v4549 = vld [vmem:[#allocation6 + $0xb8] sm:$0xff]
    %v4550 = vld [vmem:[#allocation6 + $0xc0] sm:$0xff]
    %v4551 = vld [vmem:[#allocation6 + $0xc8] sm:$0xff]
    %v4552 = vld [vmem:[#allocation6 + $0xd0] sm:$0xff]
    %v4553 = vld [vmem:[#allocation6 + $0xd8] sm:$0xff]
    %v4554 = vld [vmem:[#allocation6 + $0xe0] sm:$0xff]
    %v4555 = vld [vmem:[#allocation6 + $0xe8] sm:$0xff]
    %v4556 = vld [vmem:[#allocation6 + $0xf0] sm:$0xff]
    %v4557 = vld [vmem:[#allocation6 + $0xf8] sm:$0xff]
    %v4590 = vunpack.c.l.b16 %v4526
    %v4591 = vunpack.c.h.b16 %v4526
    %v4592 = vunpack.c.l.b16 %v4527
    %v4593 = vunpack.c.h.b16 %v4527
    %v4594 = vunpack.c.l.b16 %v4528
    %v4595 = vunpack.c.h.b16 %v4528
    %v4596 = vunpack.c.l.b16 %v4529
    %v4597 = vunpack.c.h.b16 %v4529
    %v4598 = vunpack.c.l.b16 %v4530
    %v4599 = vunpack.c.h.b16 %v4530
    %v4600 = vunpack.c.l.b16 %v4531
    %v4601 = vunpack.c.h.b16 %v4531
    %v4602 = vunpack.c.l.b16 %v4532
    %v4603 = vunpack.c.h.b16 %v4532
    %v4604 = vunpack.c.l.b16 %v4533
    %v4605 = vunpack.c.h.b16 %v4533
    %v4606 = vunpack.c.l.b16 %v4534
    %v4607 = vunpack.c.h.b16 %v4534
    %v4608 = vunpack.c.l.b16 %v4535
    %v4609 = vunpack.c.h.b16 %v4535
    %v4610 = vunpack.c.l.b16 %v4536
    %v4611 = vunpack.c.h.b16 %v4536
    %v4612 = vunpack.c.l.b16 %v4537
    %v4613 = vunpack.c.h.b16 %v4537
    %v4614 = vunpack.c.l.b16 %v4538
    %v4615 = vunpack.c.h.b16 %v4538
    %v4616 = vunpack.c.l.b16 %v4539
    %v4617 = vunpack.c.h.b16 %v4539
    %v4618 = vunpack.c.l.b16 %v4540
    %v4619 = vunpack.c.h.b16 %v4540
    %v4620 = vunpack.c.l.b16 %v4541
    %v4621 = vunpack.c.h.b16 %v4541
    %v4622 = vunpack.c.l.b16 %v4542
    %v4623 = vunpack.c.h.b16 %v4542
    %v4624 = vunpack.c.l.b16 %v4543
    %v4625 = vunpack.c.h.b16 %v4543
    %v4626 = vunpack.c.l.b16 %v4544
    %v4627 = vunpack.c.h.b16 %v4544
    %v4628 = vunpack.c.l.b16 %v4545
    %v4629 = vunpack.c.h.b16 %v4545
    %v4630 = vunpack.c.l.b16 %v4546
    %v4631 = vunpack.c.h.b16 %v4546
    %v4632 = vunpack.c.l.b16 %v4547
    %v4633 = vunpack.c.h.b16 %v4547
    %v4634 = vunpack.c.l.b16 %v4548
    %v4635 = vunpack.c.h.b16 %v4548
    %v4636 = vunpack.c.l.b16 %v4549
    %v4637 = vunpack.c.h.b16 %v4549
    %v4638 = vunpack.c.l.b16 %v4550
    %v4639 = vunpack.c.h.b16 %v4550
    %v4640 = vunpack.c.l.b16 %v4551
    %v4641 = vunpack.c.h.b16 %v4551
    %v4642 = vunpack.c.l.b16 %v4552
    %v4643 = vunpack.c.h.b16 %v4552
    %v4644 = vunpack.c.l.b16 %v4553
    %v4645 = vunpack.c.h.b16 %v4553
    %v4646 = vunpack.c.l.b16 %v4554
    %v4647 = vunpack.c.h.b16 %v4554
    %v4648 = vunpack.c.l.b16 %v4555
    %v4649 = vunpack.c.h.b16 %v4555
    %v4650 = vunpack.c.l.b16 %v4556
    %v4651 = vunpack.c.h.b16 %v4556
    %v4652 = vunpack.c.l.b16 %v4557
    %v4653 = vunpack.c.h.b16 %v4557
    %v4654 = vpack.c.b16 %v4594, %v4590
    %v4655 = vpack.c.b16 %v4595, %v4591
    %v4656 = vpack.c.b16 %v4596, %v4592
    %v4657 = vpack.c.b16 %v4597, %v4593
    %v4658 = vpack.c.b16 %v4602, %v4598
    %v4659 = vpack.c.b16 %v4603, %v4599
    %v4660 = vpack.c.b16 %v4604, %v4600
    %v4661 = vpack.c.b16 %v4605, %v4601
    %v4662 = vpack.c.b16 %v4610, %v4606
    %v4663 = vpack.c.b16 %v4611, %v4607
    %v4664 = vpack.c.b16 %v4612, %v4608
    %v4665 = vpack.c.b16 %v4613, %v4609
    %v4666 = vpack.c.b16 %v4618, %v4614
    %v4667 = vpack.c.b16 %v4619, %v4615
    %v4668 = vpack.c.b16 %v4620, %v4616
    %v4669 = vpack.c.b16 %v4621, %v4617
    %v4670 = vpack.c.b16 %v4626, %v4622
    %v4671 = vpack.c.b16 %v4627, %v4623
    %v4672 = vpack.c.b16 %v4628, %v4624
    %v4673 = vpack.c.b16 %v4629, %v4625
    %v4674 = vpack.c.b16 %v4634, %v4630
    %v4675 = vpack.c.b16 %v4635, %v4631
    %v4676 = vpack.c.b16 %v4636, %v4632
    %v4677 = vpack.c.b16 %v4637, %v4633
    %v4678 = vpack.c.b16 %v4642, %v4638
    %v4679 = vpack.c.b16 %v4643, %v4639
    %v4680 = vpack.c.b16 %v4644, %v4640
    %v4681 = vpack.c.b16 %v4645, %v4641
    %v4682 = vpack.c.b16 %v4650, %v4646
    %v4683 = vpack.c.b16 %v4651, %v4647
    %v4684 = vpack.c.b16 %v4652, %v4648
    %v4685 = vpack.c.b16 %v4653, %v4649
    %4718 = vmatpush.bf16.msra.mxu0 %v4682
    %4719 = vmatpush.bf16.msra.mxu0 %v4678
    %4720 = vmatpush.bf16.msra.mxu0 %v4674
    %4721 = vmatpush.bf16.msra.mxu0 %v4670
    %4722 = vmatpush.bf16.msra.mxu0 %v4666
    %4723 = vmatpush.bf16.msra.mxu0 %v4662
    %4724 = vmatpush.bf16.msra.mxu0 %v4658
    %4725 = vmatpush.bf16.msra.mxu0 %v4654
    %4726 = vmatmul.bf16.gmra.mxu0 %v4525
    %v4727 = vpop.f32.mrf.mxu0
    %v4728 = vadd.f32 0.0, %v4727
    %v4729 = vpop.f32.mrf.mxu0
    %4730 = vdwg.mxu0
    %4731 = vmatpush.bf16.msra.mxu0 %v4683
    %4732 = vmatpush.bf16.msra.mxu0 %v4679
    %4733 = vmatpush.bf16.msra.mxu0 %v4675
    %4734 = vmatpush.bf16.msra.mxu0 %v4671
    %4735 = vmatpush.bf16.msra.mxu0 %v4667
    %4736 = vmatpush.bf16.msra.mxu0 %v4663
    %4737 = vmatpush.bf16.msra.mxu0 %v4659
    %4738 = vmatpush.bf16.msra.mxu0 %v4655
    %4739 = vmatmul.bf16.gmra.mxu0 %v4525
    %v4740 = vpop.f32.mrf.mxu0
    %v4741 = vadd.f32 0.0, %v4740
    %v4742 = vpop.f32.mrf.mxu0
    %4743 = vdwg.mxu0
    %4744 = vmatpush.bf16.msra.mxu0 %v4684
    %4745 = vmatpush.bf16.msra.mxu0 %v4680
    %4746 = vmatpush.bf16.msra.mxu0 %v4676
    %4747 = vmatpush.bf16.msra.mxu0 %v4672
    %4748 = vmatpush.bf16.msra.mxu0 %v4668
    %4749 = vmatpush.bf16.msra.mxu0 %v4664
    %4750 = vmatpush.bf16.msra.mxu0 %v4660
    %4751 = vmatpush.bf16.msra.mxu0 %v4656
    %4752 = vmatmul.bf16.gmra.mxu0 %v4525
    %v4753 = vpop.f32.mrf.mxu0
    %v4754 = vadd.f32 0.0, %v4753
    %v4755 = vpop.f32.mrf.mxu0
    %4756 = vdwg.mxu0
    %4757 = vmatpush.bf16.msra.mxu0 %v4685
    %4758 = vmatpush.bf16.msra.mxu0 %v4681
    %4759 = vmatpush.bf16.msra.mxu0 %v4677
    %4760 = vmatpush.bf16.msra.mxu0 %v4673
    %4761 = vmatpush.bf16.msra.mxu0 %v4669
    %4762 = vmatpush.bf16.msra.mxu0 %v4665
    %4763 = vmatpush.bf16.msra.mxu0 %v4661
    %4764 = vmatpush.bf16.msra.mxu0 %v4657
    %4765 = vmatmul.bf16.gmra.mxu0 %v4525
    %v4766 = vpop.f32.mrf.mxu0
    %v4767 = vadd.f32 0.0, %v4766
    %v4768 = vpop.f32.mrf.mxu0
    %4769 = vdwg.mxu0
    %v4770 = vadd.f32 %v4521, %v4728
    %v4771 = vadd.f32 %v4522, %v4741
    %v4772 = vadd.f32 %v4523, %v4754
    %v4773 = vadd.f32 %v4524, %v4767
    %v4774 = vxor.u32 %v4770, 2147483648
    %v4775 = vmul.f32 %v4774, 1.442695
    %v4776 = vpow.pop %v4775
    %v4777 = vadd.f32 %v4776, 1.0
    %v4778 = vrcp.pop %v4777
    %v4779 = vmul.f32 %v4777, %v4778
    %v4780 = vsub.f32 1.0, %v4779
    %v4781 = vmul.f32 %v4778, %v4780
    %v4782 = vadd.f32 %v4778, %v4781
    %vm4783 = vweird.f32 %v4777
    %vm4784 = vweird.f32 %v4778
    %vm4785 = vmor %vm4783, %vm4784
    %v4786 = vsel %vm4785, %v4778, %v4782
    %v4787 = vand.u32 2147483647, %v4777
    %vm4788 = vcmp.eq.f32.partialorder %v4787, 8.507059e+37
    %v4789 = vand.u32 %v4777, 2147483648
    %v4790 = vor.u32 1.1754944e-38, %v4789
    %v4791 = vsel %vm4788, %v4790, %v4786
    %v4792 = vmul.f32 1.0, %v4791
    %v4793 = vxor.u32 %v4771, 2147483648
    %v4794 = vmul.f32 %v4793, 1.442695
    %v4795 = vpow.pop %v4794
    %v4796 = vadd.f32 %v4795, 1.0
    %v4797 = vrcp.pop %v4796
    %v4798 = vmul.f32 %v4796, %v4797
    %v4799 = vsub.f32 1.0, %v4798
    %v4800 = vmul.f32 %v4797, %v4799
    %v4801 = vadd.f32 %v4797, %v4800
    %vm4802 = vweird.f32 %v4796
    %vm4803 = vweird.f32 %v4797
    %vm4804 = vmor %vm4802, %vm4803
    %v4805 = vsel %vm4804, %v4797, %v4801
    %v4806 = vand.u32 2147483647, %v4796
    %vm4807 = vcmp.eq.f32.partialorder %v4806, 8.507059e+37
    %v4808 = vand.u32 %v4796, 2147483648
    %v4809 = vor.u32 1.1754944e-38, %v4808
    %v4810 = vsel %vm4807, %v4809, %v4805
    %v4811 = vmul.f32 1.0, %v4810
    %v4812 = vtanh.pop %v4772
    %v4813 = vxor.u32 %v4773, 2147483648
    %v4814 = vmul.f32 %v4813, 1.442695
    %v4815 = vpow.pop %v4814
    %v4816 = vadd.f32 %v4815, 1.0
    %v4817 = vrcp.pop %v4816
    %v4818 = vmul.f32 %v4816, %v4817
    %v4819 = vsub.f32 1.0, %v4818
    %v4820 = vmul.f32 %v4817, %v4819
    %v4821 = vadd.f32 %v4817, %v4820
    %vm4822 = vweird.f32 %v4816
    %vm4823 = vweird.f32 %v4817
    %vm4824 = vmor %vm4822, %vm4823
    %v4825 = vsel %vm4824, %v4817, %v4821
    %v4826 = vand.u32 2147483647, %v4816
    %vm4827 = vcmp.eq.f32.partialorder %v4826, 8.507059e+37
    %v4828 = vand.u32 %v4816, 2147483648
    %v4829 = vor.u32 1.1754944e-38, %v4828
    %v4830 = vsel %vm4827, %v4829, %v4825
    %v4831 = vmul.f32 1.0, %v4830
    %v4832 = vmul.f32 %v4811, %v4200
    %v4833 = vmul.f32 %v4792, %v4812
    %v4834 = vadd.f32 %v4832, %v4833
    %v4835 = vtanh.pop %v4834
    %v4836 = vmul.f32 %v4831, %v4835
    %v4837 = vld [vmem:[#allocation3 + $0x20] sm:$0xff]
    %v4838 = vld [vmem:[#allocation3 + $0x28] sm:$0xff]
    %v4839 = vld [vmem:[#allocation3 + $0x30] sm:$0xff]
    %v4840 = vld [vmem:[#allocation3 + $0x38] sm:$0xff]
    %v4841 = vpack.c.bf16 %v4518, %v4518
    %v4842 = vld [vmem:[#allocation12] sm:$0xff]
    %v4843 = vld [vmem:[#allocation12 + $0x8] sm:$0xff]
    %v4844 = vld [vmem:[#allocation12 + $0x10] sm:$0xff]
    %v4845 = vld [vmem:[#allocation12 + $0x18] sm:$0xff]
    %v4846 = vld [vmem:[#allocation12 + $0x20] sm:$0xff]
    %v4847 = vld [vmem:[#allocation12 + $0x28] sm:$0xff]
    %v4848 = vld [vmem:[#allocation12 + $0x30] sm:$0xff]
    %v4849 = vld [vmem:[#allocation12 + $0x38] sm:$0xff]
    %v4850 = vld [vmem:[#allocation12 + $0x40] sm:$0xff]
    %v4851 = vld [vmem:[#allocation12 + $0x48] sm:$0xff]
    %v4852 = vld [vmem:[#allocation12 + $0x50] sm:$0xff]
    %v4853 = vld [vmem:[#allocation12 + $0x58] sm:$0xff]
    %v4854 = vld [vmem:[#allocation12 + $0x60] sm:$0xff]
    %v4855 = vld [vmem:[#allocation12 + $0x68] sm:$0xff]
    %v4856 = vld [vmem:[#allocation12 + $0x70] sm:$0xff]
    %v4857 = vld [vmem:[#allocation12 + $0x78] sm:$0xff]
    %v4858 = vld [vmem:[#allocation12 + $0x80] sm:$0xff]
    %v4859 = vld [vmem:[#allocation12 + $0x88] sm:$0xff]
    %v4860 = vld [vmem:[#allocation12 + $0x90] sm:$0xff]
    %v4861 = vld [vmem:[#allocation12 + $0x98] sm:$0xff]
    %v4862 = vld [vmem:[#allocation12 + $0xa0] sm:$0xff]
    %v4863 = vld [vmem:[#allocation12 + $0xa8] sm:$0xff]
    %v4864 = vld [vmem:[#allocation12 + $0xb0] sm:$0xff]
    %v4865 = vld [vmem:[#allocation12 + $0xb8] sm:$0xff]
    %v4866 = vld [vmem:[#allocation12 + $0xc0] sm:$0xff]
    %v4867 = vld [vmem:[#allocation12 + $0xc8] sm:$0xff]
    %v4868 = vld [vmem:[#allocation12 + $0xd0] sm:$0xff]
    %v4869 = vld [vmem:[#allocation12 + $0xd8] sm:$0xff]
    %v4870 = vld [vmem:[#allocation12 + $0xe0] sm:$0xff]
    %v4871 = vld [vmem:[#allocation12 + $0xe8] sm:$0xff]
    %v4872 = vld [vmem:[#allocation12 + $0xf0] sm:$0xff]
    %v4873 = vld [vmem:[#allocation12 + $0xf8] sm:$0xff]
    %v4906 = vunpack.c.l.b16 %v4842
    %v4907 = vunpack.c.h.b16 %v4842
    %v4908 = vunpack.c.l.b16 %v4843
    %v4909 = vunpack.c.h.b16 %v4843
    %v4910 = vunpack.c.l.b16 %v4844
    %v4911 = vunpack.c.h.b16 %v4844
    %v4912 = vunpack.c.l.b16 %v4845
    %v4913 = vunpack.c.h.b16 %v4845
    %v4914 = vunpack.c.l.b16 %v4846
    %v4915 = vunpack.c.h.b16 %v4846
    %v4916 = vunpack.c.l.b16 %v4847
    %v4917 = vunpack.c.h.b16 %v4847
    %v4918 = vunpack.c.l.b16 %v4848
    %v4919 = vunpack.c.h.b16 %v4848
    %v4920 = vunpack.c.l.b16 %v4849
    %v4921 = vunpack.c.h.b16 %v4849
    %v4922 = vunpack.c.l.b16 %v4850
    %v4923 = vunpack.c.h.b16 %v4850
    %v4924 = vunpack.c.l.b16 %v4851
    %v4925 = vunpack.c.h.b16 %v4851
    %v4926 = vunpack.c.l.b16 %v4852
    %v4927 = vunpack.c.h.b16 %v4852
    %v4928 = vunpack.c.l.b16 %v4853
    %v4929 = vunpack.c.h.b16 %v4853
    %v4930 = vunpack.c.l.b16 %v4854
    %v4931 = vunpack.c.h.b16 %v4854
    %v4932 = vunpack.c.l.b16 %v4855
    %v4933 = vunpack.c.h.b16 %v4855
    %v4934 = vunpack.c.l.b16 %v4856
    %v4935 = vunpack.c.h.b16 %v4856
    %v4936 = vunpack.c.l.b16 %v4857
    %v4937 = vunpack.c.h.b16 %v4857
    %v4938 = vunpack.c.l.b16 %v4858
    %v4939 = vunpack.c.h.b16 %v4858
    %v4940 = vunpack.c.l.b16 %v4859
    %v4941 = vunpack.c.h.b16 %v4859
    %v4942 = vunpack.c.l.b16 %v4860
    %v4943 = vunpack.c.h.b16 %v4860
    %v4944 = vunpack.c.l.b16 %v4861
    %v4945 = vunpack.c.h.b16 %v4861
    %v4946 = vunpack.c.l.b16 %v4862
    %v4947 = vunpack.c.h.b16 %v4862
    %v4948 = vunpack.c.l.b16 %v4863
    %v4949 = vunpack.c.h.b16 %v4863
    %v4950 = vunpack.c.l.b16 %v4864
    %v4951 = vunpack.c.h.b16 %v4864
    %v4952 = vunpack.c.l.b16 %v4865
    %v4953 = vunpack.c.h.b16 %v4865
    %v4954 = vunpack.c.l.b16 %v4866
    %v4955 = vunpack.c.h.b16 %v4866
    %v4956 = vunpack.c.l.b16 %v4867
    %v4957 = vunpack.c.h.b16 %v4867
    %v4958 = vunpack.c.l.b16 %v4868
    %v4959 = vunpack.c.h.b16 %v4868
    %v4960 = vunpack.c.l.b16 %v4869
    %v4961 = vunpack.c.h.b16 %v4869
    %v4962 = vunpack.c.l.b16 %v4870
    %v4963 = vunpack.c.h.b16 %v4870
    %v4964 = vunpack.c.l.b16 %v4871
    %v4965 = vunpack.c.h.b16 %v4871
    %v4966 = vunpack.c.l.b16 %v4872
    %v4967 = vunpack.c.h.b16 %v4872
    %v4968 = vunpack.c.l.b16 %v4873
    %v4969 = vunpack.c.h.b16 %v4873
    %v4970 = vpack.c.b16 %v4910, %v4906
    %v4971 = vpack.c.b16 %v4911, %v4907
    %v4972 = vpack.c.b16 %v4912, %v4908
    %v4973 = vpack.c.b16 %v4913, %v4909
    %v4974 = vpack.c.b16 %v4918, %v4914
    %v4975 = vpack.c.b16 %v4919, %v4915
    %v4976 = vpack.c.b16 %v4920, %v4916
    %v4977 = vpack.c.b16 %v4921, %v4917
    %v4978 = vpack.c.b16 %v4926, %v4922
    %v4979 = vpack.c.b16 %v4927, %v4923
    %v4980 = vpack.c.b16 %v4928, %v4924
    %v4981 = vpack.c.b16 %v4929, %v4925
    %v4982 = vpack.c.b16 %v4934, %v4930
    %v4983 = vpack.c.b16 %v4935, %v4931
    %v4984 = vpack.c.b16 %v4936, %v4932
    %v4985 = vpack.c.b16 %v4937, %v4933
    %v4986 = vpack.c.b16 %v4942, %v4938
    %v4987 = vpack.c.b16 %v4943, %v4939
    %v4988 = vpack.c.b16 %v4944, %v4940
    %v4989 = vpack.c.b16 %v4945, %v4941
    %v4990 = vpack.c.b16 %v4950, %v4946
    %v4991 = vpack.c.b16 %v4951, %v4947
    %v4992 = vpack.c.b16 %v4952, %v4948
    %v4993 = vpack.c.b16 %v4953, %v4949
    %v4994 = vpack.c.b16 %v4958, %v4954
    %v4995 = vpack.c.b16 %v4959, %v4955
    %v4996 = vpack.c.b16 %v4960, %v4956
    %v4997 = vpack.c.b16 %v4961, %v4957
    %v4998 = vpack.c.b16 %v4966, %v4962
    %v4999 = vpack.c.b16 %v4967, %v4963
    %v5000 = vpack.c.b16 %v4968, %v4964
    %v5001 = vpack.c.b16 %v4969, %v4965
    %5034 = vmatpush.bf16.msra.mxu0 %v4998
    %5035 = vmatpush.bf16.msra.mxu0 %v4994
    %5036 = vmatpush.bf16.msra.mxu0 %v4990
    %5037 = vmatpush.bf16.msra.mxu0 %v4986
    %5038 = vmatpush.bf16.msra.mxu0 %v4982
    %5039 = vmatpush.bf16.msra.mxu0 %v4978
    %5040 = vmatpush.bf16.msra.mxu0 %v4974
    %5041 = vmatpush.bf16.msra.mxu0 %v4970
    %5042 = vmatmul.bf16.gmra.mxu0 %v4841
    %v5043 = vpop.f32.mrf.mxu0
    %v5044 = vadd.f32 0.0, %v5043
    %v5045 = vpop.f32.mrf.mxu0
    %5046 = vdwg.mxu0
    %5047 = vmatpush.bf16.msra.mxu0 %v4999
    %5048 = vmatpush.bf16.msra.mxu0 %v4995
    %5049 = vmatpush.bf16.msra.mxu0 %v4991
    %5050 = vmatpush.bf16.msra.mxu0 %v4987
    %5051 = vmatpush.bf16.msra.mxu0 %v4983
    %5052 = vmatpush.bf16.msra.mxu0 %v4979
    %5053 = vmatpush.bf16.msra.mxu0 %v4975
    %5054 = vmatpush.bf16.msra.mxu0 %v4971
    %5055 = vmatmul.bf16.gmra.mxu0 %v4841
    %v5056 = vpop.f32.mrf.mxu0
    %v5057 = vadd.f32 0.0, %v5056
    %v5058 = vpop.f32.mrf.mxu0
    %5059 = vdwg.mxu0
    %5060 = vmatpush.bf16.msra.mxu0 %v5000
    %5061 = vmatpush.bf16.msra.mxu0 %v4996
    %5062 = vmatpush.bf16.msra.mxu0 %v4992
    %5063 = vmatpush.bf16.msra.mxu0 %v4988
    %5064 = vmatpush.bf16.msra.mxu0 %v4984
    %5065 = vmatpush.bf16.msra.mxu0 %v4980
    %5066 = vmatpush.bf16.msra.mxu0 %v4976
    %5067 = vmatpush.bf16.msra.mxu0 %v4972
    %5068 = vmatmul.bf16.gmra.mxu0 %v4841
    %v5069 = vpop.f32.mrf.mxu0
    %v5070 = vadd.f32 0.0, %v5069
    %v5071 = vpop.f32.mrf.mxu0
    %5072 = vdwg.mxu0
    %5073 = vmatpush.bf16.msra.mxu0 %v5001
    %5074 = vmatpush.bf16.msra.mxu0 %v4997
    %5075 = vmatpush.bf16.msra.mxu0 %v4993
    %5076 = vmatpush.bf16.msra.mxu0 %v4989
    %5077 = vmatpush.bf16.msra.mxu0 %v4985
    %5078 = vmatpush.bf16.msra.mxu0 %v4981
    %5079 = vmatpush.bf16.msra.mxu0 %v4977
    %5080 = vmatpush.bf16.msra.mxu0 %v4973
    %5081 = vmatmul.bf16.gmra.mxu0 %v4841
    %v5082 = vpop.f32.mrf.mxu0
    %v5083 = vadd.f32 0.0, %v5082
    %v5084 = vpop.f32.mrf.mxu0
    %5085 = vdwg.mxu0
    %v5086 = vadd.f32 %v4837, %v5044
    %v5087 = vadd.f32 %v4838, %v5057
    %v5088 = vadd.f32 %v4839, %v5070
    %v5089 = vadd.f32 %v4840, %v5083
    %v5090 = vxor.u32 %v5086, 2147483648
    %v5091 = vmul.f32 %v5090, 1.442695
    %v5092 = vpow.pop %v5091
    %v5093 = vadd.f32 %v5092, 1.0
    %v5094 = vrcp.pop %v5093
    %v5095 = vmul.f32 %v5093, %v5094
    %v5096 = vsub.f32 1.0, %v5095
    %v5097 = vmul.f32 %v5094, %v5096
    %v5098 = vadd.f32 %v5094, %v5097
    %vm5099 = vweird.f32 %v5093
    %vm5100 = vweird.f32 %v5094
    %vm5101 = vmor %vm5099, %vm5100
    %v5102 = vsel %vm5101, %v5094, %v5098
    %v5103 = vand.u32 2147483647, %v5093
    %vm5104 = vcmp.eq.f32.partialorder %v5103, 8.507059e+37
    %v5105 = vand.u32 %v5093, 2147483648
    %v5106 = vor.u32 1.1754944e-38, %v5105
    %v5107 = vsel %vm5104, %v5106, %v5102
    %v5108 = vmul.f32 1.0, %v5107
    %v5109 = vxor.u32 %v5087, 2147483648
    %v5110 = vmul.f32 %v5109, 1.442695
    %v5111 = vpow.pop %v5110
    %v5112 = vadd.f32 %v5111, 1.0
    %v5113 = vrcp.pop %v5112
    %v5114 = vmul.f32 %v5112, %v5113
    %v5115 = vsub.f32 1.0, %v5114
    %v5116 = vmul.f32 %v5113, %v5115
    %v5117 = vadd.f32 %v5113, %v5116
    %vm5118 = vweird.f32 %v5112
    %vm5119 = vweird.f32 %v5113
    %vm5120 = vmor %vm5118, %vm5119
    %v5121 = vsel %vm5120, %v5113, %v5117
    %v5122 = vand.u32 2147483647, %v5112
    %vm5123 = vcmp.eq.f32.partialorder %v5122, 8.507059e+37
    %v5124 = vand.u32 %v5112, 2147483648
    %v5125 = vor.u32 1.1754944e-38, %v5124
    %v5126 = vsel %vm5123, %v5125, %v5121
    %v5127 = vmul.f32 1.0, %v5126
    %v5128 = vtanh.pop %v5088
    %v5129 = vxor.u32 %v5089, 2147483648
    %v5130 = vmul.f32 %v5129, 1.442695
    %v5131 = vpow.pop %v5130
    %v5132 = vadd.f32 %v5131, 1.0
    %v5133 = vrcp.pop %v5132
    %v5134 = vmul.f32 %v5132, %v5133
    %v5135 = vsub.f32 1.0, %v5134
    %v5136 = vmul.f32 %v5133, %v5135
    %v5137 = vadd.f32 %v5133, %v5136
    %vm5138 = vweird.f32 %v5132
    %vm5139 = vweird.f32 %v5133
    %vm5140 = vmor %vm5138, %vm5139
    %v5141 = vsel %vm5140, %v5133, %v5137
    %v5142 = vand.u32 2147483647, %v5132
    %vm5143 = vcmp.eq.f32.partialorder %v5142, 8.507059e+37
    %v5144 = vand.u32 %v5132, 2147483648
    %v5145 = vor.u32 1.1754944e-38, %v5144
    %v5146 = vsel %vm5143, %v5145, %v5141
    %v5147 = vmul.f32 1.0, %v5146
    %v5148 = vmul.f32 %v5127, %v4516
    %v5149 = vmul.f32 %v5108, %v5128
    %v5150 = vadd.f32 %v5148, %v5149
    %v5151 = vtanh.pop %v5150
    %v5152 = vmul.f32 %v5147, %v5151
    %5153 = vst [vmem:[#allocation4 + $0x60] sm:$0xff] %v4836
    %5154 = vst [vmem:[#allocation4 + $0x18] sm:$0xff] %v5152
    %v5155 = vld [vmem:[#allocation2 + $0xe0] sm:$0xff]
    %v5156 = vld [vmem:[#allocation2 + $0xe8] sm:$0xff]
    %v5157 = vld [vmem:[#allocation2 + $0xf0] sm:$0xff]
    %v5158 = vld [vmem:[#allocation2 + $0xf8] sm:$0xff]
    %v5159 = vpack.c.bf16 %v4836, %v4836
    %v5160 = vld [vmem:[#allocation6] sm:$0xff]
    %v5161 = vld [vmem:[#allocation6 + $0x8] sm:$0xff]
    %v5162 = vld [vmem:[#allocation6 + $0x10] sm:$0xff]
    %v5163 = vld [vmem:[#allocation6 + $0x18] sm:$0xff]
    %v5164 = vld [vmem:[#allocation6 + $0x20] sm:$0xff]
    %v5165 = vld [vmem:[#allocation6 + $0x28] sm:$0xff]
    %v5166 = vld [vmem:[#allocation6 + $0x30] sm:$0xff]
    %v5167 = vld [vmem:[#allocation6 + $0x38] sm:$0xff]
    %v5168 = vld [vmem:[#allocation6 + $0x40] sm:$0xff]
    %v5169 = vld [vmem:[#allocation6 + $0x48] sm:$0xff]
    %v5170 = vld [vmem:[#allocation6 + $0x50] sm:$0xff]
    %v5171 = vld [vmem:[#allocation6 + $0x58] sm:$0xff]
    %v5172 = vld [vmem:[#allocation6 + $0x60] sm:$0xff]
    %v5173 = vld [vmem:[#allocation6 + $0x68] sm:$0xff]
    %v5174 = vld [vmem:[#allocation6 + $0x70] sm:$0xff]
    %v5175 = vld [vmem:[#allocation6 + $0x78] sm:$0xff]
    %v5176 = vld [vmem:[#allocation6 + $0x80] sm:$0xff]
    %v5177 = vld [vmem:[#allocation6 + $0x88] sm:$0xff]
    %v5178 = vld [vmem:[#allocation6 + $0x90] sm:$0xff]
    %v5179 = vld [vmem:[#allocation6 + $0x98] sm:$0xff]
    %v5180 = vld [vmem:[#allocation6 + $0xa0] sm:$0xff]
    %v5181 = vld [vmem:[#allocation6 + $0xa8] sm:$0xff]
    %v5182 = vld [vmem:[#allocation6 + $0xb0] sm:$0xff]
    %v5183 = vld [vmem:[#allocation6 + $0xb8] sm:$0xff]
    %v5184 = vld [vmem:[#allocation6 + $0xc0] sm:$0xff]
    %v5185 = vld [vmem:[#allocation6 + $0xc8] sm:$0xff]
    %v5186 = vld [vmem:[#allocation6 + $0xd0] sm:$0xff]
    %v5187 = vld [vmem:[#allocation6 + $0xd8] sm:$0xff]
    %v5188 = vld [vmem:[#allocation6 + $0xe0] sm:$0xff]
    %v5189 = vld [vmem:[#allocation6 + $0xe8] sm:$0xff]
    %v5190 = vld [vmem:[#allocation6 + $0xf0] sm:$0xff]
    %v5191 = vld [vmem:[#allocation6 + $0xf8] sm:$0xff]
    %v5224 = vunpack.c.l.b16 %v5160
    %v5225 = vunpack.c.h.b16 %v5160
    %v5226 = vunpack.c.l.b16 %v5161
    %v5227 = vunpack.c.h.b16 %v5161
    %v5228 = vunpack.c.l.b16 %v5162
    %v5229 = vunpack.c.h.b16 %v5162
    %v5230 = vunpack.c.l.b16 %v5163
    %v5231 = vunpack.c.h.b16 %v5163
    %v5232 = vunpack.c.l.b16 %v5164
    %v5233 = vunpack.c.h.b16 %v5164
    %v5234 = vunpack.c.l.b16 %v5165
    %v5235 = vunpack.c.h.b16 %v5165
    %v5236 = vunpack.c.l.b16 %v5166
    %v5237 = vunpack.c.h.b16 %v5166
    %v5238 = vunpack.c.l.b16 %v5167
    %v5239 = vunpack.c.h.b16 %v5167
    %v5240 = vunpack.c.l.b16 %v5168
    %v5241 = vunpack.c.h.b16 %v5168
    %v5242 = vunpack.c.l.b16 %v5169
    %v5243 = vunpack.c.h.b16 %v5169
    %v5244 = vunpack.c.l.b16 %v5170
    %v5245 = vunpack.c.h.b16 %v5170
    %v5246 = vunpack.c.l.b16 %v5171
    %v5247 = vunpack.c.h.b16 %v5171
    %v5248 = vunpack.c.l.b16 %v5172
    %v5249 = vunpack.c.h.b16 %v5172
    %v5250 = vunpack.c.l.b16 %v5173
    %v5251 = vunpack.c.h.b16 %v5173
    %v5252 = vunpack.c.l.b16 %v5174
    %v5253 = vunpack.c.h.b16 %v5174
    %v5254 = vunpack.c.l.b16 %v5175
    %v5255 = vunpack.c.h.b16 %v5175
    %v5256 = vunpack.c.l.b16 %v5176
    %v5257 = vunpack.c.h.b16 %v5176
    %v5258 = vunpack.c.l.b16 %v5177
    %v5259 = vunpack.c.h.b16 %v5177
    %v5260 = vunpack.c.l.b16 %v5178
    %v5261 = vunpack.c.h.b16 %v5178
    %v5262 = vunpack.c.l.b16 %v5179
    %v5263 = vunpack.c.h.b16 %v5179
    %v5264 = vunpack.c.l.b16 %v5180
    %v5265 = vunpack.c.h.b16 %v5180
    %v5266 = vunpack.c.l.b16 %v5181
    %v5267 = vunpack.c.h.b16 %v5181
    %v5268 = vunpack.c.l.b16 %v5182
    %v5269 = vunpack.c.h.b16 %v5182
    %v5270 = vunpack.c.l.b16 %v5183
    %v5271 = vunpack.c.h.b16 %v5183
    %v5272 = vunpack.c.l.b16 %v5184
    %v5273 = vunpack.c.h.b16 %v5184
    %v5274 = vunpack.c.l.b16 %v5185
    %v5275 = vunpack.c.h.b16 %v5185
    %v5276 = vunpack.c.l.b16 %v5186
    %v5277 = vunpack.c.h.b16 %v5186
    %v5278 = vunpack.c.l.b16 %v5187
    %v5279 = vunpack.c.h.b16 %v5187
    %v5280 = vunpack.c.l.b16 %v5188
    %v5281 = vunpack.c.h.b16 %v5188
    %v5282 = vunpack.c.l.b16 %v5189
    %v5283 = vunpack.c.h.b16 %v5189
    %v5284 = vunpack.c.l.b16 %v5190
    %v5285 = vunpack.c.h.b16 %v5190
    %v5286 = vunpack.c.l.b16 %v5191
    %v5287 = vunpack.c.h.b16 %v5191
    %v5288 = vpack.c.b16 %v5228, %v5224
    %v5289 = vpack.c.b16 %v5229, %v5225
    %v5290 = vpack.c.b16 %v5230, %v5226
    %v5291 = vpack.c.b16 %v5231, %v5227
    %v5292 = vpack.c.b16 %v5236, %v5232
    %v5293 = vpack.c.b16 %v5237, %v5233
    %v5294 = vpack.c.b16 %v5238, %v5234
    %v5295 = vpack.c.b16 %v5239, %v5235
    %v5296 = vpack.c.b16 %v5244, %v5240
    %v5297 = vpack.c.b16 %v5245, %v5241
    %v5298 = vpack.c.b16 %v5246, %v5242
    %v5299 = vpack.c.b16 %v5247, %v5243
    %v5300 = vpack.c.b16 %v5252, %v5248
    %v5301 = vpack.c.b16 %v5253, %v5249
    %v5302 = vpack.c.b16 %v5254, %v5250
    %v5303 = vpack.c.b16 %v5255, %v5251
    %v5304 = vpack.c.b16 %v5260, %v5256
    %v5305 = vpack.c.b16 %v5261, %v5257
    %v5306 = vpack.c.b16 %v5262, %v5258
    %v5307 = vpack.c.b16 %v5263, %v5259
    %v5308 = vpack.c.b16 %v5268, %v5264
    %v5309 = vpack.c.b16 %v5269, %v5265
    %v5310 = vpack.c.b16 %v5270, %v5266
    %v5311 = vpack.c.b16 %v5271, %v5267
    %v5312 = vpack.c.b16 %v5276, %v5272
    %v5313 = vpack.c.b16 %v5277, %v5273
    %v5314 = vpack.c.b16 %v5278, %v5274
    %v5315 = vpack.c.b16 %v5279, %v5275
    %v5316 = vpack.c.b16 %v5284, %v5280
    %v5317 = vpack.c.b16 %v5285, %v5281
    %v5318 = vpack.c.b16 %v5286, %v5282
    %v5319 = vpack.c.b16 %v5287, %v5283
    %5352 = vmatpush.bf16.msra.mxu0 %v5316
    %5353 = vmatpush.bf16.msra.mxu0 %v5312
    %5354 = vmatpush.bf16.msra.mxu0 %v5308
    %5355 = vmatpush.bf16.msra.mxu0 %v5304
    %5356 = vmatpush.bf16.msra.mxu0 %v5300
    %5357 = vmatpush.bf16.msra.mxu0 %v5296
    %5358 = vmatpush.bf16.msra.mxu0 %v5292
    %5359 = vmatpush.bf16.msra.mxu0 %v5288
    %5360 = vmatmul.bf16.gmra.mxu0 %v5159
    %v5361 = vpop.f32.mrf.mxu0
    %v5362 = vadd.f32 0.0, %v5361
    %v5363 = vpop.f32.mrf.mxu0
    %5364 = vdwg.mxu0
    %5365 = vmatpush.bf16.msra.mxu0 %v5317
    %5366 = vmatpush.bf16.msra.mxu0 %v5313
    %5367 = vmatpush.bf16.msra.mxu0 %v5309
    %5368 = vmatpush.bf16.msra.mxu0 %v5305
    %5369 = vmatpush.bf16.msra.mxu0 %v5301
    %5370 = vmatpush.bf16.msra.mxu0 %v5297
    %5371 = vmatpush.bf16.msra.mxu0 %v5293
    %5372 = vmatpush.bf16.msra.mxu0 %v5289
    %5373 = vmatmul.bf16.gmra.mxu0 %v5159
    %v5374 = vpop.f32.mrf.mxu0
    %v5375 = vadd.f32 0.0, %v5374
    %v5376 = vpop.f32.mrf.mxu0
    %5377 = vdwg.mxu0
    %5378 = vmatpush.bf16.msra.mxu0 %v5318
    %5379 = vmatpush.bf16.msra.mxu0 %v5314
    %5380 = vmatpush.bf16.msra.mxu0 %v5310
    %5381 = vmatpush.bf16.msra.mxu0 %v5306
    %5382 = vmatpush.bf16.msra.mxu0 %v5302
    %5383 = vmatpush.bf16.msra.mxu0 %v5298
    %5384 = vmatpush.bf16.msra.mxu0 %v5294
    %5385 = vmatpush.bf16.msra.mxu0 %v5290
    %5386 = vmatmul.bf16.gmra.mxu0 %v5159
    %v5387 = vpop.f32.mrf.mxu0
    %v5388 = vadd.f32 0.0, %v5387
    %v5389 = vpop.f32.mrf.mxu0
    %5390 = vdwg.mxu0
    %5391 = vmatpush.bf16.msra.mxu0 %v5319
    %5392 = vmatpush.bf16.msra.mxu0 %v5315
    %5393 = vmatpush.bf16.msra.mxu0 %v5311
    %5394 = vmatpush.bf16.msra.mxu0 %v5307
    %5395 = vmatpush.bf16.msra.mxu0 %v5303
    %5396 = vmatpush.bf16.msra.mxu0 %v5299
    %5397 = vmatpush.bf16.msra.mxu0 %v5295
    %5398 = vmatpush.bf16.msra.mxu0 %v5291
    %5399 = vmatmul.bf16.gmra.mxu0 %v5159
    %v5400 = vpop.f32.mrf.mxu0
    %v5401 = vadd.f32 0.0, %v5400
    %v5402 = vpop.f32.mrf.mxu0
    %5403 = vdwg.mxu0
    %v5404 = vadd.f32 %v5155, %v5362
    %v5405 = vadd.f32 %v5156, %v5375
    %v5406 = vadd.f32 %v5157, %v5388
    %v5407 = vadd.f32 %v5158, %v5401
    %v5408 = vxor.u32 %v5404, 2147483648
    %v5409 = vmul.f32 %v5408, 1.442695
    %v5410 = vpow.pop %v5409
    %v5411 = vadd.f32 %v5410, 1.0
    %v5412 = vrcp.pop %v5411
    %v5413 = vmul.f32 %v5411, %v5412
    %v5414 = vsub.f32 1.0, %v5413
    %v5415 = vmul.f32 %v5412, %v5414
    %v5416 = vadd.f32 %v5412, %v5415
    %vm5417 = vweird.f32 %v5411
    %vm5418 = vweird.f32 %v5412
    %vm5419 = vmor %vm5417, %vm5418
    %v5420 = vsel %vm5419, %v5412, %v5416
    %v5421 = vand.u32 2147483647, %v5411
    %vm5422 = vcmp.eq.f32.partialorder %v5421, 8.507059e+37
    %v5423 = vand.u32 %v5411, 2147483648
    %v5424 = vor.u32 1.1754944e-38, %v5423
    %v5425 = vsel %vm5422, %v5424, %v5420
    %v5426 = vmul.f32 1.0, %v5425
    %v5427 = vxor.u32 %v5405, 2147483648
    %v5428 = vmul.f32 %v5427, 1.442695
    %v5429 = vpow.pop %v5428
    %v5430 = vadd.f32 %v5429, 1.0
    %v5431 = vrcp.pop %v5430
    %v5432 = vmul.f32 %v5430, %v5431
    %v5433 = vsub.f32 1.0, %v5432
    %v5434 = vmul.f32 %v5431, %v5433
    %v5435 = vadd.f32 %v5431, %v5434
    %vm5436 = vweird.f32 %v5430
    %vm5437 = vweird.f32 %v5431
    %vm5438 = vmor %vm5436, %vm5437
    %v5439 = vsel %vm5438, %v5431, %v5435
    %v5440 = vand.u32 2147483647, %v5430
    %vm5441 = vcmp.eq.f32.partialorder %v5440, 8.507059e+37
    %v5442 = vand.u32 %v5430, 2147483648
    %v5443 = vor.u32 1.1754944e-38, %v5442
    %v5444 = vsel %vm5441, %v5443, %v5439
    %v5445 = vmul.f32 1.0, %v5444
    %v5446 = vtanh.pop %v5406
    %v5447 = vxor.u32 %v5407, 2147483648
    %v5448 = vmul.f32 %v5447, 1.442695
    %v5449 = vpow.pop %v5448
    %v5450 = vadd.f32 %v5449, 1.0
    %v5451 = vrcp.pop %v5450
    %v5452 = vmul.f32 %v5450, %v5451
    %v5453 = vsub.f32 1.0, %v5452
    %v5454 = vmul.f32 %v5451, %v5453
    %v5455 = vadd.f32 %v5451, %v5454
    %vm5456 = vweird.f32 %v5450
    %vm5457 = vweird.f32 %v5451
    %vm5458 = vmor %vm5456, %vm5457
    %v5459 = vsel %vm5458, %v5451, %v5455
    %v5460 = vand.u32 2147483647, %v5450
    %vm5461 = vcmp.eq.f32.partialorder %v5460, 8.507059e+37
    %v5462 = vand.u32 %v5450, 2147483648
    %v5463 = vor.u32 1.1754944e-38, %v5462
    %v5464 = vsel %vm5461, %v5463, %v5459
    %v5465 = vmul.f32 1.0, %v5464
    %v5466 = vmul.f32 %v5445, %v4834
    %v5467 = vmul.f32 %v5426, %v5446
    %v5468 = vadd.f32 %v5466, %v5467
    %v5469 = vtanh.pop %v5468
    %v5470 = vmul.f32 %v5465, %v5469
    %v5471 = vld [vmem:[#allocation3] sm:$0xff]
    %v5472 = vld [vmem:[#allocation3 + $0x8] sm:$0xff]
    %v5473 = vld [vmem:[#allocation3 + $0x10] sm:$0xff]
    %v5474 = vld [vmem:[#allocation3 + $0x18] sm:$0xff]
    %v5475 = vpack.c.bf16 %v5152, %v5152
    %v5476 = vld [vmem:[#allocation12] sm:$0xff]
    %v5477 = vld [vmem:[#allocation12 + $0x8] sm:$0xff]
    %v5478 = vld [vmem:[#allocation12 + $0x10] sm:$0xff]
    %v5479 = vld [vmem:[#allocation12 + $0x18] sm:$0xff]
    %v5480 = vld [vmem:[#allocation12 + $0x20] sm:$0xff]
    %v5481 = vld [vmem:[#allocation12 + $0x28] sm:$0xff]
    %v5482 = vld [vmem:[#allocation12 + $0x30] sm:$0xff]
    %v5483 = vld [vmem:[#allocation12 + $0x38] sm:$0xff]
    %v5484 = vld [vmem:[#allocation12 + $0x40] sm:$0xff]
    %v5485 = vld [vmem:[#allocation12 + $0x48] sm:$0xff]
    %v5486 = vld [vmem:[#allocation12 + $0x50] sm:$0xff]
    %v5487 = vld [vmem:[#allocation12 + $0x58] sm:$0xff]
    %v5488 = vld [vmem:[#allocation12 + $0x60] sm:$0xff]
    %v5489 = vld [vmem:[#allocation12 + $0x68] sm:$0xff]
    %v5490 = vld [vmem:[#allocation12 + $0x70] sm:$0xff]
    %v5491 = vld [vmem:[#allocation12 + $0x78] sm:$0xff]
    %v5492 = vld [vmem:[#allocation12 + $0x80] sm:$0xff]
    %v5493 = vld [vmem:[#allocation12 + $0x88] sm:$0xff]
    %v5494 = vld [vmem:[#allocation12 + $0x90] sm:$0xff]
    %v5495 = vld [vmem:[#allocation12 + $0x98] sm:$0xff]
    %v5496 = vld [vmem:[#allocation12 + $0xa0] sm:$0xff]
    %v5497 = vld [vmem:[#allocation12 + $0xa8] sm:$0xff]
    %v5498 = vld [vmem:[#allocation12 + $0xb0] sm:$0xff]
    %v5499 = vld [vmem:[#allocation12 + $0xb8] sm:$0xff]
    %v5500 = vld [vmem:[#allocation12 + $0xc0] sm:$0xff]
    %v5501 = vld [vmem:[#allocation12 + $0xc8] sm:$0xff]
    %v5502 = vld [vmem:[#allocation12 + $0xd0] sm:$0xff]
    %v5503 = vld [vmem:[#allocation12 + $0xd8] sm:$0xff]
    %v5504 = vld [vmem:[#allocation12 + $0xe0] sm:$0xff]
    %v5505 = vld [vmem:[#allocation12 + $0xe8] sm:$0xff]
    %v5506 = vld [vmem:[#allocation12 + $0xf0] sm:$0xff]
    %v5507 = vld [vmem:[#allocation12 + $0xf8] sm:$0xff]
    %v5540 = vunpack.c.l.b16 %v5476
    %v5541 = vunpack.c.h.b16 %v5476
    %v5542 = vunpack.c.l.b16 %v5477
    %v5543 = vunpack.c.h.b16 %v5477
    %v5544 = vunpack.c.l.b16 %v5478
    %v5545 = vunpack.c.h.b16 %v5478
    %v5546 = vunpack.c.l.b16 %v5479
    %v5547 = vunpack.c.h.b16 %v5479
    %v5548 = vunpack.c.l.b16 %v5480
    %v5549 = vunpack.c.h.b16 %v5480
    %v5550 = vunpack.c.l.b16 %v5481
    %v5551 = vunpack.c.h.b16 %v5481
    %v5552 = vunpack.c.l.b16 %v5482
    %v5553 = vunpack.c.h.b16 %v5482
    %v5554 = vunpack.c.l.b16 %v5483
    %v5555 = vunpack.c.h.b16 %v5483
    %v5556 = vunpack.c.l.b16 %v5484
    %v5557 = vunpack.c.h.b16 %v5484
    %v5558 = vunpack.c.l.b16 %v5485
    %v5559 = vunpack.c.h.b16 %v5485
    %v5560 = vunpack.c.l.b16 %v5486
    %v5561 = vunpack.c.h.b16 %v5486
    %v5562 = vunpack.c.l.b16 %v5487
    %v5563 = vunpack.c.h.b16 %v5487
    %v5564 = vunpack.c.l.b16 %v5488
    %v5565 = vunpack.c.h.b16 %v5488
    %v5566 = vunpack.c.l.b16 %v5489
    %v5567 = vunpack.c.h.b16 %v5489
    %v5568 = vunpack.c.l.b16 %v5490
    %v5569 = vunpack.c.h.b16 %v5490
    %v5570 = vunpack.c.l.b16 %v5491
    %v5571 = vunpack.c.h.b16 %v5491
    %v5572 = vunpack.c.l.b16 %v5492
    %v5573 = vunpack.c.h.b16 %v5492
    %v5574 = vunpack.c.l.b16 %v5493
    %v5575 = vunpack.c.h.b16 %v5493
    %v5576 = vunpack.c.l.b16 %v5494
    %v5577 = vunpack.c.h.b16 %v5494
    %v5578 = vunpack.c.l.b16 %v5495
    %v5579 = vunpack.c.h.b16 %v5495
    %v5580 = vunpack.c.l.b16 %v5496
    %v5581 = vunpack.c.h.b16 %v5496
    %v5582 = vunpack.c.l.b16 %v5497
    %v5583 = vunpack.c.h.b16 %v5497
    %v5584 = vunpack.c.l.b16 %v5498
    %v5585 = vunpack.c.h.b16 %v5498
    %v5586 = vunpack.c.l.b16 %v5499
    %v5587 = vunpack.c.h.b16 %v5499
    %v5588 = vunpack.c.l.b16 %v5500
    %v5589 = vunpack.c.h.b16 %v5500
    %v5590 = vunpack.c.l.b16 %v5501
    %v5591 = vunpack.c.h.b16 %v5501
    %v5592 = vunpack.c.l.b16 %v5502
    %v5593 = vunpack.c.h.b16 %v5502
    %v5594 = vunpack.c.l.b16 %v5503
    %v5595 = vunpack.c.h.b16 %v5503
    %v5596 = vunpack.c.l.b16 %v5504
    %v5597 = vunpack.c.h.b16 %v5504
    %v5598 = vunpack.c.l.b16 %v5505
    %v5599 = vunpack.c.h.b16 %v5505
    %v5600 = vunpack.c.l.b16 %v5506
    %v5601 = vunpack.c.h.b16 %v5506
    %v5602 = vunpack.c.l.b16 %v5507
    %v5603 = vunpack.c.h.b16 %v5507
    %v5604 = vpack.c.b16 %v5544, %v5540
    %v5605 = vpack.c.b16 %v5545, %v5541
    %v5606 = vpack.c.b16 %v5546, %v5542
    %v5607 = vpack.c.b16 %v5547, %v5543
    %v5608 = vpack.c.b16 %v5552, %v5548
    %v5609 = vpack.c.b16 %v5553, %v5549
    %v5610 = vpack.c.b16 %v5554, %v5550
    %v5611 = vpack.c.b16 %v5555, %v5551
    %v5612 = vpack.c.b16 %v5560, %v5556
    %v5613 = vpack.c.b16 %v5561, %v5557
    %v5614 = vpack.c.b16 %v5562, %v5558
    %v5615 = vpack.c.b16 %v5563, %v5559
    %v5616 = vpack.c.b16 %v5568, %v5564
    %v5617 = vpack.c.b16 %v5569, %v5565
    %v5618 = vpack.c.b16 %v5570, %v5566
    %v5619 = vpack.c.b16 %v5571, %v5567
    %v5620 = vpack.c.b16 %v5576, %v5572
    %v5621 = vpack.c.b16 %v5577, %v5573
    %v5622 = vpack.c.b16 %v5578, %v5574
    %v5623 = vpack.c.b16 %v5579, %v5575
    %v5624 = vpack.c.b16 %v5584, %v5580
    %v5625 = vpack.c.b16 %v5585, %v5581
    %v5626 = vpack.c.b16 %v5586, %v5582
    %v5627 = vpack.c.b16 %v5587, %v5583
    %v5628 = vpack.c.b16 %v5592, %v5588
    %v5629 = vpack.c.b16 %v5593, %v5589
    %v5630 = vpack.c.b16 %v5594, %v5590
    %v5631 = vpack.c.b16 %v5595, %v5591
    %v5632 = vpack.c.b16 %v5600, %v5596
    %v5633 = vpack.c.b16 %v5601, %v5597
    %v5634 = vpack.c.b16 %v5602, %v5598
    %v5635 = vpack.c.b16 %v5603, %v5599
    %5668 = vmatpush.bf16.msra.mxu0 %v5632
    %5669 = vmatpush.bf16.msra.mxu0 %v5628
    %5670 = vmatpush.bf16.msra.mxu0 %v5624
    %5671 = vmatpush.bf16.msra.mxu0 %v5620
    %5672 = vmatpush.bf16.msra.mxu0 %v5616
    %5673 = vmatpush.bf16.msra.mxu0 %v5612
    %5674 = vmatpush.bf16.msra.mxu0 %v5608
    %5675 = vmatpush.bf16.msra.mxu0 %v5604
    %5676 = vmatmul.bf16.gmra.mxu0 %v5475
    %v5677 = vpop.f32.mrf.mxu0
    %v5678 = vadd.f32 0.0, %v5677
    %v5679 = vpop.f32.mrf.mxu0
    %5680 = vdwg.mxu0
    %5681 = vmatpush.bf16.msra.mxu0 %v5633
    %5682 = vmatpush.bf16.msra.mxu0 %v5629
    %5683 = vmatpush.bf16.msra.mxu0 %v5625
    %5684 = vmatpush.bf16.msra.mxu0 %v5621
    %5685 = vmatpush.bf16.msra.mxu0 %v5617
    %5686 = vmatpush.bf16.msra.mxu0 %v5613
    %5687 = vmatpush.bf16.msra.mxu0 %v5609
    %5688 = vmatpush.bf16.msra.mxu0 %v5605
    %5689 = vmatmul.bf16.gmra.mxu0 %v5475
    %v5690 = vpop.f32.mrf.mxu0
    %v5691 = vadd.f32 0.0, %v5690
    %v5692 = vpop.f32.mrf.mxu0
    %5693 = vdwg.mxu0
    %5694 = vmatpush.bf16.msra.mxu0 %v5634
    %5695 = vmatpush.bf16.msra.mxu0 %v5630
    %5696 = vmatpush.bf16.msra.mxu0 %v5626
    %5697 = vmatpush.bf16.msra.mxu0 %v5622
    %5698 = vmatpush.bf16.msra.mxu0 %v5618
    %5699 = vmatpush.bf16.msra.mxu0 %v5614
    %5700 = vmatpush.bf16.msra.mxu0 %v5610
    %5701 = vmatpush.bf16.msra.mxu0 %v5606
    %5702 = vmatmul.bf16.gmra.mxu0 %v5475
    %v5703 = vpop.f32.mrf.mxu0
    %v5704 = vadd.f32 0.0, %v5703
    %v5705 = vpop.f32.mrf.mxu0
    %5706 = vdwg.mxu0
    %5707 = vmatpush.bf16.msra.mxu0 %v5635
    %5708 = vmatpush.bf16.msra.mxu0 %v5631
    %5709 = vmatpush.bf16.msra.mxu0 %v5627
    %5710 = vmatpush.bf16.msra.mxu0 %v5623
    %5711 = vmatpush.bf16.msra.mxu0 %v5619
    %5712 = vmatpush.bf16.msra.mxu0 %v5615
    %5713 = vmatpush.bf16.msra.mxu0 %v5611
    %5714 = vmatpush.bf16.msra.mxu0 %v5607
    %5715 = vmatmul.bf16.gmra.mxu0 %v5475
    %v5716 = vpop.f32.mrf.mxu0
    %v5717 = vadd.f32 0.0, %v5716
    %v5718 = vpop.f32.mrf.mxu0
    %5719 = vdwg.mxu0
    %v5720 = vadd.f32 %v5471, %v5678
    %v5721 = vadd.f32 %v5472, %v5691
    %v5722 = vadd.f32 %v5473, %v5704
    %v5723 = vadd.f32 %v5474, %v5717
    %v5724 = vxor.u32 %v5720, 2147483648
    %v5725 = vmul.f32 %v5724, 1.442695
    %v5726 = vpow.pop %v5725
    %v5727 = vadd.f32 %v5726, 1.0
    %v5728 = vrcp.pop %v5727
    %v5729 = vmul.f32 %v5727, %v5728
    %v5730 = vsub.f32 1.0, %v5729
    %v5731 = vmul.f32 %v5728, %v5730
    %v5732 = vadd.f32 %v5728, %v5731
    %vm5733 = vweird.f32 %v5727
    %vm5734 = vweird.f32 %v5728
    %vm5735 = vmor %vm5733, %vm5734
    %v5736 = vsel %vm5735, %v5728, %v5732
    %v5737 = vand.u32 2147483647, %v5727
    %vm5738 = vcmp.eq.f32.partialorder %v5737, 8.507059e+37
    %v5739 = vand.u32 %v5727, 2147483648
    %v5740 = vor.u32 1.1754944e-38, %v5739
    %v5741 = vsel %vm5738, %v5740, %v5736
    %v5742 = vmul.f32 1.0, %v5741
    %v5743 = vxor.u32 %v5721, 2147483648
    %v5744 = vmul.f32 %v5743, 1.442695
    %v5745 = vpow.pop %v5744
    %v5746 = vadd.f32 %v5745, 1.0
    %v5747 = vrcp.pop %v5746
    %v5748 = vmul.f32 %v5746, %v5747
    %v5749 = vsub.f32 1.0, %v5748
    %v5750 = vmul.f32 %v5747, %v5749
    %v5751 = vadd.f32 %v5747, %v5750
    %vm5752 = vweird.f32 %v5746
    %vm5753 = vweird.f32 %v5747
    %vm5754 = vmor %vm5752, %vm5753
    %v5755 = vsel %vm5754, %v5747, %v5751
    %v5756 = vand.u32 2147483647, %v5746
    %vm5757 = vcmp.eq.f32.partialorder %v5756, 8.507059e+37
    %v5758 = vand.u32 %v5746, 2147483648
    %v5759 = vor.u32 1.1754944e-38, %v5758
    %v5760 = vsel %vm5757, %v5759, %v5755
    %v5761 = vmul.f32 1.0, %v5760
    %v5762 = vtanh.pop %v5722
    %v5763 = vxor.u32 %v5723, 2147483648
    %v5764 = vmul.f32 %v5763, 1.442695
    %v5765 = vpow.pop %v5764
    %v5766 = vadd.f32 %v5765, 1.0
    %v5767 = vrcp.pop %v5766
    %v5768 = vmul.f32 %v5766, %v5767
    %v5769 = vsub.f32 1.0, %v5768
    %v5770 = vmul.f32 %v5767, %v5769
    %v5771 = vadd.f32 %v5767, %v5770
    %vm5772 = vweird.f32 %v5766
    %vm5773 = vweird.f32 %v5767
    %vm5774 = vmor %vm5772, %vm5773
    %v5775 = vsel %vm5774, %v5767, %v5771
    %v5776 = vand.u32 2147483647, %v5766
    %vm5777 = vcmp.eq.f32.partialorder %v5776, 8.507059e+37
    %v5778 = vand.u32 %v5766, 2147483648
    %v5779 = vor.u32 1.1754944e-38, %v5778
    %v5780 = vsel %vm5777, %v5779, %v5775
    %v5781 = vmul.f32 1.0, %v5780
    %v5782 = vmul.f32 %v5761, %v5150
    %v5783 = vmul.f32 %v5742, %v5762
    %v5784 = vadd.f32 %v5782, %v5783
    %v5785 = vtanh.pop %v5784
    %v5786 = vmul.f32 %v5781, %v5785
    %5787 = vst [vmem:[#allocation4 + $0x70] sm:$0xff] %v5470
    %5788 = vst [vmem:[#allocation4 + $0x8] sm:$0xff] %v5786
    %v5789 = vld [vmem:[#allocation4] sm:$0xff]
    %v5790 = vld [vmem:[#allocation4 + $0x8] sm:$0xff]
    %v5791 = vld [vmem:[#allocation4 + $0x10] sm:$0xff]
    %v5792 = vld [vmem:[#allocation4 + $0x18] sm:$0xff]
    %v5793 = vld [vmem:[#allocation4 + $0x20] sm:$0xff]
    %v5794 = vld [vmem:[#allocation4 + $0x28] sm:$0xff]
    %v5795 = vld [vmem:[#allocation4 + $0x30] sm:$0xff]
    %v5796 = vld [vmem:[#allocation4 + $0x38] sm:$0xff]
    %v5797 = vld [vmem:[#allocation4 + $0x40] sm:$0xff]
    %v5798 = vld [vmem:[#allocation4 + $0x48] sm:$0xff]
    %v5799 = vld [vmem:[#allocation4 + $0x50] sm:$0xff]
    %v5800 = vld [vmem:[#allocation4 + $0x58] sm:$0xff]
    %v5801 = vld [vmem:[#allocation4 + $0x60] sm:$0xff]
    %v5802 = vld [vmem:[#allocation4 + $0x68] sm:$0xff]
    %v5803 = vld [vmem:[#allocation4 + $0x70] sm:$0xff]
    %v5804 = vld [vmem:[#allocation4 + $0x78] sm:$0xff]
    %v5805 = vpack.c.bf16 %v5791, %v5789
    %v5806 = vpack.c.bf16 %v5792, %v5790
    %v5807 = vpack.c.bf16 %v5795, %v5793
    %v5808 = vpack.c.bf16 %v5796, %v5794
    %v5809 = vpack.c.bf16 %v5799, %v5797
    %v5810 = vpack.c.bf16 %v5800, %v5798
    %v5811 = vpack.c.bf16 %v5803, %v5801
    %v5812 = vpack.c.bf16 %v5804, %v5802
    %v5813 = vld [vmem:[#allocation15] sm:$0xff]
    %v5814 = vld [vmem:[#allocation15 + $0x8] sm:$0xff]
    %v5815 = vld [vmem:[#allocation15 + $0x10] sm:$0xff]
    %v5816 = vld [vmem:[#allocation15 + $0x18] sm:$0xff]
    %v5817 = vld [vmem:[#allocation15 + $0x20] sm:$0xff]
    %v5818 = vld [vmem:[#allocation15 + $0x28] sm:$0xff]
    %v5819 = vld [vmem:[#allocation15 + $0x30] sm:$0xff]
    %v5820 = vld [vmem:[#allocation15 + $0x38] sm:$0xff]
    %v5821 = vld [vmem:[#allocation15 + $0x40] sm:$0xff]
    %v5822 = vld [vmem:[#allocation15 + $0x48] sm:$0xff]
    %v5823 = vld [vmem:[#allocation15 + $0x50] sm:$0xff]
    %v5824 = vld [vmem:[#allocation15 + $0x58] sm:$0xff]
    %v5825 = vld [vmem:[#allocation15 + $0x60] sm:$0xff]
    %v5826 = vld [vmem:[#allocation15 + $0x68] sm:$0xff]
    %v5827 = vld [vmem:[#allocation15 + $0x70] sm:$0xff]
    %v5828 = vld [vmem:[#allocation15 + $0x78] sm:$0xff]
    %v5829 = vld [vmem:[#allocation15 + $0x80] sm:$0xff]
    %v5830 = vld [vmem:[#allocation15 + $0x88] sm:$0xff]
    %v5831 = vld [vmem:[#allocation15 + $0x90] sm:$0xff]
    %v5832 = vld [vmem:[#allocation15 + $0x98] sm:$0xff]
    %v5833 = vld [vmem:[#allocation15 + $0xa0] sm:$0xff]
    %v5834 = vld [vmem:[#allocation15 + $0xa8] sm:$0xff]
    %v5835 = vld [vmem:[#allocation15 + $0xb0] sm:$0xff]
    %v5836 = vld [vmem:[#allocation15 + $0xb8] sm:$0xff]
    %v5837 = vld [vmem:[#allocation15 + $0xc0] sm:$0xff]
    %v5838 = vld [vmem:[#allocation15 + $0xc8] sm:$0xff]
    %v5839 = vld [vmem:[#allocation15 + $0xd0] sm:$0xff]
    %v5840 = vld [vmem:[#allocation15 + $0xd8] sm:$0xff]
    %v5841 = vld [vmem:[#allocation15 + $0xe0] sm:$0xff]
    %v5842 = vld [vmem:[#allocation15 + $0xe8] sm:$0xff]
    %v5843 = vld [vmem:[#allocation15 + $0xf0] sm:$0xff]
    %v5844 = vld [vmem:[#allocation15 + $0xf8] sm:$0xff]
    %v5845 = vld [vmem:[#allocation15 + $0x100] sm:$0xff]
    %v5846 = vld [vmem:[#allocation15 + $0x108] sm:$0xff]
    %v5847 = vld [vmem:[#allocation15 + $0x110] sm:$0xff]
    %v5848 = vld [vmem:[#allocation15 + $0x118] sm:$0xff]
    %v5849 = vld [vmem:[#allocation15 + $0x120] sm:$0xff]
    %v5850 = vld [vmem:[#allocation15 + $0x128] sm:$0xff]
    %v5851 = vld [vmem:[#allocation15 + $0x130] sm:$0xff]
    %v5852 = vld [vmem:[#allocation15 + $0x138] sm:$0xff]
    %v5853 = vld [vmem:[#allocation15 + $0x140] sm:$0xff]
    %v5854 = vld [vmem:[#allocation15 + $0x148] sm:$0xff]
    %v5855 = vld [vmem:[#allocation15 + $0x150] sm:$0xff]
    %v5856 = vld [vmem:[#allocation15 + $0x158] sm:$0xff]
    %v5857 = vld [vmem:[#allocation15 + $0x160] sm:$0xff]
    %v5858 = vld [vmem:[#allocation15 + $0x168] sm:$0xff]
    %v5859 = vld [vmem:[#allocation15 + $0x170] sm:$0xff]
    %v5860 = vld [vmem:[#allocation15 + $0x178] sm:$0xff]
    %v5861 = vld [vmem:[#allocation15 + $0x180] sm:$0xff]
    %v5862 = vld [vmem:[#allocation15 + $0x188] sm:$0xff]
    %v5863 = vld [vmem:[#allocation15 + $0x190] sm:$0xff]
    %v5864 = vld [vmem:[#allocation15 + $0x198] sm:$0xff]
    %v5865 = vld [vmem:[#allocation15 + $0x1a0] sm:$0xff]
    %v5866 = vld [vmem:[#allocation15 + $0x1a8] sm:$0xff]
    %v5867 = vld [vmem:[#allocation15 + $0x1b0] sm:$0xff]
    %v5868 = vld [vmem:[#allocation15 + $0x1b8] sm:$0xff]
    %v5869 = vld [vmem:[#allocation15 + $0x1c0] sm:$0xff]
    %v5870 = vld [vmem:[#allocation15 + $0x1c8] sm:$0xff]
    %v5871 = vld [vmem:[#allocation15 + $0x1d0] sm:$0xff]
    %v5872 = vld [vmem:[#allocation15 + $0x1d8] sm:$0xff]
    %v5873 = vld [vmem:[#allocation15 + $0x1e0] sm:$0xff]
    %v5874 = vld [vmem:[#allocation15 + $0x1e8] sm:$0xff]
    %v5875 = vld [vmem:[#allocation15 + $0x1f0] sm:$0xff]
    %v5876 = vld [vmem:[#allocation15 + $0x1f8] sm:$0xff]
    %v5877 = vld [vmem:[#allocation18] sm:$0xf]
    %v5879 = vperm.slane %v5877, 0
    %v5880 = vperm.slane %v5877, 1
    %v5881 = vperm.slane %v5877, 2
    %v5882 = vperm.slane %v5877, 3
    %v5951 = vunpack.c.l.b16 %v5813
    %v5952 = vunpack.c.h.b16 %v5813
    %v5953 = vunpack.c.l.b16 %v5814
    %v5954 = vunpack.c.h.b16 %v5814
    %v5955 = vunpack.c.l.b16 %v5815
    %v5956 = vunpack.c.h.b16 %v5815
    %v5957 = vunpack.c.l.b16 %v5816
    %v5958 = vunpack.c.h.b16 %v5816
    %v5959 = vunpack.c.l.b16 %v5817
    %v5960 = vunpack.c.h.b16 %v5817
    %v5961 = vunpack.c.l.b16 %v5818
    %v5962 = vunpack.c.h.b16 %v5818
    %v5963 = vunpack.c.l.b16 %v5819
    %v5964 = vunpack.c.h.b16 %v5819
    %v5965 = vunpack.c.l.b16 %v5820
    %v5966 = vunpack.c.h.b16 %v5820
    %v5967 = vunpack.c.l.b16 %v5821
    %v5968 = vunpack.c.h.b16 %v5821
    %v5969 = vunpack.c.l.b16 %v5822
    %v5970 = vunpack.c.h.b16 %v5822
    %v5971 = vunpack.c.l.b16 %v5823
    %v5972 = vunpack.c.h.b16 %v5823
    %v5973 = vunpack.c.l.b16 %v5824
    %v5974 = vunpack.c.h.b16 %v5824
    %v5975 = vunpack.c.l.b16 %v5825
    %v5976 = vunpack.c.h.b16 %v5825
    %v5977 = vunpack.c.l.b16 %v5826
    %v5978 = vunpack.c.h.b16 %v5826
    %v5979 = vunpack.c.l.b16 %v5827
    %v5980 = vunpack.c.h.b16 %v5827
    %v5981 = vunpack.c.l.b16 %v5828
    %v5982 = vunpack.c.h.b16 %v5828
    %v5983 = vunpack.c.l.b16 %v5829
    %v5984 = vunpack.c.h.b16 %v5829
    %v5985 = vunpack.c.l.b16 %v5830
    %v5986 = vunpack.c.h.b16 %v5830
    %v5987 = vunpack.c.l.b16 %v5831
    %v5988 = vunpack.c.h.b16 %v5831
    %v5989 = vunpack.c.l.b16 %v5832
    %v5990 = vunpack.c.h.b16 %v5832
    %v5991 = vunpack.c.l.b16 %v5833
    %v5992 = vunpack.c.h.b16 %v5833
    %v5993 = vunpack.c.l.b16 %v5834
    %v5994 = vunpack.c.h.b16 %v5834
    %v5995 = vunpack.c.l.b16 %v5835
    %v5996 = vunpack.c.h.b16 %v5835
    %v5997 = vunpack.c.l.b16 %v5836
    %v5998 = vunpack.c.h.b16 %v5836
    %v5999 = vunpack.c.l.b16 %v5837
    %v6000 = vunpack.c.h.b16 %v5837
    %v6001 = vunpack.c.l.b16 %v5838
    %v6002 = vunpack.c.h.b16 %v5838
    %v6003 = vunpack.c.l.b16 %v5839
    %v6004 = vunpack.c.h.b16 %v5839
    %v6005 = vunpack.c.l.b16 %v5840
    %v6006 = vunpack.c.h.b16 %v5840
    %v6007 = vunpack.c.l.b16 %v5841
    %v6008 = vunpack.c.h.b16 %v5841
    %v6009 = vunpack.c.l.b16 %v5842
    %v6010 = vunpack.c.h.b16 %v5842
    %v6011 = vunpack.c.l.b16 %v5843
    %v6012 = vunpack.c.h.b16 %v5843
    %v6013 = vunpack.c.l.b16 %v5844
    %v6014 = vunpack.c.h.b16 %v5844
    %v6015 = vunpack.c.l.b16 %v5845
    %v6016 = vunpack.c.h.b16 %v5845
    %v6017 = vunpack.c.l.b16 %v5846
    %v6018 = vunpack.c.h.b16 %v5846
    %v6019 = vunpack.c.l.b16 %v5847
    %v6020 = vunpack.c.h.b16 %v5847
    %v6021 = vunpack.c.l.b16 %v5848
    %v6022 = vunpack.c.h.b16 %v5848
    %v6023 = vunpack.c.l.b16 %v5849
    %v6024 = vunpack.c.h.b16 %v5849
    %v6025 = vunpack.c.l.b16 %v5850
    %v6026 = vunpack.c.h.b16 %v5850
    %v6027 = vunpack.c.l.b16 %v5851
    %v6028 = vunpack.c.h.b16 %v5851
    %v6029 = vunpack.c.l.b16 %v5852
    %v6030 = vunpack.c.h.b16 %v5852
    %v6031 = vunpack.c.l.b16 %v5853
    %v6032 = vunpack.c.h.b16 %v5853
    %v6033 = vunpack.c.l.b16 %v5854
    %v6034 = vunpack.c.h.b16 %v5854
    %v6035 = vunpack.c.l.b16 %v5855
    %v6036 = vunpack.c.h.b16 %v5855
    %v6037 = vunpack.c.l.b16 %v5856
    %v6038 = vunpack.c.h.b16 %v5856
    %v6039 = vunpack.c.l.b16 %v5857
    %v6040 = vunpack.c.h.b16 %v5857
    %v6041 = vunpack.c.l.b16 %v5858
    %v6042 = vunpack.c.h.b16 %v5858
    %v6043 = vunpack.c.l.b16 %v5859
    %v6044 = vunpack.c.h.b16 %v5859
    %v6045 = vunpack.c.l.b16 %v5860
    %v6046 = vunpack.c.h.b16 %v5860
    %v6047 = vunpack.c.l.b16 %v5861
    %v6048 = vunpack.c.h.b16 %v5861
    %v6049 = vunpack.c.l.b16 %v5862
    %v6050 = vunpack.c.h.b16 %v5862
    %v6051 = vunpack.c.l.b16 %v5863
    %v6052 = vunpack.c.h.b16 %v5863
    %v6053 = vunpack.c.l.b16 %v5864
    %v6054 = vunpack.c.h.b16 %v5864
    %v6055 = vunpack.c.l.b16 %v5865
    %v6056 = vunpack.c.h.b16 %v5865
    %v6057 = vunpack.c.l.b16 %v5866
    %v6058 = vunpack.c.h.b16 %v5866
    %v6059 = vunpack.c.l.b16 %v5867
    %v6060 = vunpack.c.h.b16 %v5867
    %v6061 = vunpack.c.l.b16 %v5868
    %v6062 = vunpack.c.h.b16 %v5868
    %v6063 = vunpack.c.l.b16 %v5869
    %v6064 = vunpack.c.h.b16 %v5869
    %v6065 = vunpack.c.l.b16 %v5870
    %v6066 = vunpack.c.h.b16 %v5870
    %v6067 = vunpack.c.l.b16 %v5871
    %v6068 = vunpack.c.h.b16 %v5871
    %v6069 = vunpack.c.l.b16 %v5872
    %v6070 = vunpack.c.h.b16 %v5872
    %v6071 = vunpack.c.l.b16 %v5873
    %v6072 = vunpack.c.h.b16 %v5873
    %v6073 = vunpack.c.l.b16 %v5874
    %v6074 = vunpack.c.h.b16 %v5874
    %v6075 = vunpack.c.l.b16 %v5875
    %v6076 = vunpack.c.h.b16 %v5875
    %v6077 = vunpack.c.l.b16 %v5876
    %v6078 = vunpack.c.h.b16 %v5876
    %v6079 = vpack.c.b16 %v5955, %v5951
    %v6080 = vpack.c.b16 %v5956, %v5952
    %v6081 = vpack.c.b16 %v5957, %v5953
    %v6082 = vpack.c.b16 %v5958, %v5954
    %v6083 = vpack.c.b16 %v5963, %v5959
    %v6084 = vpack.c.b16 %v5964, %v5960
    %v6085 = vpack.c.b16 %v5965, %v5961
    %v6086 = vpack.c.b16 %v5966, %v5962
    %v6087 = vpack.c.b16 %v5971, %v5967
    %v6088 = vpack.c.b16 %v5972, %v5968
    %v6089 = vpack.c.b16 %v5973, %v5969
    %v6090 = vpack.c.b16 %v5974, %v5970
    %v6091 = vpack.c.b16 %v5979, %v5975
    %v6092 = vpack.c.b16 %v5980, %v5976
    %v6093 = vpack.c.b16 %v5981, %v5977
    %v6094 = vpack.c.b16 %v5982, %v5978
    %v6095 = vpack.c.b16 %v5987, %v5983
    %v6096 = vpack.c.b16 %v5988, %v5984
    %v6097 = vpack.c.b16 %v5989, %v5985
    %v6098 = vpack.c.b16 %v5990, %v5986
    %v6099 = vpack.c.b16 %v5995, %v5991
    %v6100 = vpack.c.b16 %v5996, %v5992
    %v6101 = vpack.c.b16 %v5997, %v5993
    %v6102 = vpack.c.b16 %v5998, %v5994
    %v6103 = vpack.c.b16 %v6003, %v5999
    %v6104 = vpack.c.b16 %v6004, %v6000
    %v6105 = vpack.c.b16 %v6005, %v6001
    %v6106 = vpack.c.b16 %v6006, %v6002
    %v6107 = vpack.c.b16 %v6011, %v6007
    %v6108 = vpack.c.b16 %v6012, %v6008
    %v6109 = vpack.c.b16 %v6013, %v6009
    %v6110 = vpack.c.b16 %v6014, %v6010
    %v6111 = vpack.c.b16 %v6019, %v6015
    %v6112 = vpack.c.b16 %v6020, %v6016
    %v6113 = vpack.c.b16 %v6021, %v6017
    %v6114 = vpack.c.b16 %v6022, %v6018
    %v6115 = vpack.c.b16 %v6027, %v6023
    %v6116 = vpack.c.b16 %v6028, %v6024
    %v6117 = vpack.c.b16 %v6029, %v6025
    %v6118 = vpack.c.b16 %v6030, %v6026
    %v6119 = vpack.c.b16 %v6035, %v6031
    %v6120 = vpack.c.b16 %v6036, %v6032
    %v6121 = vpack.c.b16 %v6037, %v6033
    %v6122 = vpack.c.b16 %v6038, %v6034
    %v6123 = vpack.c.b16 %v6043, %v6039
    %v6124 = vpack.c.b16 %v6044, %v6040
    %v6125 = vpack.c.b16 %v6045, %v6041
    %v6126 = vpack.c.b16 %v6046, %v6042
    %v6127 = vpack.c.b16 %v6051, %v6047
    %v6128 = vpack.c.b16 %v6052, %v6048
    %v6129 = vpack.c.b16 %v6053, %v6049
    %v6130 = vpack.c.b16 %v6054, %v6050
    %v6131 = vpack.c.b16 %v6059, %v6055
    %v6132 = vpack.c.b16 %v6060, %v6056
    %v6133 = vpack.c.b16 %v6061, %v6057
    %v6134 = vpack.c.b16 %v6062, %v6058
    %v6135 = vpack.c.b16 %v6067, %v6063
    %v6136 = vpack.c.b16 %v6068, %v6064
    %v6137 = vpack.c.b16 %v6069, %v6065
    %v6138 = vpack.c.b16 %v6070, %v6066
    %v6139 = vpack.c.b16 %v6075, %v6071
    %v6140 = vpack.c.b16 %v6076, %v6072
    %v6141 = vpack.c.b16 %v6077, %v6073
    %v6142 = vpack.c.b16 %v6078, %v6074
    %6207 = vmatpush.bf16.msra.mxu0 %v6107
    %6208 = vmatpush.bf16.msra.mxu0 %v6103
    %6209 = vmatpush.bf16.msra.mxu0 %v6099
    %6210 = vmatpush.bf16.msra.mxu0 %v6095
    %6211 = vmatpush.bf16.msra.mxu0 %v6091
    %6212 = vmatpush.bf16.msra.mxu0 %v6087
    %6213 = vmatpush.bf16.msra.mxu0 %v6083
    %6214 = vmatpush.bf16.msra.mxu0 %v6079
    %6215 = vmatmul.bf16.gmra.mxu0 %v5805
    %v6216 = vpop.f32.mrf.mxu0
    %v6217 = vadd.f32 %v5879, %v6216
    %v6218 = vpop.f32.mrf.mxu0
    %v6219 = vadd.f32 %v5879, %v6218
    %6220 = vmatmul.bf16.gmra.mxu0 %v5807
    %v6221 = vpop.f32.mrf.mxu0
    %v6222 = vadd.f32 %v5879, %v6221
    %v6223 = vpop.f32.mrf.mxu0
    %v6224 = vadd.f32 %v5879, %v6223
    %6225 = vmatmul.bf16.gmra.mxu0 %v5809
    %v6226 = vpop.f32.mrf.mxu0
    %v6227 = vadd.f32 %v5879, %v6226
    %v6228 = vpop.f32.mrf.mxu0
    %v6229 = vadd.f32 %v5879, %v6228
    %6230 = vmatmul.bf16.gmra.mxu0 %v5811
    %v6231 = vpop.f32.mrf.mxu0
    %v6232 = vadd.f32 %v5879, %v6231
    %v6233 = vpop.f32.mrf.mxu0
    %v6234 = vadd.f32 %v5879, %v6233
    %6235 = vdwg.mxu0
    %6236 = vmatpush.bf16.msra.mxu0 %v6139
    %6237 = vmatpush.bf16.msra.mxu0 %v6135
    %6238 = vmatpush.bf16.msra.mxu0 %v6131
    %6239 = vmatpush.bf16.msra.mxu0 %v6127
    %6240 = vmatpush.bf16.msra.mxu0 %v6123
    %6241 = vmatpush.bf16.msra.mxu0 %v6119
    %6242 = vmatpush.bf16.msra.mxu0 %v6115
    %6243 = vmatpush.bf16.msra.mxu0 %v6111
    %6244 = vmatmul.bf16.gmra.mxu0 %v5806
    %v6245 = vpop.f32.mrf.mxu0
    %v6246 = vadd.f32 %v6217, %v6245
    %v6247 = vpop.f32.mrf.mxu0
    %v6248 = vadd.f32 %v6219, %v6247
    %6249 = vmatmul.bf16.gmra.mxu0 %v5808
    %v6250 = vpop.f32.mrf.mxu0
    %v6251 = vadd.f32 %v6222, %v6250
    %v6252 = vpop.f32.mrf.mxu0
    %v6253 = vadd.f32 %v6224, %v6252
    %6254 = vmatmul.bf16.gmra.mxu0 %v5810
    %v6255 = vpop.f32.mrf.mxu0
    %v6256 = vadd.f32 %v6227, %v6255
    %v6257 = vpop.f32.mrf.mxu0
    %v6258 = vadd.f32 %v6229, %v6257
    %6259 = vmatmul.bf16.gmra.mxu0 %v5812
    %v6260 = vpop.f32.mrf.mxu0
    %v6261 = vadd.f32 %v6232, %v6260
    %v6262 = vpop.f32.mrf.mxu0
    %v6263 = vadd.f32 %v6234, %v6262
    %6264 = vdwg.mxu0
    %6265 = vmatpush.bf16.msra.mxu0 %v6108
    %6266 = vmatpush.bf16.msra.mxu0 %v6104
    %6267 = vmatpush.bf16.msra.mxu0 %v6100
    %6268 = vmatpush.bf16.msra.mxu0 %v6096
    %6269 = vmatpush.bf16.msra.mxu0 %v6092
    %6270 = vmatpush.bf16.msra.mxu0 %v6088
    %6271 = vmatpush.bf16.msra.mxu0 %v6084
    %6272 = vmatpush.bf16.msra.mxu0 %v6080
    %6273 = vmatmul.bf16.gmra.mxu0 %v5805
    %v6274 = vpop.f32.mrf.mxu0
    %v6275 = vadd.f32 %v5880, %v6274
    %v6276 = vpop.f32.mrf.mxu0
    %v6277 = vadd.f32 %v5880, %v6276
    %6278 = vmatmul.bf16.gmra.mxu0 %v5807
    %v6279 = vpop.f32.mrf.mxu0
    %v6280 = vadd.f32 %v5880, %v6279
    %v6281 = vpop.f32.mrf.mxu0
    %v6282 = vadd.f32 %v5880, %v6281
    %6283 = vmatmul.bf16.gmra.mxu0 %v5809
    %v6284 = vpop.f32.mrf.mxu0
    %v6285 = vadd.f32 %v5880, %v6284
    %v6286 = vpop.f32.mrf.mxu0
    %v6287 = vadd.f32 %v5880, %v6286
    %6288 = vmatmul.bf16.gmra.mxu0 %v5811
    %v6289 = vpop.f32.mrf.mxu0
    %v6290 = vadd.f32 %v5880, %v6289
    %v6291 = vpop.f32.mrf.mxu0
    %v6292 = vadd.f32 %v5880, %v6291
    %6293 = vdwg.mxu0
    %6294 = vmatpush.bf16.msra.mxu0 %v6140
    %6295 = vmatpush.bf16.msra.mxu0 %v6136
    %6296 = vmatpush.bf16.msra.mxu0 %v6132
    %6297 = vmatpush.bf16.msra.mxu0 %v6128
    %6298 = vmatpush.bf16.msra.mxu0 %v6124
    %6299 = vmatpush.bf16.msra.mxu0 %v6120
    %6300 = vmatpush.bf16.msra.mxu0 %v6116
    %6301 = vmatpush.bf16.msra.mxu0 %v6112
    %6302 = vmatmul.bf16.gmra.mxu0 %v5806
    %v6303 = vpop.f32.mrf.mxu0
    %v6304 = vadd.f32 %v6275, %v6303
    %v6305 = vpop.f32.mrf.mxu0
    %v6306 = vadd.f32 %v6277, %v6305
    %6307 = vmatmul.bf16.gmra.mxu0 %v5808
    %v6308 = vpop.f32.mrf.mxu0
    %v6309 = vadd.f32 %v6280, %v6308
    %v6310 = vpop.f32.mrf.mxu0
    %v6311 = vadd.f32 %v6282, %v6310
    %6312 = vmatmul.bf16.gmra.mxu0 %v5810
    %v6313 = vpop.f32.mrf.mxu0
    %v6314 = vadd.f32 %v6285, %v6313
    %v6315 = vpop.f32.mrf.mxu0
    %v6316 = vadd.f32 %v6287, %v6315
    %6317 = vmatmul.bf16.gmra.mxu0 %v5812
    %v6318 = vpop.f32.mrf.mxu0
    %v6319 = vadd.f32 %v6290, %v6318
    %v6320 = vpop.f32.mrf.mxu0
    %v6321 = vadd.f32 %v6292, %v6320
    %6322 = vdwg.mxu0
    %6323 = vmatpush.bf16.msra.mxu0 %v6109
    %6324 = vmatpush.bf16.msra.mxu0 %v6105
    %6325 = vmatpush.bf16.msra.mxu0 %v6101
    %6326 = vmatpush.bf16.msra.mxu0 %v6097
    %6327 = vmatpush.bf16.msra.mxu0 %v6093
    %6328 = vmatpush.bf16.msra.mxu0 %v6089
    %6329 = vmatpush.bf16.msra.mxu0 %v6085
    %6330 = vmatpush.bf16.msra.mxu0 %v6081
    %6331 = vmatmul.bf16.gmra.mxu0 %v5805
    %v6332 = vpop.f32.mrf.mxu0
    %v6333 = vadd.f32 %v5881, %v6332
    %v6334 = vpop.f32.mrf.mxu0
    %v6335 = vadd.f32 %v5881, %v6334
    %6336 = vmatmul.bf16.gmra.mxu0 %v5807
    %v6337 = vpop.f32.mrf.mxu0
    %v6338 = vadd.f32 %v5881, %v6337
    %v6339 = vpop.f32.mrf.mxu0
    %v6340 = vadd.f32 %v5881, %v6339
    %6341 = vmatmul.bf16.gmra.mxu0 %v5809
    %v6342 = vpop.f32.mrf.mxu0
    %v6343 = vadd.f32 %v5881, %v6342
    %v6344 = vpop.f32.mrf.mxu0
    %v6345 = vadd.f32 %v5881, %v6344
    %6346 = vmatmul.bf16.gmra.mxu0 %v5811
    %v6347 = vpop.f32.mrf.mxu0
    %v6348 = vadd.f32 %v5881, %v6347
    %v6349 = vpop.f32.mrf.mxu0
    %v6350 = vadd.f32 %v5881, %v6349
    %6351 = vdwg.mxu0
    %6352 = vmatpush.bf16.msra.mxu0 %v6141
    %6353 = vmatpush.bf16.msra.mxu0 %v6137
    %6354 = vmatpush.bf16.msra.mxu0 %v6133
    %6355 = vmatpush.bf16.msra.mxu0 %v6129
    %6356 = vmatpush.bf16.msra.mxu0 %v6125
    %6357 = vmatpush.bf16.msra.mxu0 %v6121
    %6358 = vmatpush.bf16.msra.mxu0 %v6117
    %6359 = vmatpush.bf16.msra.mxu0 %v6113
    %6360 = vmatmul.bf16.gmra.mxu0 %v5806
    %v6361 = vpop.f32.mrf.mxu0
    %v6362 = vadd.f32 %v6333, %v6361
    %v6363 = vpop.f32.mrf.mxu0
    %v6364 = vadd.f32 %v6335, %v6363
    %6365 = vmatmul.bf16.gmra.mxu0 %v5808
    %v6366 = vpop.f32.mrf.mxu0
    %v6367 = vadd.f32 %v6338, %v6366
    %v6368 = vpop.f32.mrf.mxu0
    %v6369 = vadd.f32 %v6340, %v6368
    %6370 = vmatmul.bf16.gmra.mxu0 %v5810
    %v6371 = vpop.f32.mrf.mxu0
    %v6372 = vadd.f32 %v6343, %v6371
    %v6373 = vpop.f32.mrf.mxu0
    %v6374 = vadd.f32 %v6345, %v6373
    %6375 = vmatmul.bf16.gmra.mxu0 %v5812
    %v6376 = vpop.f32.mrf.mxu0
    %v6377 = vadd.f32 %v6348, %v6376
    %v6378 = vpop.f32.mrf.mxu0
    %v6379 = vadd.f32 %v6350, %v6378
    %6380 = vdwg.mxu0
    %6381 = vmatpush.bf16.msra.mxu0 %v6110
    %6382 = vmatpush.bf16.msra.mxu0 %v6106
    %6383 = vmatpush.bf16.msra.mxu0 %v6102
    %6384 = vmatpush.bf16.msra.mxu0 %v6098
    %6385 = vmatpush.bf16.msra.mxu0 %v6094
    %6386 = vmatpush.bf16.msra.mxu0 %v6090
    %6387 = vmatpush.bf16.msra.mxu0 %v6086
    %6388 = vmatpush.bf16.msra.mxu0 %v6082
    %6389 = vmatmul.bf16.gmra.mxu0 %v5805
    %v6390 = vpop.f32.mrf.mxu0
    %v6391 = vadd.f32 %v5882, %v6390
    %v6392 = vpop.f32.mrf.mxu0
    %v6393 = vadd.f32 %v5882, %v6392
    %6394 = vmatmul.bf16.gmra.mxu0 %v5807
    %v6395 = vpop.f32.mrf.mxu0
    %v6396 = vadd.f32 %v5882, %v6395
    %v6397 = vpop.f32.mrf.mxu0
    %v6398 = vadd.f32 %v5882, %v6397
    %6399 = vmatmul.bf16.gmra.mxu0 %v5809
    %v6400 = vpop.f32.mrf.mxu0
    %v6401 = vadd.f32 %v5882, %v6400
    %v6402 = vpop.f32.mrf.mxu0
    %v6403 = vadd.f32 %v5882, %v6402
    %6404 = vmatmul.bf16.gmra.mxu0 %v5811
    %v6405 = vpop.f32.mrf.mxu0
    %v6406 = vadd.f32 %v5882, %v6405
    %v6407 = vpop.f32.mrf.mxu0
    %v6408 = vadd.f32 %v5882, %v6407
    %6409 = vdwg.mxu0
    %6410 = vmatpush.bf16.msra.mxu0 %v6142
    %6411 = vmatpush.bf16.msra.mxu0 %v6138
    %6412 = vmatpush.bf16.msra.mxu0 %v6134
    %6413 = vmatpush.bf16.msra.mxu0 %v6130
    %6414 = vmatpush.bf16.msra.mxu0 %v6126
    %6415 = vmatpush.bf16.msra.mxu0 %v6122
    %6416 = vmatpush.bf16.msra.mxu0 %v6118
    %6417 = vmatpush.bf16.msra.mxu0 %v6114
    %6418 = vmatmul.bf16.gmra.mxu0 %v5806
    %v6419 = vpop.f32.mrf.mxu0
    %v6420 = vadd.f32 %v6391, %v6419
    %v6421 = vpop.f32.mrf.mxu0
    %v6422 = vadd.f32 %v6393, %v6421
    %6423 = vmatmul.bf16.gmra.mxu0 %v5808
    %v6424 = vpop.f32.mrf.mxu0
    %v6425 = vadd.f32 %v6396, %v6424
    %v6426 = vpop.f32.mrf.mxu0
    %v6427 = vadd.f32 %v6398, %v6426
    %6428 = vmatmul.bf16.gmra.mxu0 %v5810
    %v6429 = vpop.f32.mrf.mxu0
    %v6430 = vadd.f32 %v6401, %v6429
    %v6431 = vpop.f32.mrf.mxu0
    %v6432 = vadd.f32 %v6403, %v6431
    %6433 = vmatmul.bf16.gmra.mxu0 %v5812
    %v6434 = vpop.f32.mrf.mxu0
    %v6435 = vadd.f32 %v6406, %v6434
    %v6436 = vpop.f32.mrf.mxu0
    %v6437 = vadd.f32 %v6408, %v6436
    %6438 = vdwg.mxu0
    %6439 = vst [vmem:[#allocation5] sm:$0xff] %v6246
    %6440 = vst [vmem:[#allocation5 + $0x8] sm:$0xff] %v6304
    %6441 = vst [vmem:[#allocation5 + $0x10] sm:$0xff] %v6362
    %6442 = vst [vmem:[#allocation5 + $0x18] sm:$0xff] %v6420
    %6443 = vst [vmem:[#allocation5 + $0x20] sm:$0xff] %v6248
    %6444 = vst [vmem:[#allocation5 + $0x28] sm:$0xff] %v6306
    %6445 = vst [vmem:[#allocation5 + $0x30] sm:$0xff] %v6364
    %6446 = vst [vmem:[#allocation5 + $0x38] sm:$0xff] %v6422
    %6447 = vst [vmem:[#allocation5 + $0x40] sm:$0xff] %v6251
    %6448 = vst [vmem:[#allocation5 + $0x48] sm:$0xff] %v6309
    %6449 = vst [vmem:[#allocation5 + $0x50] sm:$0xff] %v6367
    %6450 = vst [vmem:[#allocation5 + $0x58] sm:$0xff] %v6425
    %6451 = vst [vmem:[#allocation5 + $0x60] sm:$0xff] %v6253
    %6452 = vst [vmem:[#allocation5 + $0x68] sm:$0xff] %v6311
    %6453 = vst [vmem:[#allocation5 + $0x70] sm:$0xff] %v6369
    %6454 = vst [vmem:[#allocation5 + $0x78] sm:$0xff] %v6427
    %6455 = vst [vmem:[#allocation5 + $0x80] sm:$0xff] %v6256
    %6456 = vst [vmem:[#allocation5 + $0x88] sm:$0xff] %v6314
    %6457 = vst [vmem:[#allocation5 + $0x90] sm:$0xff] %v6372
    %6458 = vst [vmem:[#allocation5 + $0x98] sm:$0xff] %v6430
    %6459 = vst [vmem:[#allocation5 + $0xa0] sm:$0xff] %v6258
    %6460 = vst [vmem:[#allocation5 + $0xa8] sm:$0xff] %v6316
    %6461 = vst [vmem:[#allocation5 + $0xb0] sm:$0xff] %v6374
    %6462 = vst [vmem:[#allocation5 + $0xb8] sm:$0xff] %v6432
    %6463 = vst [vmem:[#allocation5 + $0xc0] sm:$0xff] %v6261
    %6464 = vst [vmem:[#allocation5 + $0xc8] sm:$0xff] %v6319
    %6465 = vst [vmem:[#allocation5 + $0xd0] sm:$0xff] %v6377
    %6466 = vst [vmem:[#allocation5 + $0xd8] sm:$0xff] %v6435
    %6467 = vst [vmem:[#allocation5 + $0xe0] sm:$0xff] %v6263
    %6468 = vst [vmem:[#allocation5 + $0xe8] sm:$0xff] %v6321
    %6469 = vst [vmem:[#allocation5 + $0xf0] sm:$0xff] %v6379
    %6470 = vst [vmem:[#allocation5 + $0xf8] sm:$0xff] %v6437
    %v6471 = vld [vmem:[#allocation5] sm:$0xff]
    %v6472 = vld [vmem:[#allocation5 + $0x8] sm:$0xff]
    %v6473 = vld [vmem:[#allocation5 + $0x10] sm:$0xff]
    %v6474 = vld [vmem:[#allocation5 + $0x18] sm:$0xff]
    %v6475 = vld [vmem:[#allocation17] sm:$0xff]
    %v6476 = vld [vmem:[#allocation17 + $0x8] sm:$0xff]
    %v6477 = vld [vmem:[#allocation17 + $0x10] sm:$0xff]
    %v6478 = vld [vmem:[#allocation17 + $0x18] sm:$0xff]
    %v6479 = vld [vmem:[#allocation17 + $0x20] sm:$0xff]
    %v6480 = vld [vmem:[#allocation17 + $0x28] sm:$0xff]
    %v6481 = vld [vmem:[#allocation17 + $0x30] sm:$0xff]
    %v6482 = vld [vmem:[#allocation17 + $0x38] sm:$0xff]
    %v6483 = vld [vmem:[#allocation17 + $0x40] sm:$0xff]
    %v6484 = vld [vmem:[#allocation17 + $0x48] sm:$0xff]
    %v6485 = vld [vmem:[#allocation17 + $0x50] sm:$0xff]
    %v6486 = vld [vmem:[#allocation17 + $0x58] sm:$0xff]
    %v6487 = vld [vmem:[#allocation17 + $0x60] sm:$0xff]
    %v6488 = vld [vmem:[#allocation17 + $0x68] sm:$0xff]
    %v6489 = vld [vmem:[#allocation17 + $0x70] sm:$0xff]
    %v6490 = vld [vmem:[#allocation17 + $0x78] sm:$0xff]
    %v6491 = vld [vmem:[#allocation17 + $0x80] sm:$0xff]
    %v6492 = vld [vmem:[#allocation17 + $0x88] sm:$0xff]
    %v6493 = vld [vmem:[#allocation17 + $0x90] sm:$0xff]
    %v6494 = vld [vmem:[#allocation17 + $0x98] sm:$0xff]
    %v6495 = vld [vmem:[#allocation17 + $0xa0] sm:$0xff]
    %v6496 = vld [vmem:[#allocation17 + $0xa8] sm:$0xff]
    %v6497 = vld [vmem:[#allocation17 + $0xb0] sm:$0xff]
    %v6498 = vld [vmem:[#allocation17 + $0xb8] sm:$0xff]
    %v6499 = vld [vmem:[#allocation17 + $0xc0] sm:$0xff]
    %v6500 = vld [vmem:[#allocation17 + $0xc8] sm:$0xff]
    %v6501 = vld [vmem:[#allocation17 + $0xd0] sm:$0xff]
    %v6502 = vld [vmem:[#allocation17 + $0xd8] sm:$0xff]
    %v6503 = vld [vmem:[#allocation17 + $0xe0] sm:$0xff]
    %v6504 = vld [vmem:[#allocation17 + $0xe8] sm:$0xff]
    %v6505 = vld [vmem:[#allocation17 + $0xf0] sm:$0xff]
    %v6506 = vld [vmem:[#allocation17 + $0xf8] sm:$0xff]
    %v6539 = vunpack.c.l.b16 %v6475
    %v6540 = vunpack.c.h.b16 %v6475
    %v6541 = vunpack.c.l.b16 %v6476
    %v6542 = vunpack.c.h.b16 %v6476
    %v6543 = vunpack.c.l.b16 %v6477
    %v6544 = vunpack.c.h.b16 %v6477
    %v6545 = vunpack.c.l.b16 %v6478
    %v6546 = vunpack.c.h.b16 %v6478
    %v6547 = vunpack.c.l.b16 %v6479
    %v6548 = vunpack.c.h.b16 %v6479
    %v6549 = vunpack.c.l.b16 %v6480
    %v6550 = vunpack.c.h.b16 %v6480
    %v6551 = vunpack.c.l.b16 %v6481
    %v6552 = vunpack.c.h.b16 %v6481
    %v6553 = vunpack.c.l.b16 %v6482
    %v6554 = vunpack.c.h.b16 %v6482
    %v6555 = vunpack.c.l.b16 %v6483
    %v6556 = vunpack.c.h.b16 %v6483
    %v6557 = vunpack.c.l.b16 %v6484
    %v6558 = vunpack.c.h.b16 %v6484
    %v6559 = vunpack.c.l.b16 %v6485
    %v6560 = vunpack.c.h.b16 %v6485
    %v6561 = vunpack.c.l.b16 %v6486
    %v6562 = vunpack.c.h.b16 %v6486
    %v6563 = vunpack.c.l.b16 %v6487
    %v6564 = vunpack.c.h.b16 %v6487
    %v6565 = vunpack.c.l.b16 %v6488
    %v6566 = vunpack.c.h.b16 %v6488
    %v6567 = vunpack.c.l.b16 %v6489
    %v6568 = vunpack.c.h.b16 %v6489
    %v6569 = vunpack.c.l.b16 %v6490
    %v6570 = vunpack.c.h.b16 %v6490
    %v6571 = vunpack.c.l.b16 %v6491
    %v6572 = vunpack.c.h.b16 %v6491
    %v6573 = vunpack.c.l.b16 %v6492
    %v6574 = vunpack.c.h.b16 %v6492
    %v6575 = vunpack.c.l.b16 %v6493
    %v6576 = vunpack.c.h.b16 %v6493
    %v6577 = vunpack.c.l.b16 %v6494
    %v6578 = vunpack.c.h.b16 %v6494
    %v6579 = vunpack.c.l.b16 %v6495
    %v6580 = vunpack.c.h.b16 %v6495
    %v6581 = vunpack.c.l.b16 %v6496
    %v6582 = vunpack.c.h.b16 %v6496
    %v6583 = vunpack.c.l.b16 %v6497
    %v6584 = vunpack.c.h.b16 %v6497
    %v6585 = vunpack.c.l.b16 %v6498
    %v6586 = vunpack.c.h.b16 %v6498
    %v6587 = vunpack.c.l.b16 %v6499
    %v6588 = vunpack.c.h.b16 %v6499
    %v6589 = vunpack.c.l.b16 %v6500
    %v6590 = vunpack.c.h.b16 %v6500
    %v6591 = vunpack.c.l.b16 %v6501
    %v6592 = vunpack.c.h.b16 %v6501
    %v6593 = vunpack.c.l.b16 %v6502
    %v6594 = vunpack.c.h.b16 %v6502
    %v6595 = vunpack.c.l.b16 %v6503
    %v6596 = vunpack.c.h.b16 %v6503
    %v6597 = vunpack.c.l.b16 %v6504
    %v6598 = vunpack.c.h.b16 %v6504
    %v6599 = vunpack.c.l.b16 %v6505
    %v6600 = vunpack.c.h.b16 %v6505
    %v6601 = vunpack.c.l.b16 %v6506
    %v6602 = vunpack.c.h.b16 %v6506
    %v6603 = vpack.c.b16 %v6543, %v6539
    %v6604 = vpack.c.b16 %v6544, %v6540
    %v6605 = vpack.c.b16 %v6545, %v6541
    %v6606 = vpack.c.b16 %v6546, %v6542
    %v6607 = vpack.c.b16 %v6551, %v6547
    %v6608 = vpack.c.b16 %v6552, %v6548
    %v6609 = vpack.c.b16 %v6553, %v6549
    %v6610 = vpack.c.b16 %v6554, %v6550
    %v6611 = vpack.c.b16 %v6559, %v6555
    %v6612 = vpack.c.b16 %v6560, %v6556
    %v6613 = vpack.c.b16 %v6561, %v6557
    %v6614 = vpack.c.b16 %v6562, %v6558
    %v6615 = vpack.c.b16 %v6567, %v6563
    %v6616 = vpack.c.b16 %v6568, %v6564
    %v6617 = vpack.c.b16 %v6569, %v6565
    %v6618 = vpack.c.b16 %v6570, %v6566
    %v6619 = vpack.c.b16 %v6575, %v6571
    %v6620 = vpack.c.b16 %v6576, %v6572
    %v6621 = vpack.c.b16 %v6577, %v6573
    %v6622 = vpack.c.b16 %v6578, %v6574
    %v6623 = vpack.c.b16 %v6583, %v6579
    %v6624 = vpack.c.b16 %v6584, %v6580
    %v6625 = vpack.c.b16 %v6585, %v6581
    %v6626 = vpack.c.b16 %v6586, %v6582
    %v6627 = vpack.c.b16 %v6591, %v6587
    %v6628 = vpack.c.b16 %v6592, %v6588
    %v6629 = vpack.c.b16 %v6593, %v6589
    %v6630 = vpack.c.b16 %v6594, %v6590
    %v6631 = vpack.c.b16 %v6599, %v6595
    %v6632 = vpack.c.b16 %v6600, %v6596
    %v6633 = vpack.c.b16 %v6601, %v6597
    %v6634 = vpack.c.b16 %v6602, %v6598
    %6667 = vmatpush.bf16.msra.mxu0 %v6631
    %6668 = vmatpush.bf16.msra.mxu0 %v6627
    %6669 = vmatpush.bf16.msra.mxu0 %v6623
    %6670 = vmatpush.bf16.msra.mxu0 %v6619
    %6671 = vmatpush.bf16.msra.mxu0 %v6615
    %6672 = vmatpush.bf16.msra.mxu0 %v6611
    %6673 = vmatpush.bf16.msra.mxu0 %v6607
    %6674 = vmatpush.bf16.msra.mxu0 %v6603
    %6675 = vmatmul.bf16.gmra.mxu0 0
    %v6676 = vpop.f32.mrf.mxu0
    %v6677 = vadd.f32 0.0, %v6676
    %v6678 = vpop.f32.mrf.mxu0
    %6679 = vdwg.mxu0
    %6680 = vmatpush.bf16.msra.mxu0 %v6632
    %6681 = vmatpush.bf16.msra.mxu0 %v6628
    %6682 = vmatpush.bf16.msra.mxu0 %v6624
    %6683 = vmatpush.bf16.msra.mxu0 %v6620
    %6684 = vmatpush.bf16.msra.mxu0 %v6616
    %6685 = vmatpush.bf16.msra.mxu0 %v6612
    %6686 = vmatpush.bf16.msra.mxu0 %v6608
    %6687 = vmatpush.bf16.msra.mxu0 %v6604
    %6688 = vmatmul.bf16.gmra.mxu0 0
    %v6689 = vpop.f32.mrf.mxu0
    %v6690 = vadd.f32 0.0, %v6689
    %v6691 = vpop.f32.mrf.mxu0
    %6692 = vdwg.mxu0
    %6693 = vmatpush.bf16.msra.mxu0 %v6633
    %6694 = vmatpush.bf16.msra.mxu0 %v6629
    %6695 = vmatpush.bf16.msra.mxu0 %v6625
    %6696 = vmatpush.bf16.msra.mxu0 %v6621
    %6697 = vmatpush.bf16.msra.mxu0 %v6617
    %6698 = vmatpush.bf16.msra.mxu0 %v6613
    %6699 = vmatpush.bf16.msra.mxu0 %v6609
    %6700 = vmatpush.bf16.msra.mxu0 %v6605
    %6701 = vmatmul.bf16.gmra.mxu0 0
    %v6702 = vpop.f32.mrf.mxu0
    %v6703 = vadd.f32 0.0, %v6702
    %v6704 = vpop.f32.mrf.mxu0
    %6705 = vdwg.mxu0
    %6706 = vmatpush.bf16.msra.mxu0 %v6634
    %6707 = vmatpush.bf16.msra.mxu0 %v6630
    %6708 = vmatpush.bf16.msra.mxu0 %v6626
    %6709 = vmatpush.bf16.msra.mxu0 %v6622
    %6710 = vmatpush.bf16.msra.mxu0 %v6618
    %6711 = vmatpush.bf16.msra.mxu0 %v6614
    %6712 = vmatpush.bf16.msra.mxu0 %v6610
    %6713 = vmatpush.bf16.msra.mxu0 %v6606
    %6714 = vmatmul.bf16.gmra.mxu0 0
    %v6715 = vpop.f32.mrf.mxu0
    %v6716 = vadd.f32 0.0, %v6715
    %v6717 = vpop.f32.mrf.mxu0
    %6718 = vdwg.mxu0
    %v6719 = vadd.f32 %v6471, %v6677
    %v6720 = vadd.f32 %v6472, %v6690
    %v6721 = vadd.f32 %v6473, %v6703
    %v6722 = vadd.f32 %v6474, %v6716
    %v6723 = vxor.u32 %v6719, 2147483648
    %v6724 = vmul.f32 %v6723, 1.442695
    %v6725 = vpow.pop %v6724
    %v6726 = vadd.f32 %v6725, 1.0
    %v6727 = vrcp.pop %v6726
    %v6728 = vmul.f32 %v6726, %v6727
    %v6729 = vsub.f32 1.0, %v6728
    %v6730 = vmul.f32 %v6727, %v6729
    %v6731 = vadd.f32 %v6727, %v6730
    %vm6732 = vweird.f32 %v6726
    %vm6733 = vweird.f32 %v6727
    %vm6734 = vmor %vm6732, %vm6733
    %v6735 = vsel %vm6734, %v6727, %v6731
    %v6736 = vand.u32 2147483647, %v6726
    %vm6737 = vcmp.eq.f32.partialorder %v6736, 8.507059e+37
    %v6738 = vand.u32 %v6726, 2147483648
    %v6739 = vor.u32 1.1754944e-38, %v6738
    %v6740 = vsel %vm6737, %v6739, %v6735
    %v6741 = vmul.f32 1.0, %v6740
    %v6742 = vxor.u32 %v6720, 2147483648
    %v6743 = vmul.f32 %v6742, 1.442695
    %v6744 = vpow.pop %v6743
    %v6745 = vadd.f32 %v6744, 1.0
    %v6746 = vrcp.pop %v6745
    %v6747 = vmul.f32 %v6745, %v6746
    %v6748 = vsub.f32 1.0, %v6747
    %v6749 = vmul.f32 %v6746, %v6748
    %v6750 = vadd.f32 %v6746, %v6749
    %vm6751 = vweird.f32 %v6745
    %vm6752 = vweird.f32 %v6746
    %vm6753 = vmor %vm6751, %vm6752
    %v6754 = vsel %vm6753, %v6746, %v6750
    %v6755 = vand.u32 2147483647, %v6745
    %vm6756 = vcmp.eq.f32.partialorder %v6755, 8.507059e+37
    %v6757 = vand.u32 %v6745, 2147483648
    %v6758 = vor.u32 1.1754944e-38, %v6757
    %v6759 = vsel %vm6756, %v6758, %v6754
    %v6760 = vmul.f32 1.0, %v6759
    %v6761 = vtanh.pop %v6721
    %v6762 = vxor.u32 %v6722, 2147483648
    %v6763 = vmul.f32 %v6762, 1.442695
    %v6764 = vpow.pop %v6763
    %v6765 = vadd.f32 %v6764, 1.0
    %v6766 = vrcp.pop %v6765
    %v6767 = vmul.f32 %v6765, %v6766
    %v6768 = vsub.f32 1.0, %v6767
    %v6769 = vmul.f32 %v6766, %v6768
    %v6770 = vadd.f32 %v6766, %v6769
    %vm6771 = vweird.f32 %v6765
    %vm6772 = vweird.f32 %v6766
    %vm6773 = vmor %vm6771, %vm6772
    %v6774 = vsel %vm6773, %v6766, %v6770
    %v6775 = vand.u32 2147483647, %v6765
    %vm6776 = vcmp.eq.f32.partialorder %v6775, 8.507059e+37
    %v6777 = vand.u32 %v6765, 2147483648
    %v6778 = vor.u32 1.1754944e-38, %v6777
    %v6779 = vsel %vm6776, %v6778, %v6774
    %v6780 = vmul.f32 1.0, %v6779
    %v6781 = vmul.f32 %v6760, 0.0
    %v6782 = vmul.f32 %v6741, %v6761
    %v6783 = vadd.f32 %v6781, %v6782
    %v6784 = vtanh.pop %v6783
    %v6785 = vmul.f32 %v6780, %v6784
    %v6786 = vld [vmem:[#allocation5 + $0x20] sm:$0xff]
    %v6787 = vld [vmem:[#allocation5 + $0x28] sm:$0xff]
    %v6788 = vld [vmem:[#allocation5 + $0x30] sm:$0xff]
    %v6789 = vld [vmem:[#allocation5 + $0x38] sm:$0xff]
    %v6790 = vpack.c.bf16 %v6785, %v6785
    %6791 = vmatpush.bf16.msra.mxu0 %v6631
    %6792 = vmatpush.bf16.msra.mxu0 %v6627
    %6793 = vmatpush.bf16.msra.mxu0 %v6623
    %6794 = vmatpush.bf16.msra.mxu0 %v6619
    %6795 = vmatpush.bf16.msra.mxu0 %v6615
    %6796 = vmatpush.bf16.msra.mxu0 %v6611
    %6797 = vmatpush.bf16.msra.mxu0 %v6607
    %6798 = vmatpush.bf16.msra.mxu0 %v6603
    %6799 = vmatmul.bf16.gmra.mxu0 %v6790
    %v6800 = vpop.f32.mrf.mxu0
    %v6801 = vadd.f32 0.0, %v6800
    %v6802 = vpop.f32.mrf.mxu0
    %6803 = vdwg.mxu0
    %6804 = vmatpush.bf16.msra.mxu0 %v6632
    %6805 = vmatpush.bf16.msra.mxu0 %v6628
    %6806 = vmatpush.bf16.msra.mxu0 %v6624
    %6807 = vmatpush.bf16.msra.mxu0 %v6620
    %6808 = vmatpush.bf16.msra.mxu0 %v6616
    %6809 = vmatpush.bf16.msra.mxu0 %v6612
    %6810 = vmatpush.bf16.msra.mxu0 %v6608
    %6811 = vmatpush.bf16.msra.mxu0 %v6604
    %6812 = vmatmul.bf16.gmra.mxu0 %v6790
    %v6813 = vpop.f32.mrf.mxu0
    %v6814 = vadd.f32 0.0, %v6813
    %v6815 = vpop.f32.mrf.mxu0
    %6816 = vdwg.mxu0
    %6817 = vmatpush.bf16.msra.mxu0 %v6633
    %6818 = vmatpush.bf16.msra.mxu0 %v6629
    %6819 = vmatpush.bf16.msra.mxu0 %v6625
    %6820 = vmatpush.bf16.msra.mxu0 %v6621
    %6821 = vmatpush.bf16.msra.mxu0 %v6617
    %6822 = vmatpush.bf16.msra.mxu0 %v6613
    %6823 = vmatpush.bf16.msra.mxu0 %v6609
    %6824 = vmatpush.bf16.msra.mxu0 %v6605
    %6825 = vmatmul.bf16.gmra.mxu0 %v6790
    %v6826 = vpop.f32.mrf.mxu0
    %v6827 = vadd.f32 0.0, %v6826
    %v6828 = vpop.f32.mrf.mxu0
    %6829 = vdwg.mxu0
    %6830 = vmatpush.bf16.msra.mxu0 %v6634
    %6831 = vmatpush.bf16.msra.mxu0 %v6630
    %6832 = vmatpush.bf16.msra.mxu0 %v6626
    %6833 = vmatpush.bf16.msra.mxu0 %v6622
    %6834 = vmatpush.bf16.msra.mxu0 %v6618
    %6835 = vmatpush.bf16.msra.mxu0 %v6614
    %6836 = vmatpush.bf16.msra.mxu0 %v6610
    %6837 = vmatpush.bf16.msra.mxu0 %v6606
    %6838 = vmatmul.bf16.gmra.mxu0 %v6790
    %v6839 = vpop.f32.mrf.mxu0
    %v6840 = vadd.f32 0.0, %v6839
    %v6841 = vpop.f32.mrf.mxu0
    %6842 = vdwg.mxu0
    %v6843 = vadd.f32 %v6786, %v6801
    %v6844 = vadd.f32 %v6787, %v6814
    %v6845 = vadd.f32 %v6788, %v6827
    %v6846 = vadd.f32 %v6789, %v6840
    %v6847 = vxor.u32 %v6843, 2147483648
    %v6848 = vmul.f32 %v6847, 1.442695
    %v6849 = vpow.pop %v6848
    %v6850 = vadd.f32 %v6849, 1.0
    %v6851 = vrcp.pop %v6850
    %v6852 = vmul.f32 %v6850, %v6851
    %v6853 = vsub.f32 1.0, %v6852
    %v6854 = vmul.f32 %v6851, %v6853
    %v6855 = vadd.f32 %v6851, %v6854
    %vm6856 = vweird.f32 %v6850
    %vm6857 = vweird.f32 %v6851
    %vm6858 = vmor %vm6856, %vm6857
    %v6859 = vsel %vm6858, %v6851, %v6855
    %v6860 = vand.u32 2147483647, %v6850
    %vm6861 = vcmp.eq.f32.partialorder %v6860, 8.507059e+37
    %v6862 = vand.u32 %v6850, 2147483648
    %v6863 = vor.u32 1.1754944e-38, %v6862
    %v6864 = vsel %vm6861, %v6863, %v6859
    %v6865 = vmul.f32 1.0, %v6864
    %v6866 = vxor.u32 %v6844, 2147483648
    %v6867 = vmul.f32 %v6866, 1.442695
    %v6868 = vpow.pop %v6867
    %v6869 = vadd.f32 %v6868, 1.0
    %v6870 = vrcp.pop %v6869
    %v6871 = vmul.f32 %v6869, %v6870
    %v6872 = vsub.f32 1.0, %v6871
    %v6873 = vmul.f32 %v6870, %v6872
    %v6874 = vadd.f32 %v6870, %v6873
    %vm6875 = vweird.f32 %v6869
    %vm6876 = vweird.f32 %v6870
    %vm6877 = vmor %vm6875, %vm6876
    %v6878 = vsel %vm6877, %v6870, %v6874
    %v6879 = vand.u32 2147483647, %v6869
    %vm6880 = vcmp.eq.f32.partialorder %v6879, 8.507059e+37
    %v6881 = vand.u32 %v6869, 2147483648
    %v6882 = vor.u32 1.1754944e-38, %v6881
    %v6883 = vsel %vm6880, %v6882, %v6878
    %v6884 = vmul.f32 1.0, %v6883
    %v6885 = vtanh.pop %v6845
    %v6886 = vxor.u32 %v6846, 2147483648
    %v6887 = vmul.f32 %v6886, 1.442695
    %v6888 = vpow.pop %v6887
    %v6889 = vadd.f32 %v6888, 1.0
    %v6890 = vrcp.pop %v6889
    %v6891 = vmul.f32 %v6889, %v6890
    %v6892 = vsub.f32 1.0, %v6891
    %v6893 = vmul.f32 %v6890, %v6892
    %v6894 = vadd.f32 %v6890, %v6893
    %vm6895 = vweird.f32 %v6889
    %vm6896 = vweird.f32 %v6890
    %vm6897 = vmor %vm6895, %vm6896
    %v6898 = vsel %vm6897, %v6890, %v6894
    %v6899 = vand.u32 2147483647, %v6889
    %vm6900 = vcmp.eq.f32.partialorder %v6899, 8.507059e+37
    %v6901 = vand.u32 %v6889, 2147483648
    %v6902 = vor.u32 1.1754944e-38, %v6901
    %v6903 = vsel %vm6900, %v6902, %v6898
    %v6904 = vmul.f32 1.0, %v6903
    %v6905 = vmul.f32 %v6884, %v6783
    %v6906 = vmul.f32 %v6865, %v6885
    %v6907 = vadd.f32 %v6905, %v6906
    %v6908 = vtanh.pop %v6907
    %v6909 = vmul.f32 %v6904, %v6908
    %v6910 = vld [vmem:[#allocation5 + $0x40] sm:$0xff]
    %v6911 = vld [vmem:[#allocation5 + $0x48] sm:$0xff]
    %v6912 = vld [vmem:[#allocation5 + $0x50] sm:$0xff]
    %v6913 = vld [vmem:[#allocation5 + $0x58] sm:$0xff]
    %v6914 = vpack.c.bf16 %v6909, %v6909
    %6915 = vmatpush.bf16.msra.mxu0 %v6631
    %6916 = vmatpush.bf16.msra.mxu0 %v6627
    %6917 = vmatpush.bf16.msra.mxu0 %v6623
    %6918 = vmatpush.bf16.msra.mxu0 %v6619
    %6919 = vmatpush.bf16.msra.mxu0 %v6615
    %6920 = vmatpush.bf16.msra.mxu0 %v6611
    %6921 = vmatpush.bf16.msra.mxu0 %v6607
    %6922 = vmatpush.bf16.msra.mxu0 %v6603
    %6923 = vmatmul.bf16.gmra.mxu0 %v6914
    %v6924 = vpop.f32.mrf.mxu0
    %v6925 = vadd.f32 0.0, %v6924
    %v6926 = vpop.f32.mrf.mxu0
    %6927 = vdwg.mxu0
    %6928 = vmatpush.bf16.msra.mxu0 %v6632
    %6929 = vmatpush.bf16.msra.mxu0 %v6628
    %6930 = vmatpush.bf16.msra.mxu0 %v6624
    %6931 = vmatpush.bf16.msra.mxu0 %v6620
    %6932 = vmatpush.bf16.msra.mxu0 %v6616
    %6933 = vmatpush.bf16.msra.mxu0 %v6612
    %6934 = vmatpush.bf16.msra.mxu0 %v6608
    %6935 = vmatpush.bf16.msra.mxu0 %v6604
    %6936 = vmatmul.bf16.gmra.mxu0 %v6914
    %v6937 = vpop.f32.mrf.mxu0
    %v6938 = vadd.f32 0.0, %v6937
    %v6939 = vpop.f32.mrf.mxu0
    %6940 = vdwg.mxu0
    %6941 = vmatpush.bf16.msra.mxu0 %v6633
    %6942 = vmatpush.bf16.msra.mxu0 %v6629
    %6943 = vmatpush.bf16.msra.mxu0 %v6625
    %6944 = vmatpush.bf16.msra.mxu0 %v6621
    %6945 = vmatpush.bf16.msra.mxu0 %v6617
    %6946 = vmatpush.bf16.msra.mxu0 %v6613
    %6947 = vmatpush.bf16.msra.mxu0 %v6609
    %6948 = vmatpush.bf16.msra.mxu0 %v6605
    %6949 = vmatmul.bf16.gmra.mxu0 %v6914
    %v6950 = vpop.f32.mrf.mxu0
    %v6951 = vadd.f32 0.0, %v6950
    %v6952 = vpop.f32.mrf.mxu0
    %6953 = vdwg.mxu0
    %6954 = vmatpush.bf16.msra.mxu0 %v6634
    %6955 = vmatpush.bf16.msra.mxu0 %v6630
    %6956 = vmatpush.bf16.msra.mxu0 %v6626
    %6957 = vmatpush.bf16.msra.mxu0 %v6622
    %6958 = vmatpush.bf16.msra.mxu0 %v6618
    %6959 = vmatpush.bf16.msra.mxu0 %v6614
    %6960 = vmatpush.bf16.msra.mxu0 %v6610
    %6961 = vmatpush.bf16.msra.mxu0 %v6606
    %6962 = vmatmul.bf16.gmra.mxu0 %v6914
    %v6963 = vpop.f32.mrf.mxu0
    %v6964 = vadd.f32 0.0, %v6963
    %v6965 = vpop.f32.mrf.mxu0
    %6966 = vdwg.mxu0
    %v6967 = vadd.f32 %v6910, %v6925
    %v6968 = vadd.f32 %v6911, %v6938
    %v6969 = vadd.f32 %v6912, %v6951
    %v6970 = vadd.f32 %v6913, %v6964
    %v6971 = vxor.u32 %v6967, 2147483648
    %v6972 = vmul.f32 %v6971, 1.442695
    %v6973 = vpow.pop %v6972
    %v6974 = vadd.f32 %v6973, 1.0
    %v6975 = vrcp.pop %v6974
    %v6976 = vmul.f32 %v6974, %v6975
    %v6977 = vsub.f32 1.0, %v6976
    %v6978 = vmul.f32 %v6975, %v6977
    %v6979 = vadd.f32 %v6975, %v6978
    %vm6980 = vweird.f32 %v6974
    %vm6981 = vweird.f32 %v6975
    %vm6982 = vmor %vm6980, %vm6981
    %v6983 = vsel %vm6982, %v6975, %v6979
    %v6984 = vand.u32 2147483647, %v6974
    %vm6985 = vcmp.eq.f32.partialorder %v6984, 8.507059e+37
    %v6986 = vand.u32 %v6974, 2147483648
    %v6987 = vor.u32 1.1754944e-38, %v6986
    %v6988 = vsel %vm6985, %v6987, %v6983
    %v6989 = vmul.f32 1.0, %v6988
    %v6990 = vxor.u32 %v6968, 2147483648
    %v6991 = vmul.f32 %v6990, 1.442695
    %v6992 = vpow.pop %v6991
    %v6993 = vadd.f32 %v6992, 1.0
    %v6994 = vrcp.pop %v6993
    %v6995 = vmul.f32 %v6993, %v6994
    %v6996 = vsub.f32 1.0, %v6995
    %v6997 = vmul.f32 %v6994, %v6996
    %v6998 = vadd.f32 %v6994, %v6997
    %vm6999 = vweird.f32 %v6993
    %vm7000 = vweird.f32 %v6994
    %vm7001 = vmor %vm6999, %vm7000
    %v7002 = vsel %vm7001, %v6994, %v6998
    %v7003 = vand.u32 2147483647, %v6993
    %vm7004 = vcmp.eq.f32.partialorder %v7003, 8.507059e+37
    %v7005 = vand.u32 %v6993, 2147483648
    %v7006 = vor.u32 1.1754944e-38, %v7005
    %v7007 = vsel %vm7004, %v7006, %v7002
    %v7008 = vmul.f32 1.0, %v7007
    %v7009 = vtanh.pop %v6969
    %v7010 = vxor.u32 %v6970, 2147483648
    %v7011 = vmul.f32 %v7010, 1.442695
    %v7012 = vpow.pop %v7011
    %v7013 = vadd.f32 %v7012, 1.0
    %v7014 = vrcp.pop %v7013
    %v7015 = vmul.f32 %v7013, %v7014
    %v7016 = vsub.f32 1.0, %v7015
    %v7017 = vmul.f32 %v7014, %v7016
    %v7018 = vadd.f32 %v7014, %v7017
    %vm7019 = vweird.f32 %v7013
    %vm7020 = vweird.f32 %v7014
    %vm7021 = vmor %vm7019, %vm7020
    %v7022 = vsel %vm7021, %v7014, %v7018
    %v7023 = vand.u32 2147483647, %v7013
    %vm7024 = vcmp.eq.f32.partialorder %v7023, 8.507059e+37
    %v7025 = vand.u32 %v7013, 2147483648
    %v7026 = vor.u32 1.1754944e-38, %v7025
    %v7027 = vsel %vm7024, %v7026, %v7022
    %v7028 = vmul.f32 1.0, %v7027
    %v7029 = vmul.f32 %v7008, %v6907
    %v7030 = vmul.f32 %v6989, %v7009
    %v7031 = vadd.f32 %v7029, %v7030
    %v7032 = vtanh.pop %v7031
    %v7033 = vmul.f32 %v7028, %v7032
    %v7034 = vld [vmem:[#allocation5 + $0x60] sm:$0xff]
    %v7035 = vld [vmem:[#allocation5 + $0x68] sm:$0xff]
    %v7036 = vld [vmem:[#allocation5 + $0x70] sm:$0xff]
    %v7037 = vld [vmem:[#allocation5 + $0x78] sm:$0xff]
    %v7038 = vpack.c.bf16 %v7033, %v7033
    %7039 = vmatpush.bf16.msra.mxu0 %v6631
    %7040 = vmatpush.bf16.msra.mxu0 %v6627
    %7041 = vmatpush.bf16.msra.mxu0 %v6623
    %7042 = vmatpush.bf16.msra.mxu0 %v6619
    %7043 = vmatpush.bf16.msra.mxu0 %v6615
    %7044 = vmatpush.bf16.msra.mxu0 %v6611
    %7045 = vmatpush.bf16.msra.mxu0 %v6607
    %7046 = vmatpush.bf16.msra.mxu0 %v6603
    %7047 = vmatmul.bf16.gmra.mxu0 %v7038
    %v7048 = vpop.f32.mrf.mxu0
    %v7049 = vadd.f32 0.0, %v7048
    %v7050 = vpop.f32.mrf.mxu0
    %7051 = vdwg.mxu0
    %7052 = vmatpush.bf16.msra.mxu0 %v6632
    %7053 = vmatpush.bf16.msra.mxu0 %v6628
    %7054 = vmatpush.bf16.msra.mxu0 %v6624
    %7055 = vmatpush.bf16.msra.mxu0 %v6620
    %7056 = vmatpush.bf16.msra.mxu0 %v6616
    %7057 = vmatpush.bf16.msra.mxu0 %v6612
    %7058 = vmatpush.bf16.msra.mxu0 %v6608
    %7059 = vmatpush.bf16.msra.mxu0 %v6604
    %7060 = vmatmul.bf16.gmra.mxu0 %v7038
    %v7061 = vpop.f32.mrf.mxu0
    %v7062 = vadd.f32 0.0, %v7061
    %v7063 = vpop.f32.mrf.mxu0
    %7064 = vdwg.mxu0
    %7065 = vmatpush.bf16.msra.mxu0 %v6633
    %7066 = vmatpush.bf16.msra.mxu0 %v6629
    %7067 = vmatpush.bf16.msra.mxu0 %v6625
    %7068 = vmatpush.bf16.msra.mxu0 %v6621
    %7069 = vmatpush.bf16.msra.mxu0 %v6617
    %7070 = vmatpush.bf16.msra.mxu0 %v6613
    %7071 = vmatpush.bf16.msra.mxu0 %v6609
    %7072 = vmatpush.bf16.msra.mxu0 %v6605
    %7073 = vmatmul.bf16.gmra.mxu0 %v7038
    %v7074 = vpop.f32.mrf.mxu0
    %v7075 = vadd.f32 0.0, %v7074
    %v7076 = vpop.f32.mrf.mxu0
    %7077 = vdwg.mxu0
    %7078 = vmatpush.bf16.msra.mxu0 %v6634
    %7079 = vmatpush.bf16.msra.mxu0 %v6630
    %7080 = vmatpush.bf16.msra.mxu0 %v6626
    %7081 = vmatpush.bf16.msra.mxu0 %v6622
    %7082 = vmatpush.bf16.msra.mxu0 %v6618
    %7083 = vmatpush.bf16.msra.mxu0 %v6614
    %7084 = vmatpush.bf16.msra.mxu0 %v6610
    %7085 = vmatpush.bf16.msra.mxu0 %v6606
    %7086 = vmatmul.bf16.gmra.mxu0 %v7038
    %v7087 = vpop.f32.mrf.mxu0
    %v7088 = vadd.f32 0.0, %v7087
    %v7089 = vpop.f32.mrf.mxu0
    %7090 = vdwg.mxu0
    %v7091 = vadd.f32 %v7034, %v7049
    %v7092 = vadd.f32 %v7035, %v7062
    %v7093 = vadd.f32 %v7036, %v7075
    %v7094 = vadd.f32 %v7037, %v7088
    %v7095 = vxor.u32 %v7091, 2147483648
    %v7096 = vmul.f32 %v7095, 1.442695
    %v7097 = vpow.pop %v7096
    %v7098 = vadd.f32 %v7097, 1.0
    %v7099 = vrcp.pop %v7098
    %v7100 = vmul.f32 %v7098, %v7099
    %v7101 = vsub.f32 1.0, %v7100
    %v7102 = vmul.f32 %v7099, %v7101
    %v7103 = vadd.f32 %v7099, %v7102
    %vm7104 = vweird.f32 %v7098
    %vm7105 = vweird.f32 %v7099
    %vm7106 = vmor %vm7104, %vm7105
    %v7107 = vsel %vm7106, %v7099, %v7103
    %v7108 = vand.u32 2147483647, %v7098
    %vm7109 = vcmp.eq.f32.partialorder %v7108, 8.507059e+37
    %v7110 = vand.u32 %v7098, 2147483648
    %v7111 = vor.u32 1.1754944e-38, %v7110
    %v7112 = vsel %vm7109, %v7111, %v7107
    %v7113 = vmul.f32 1.0, %v7112
    %v7114 = vxor.u32 %v7092, 2147483648
    %v7115 = vmul.f32 %v7114, 1.442695
    %v7116 = vpow.pop %v7115
    %v7117 = vadd.f32 %v7116, 1.0
    %v7118 = vrcp.pop %v7117
    %v7119 = vmul.f32 %v7117, %v7118
    %v7120 = vsub.f32 1.0, %v7119
    %v7121 = vmul.f32 %v7118, %v7120
    %v7122 = vadd.f32 %v7118, %v7121
    %vm7123 = vweird.f32 %v7117
    %vm7124 = vweird.f32 %v7118
    %vm7125 = vmor %vm7123, %vm7124
    %v7126 = vsel %vm7125, %v7118, %v7122
    %v7127 = vand.u32 2147483647, %v7117
    %vm7128 = vcmp.eq.f32.partialorder %v7127, 8.507059e+37
    %v7129 = vand.u32 %v7117, 2147483648
    %v7130 = vor.u32 1.1754944e-38, %v7129
    %v7131 = vsel %vm7128, %v7130, %v7126
    %v7132 = vmul.f32 1.0, %v7131
    %v7133 = vtanh.pop %v7093
    %v7134 = vxor.u32 %v7094, 2147483648
    %v7135 = vmul.f32 %v7134, 1.442695
    %v7136 = vpow.pop %v7135
    %v7137 = vadd.f32 %v7136, 1.0
    %v7138 = vrcp.pop %v7137
    %v7139 = vmul.f32 %v7137, %v7138
    %v7140 = vsub.f32 1.0, %v7139
    %v7141 = vmul.f32 %v7138, %v7140
    %v7142 = vadd.f32 %v7138, %v7141
    %vm7143 = vweird.f32 %v7137
    %vm7144 = vweird.f32 %v7138
    %vm7145 = vmor %vm7143, %vm7144
    %v7146 = vsel %vm7145, %v7138, %v7142
    %v7147 = vand.u32 2147483647, %v7137
    %vm7148 = vcmp.eq.f32.partialorder %v7147, 8.507059e+37
    %v7149 = vand.u32 %v7137, 2147483648
    %v7150 = vor.u32 1.1754944e-38, %v7149
    %v7151 = vsel %vm7148, %v7150, %v7146
    %v7152 = vmul.f32 1.0, %v7151
    %v7153 = vmul.f32 %v7132, %v7031
    %v7154 = vmul.f32 %v7113, %v7133
    %v7155 = vadd.f32 %v7153, %v7154
    %v7156 = vtanh.pop %v7155
    %v7157 = vmul.f32 %v7152, %v7156
    %v7158 = vld [vmem:[#allocation5 + $0x80] sm:$0xff]
    %v7159 = vld [vmem:[#allocation5 + $0x88] sm:$0xff]
    %v7160 = vld [vmem:[#allocation5 + $0x90] sm:$0xff]
    %v7161 = vld [vmem:[#allocation5 + $0x98] sm:$0xff]
    %v7162 = vpack.c.bf16 %v7157, %v7157
    %7163 = vmatpush.bf16.msra.mxu0 %v6631
    %7164 = vmatpush.bf16.msra.mxu0 %v6627
    %7165 = vmatpush.bf16.msra.mxu0 %v6623
    %7166 = vmatpush.bf16.msra.mxu0 %v6619
    %7167 = vmatpush.bf16.msra.mxu0 %v6615
    %7168 = vmatpush.bf16.msra.mxu0 %v6611
    %7169 = vmatpush.bf16.msra.mxu0 %v6607
    %7170 = vmatpush.bf16.msra.mxu0 %v6603
    %7171 = vmatmul.bf16.gmra.mxu0 %v7162
    %v7172 = vpop.f32.mrf.mxu0
    %v7173 = vadd.f32 0.0, %v7172
    %v7174 = vpop.f32.mrf.mxu0
    %7175 = vdwg.mxu0
    %7176 = vmatpush.bf16.msra.mxu0 %v6632
    %7177 = vmatpush.bf16.msra.mxu0 %v6628
    %7178 = vmatpush.bf16.msra.mxu0 %v6624
    %7179 = vmatpush.bf16.msra.mxu0 %v6620
    %7180 = vmatpush.bf16.msra.mxu0 %v6616
    %7181 = vmatpush.bf16.msra.mxu0 %v6612
    %7182 = vmatpush.bf16.msra.mxu0 %v6608
    %7183 = vmatpush.bf16.msra.mxu0 %v6604
    %7184 = vmatmul.bf16.gmra.mxu0 %v7162
    %v7185 = vpop.f32.mrf.mxu0
    %v7186 = vadd.f32 0.0, %v7185
    %v7187 = vpop.f32.mrf.mxu0
    %7188 = vdwg.mxu0
    %7189 = vmatpush.bf16.msra.mxu0 %v6633
    %7190 = vmatpush.bf16.msra.mxu0 %v6629
    %7191 = vmatpush.bf16.msra.mxu0 %v6625
    %7192 = vmatpush.bf16.msra.mxu0 %v6621
    %7193 = vmatpush.bf16.msra.mxu0 %v6617
    %7194 = vmatpush.bf16.msra.mxu0 %v6613
    %7195 = vmatpush.bf16.msra.mxu0 %v6609
    %7196 = vmatpush.bf16.msra.mxu0 %v6605
    %7197 = vmatmul.bf16.gmra.mxu0 %v7162
    %v7198 = vpop.f32.mrf.mxu0
    %v7199 = vadd.f32 0.0, %v7198
    %v7200 = vpop.f32.mrf.mxu0
    %7201 = vdwg.mxu0
    %7202 = vmatpush.bf16.msra.mxu0 %v6634
    %7203 = vmatpush.bf16.msra.mxu0 %v6630
    %7204 = vmatpush.bf16.msra.mxu0 %v6626
    %7205 = vmatpush.bf16.msra.mxu0 %v6622
    %7206 = vmatpush.bf16.msra.mxu0 %v6618
    %7207 = vmatpush.bf16.msra.mxu0 %v6614
    %7208 = vmatpush.bf16.msra.mxu0 %v6610
    %7209 = vmatpush.bf16.msra.mxu0 %v6606
    %7210 = vmatmul.bf16.gmra.mxu0 %v7162
    %v7211 = vpop.f32.mrf.mxu0
    %v7212 = vadd.f32 0.0, %v7211
    %v7213 = vpop.f32.mrf.mxu0
    %7214 = vdwg.mxu0
    %v7215 = vadd.f32 %v7158, %v7173
    %v7216 = vadd.f32 %v7159, %v7186
    %v7217 = vadd.f32 %v7160, %v7199
    %v7218 = vadd.f32 %v7161, %v7212
    %v7219 = vxor.u32 %v7215, 2147483648
    %v7220 = vmul.f32 %v7219, 1.442695
    %v7221 = vpow.pop %v7220
    %v7222 = vadd.f32 %v7221, 1.0
    %v7223 = vrcp.pop %v7222
    %v7224 = vmul.f32 %v7222, %v7223
    %v7225 = vsub.f32 1.0, %v7224
    %v7226 = vmul.f32 %v7223, %v7225
    %v7227 = vadd.f32 %v7223, %v7226
    %vm7228 = vweird.f32 %v7222
    %vm7229 = vweird.f32 %v7223
    %vm7230 = vmor %vm7228, %vm7229
    %v7231 = vsel %vm7230, %v7223, %v7227
    %v7232 = vand.u32 2147483647, %v7222
    %vm7233 = vcmp.eq.f32.partialorder %v7232, 8.507059e+37
    %v7234 = vand.u32 %v7222, 2147483648
    %v7235 = vor.u32 1.1754944e-38, %v7234
    %v7236 = vsel %vm7233, %v7235, %v7231
    %v7237 = vmul.f32 1.0, %v7236
    %v7238 = vxor.u32 %v7216, 2147483648
    %v7239 = vmul.f32 %v7238, 1.442695
    %v7240 = vpow.pop %v7239
    %v7241 = vadd.f32 %v7240, 1.0
    %v7242 = vrcp.pop %v7241
    %v7243 = vmul.f32 %v7241, %v7242
    %v7244 = vsub.f32 1.0, %v7243
    %v7245 = vmul.f32 %v7242, %v7244
    %v7246 = vadd.f32 %v7242, %v7245
    %vm7247 = vweird.f32 %v7241
    %vm7248 = vweird.f32 %v7242
    %vm7249 = vmor %vm7247, %vm7248
    %v7250 = vsel %vm7249, %v7242, %v7246
    %v7251 = vand.u32 2147483647, %v7241
    %vm7252 = vcmp.eq.f32.partialorder %v7251, 8.507059e+37
    %v7253 = vand.u32 %v7241, 2147483648
    %v7254 = vor.u32 1.1754944e-38, %v7253
    %v7255 = vsel %vm7252, %v7254, %v7250
    %v7256 = vmul.f32 1.0, %v7255
    %v7257 = vtanh.pop %v7217
    %v7258 = vxor.u32 %v7218, 2147483648
    %v7259 = vmul.f32 %v7258, 1.442695
    %v7260 = vpow.pop %v7259
    %v7261 = vadd.f32 %v7260, 1.0
    %v7262 = vrcp.pop %v7261
    %v7263 = vmul.f32 %v7261, %v7262
    %v7264 = vsub.f32 1.0, %v7263
    %v7265 = vmul.f32 %v7262, %v7264
    %v7266 = vadd.f32 %v7262, %v7265
    %vm7267 = vweird.f32 %v7261
    %vm7268 = vweird.f32 %v7262
    %vm7269 = vmor %vm7267, %vm7268
    %v7270 = vsel %vm7269, %v7262, %v7266
    %v7271 = vand.u32 2147483647, %v7261
    %vm7272 = vcmp.eq.f32.partialorder %v7271, 8.507059e+37
    %v7273 = vand.u32 %v7261, 2147483648
    %v7274 = vor.u32 1.1754944e-38, %v7273
    %v7275 = vsel %vm7272, %v7274, %v7270
    %v7276 = vmul.f32 1.0, %v7275
    %v7277 = vmul.f32 %v7256, %v7155
    %v7278 = vmul.f32 %v7237, %v7257
    %v7279 = vadd.f32 %v7277, %v7278
    %v7280 = vtanh.pop %v7279
    %v7281 = vmul.f32 %v7276, %v7280
    %v7282 = vld [vmem:[#allocation5 + $0xa0] sm:$0xff]
    %v7283 = vld [vmem:[#allocation5 + $0xa8] sm:$0xff]
    %v7284 = vld [vmem:[#allocation5 + $0xb0] sm:$0xff]
    %v7285 = vld [vmem:[#allocation5 + $0xb8] sm:$0xff]
    %v7286 = vpack.c.bf16 %v7281, %v7281
    %7287 = vmatpush.bf16.msra.mxu0 %v6631
    %7288 = vmatpush.bf16.msra.mxu0 %v6627
    %7289 = vmatpush.bf16.msra.mxu0 %v6623
    %7290 = vmatpush.bf16.msra.mxu0 %v6619
    %7291 = vmatpush.bf16.msra.mxu0 %v6615
    %7292 = vmatpush.bf16.msra.mxu0 %v6611
    %7293 = vmatpush.bf16.msra.mxu0 %v6607
    %7294 = vmatpush.bf16.msra.mxu0 %v6603
    %7295 = vmatmul.bf16.gmra.mxu0 %v7286
    %v7296 = vpop.f32.mrf.mxu0
    %v7297 = vadd.f32 0.0, %v7296
    %v7298 = vpop.f32.mrf.mxu0
    %7299 = vdwg.mxu0
    %7300 = vmatpush.bf16.msra.mxu0 %v6632
    %7301 = vmatpush.bf16.msra.mxu0 %v6628
    %7302 = vmatpush.bf16.msra.mxu0 %v6624
    %7303 = vmatpush.bf16.msra.mxu0 %v6620
    %7304 = vmatpush.bf16.msra.mxu0 %v6616
    %7305 = vmatpush.bf16.msra.mxu0 %v6612
    %7306 = vmatpush.bf16.msra.mxu0 %v6608
    %7307 = vmatpush.bf16.msra.mxu0 %v6604
    %7308 = vmatmul.bf16.gmra.mxu0 %v7286
    %v7309 = vpop.f32.mrf.mxu0
    %v7310 = vadd.f32 0.0, %v7309
    %v7311 = vpop.f32.mrf.mxu0
    %7312 = vdwg.mxu0
    %7313 = vmatpush.bf16.msra.mxu0 %v6633
    %7314 = vmatpush.bf16.msra.mxu0 %v6629
    %7315 = vmatpush.bf16.msra.mxu0 %v6625
    %7316 = vmatpush.bf16.msra.mxu0 %v6621
    %7317 = vmatpush.bf16.msra.mxu0 %v6617
    %7318 = vmatpush.bf16.msra.mxu0 %v6613
    %7319 = vmatpush.bf16.msra.mxu0 %v6609
    %7320 = vmatpush.bf16.msra.mxu0 %v6605
    %7321 = vmatmul.bf16.gmra.mxu0 %v7286
    %v7322 = vpop.f32.mrf.mxu0
    %v7323 = vadd.f32 0.0, %v7322
    %v7324 = vpop.f32.mrf.mxu0
    %7325 = vdwg.mxu0
    %7326 = vmatpush.bf16.msra.mxu0 %v6634
    %7327 = vmatpush.bf16.msra.mxu0 %v6630
    %7328 = vmatpush.bf16.msra.mxu0 %v6626
    %7329 = vmatpush.bf16.msra.mxu0 %v6622
    %7330 = vmatpush.bf16.msra.mxu0 %v6618
    %7331 = vmatpush.bf16.msra.mxu0 %v6614
    %7332 = vmatpush.bf16.msra.mxu0 %v6610
    %7333 = vmatpush.bf16.msra.mxu0 %v6606
    %7334 = vmatmul.bf16.gmra.mxu0 %v7286
    %v7335 = vpop.f32.mrf.mxu0
    %v7336 = vadd.f32 0.0, %v7335
    %v7337 = vpop.f32.mrf.mxu0
    %7338 = vdwg.mxu0
    %v7339 = vadd.f32 %v7282, %v7297
    %v7340 = vadd.f32 %v7283, %v7310
    %v7341 = vadd.f32 %v7284, %v7323
    %v7342 = vadd.f32 %v7285, %v7336
    %v7343 = vxor.u32 %v7339, 2147483648
    %v7344 = vmul.f32 %v7343, 1.442695
    %v7345 = vpow.pop %v7344
    %v7346 = vadd.f32 %v7345, 1.0
    %v7347 = vrcp.pop %v7346
    %v7348 = vmul.f32 %v7346, %v7347
    %v7349 = vsub.f32 1.0, %v7348
    %v7350 = vmul.f32 %v7347, %v7349
    %v7351 = vadd.f32 %v7347, %v7350
    %vm7352 = vweird.f32 %v7346
    %vm7353 = vweird.f32 %v7347
    %vm7354 = vmor %vm7352, %vm7353
    %v7355 = vsel %vm7354, %v7347, %v7351
    %v7356 = vand.u32 2147483647, %v7346
    %vm7357 = vcmp.eq.f32.partialorder %v7356, 8.507059e+37
    %v7358 = vand.u32 %v7346, 2147483648
    %v7359 = vor.u32 1.1754944e-38, %v7358
    %v7360 = vsel %vm7357, %v7359, %v7355
    %v7361 = vmul.f32 1.0, %v7360
    %v7362 = vxor.u32 %v7340, 2147483648
    %v7363 = vmul.f32 %v7362, 1.442695
    %v7364 = vpow.pop %v7363
    %v7365 = vadd.f32 %v7364, 1.0
    %v7366 = vrcp.pop %v7365
    %v7367 = vmul.f32 %v7365, %v7366
    %v7368 = vsub.f32 1.0, %v7367
    %v7369 = vmul.f32 %v7366, %v7368
    %v7370 = vadd.f32 %v7366, %v7369
    %vm7371 = vweird.f32 %v7365
    %vm7372 = vweird.f32 %v7366
    %vm7373 = vmor %vm7371, %vm7372
    %v7374 = vsel %vm7373, %v7366, %v7370
    %v7375 = vand.u32 2147483647, %v7365
    %vm7376 = vcmp.eq.f32.partialorder %v7375, 8.507059e+37
    %v7377 = vand.u32 %v7365, 2147483648
    %v7378 = vor.u32 1.1754944e-38, %v7377
    %v7379 = vsel %vm7376, %v7378, %v7374
    %v7380 = vmul.f32 1.0, %v7379
    %v7381 = vtanh.pop %v7341
    %v7382 = vxor.u32 %v7342, 2147483648
    %v7383 = vmul.f32 %v7382, 1.442695
    %v7384 = vpow.pop %v7383
    %v7385 = vadd.f32 %v7384, 1.0
    %v7386 = vrcp.pop %v7385
    %v7387 = vmul.f32 %v7385, %v7386
    %v7388 = vsub.f32 1.0, %v7387
    %v7389 = vmul.f32 %v7386, %v7388
    %v7390 = vadd.f32 %v7386, %v7389
    %vm7391 = vweird.f32 %v7385
    %vm7392 = vweird.f32 %v7386
    %vm7393 = vmor %vm7391, %vm7392
    %v7394 = vsel %vm7393, %v7386, %v7390
    %v7395 = vand.u32 2147483647, %v7385
    %vm7396 = vcmp.eq.f32.partialorder %v7395, 8.507059e+37
    %v7397 = vand.u32 %v7385, 2147483648
    %v7398 = vor.u32 1.1754944e-38, %v7397
    %v7399 = vsel %vm7396, %v7398, %v7394
    %v7400 = vmul.f32 1.0, %v7399
    %v7401 = vmul.f32 %v7380, %v7279
    %v7402 = vmul.f32 %v7361, %v7381
    %v7403 = vadd.f32 %v7401, %v7402
    %v7404 = vtanh.pop %v7403
    %v7405 = vmul.f32 %v7400, %v7404
    %v7406 = vld [vmem:[#allocation5 + $0xc0] sm:$0xff]
    %v7407 = vld [vmem:[#allocation5 + $0xc8] sm:$0xff]
    %v7408 = vld [vmem:[#allocation5 + $0xd0] sm:$0xff]
    %v7409 = vld [vmem:[#allocation5 + $0xd8] sm:$0xff]
    %v7410 = vpack.c.bf16 %v7405, %v7405
    %7411 = vmatpush.bf16.msra.mxu0 %v6631
    %7412 = vmatpush.bf16.msra.mxu0 %v6627
    %7413 = vmatpush.bf16.msra.mxu0 %v6623
    %7414 = vmatpush.bf16.msra.mxu0 %v6619
    %7415 = vmatpush.bf16.msra.mxu0 %v6615
    %7416 = vmatpush.bf16.msra.mxu0 %v6611
    %7417 = vmatpush.bf16.msra.mxu0 %v6607
    %7418 = vmatpush.bf16.msra.mxu0 %v6603
    %7419 = vmatmul.bf16.gmra.mxu0 %v7410
    %v7420 = vpop.f32.mrf.mxu0
    %v7421 = vadd.f32 0.0, %v7420
    %v7422 = vpop.f32.mrf.mxu0
    %7423 = vdwg.mxu0
    %7424 = vmatpush.bf16.msra.mxu0 %v6632
    %7425 = vmatpush.bf16.msra.mxu0 %v6628
    %7426 = vmatpush.bf16.msra.mxu0 %v6624
    %7427 = vmatpush.bf16.msra.mxu0 %v6620
    %7428 = vmatpush.bf16.msra.mxu0 %v6616
    %7429 = vmatpush.bf16.msra.mxu0 %v6612
    %7430 = vmatpush.bf16.msra.mxu0 %v6608
    %7431 = vmatpush.bf16.msra.mxu0 %v6604
    %7432 = vmatmul.bf16.gmra.mxu0 %v7410
    %v7433 = vpop.f32.mrf.mxu0
    %v7434 = vadd.f32 0.0, %v7433
    %v7435 = vpop.f32.mrf.mxu0
    %7436 = vdwg.mxu0
    %7437 = vmatpush.bf16.msra.mxu0 %v6633
    %7438 = vmatpush.bf16.msra.mxu0 %v6629
    %7439 = vmatpush.bf16.msra.mxu0 %v6625
    %7440 = vmatpush.bf16.msra.mxu0 %v6621
    %7441 = vmatpush.bf16.msra.mxu0 %v6617
    %7442 = vmatpush.bf16.msra.mxu0 %v6613
    %7443 = vmatpush.bf16.msra.mxu0 %v6609
    %7444 = vmatpush.bf16.msra.mxu0 %v6605
    %7445 = vmatmul.bf16.gmra.mxu0 %v7410
    %v7446 = vpop.f32.mrf.mxu0
    %v7447 = vadd.f32 0.0, %v7446
    %v7448 = vpop.f32.mrf.mxu0
    %7449 = vdwg.mxu0
    %7450 = vmatpush.bf16.msra.mxu0 %v6634
    %7451 = vmatpush.bf16.msra.mxu0 %v6630
    %7452 = vmatpush.bf16.msra.mxu0 %v6626
    %7453 = vmatpush.bf16.msra.mxu0 %v6622
    %7454 = vmatpush.bf16.msra.mxu0 %v6618
    %7455 = vmatpush.bf16.msra.mxu0 %v6614
    %7456 = vmatpush.bf16.msra.mxu0 %v6610
    %7457 = vmatpush.bf16.msra.mxu0 %v6606
    %7458 = vmatmul.bf16.gmra.mxu0 %v7410
    %v7459 = vpop.f32.mrf.mxu0
    %v7460 = vadd.f32 0.0, %v7459
    %v7461 = vpop.f32.mrf.mxu0
    %7462 = vdwg.mxu0
    %v7463 = vadd.f32 %v7406, %v7421
    %v7464 = vadd.f32 %v7407, %v7434
    %v7465 = vadd.f32 %v7408, %v7447
    %v7466 = vadd.f32 %v7409, %v7460
    %v7467 = vxor.u32 %v7463, 2147483648
    %v7468 = vmul.f32 %v7467, 1.442695
    %v7469 = vpow.pop %v7468
    %v7470 = vadd.f32 %v7469, 1.0
    %v7471 = vrcp.pop %v7470
    %v7472 = vmul.f32 %v7470, %v7471
    %v7473 = vsub.f32 1.0, %v7472
    %v7474 = vmul.f32 %v7471, %v7473
    %v7475 = vadd.f32 %v7471, %v7474
    %vm7476 = vweird.f32 %v7470
    %vm7477 = vweird.f32 %v7471
    %vm7478 = vmor %vm7476, %vm7477
    %v7479 = vsel %vm7478, %v7471, %v7475
    %v7480 = vand.u32 2147483647, %v7470
    %vm7481 = vcmp.eq.f32.partialorder %v7480, 8.507059e+37
    %v7482 = vand.u32 %v7470, 2147483648
    %v7483 = vor.u32 1.1754944e-38, %v7482
    %v7484 = vsel %vm7481, %v7483, %v7479
    %v7485 = vmul.f32 1.0, %v7484
    %v7486 = vxor.u32 %v7464, 2147483648
    %v7487 = vmul.f32 %v7486, 1.442695
    %v7488 = vpow.pop %v7487
    %v7489 = vadd.f32 %v7488, 1.0
    %v7490 = vrcp.pop %v7489
    %v7491 = vmul.f32 %v7489, %v7490
    %v7492 = vsub.f32 1.0, %v7491
    %v7493 = vmul.f32 %v7490, %v7492
    %v7494 = vadd.f32 %v7490, %v7493
    %vm7495 = vweird.f32 %v7489
    %vm7496 = vweird.f32 %v7490
    %vm7497 = vmor %vm7495, %vm7496
    %v7498 = vsel %vm7497, %v7490, %v7494
    %v7499 = vand.u32 2147483647, %v7489
    %vm7500 = vcmp.eq.f32.partialorder %v7499, 8.507059e+37
    %v7501 = vand.u32 %v7489, 2147483648
    %v7502 = vor.u32 1.1754944e-38, %v7501
    %v7503 = vsel %vm7500, %v7502, %v7498
    %v7504 = vmul.f32 1.0, %v7503
    %v7505 = vtanh.pop %v7465
    %v7506 = vxor.u32 %v7466, 2147483648
    %v7507 = vmul.f32 %v7506, 1.442695
    %v7508 = vpow.pop %v7507
    %v7509 = vadd.f32 %v7508, 1.0
    %v7510 = vrcp.pop %v7509
    %v7511 = vmul.f32 %v7509, %v7510
    %v7512 = vsub.f32 1.0, %v7511
    %v7513 = vmul.f32 %v7510, %v7512
    %v7514 = vadd.f32 %v7510, %v7513
    %vm7515 = vweird.f32 %v7509
    %vm7516 = vweird.f32 %v7510
    %vm7517 = vmor %vm7515, %vm7516
    %v7518 = vsel %vm7517, %v7510, %v7514
    %v7519 = vand.u32 2147483647, %v7509
    %vm7520 = vcmp.eq.f32.partialorder %v7519, 8.507059e+37
    %v7521 = vand.u32 %v7509, 2147483648
    %v7522 = vor.u32 1.1754944e-38, %v7521
    %v7523 = vsel %vm7520, %v7522, %v7518
    %v7524 = vmul.f32 1.0, %v7523
    %v7525 = vmul.f32 %v7504, %v7403
    %v7526 = vmul.f32 %v7485, %v7505
    %v7527 = vadd.f32 %v7525, %v7526
    %v7528 = vtanh.pop %v7527
    %v7529 = vmul.f32 %v7524, %v7528
    %v7530 = vld [vmem:[#allocation5 + $0xe0] sm:$0xff]
    %v7531 = vld [vmem:[#allocation5 + $0xe8] sm:$0xff]
    %v7532 = vld [vmem:[#allocation5 + $0xf0] sm:$0xff]
    %v7533 = vld [vmem:[#allocation5 + $0xf8] sm:$0xff]
    %v7534 = vpack.c.bf16 %v7529, %v7529
    %7535 = vmatpush.bf16.msra.mxu0 %v6631
    %7536 = vmatpush.bf16.msra.mxu0 %v6627
    %7537 = vmatpush.bf16.msra.mxu0 %v6623
    %7538 = vmatpush.bf16.msra.mxu0 %v6619
    %7539 = vmatpush.bf16.msra.mxu0 %v6615
    %7540 = vmatpush.bf16.msra.mxu0 %v6611
    %7541 = vmatpush.bf16.msra.mxu0 %v6607
    %7542 = vmatpush.bf16.msra.mxu0 %v6603
    %7543 = vmatmul.bf16.gmra.mxu0 %v7534
    %v7544 = vpop.f32.mrf.mxu0
    %v7545 = vadd.f32 0.0, %v7544
    %v7546 = vpop.f32.mrf.mxu0
    %7547 = vdwg.mxu0
    %7548 = vmatpush.bf16.msra.mxu0 %v6632
    %7549 = vmatpush.bf16.msra.mxu0 %v6628
    %7550 = vmatpush.bf16.msra.mxu0 %v6624
    %7551 = vmatpush.bf16.msra.mxu0 %v6620
    %7552 = vmatpush.bf16.msra.mxu0 %v6616
    %7553 = vmatpush.bf16.msra.mxu0 %v6612
    %7554 = vmatpush.bf16.msra.mxu0 %v6608
    %7555 = vmatpush.bf16.msra.mxu0 %v6604
    %7556 = vmatmul.bf16.gmra.mxu0 %v7534
    %v7557 = vpop.f32.mrf.mxu0
    %v7558 = vadd.f32 0.0, %v7557
    %v7559 = vpop.f32.mrf.mxu0
    %7560 = vdwg.mxu0
    %7561 = vmatpush.bf16.msra.mxu0 %v6633
    %7562 = vmatpush.bf16.msra.mxu0 %v6629
    %7563 = vmatpush.bf16.msra.mxu0 %v6625
    %7564 = vmatpush.bf16.msra.mxu0 %v6621
    %7565 = vmatpush.bf16.msra.mxu0 %v6617
    %7566 = vmatpush.bf16.msra.mxu0 %v6613
    %7567 = vmatpush.bf16.msra.mxu0 %v6609
    %7568 = vmatpush.bf16.msra.mxu0 %v6605
    %7569 = vmatmul.bf16.gmra.mxu0 %v7534
    %v7570 = vpop.f32.mrf.mxu0
    %v7571 = vadd.f32 0.0, %v7570
    %v7572 = vpop.f32.mrf.mxu0
    %7573 = vdwg.mxu0
    %7574 = vmatpush.bf16.msra.mxu0 %v6634
    %7575 = vmatpush.bf16.msra.mxu0 %v6630
    %7576 = vmatpush.bf16.msra.mxu0 %v6626
    %7577 = vmatpush.bf16.msra.mxu0 %v6622
    %7578 = vmatpush.bf16.msra.mxu0 %v6618
    %7579 = vmatpush.bf16.msra.mxu0 %v6614
    %7580 = vmatpush.bf16.msra.mxu0 %v6610
    %7581 = vmatpush.bf16.msra.mxu0 %v6606
    %7582 = vmatmul.bf16.gmra.mxu0 %v7534
    %v7583 = vpop.f32.mrf.mxu0
    %v7584 = vadd.f32 0.0, %v7583
    %v7585 = vpop.f32.mrf.mxu0
    %7586 = vdwg.mxu0
    %v7587 = vadd.f32 %v7530, %v7545
    %v7588 = vadd.f32 %v7531, %v7558
    %v7589 = vadd.f32 %v7532, %v7571
    %v7590 = vadd.f32 %v7533, %v7584
    %v7591 = vxor.u32 %v7587, 2147483648
    %v7592 = vmul.f32 %v7591, 1.442695
    %v7593 = vpow.pop %v7592
    %v7594 = vadd.f32 %v7593, 1.0
    %v7595 = vrcp.pop %v7594
    %v7596 = vmul.f32 %v7594, %v7595
    %v7597 = vsub.f32 1.0, %v7596
    %v7598 = vmul.f32 %v7595, %v7597
    %v7599 = vadd.f32 %v7595, %v7598
    %vm7600 = vweird.f32 %v7594
    %vm7601 = vweird.f32 %v7595
    %vm7602 = vmor %vm7600, %vm7601
    %v7603 = vsel %vm7602, %v7595, %v7599
    %v7604 = vand.u32 2147483647, %v7594
    %vm7605 = vcmp.eq.f32.partialorder %v7604, 8.507059e+37
    %v7606 = vand.u32 %v7594, 2147483648
    %v7607 = vor.u32 1.1754944e-38, %v7606
    %v7608 = vsel %vm7605, %v7607, %v7603
    %v7609 = vmul.f32 1.0, %v7608
    %v7610 = vxor.u32 %v7588, 2147483648
    %v7611 = vmul.f32 %v7610, 1.442695
    %v7612 = vpow.pop %v7611
    %v7613 = vadd.f32 %v7612, 1.0
    %v7614 = vrcp.pop %v7613
    %v7615 = vmul.f32 %v7613, %v7614
    %v7616 = vsub.f32 1.0, %v7615
    %v7617 = vmul.f32 %v7614, %v7616
    %v7618 = vadd.f32 %v7614, %v7617
    %vm7619 = vweird.f32 %v7613
    %vm7620 = vweird.f32 %v7614
    %vm7621 = vmor %vm7619, %vm7620
    %v7622 = vsel %vm7621, %v7614, %v7618
    %v7623 = vand.u32 2147483647, %v7613
    %vm7624 = vcmp.eq.f32.partialorder %v7623, 8.507059e+37
    %v7625 = vand.u32 %v7613, 2147483648
    %v7626 = vor.u32 1.1754944e-38, %v7625
    %v7627 = vsel %vm7624, %v7626, %v7622
    %v7628 = vmul.f32 1.0, %v7627
    %v7629 = vtanh.pop %v7589
    %v7630 = vxor.u32 %v7590, 2147483648
    %v7631 = vmul.f32 %v7630, 1.442695
    %v7632 = vpow.pop %v7631
    %v7633 = vadd.f32 %v7632, 1.0
    %v7634 = vrcp.pop %v7633
    %v7635 = vmul.f32 %v7633, %v7634
    %v7636 = vsub.f32 1.0, %v7635
    %v7637 = vmul.f32 %v7634, %v7636
    %v7638 = vadd.f32 %v7634, %v7637
    %vm7639 = vweird.f32 %v7633
    %vm7640 = vweird.f32 %v7634
    %vm7641 = vmor %vm7639, %vm7640
    %v7642 = vsel %vm7641, %v7634, %v7638
    %v7643 = vand.u32 2147483647, %v7633
    %vm7644 = vcmp.eq.f32.partialorder %v7643, 8.507059e+37
    %v7645 = vand.u32 %v7633, 2147483648
    %v7646 = vor.u32 1.1754944e-38, %v7645
    %v7647 = vsel %vm7644, %v7646, %v7642
    %v7648 = vmul.f32 1.0, %v7647
    %v7649 = vmul.f32 %v7628, %v7527
    %v7650 = vmul.f32 %v7609, %v7629
    %v7651 = vadd.f32 %v7649, %v7650
    %v7652 = vtanh.pop %v7651
    %v7653 = vmul.f32 %v7648, %v7652
    %v7654 = vld [vmem:[#allocation4 + $0x70] sm:$0xff]
    %v7655 = vld [vmem:[#allocation4 + $0x78] sm:$0xff]
    %v7656 = vpack.c.bf16 %v7654, %v7654
    %v7657 = vpack.c.bf16 %v7655, %v7655
    %v7658 = vld [vmem:[#allocation20] sm:$0xff]
    %v7659 = vld [vmem:[#allocation20 + $0x8] sm:$0xff]
    %v7660 = vld [vmem:[#allocation20 + $0x10] sm:$0xff]
    %v7661 = vld [vmem:[#allocation20 + $0x18] sm:$0xff]
    %v7662 = vld [vmem:[#allocation20 + $0x20] sm:$0xff]
    %v7663 = vld [vmem:[#allocation20 + $0x28] sm:$0xff]
    %v7664 = vld [vmem:[#allocation20 + $0x30] sm:$0xff]
    %v7665 = vld [vmem:[#allocation20 + $0x38] sm:$0xff]
    %v7666 = vld [vmem:[#allocation20 + $0x40] sm:$0xff]
    %v7667 = vld [vmem:[#allocation20 + $0x48] sm:$0xff]
    %v7668 = vld [vmem:[#allocation20 + $0x50] sm:$0xff]
    %v7669 = vld [vmem:[#allocation20 + $0x58] sm:$0xff]
    %v7670 = vld [vmem:[#allocation20 + $0x60] sm:$0xff]
    %v7671 = vld [vmem:[#allocation20 + $0x68] sm:$0xff]
    %v7672 = vld [vmem:[#allocation20 + $0x70] sm:$0xff]
    %v7673 = vld [vmem:[#allocation20 + $0x78] sm:$0xff]
    %v7674 = vld [vmem:[#allocation20 + $0x80] sm:$0xff]
    %v7675 = vld [vmem:[#allocation20 + $0x88] sm:$0xff]
    %v7676 = vld [vmem:[#allocation20 + $0x90] sm:$0xff]
    %v7677 = vld [vmem:[#allocation20 + $0x98] sm:$0xff]
    %v7678 = vld [vmem:[#allocation20 + $0xa0] sm:$0xff]
    %v7679 = vld [vmem:[#allocation20 + $0xa8] sm:$0xff]
    %v7680 = vld [vmem:[#allocation20 + $0xb0] sm:$0xff]
    %v7681 = vld [vmem:[#allocation20 + $0xb8] sm:$0xff]
    %v7682 = vld [vmem:[#allocation20 + $0xc0] sm:$0xff]
    %v7683 = vld [vmem:[#allocation20 + $0xc8] sm:$0xff]
    %v7684 = vld [vmem:[#allocation20 + $0xd0] sm:$0xff]
    %v7685 = vld [vmem:[#allocation20 + $0xd8] sm:$0xff]
    %v7686 = vld [vmem:[#allocation20 + $0xe0] sm:$0xff]
    %v7687 = vld [vmem:[#allocation20 + $0xe8] sm:$0xff]
    %v7688 = vld [vmem:[#allocation20 + $0xf0] sm:$0xff]
    %v7689 = vld [vmem:[#allocation20 + $0xf8] sm:$0xff]
    %v7690 = vld [vmem:[#allocation20 + $0x100] sm:$0xff]
    %v7691 = vld [vmem:[#allocation20 + $0x108] sm:$0xff]
    %v7692 = vld [vmem:[#allocation20 + $0x110] sm:$0xff]
    %v7693 = vld [vmem:[#allocation20 + $0x118] sm:$0xff]
    %v7694 = vld [vmem:[#allocation20 + $0x120] sm:$0xff]
    %v7695 = vld [vmem:[#allocation20 + $0x128] sm:$0xff]
    %v7696 = vld [vmem:[#allocation20 + $0x130] sm:$0xff]
    %v7697 = vld [vmem:[#allocation20 + $0x138] sm:$0xff]
    %v7698 = vld [vmem:[#allocation20 + $0x140] sm:$0xff]
    %v7699 = vld [vmem:[#allocation20 + $0x148] sm:$0xff]
    %v7700 = vld [vmem:[#allocation20 + $0x150] sm:$0xff]
    %v7701 = vld [vmem:[#allocation20 + $0x158] sm:$0xff]
    %v7702 = vld [vmem:[#allocation20 + $0x160] sm:$0xff]
    %v7703 = vld [vmem:[#allocation20 + $0x168] sm:$0xff]
    %v7704 = vld [vmem:[#allocation20 + $0x170] sm:$0xff]
    %v7705 = vld [vmem:[#allocation20 + $0x178] sm:$0xff]
    %v7706 = vld [vmem:[#allocation20 + $0x180] sm:$0xff]
    %v7707 = vld [vmem:[#allocation20 + $0x188] sm:$0xff]
    %v7708 = vld [vmem:[#allocation20 + $0x190] sm:$0xff]
    %v7709 = vld [vmem:[#allocation20 + $0x198] sm:$0xff]
    %v7710 = vld [vmem:[#allocation20 + $0x1a0] sm:$0xff]
    %v7711 = vld [vmem:[#allocation20 + $0x1a8] sm:$0xff]
    %v7712 = vld [vmem:[#allocation20 + $0x1b0] sm:$0xff]
    %v7713 = vld [vmem:[#allocation20 + $0x1b8] sm:$0xff]
    %v7714 = vld [vmem:[#allocation20 + $0x1c0] sm:$0xff]
    %v7715 = vld [vmem:[#allocation20 + $0x1c8] sm:$0xff]
    %v7716 = vld [vmem:[#allocation20 + $0x1d0] sm:$0xff]
    %v7717 = vld [vmem:[#allocation20 + $0x1d8] sm:$0xff]
    %v7718 = vld [vmem:[#allocation20 + $0x1e0] sm:$0xff]
    %v7719 = vld [vmem:[#allocation20 + $0x1e8] sm:$0xff]
    %v7720 = vld [vmem:[#allocation20 + $0x1f0] sm:$0xff]
    %v7721 = vld [vmem:[#allocation20 + $0x1f8] sm:$0xff]
    %v7722 = vld [vmem:[#allocation23] sm:$0xf]
    %v7724 = vperm.slane %v7722, 0
    %v7725 = vperm.slane %v7722, 1
    %v7726 = vperm.slane %v7722, 2
    %v7727 = vperm.slane %v7722, 3
    %v7796 = vunpack.c.l.b16 %v7658
    %v7797 = vunpack.c.h.b16 %v7658
    %v7798 = vunpack.c.l.b16 %v7659
    %v7799 = vunpack.c.h.b16 %v7659
    %v7800 = vunpack.c.l.b16 %v7660
    %v7801 = vunpack.c.h.b16 %v7660
    %v7802 = vunpack.c.l.b16 %v7661
    %v7803 = vunpack.c.h.b16 %v7661
    %v7804 = vunpack.c.l.b16 %v7662
    %v7805 = vunpack.c.h.b16 %v7662
    %v7806 = vunpack.c.l.b16 %v7663
    %v7807 = vunpack.c.h.b16 %v7663
    %v7808 = vunpack.c.l.b16 %v7664
    %v7809 = vunpack.c.h.b16 %v7664
    %v7810 = vunpack.c.l.b16 %v7665
    %v7811 = vunpack.c.h.b16 %v7665
    %v7812 = vunpack.c.l.b16 %v7666
    %v7813 = vunpack.c.h.b16 %v7666
    %v7814 = vunpack.c.l.b16 %v7667
    %v7815 = vunpack.c.h.b16 %v7667
    %v7816 = vunpack.c.l.b16 %v7668
    %v7817 = vunpack.c.h.b16 %v7668
    %v7818 = vunpack.c.l.b16 %v7669
    %v7819 = vunpack.c.h.b16 %v7669
    %v7820 = vunpack.c.l.b16 %v7670
    %v7821 = vunpack.c.h.b16 %v7670
    %v7822 = vunpack.c.l.b16 %v7671
    %v7823 = vunpack.c.h.b16 %v7671
    %v7824 = vunpack.c.l.b16 %v7672
    %v7825 = vunpack.c.h.b16 %v7672
    %v7826 = vunpack.c.l.b16 %v7673
    %v7827 = vunpack.c.h.b16 %v7673
    %v7828 = vunpack.c.l.b16 %v7674
    %v7829 = vunpack.c.h.b16 %v7674
    %v7830 = vunpack.c.l.b16 %v7675
    %v7831 = vunpack.c.h.b16 %v7675
    %v7832 = vunpack.c.l.b16 %v7676
    %v7833 = vunpack.c.h.b16 %v7676
    %v7834 = vunpack.c.l.b16 %v7677
    %v7835 = vunpack.c.h.b16 %v7677
    %v7836 = vunpack.c.l.b16 %v7678
    %v7837 = vunpack.c.h.b16 %v7678
    %v7838 = vunpack.c.l.b16 %v7679
    %v7839 = vunpack.c.h.b16 %v7679
    %v7840 = vunpack.c.l.b16 %v7680
    %v7841 = vunpack.c.h.b16 %v7680
    %v7842 = vunpack.c.l.b16 %v7681
    %v7843 = vunpack.c.h.b16 %v7681
    %v7844 = vunpack.c.l.b16 %v7682
    %v7845 = vunpack.c.h.b16 %v7682
    %v7846 = vunpack.c.l.b16 %v7683
    %v7847 = vunpack.c.h.b16 %v7683
    %v7848 = vunpack.c.l.b16 %v7684
    %v7849 = vunpack.c.h.b16 %v7684
    %v7850 = vunpack.c.l.b16 %v7685
    %v7851 = vunpack.c.h.b16 %v7685
    %v7852 = vunpack.c.l.b16 %v7686
    %v7853 = vunpack.c.h.b16 %v7686
    %v7854 = vunpack.c.l.b16 %v7687
    %v7855 = vunpack.c.h.b16 %v7687
    %v7856 = vunpack.c.l.b16 %v7688
    %v7857 = vunpack.c.h.b16 %v7688
    %v7858 = vunpack.c.l.b16 %v7689
    %v7859 = vunpack.c.h.b16 %v7689
    %v7860 = vunpack.c.l.b16 %v7690
    %v7861 = vunpack.c.h.b16 %v7690
    %v7862 = vunpack.c.l.b16 %v7691
    %v7863 = vunpack.c.h.b16 %v7691
    %v7864 = vunpack.c.l.b16 %v7692
    %v7865 = vunpack.c.h.b16 %v7692
    %v7866 = vunpack.c.l.b16 %v7693
    %v7867 = vunpack.c.h.b16 %v7693
    %v7868 = vunpack.c.l.b16 %v7694
    %v7869 = vunpack.c.h.b16 %v7694
    %v7870 = vunpack.c.l.b16 %v7695
    %v7871 = vunpack.c.h.b16 %v7695
    %v7872 = vunpack.c.l.b16 %v7696
    %v7873 = vunpack.c.h.b16 %v7696
    %v7874 = vunpack.c.l.b16 %v7697
    %v7875 = vunpack.c.h.b16 %v7697
    %v7876 = vunpack.c.l.b16 %v7698
    %v7877 = vunpack.c.h.b16 %v7698
    %v7878 = vunpack.c.l.b16 %v7699
    %v7879 = vunpack.c.h.b16 %v7699
    %v7880 = vunpack.c.l.b16 %v7700
    %v7881 = vunpack.c.h.b16 %v7700
    %v7882 = vunpack.c.l.b16 %v7701
    %v7883 = vunpack.c.h.b16 %v7701
    %v7884 = vunpack.c.l.b16 %v7702
    %v7885 = vunpack.c.h.b16 %v7702
    %v7886 = vunpack.c.l.b16 %v7703
    %v7887 = vunpack.c.h.b16 %v7703
    %v7888 = vunpack.c.l.b16 %v7704
    %v7889 = vunpack.c.h.b16 %v7704
    %v7890 = vunpack.c.l.b16 %v7705
    %v7891 = vunpack.c.h.b16 %v7705
    %v7892 = vunpack.c.l.b16 %v7706
    %v7893 = vunpack.c.h.b16 %v7706
    %v7894 = vunpack.c.l.b16 %v7707
    %v7895 = vunpack.c.h.b16 %v7707
    %v7896 = vunpack.c.l.b16 %v7708
    %v7897 = vunpack.c.h.b16 %v7708
    %v7898 = vunpack.c.l.b16 %v7709
    %v7899 = vunpack.c.h.b16 %v7709
    %v7900 = vunpack.c.l.b16 %v7710
    %v7901 = vunpack.c.h.b16 %v7710
    %v7902 = vunpack.c.l.b16 %v7711
    %v7903 = vunpack.c.h.b16 %v7711
    %v7904 = vunpack.c.l.b16 %v7712
    %v7905 = vunpack.c.h.b16 %v7712
    %v7906 = vunpack.c.l.b16 %v7713
    %v7907 = vunpack.c.h.b16 %v7713
    %v7908 = vunpack.c.l.b16 %v7714
    %v7909 = vunpack.c.h.b16 %v7714
    %v7910 = vunpack.c.l.b16 %v7715
    %v7911 = vunpack.c.h.b16 %v7715
    %v7912 = vunpack.c.l.b16 %v7716
    %v7913 = vunpack.c.h.b16 %v7716
    %v7914 = vunpack.c.l.b16 %v7717
    %v7915 = vunpack.c.h.b16 %v7717
    %v7916 = vunpack.c.l.b16 %v7718
    %v7917 = vunpack.c.h.b16 %v7718
    %v7918 = vunpack.c.l.b16 %v7719
    %v7919 = vunpack.c.h.b16 %v7719
    %v7920 = vunpack.c.l.b16 %v7720
    %v7921 = vunpack.c.h.b16 %v7720
    %v7922 = vunpack.c.l.b16 %v7721
    %v7923 = vunpack.c.h.b16 %v7721
    %v7924 = vpack.c.b16 %v7800, %v7796
    %v7925 = vpack.c.b16 %v7801, %v7797
    %v7926 = vpack.c.b16 %v7802, %v7798
    %v7927 = vpack.c.b16 %v7803, %v7799
    %v7928 = vpack.c.b16 %v7808, %v7804
    %v7929 = vpack.c.b16 %v7809, %v7805
    %v7930 = vpack.c.b16 %v7810, %v7806
    %v7931 = vpack.c.b16 %v7811, %v7807
    %v7932 = vpack.c.b16 %v7816, %v7812
    %v7933 = vpack.c.b16 %v7817, %v7813
    %v7934 = vpack.c.b16 %v7818, %v7814
    %v7935 = vpack.c.b16 %v7819, %v7815
    %v7936 = vpack.c.b16 %v7824, %v7820
    %v7937 = vpack.c.b16 %v7825, %v7821
    %v7938 = vpack.c.b16 %v7826, %v7822
    %v7939 = vpack.c.b16 %v7827, %v7823
    %v7940 = vpack.c.b16 %v7832, %v7828
    %v7941 = vpack.c.b16 %v7833, %v7829
    %v7942 = vpack.c.b16 %v7834, %v7830
    %v7943 = vpack.c.b16 %v7835, %v7831
    %v7944 = vpack.c.b16 %v7840, %v7836
    %v7945 = vpack.c.b16 %v7841, %v7837
    %v7946 = vpack.c.b16 %v7842, %v7838
    %v7947 = vpack.c.b16 %v7843, %v7839
    %v7948 = vpack.c.b16 %v7848, %v7844
    %v7949 = vpack.c.b16 %v7849, %v7845
    %v7950 = vpack.c.b16 %v7850, %v7846
    %v7951 = vpack.c.b16 %v7851, %v7847
    %v7952 = vpack.c.b16 %v7856, %v7852
    %v7953 = vpack.c.b16 %v7857, %v7853
    %v7954 = vpack.c.b16 %v7858, %v7854
    %v7955 = vpack.c.b16 %v7859, %v7855
    %v7956 = vpack.c.b16 %v7864, %v7860
    %v7957 = vpack.c.b16 %v7865, %v7861
    %v7958 = vpack.c.b16 %v7866, %v7862
    %v7959 = vpack.c.b16 %v7867, %v7863
    %v7960 = vpack.c.b16 %v7872, %v7868
    %v7961 = vpack.c.b16 %v7873, %v7869
    %v7962 = vpack.c.b16 %v7874, %v7870
    %v7963 = vpack.c.b16 %v7875, %v7871
    %v7964 = vpack.c.b16 %v7880, %v7876
    %v7965 = vpack.c.b16 %v7881, %v7877
    %v7966 = vpack.c.b16 %v7882, %v7878
    %v7967 = vpack.c.b16 %v7883, %v7879
    %v7968 = vpack.c.b16 %v7888, %v7884
    %v7969 = vpack.c.b16 %v7889, %v7885
    %v7970 = vpack.c.b16 %v7890, %v7886
    %v7971 = vpack.c.b16 %v7891, %v7887
    %v7972 = vpack.c.b16 %v7896, %v7892
    %v7973 = vpack.c.b16 %v7897, %v7893
    %v7974 = vpack.c.b16 %v7898, %v7894
    %v7975 = vpack.c.b16 %v7899, %v7895
    %v7976 = vpack.c.b16 %v7904, %v7900
    %v7977 = vpack.c.b16 %v7905, %v7901
    %v7978 = vpack.c.b16 %v7906, %v7902
    %v7979 = vpack.c.b16 %v7907, %v7903
    %v7980 = vpack.c.b16 %v7912, %v7908
    %v7981 = vpack.c.b16 %v7913, %v7909
    %v7982 = vpack.c.b16 %v7914, %v7910
    %v7983 = vpack.c.b16 %v7915, %v7911
    %v7984 = vpack.c.b16 %v7920, %v7916
    %v7985 = vpack.c.b16 %v7921, %v7917
    %v7986 = vpack.c.b16 %v7922, %v7918
    %v7987 = vpack.c.b16 %v7923, %v7919
    %8052 = vmatpush.bf16.msra.mxu0 %v7952
    %8053 = vmatpush.bf16.msra.mxu0 %v7948
    %8054 = vmatpush.bf16.msra.mxu0 %v7944
    %8055 = vmatpush.bf16.msra.mxu0 %v7940
    %8056 = vmatpush.bf16.msra.mxu0 %v7936
    %8057 = vmatpush.bf16.msra.mxu0 %v7932
    %8058 = vmatpush.bf16.msra.mxu0 %v7928
    %8059 = vmatpush.bf16.msra.mxu0 %v7924
    %8060 = vmatmul.bf16.gmra.mxu0 %v7656
    %v8061 = vpop.f32.mrf.mxu0
    %v8062 = vadd.f32 %v7724, %v8061
    %v8063 = vpop.f32.mrf.mxu0
    %8064 = vdwg.mxu0
    %8065 = vmatpush.bf16.msra.mxu0 %v7984
    %8066 = vmatpush.bf16.msra.mxu0 %v7980
    %8067 = vmatpush.bf16.msra.mxu0 %v7976
    %8068 = vmatpush.bf16.msra.mxu0 %v7972
    %8069 = vmatpush.bf16.msra.mxu0 %v7968
    %8070 = vmatpush.bf16.msra.mxu0 %v7964
    %8071 = vmatpush.bf16.msra.mxu0 %v7960
    %8072 = vmatpush.bf16.msra.mxu0 %v7956
    %8073 = vmatmul.bf16.gmra.mxu0 %v7657
    %v8074 = vpop.f32.mrf.mxu0
    %v8075 = vadd.f32 %v8062, %v8074
    %v8076 = vpop.f32.mrf.mxu0
    %8077 = vdwg.mxu0
    %8078 = vmatpush.bf16.msra.mxu0 %v7953
    %8079 = vmatpush.bf16.msra.mxu0 %v7949
    %8080 = vmatpush.bf16.msra.mxu0 %v7945
    %8081 = vmatpush.bf16.msra.mxu0 %v7941
    %8082 = vmatpush.bf16.msra.mxu0 %v7937
    %8083 = vmatpush.bf16.msra.mxu0 %v7933
    %8084 = vmatpush.bf16.msra.mxu0 %v7929
    %8085 = vmatpush.bf16.msra.mxu0 %v7925
    %8086 = vmatmul.bf16.gmra.mxu0 %v7656
    %v8087 = vpop.f32.mrf.mxu0
    %v8088 = vadd.f32 %v7725, %v8087
    %v8089 = vpop.f32.mrf.mxu0
    %8090 = vdwg.mxu0
    %8091 = vmatpush.bf16.msra.mxu0 %v7985
    %8092 = vmatpush.bf16.msra.mxu0 %v7981
    %8093 = vmatpush.bf16.msra.mxu0 %v7977
    %8094 = vmatpush.bf16.msra.mxu0 %v7973
    %8095 = vmatpush.bf16.msra.mxu0 %v7969
    %8096 = vmatpush.bf16.msra.mxu0 %v7965
    %8097 = vmatpush.bf16.msra.mxu0 %v7961
    %8098 = vmatpush.bf16.msra.mxu0 %v7957
    %8099 = vmatmul.bf16.gmra.mxu0 %v7657
    %v8100 = vpop.f32.mrf.mxu0
    %v8101 = vadd.f32 %v8088, %v8100
    %v8102 = vpop.f32.mrf.mxu0
    %8103 = vdwg.mxu0
    %8104 = vmatpush.bf16.msra.mxu0 %v7954
    %8105 = vmatpush.bf16.msra.mxu0 %v7950
    %8106 = vmatpush.bf16.msra.mxu0 %v7946
    %8107 = vmatpush.bf16.msra.mxu0 %v7942
    %8108 = vmatpush.bf16.msra.mxu0 %v7938
    %8109 = vmatpush.bf16.msra.mxu0 %v7934
    %8110 = vmatpush.bf16.msra.mxu0 %v7930
    %8111 = vmatpush.bf16.msra.mxu0 %v7926
    %8112 = vmatmul.bf16.gmra.mxu0 %v7656
    %v8113 = vpop.f32.mrf.mxu0
    %v8114 = vadd.f32 %v7726, %v8113
    %v8115 = vpop.f32.mrf.mxu0
    %8116 = vdwg.mxu0
    %8117 = vmatpush.bf16.msra.mxu0 %v7986
    %8118 = vmatpush.bf16.msra.mxu0 %v7982
    %8119 = vmatpush.bf16.msra.mxu0 %v7978
    %8120 = vmatpush.bf16.msra.mxu0 %v7974
    %8121 = vmatpush.bf16.msra.mxu0 %v7970
    %8122 = vmatpush.bf16.msra.mxu0 %v7966
    %8123 = vmatpush.bf16.msra.mxu0 %v7962
    %8124 = vmatpush.bf16.msra.mxu0 %v7958
    %8125 = vmatmul.bf16.gmra.mxu0 %v7657
    %v8126 = vpop.f32.mrf.mxu0
    %v8127 = vadd.f32 %v8114, %v8126
    %v8128 = vpop.f32.mrf.mxu0
    %8129 = vdwg.mxu0
    %8130 = vmatpush.bf16.msra.mxu0 %v7955
    %8131 = vmatpush.bf16.msra.mxu0 %v7951
    %8132 = vmatpush.bf16.msra.mxu0 %v7947
    %8133 = vmatpush.bf16.msra.mxu0 %v7943
    %8134 = vmatpush.bf16.msra.mxu0 %v7939
    %8135 = vmatpush.bf16.msra.mxu0 %v7935
    %8136 = vmatpush.bf16.msra.mxu0 %v7931
    %8137 = vmatpush.bf16.msra.mxu0 %v7927
    %8138 = vmatmul.bf16.gmra.mxu0 %v7656
    %v8139 = vpop.f32.mrf.mxu0
    %v8140 = vadd.f32 %v7727, %v8139
    %v8141 = vpop.f32.mrf.mxu0
    %8142 = vdwg.mxu0
    %8143 = vmatpush.bf16.msra.mxu0 %v7987
    %8144 = vmatpush.bf16.msra.mxu0 %v7983
    %8145 = vmatpush.bf16.msra.mxu0 %v7979
    %8146 = vmatpush.bf16.msra.mxu0 %v7975
    %8147 = vmatpush.bf16.msra.mxu0 %v7971
    %8148 = vmatpush.bf16.msra.mxu0 %v7967
    %8149 = vmatpush.bf16.msra.mxu0 %v7963
    %8150 = vmatpush.bf16.msra.mxu0 %v7959
    %8151 = vmatmul.bf16.gmra.mxu0 %v7657
    %v8152 = vpop.f32.mrf.mxu0
    %v8153 = vadd.f32 %v8140, %v8152
    %v8154 = vpop.f32.mrf.mxu0
    %8155 = vdwg.mxu0
    %v8156 = vxor.u32 %v8075, 2147483648
    %v8157 = vmul.f32 %v8156, 1.442695
    %v8158 = vpow.pop %v8157
    %v8159 = vadd.f32 %v8158, 1.0
    %v8160 = vrcp.pop %v8159
    %v8161 = vmul.f32 %v8159, %v8160
    %v8162 = vsub.f32 1.0, %v8161
    %v8163 = vmul.f32 %v8160, %v8162
    %v8164 = vadd.f32 %v8160, %v8163
    %vm8165 = vweird.f32 %v8159
    %vm8166 = vweird.f32 %v8160
    %vm8167 = vmor %vm8165, %vm8166
    %v8168 = vsel %vm8167, %v8160, %v8164
    %v8169 = vand.u32 2147483647, %v8159
    %vm8170 = vcmp.eq.f32.partialorder %v8169, 8.507059e+37
    %v8171 = vand.u32 %v8159, 2147483648
    %v8172 = vor.u32 1.1754944e-38, %v8171
    %v8173 = vsel %vm8170, %v8172, %v8168
    %v8174 = vmul.f32 1.0, %v8173
    %v8175 = vxor.u32 %v8101, 2147483648
    %v8176 = vmul.f32 %v8175, 1.442695
    %v8177 = vpow.pop %v8176
    %v8178 = vadd.f32 %v8177, 1.0
    %v8179 = vrcp.pop %v8178
    %v8180 = vmul.f32 %v8178, %v8179
    %v8181 = vsub.f32 1.0, %v8180
    %v8182 = vmul.f32 %v8179, %v8181
    %v8183 = vadd.f32 %v8179, %v8182
    %vm8184 = vweird.f32 %v8178
    %vm8185 = vweird.f32 %v8179
    %vm8186 = vmor %vm8184, %vm8185
    %v8187 = vsel %vm8186, %v8179, %v8183
    %v8188 = vand.u32 2147483647, %v8178
    %vm8189 = vcmp.eq.f32.partialorder %v8188, 8.507059e+37
    %v8190 = vand.u32 %v8178, 2147483648
    %v8191 = vor.u32 1.1754944e-38, %v8190
    %v8192 = vsel %vm8189, %v8191, %v8187
    %v8193 = vmul.f32 1.0, %v8192
    %v8194 = vtanh.pop %v8127
    %v8195 = vxor.u32 %v8153, 2147483648
    %v8196 = vmul.f32 %v8195, 1.442695
    %v8197 = vpow.pop %v8196
    %v8198 = vadd.f32 %v8197, 1.0
    %v8199 = vrcp.pop %v8198
    %v8200 = vmul.f32 %v8198, %v8199
    %v8201 = vsub.f32 1.0, %v8200
    %v8202 = vmul.f32 %v8199, %v8201
    %v8203 = vadd.f32 %v8199, %v8202
    %vm8204 = vweird.f32 %v8198
    %vm8205 = vweird.f32 %v8199
    %vm8206 = vmor %vm8204, %vm8205
    %v8207 = vsel %vm8206, %v8199, %v8203
    %v8208 = vand.u32 2147483647, %v8198
    %vm8209 = vcmp.eq.f32.partialorder %v8208, 8.507059e+37
    %v8210 = vand.u32 %v8198, 2147483648
    %v8211 = vor.u32 1.1754944e-38, %v8210
    %v8212 = vsel %vm8209, %v8211, %v8207
    %v8213 = vmul.f32 1.0, %v8212
    %v8214 = vmul.f32 %v8193, 0.0
    %v8215 = vmul.f32 %v8174, %v8194
    %v8216 = vadd.f32 %v8214, %v8215
    %v8217 = vtanh.pop %v8216
    %v8218 = vmul.f32 %v8213, %v8217
    %v8219 = vpack.c.bf16 %v7653, %v7653
    %v8220 = vld [vmem:[#allocation24] sm:$0xf]
    %v8221 = vld [vmem:[#allocation24 + $0x4] sm:$0xf]
    %v8222 = vld [vmem:[#allocation24 + $0x8] sm:$0xf]
    %v8223 = vld [vmem:[#allocation24 + $0xc] sm:$0xf]
    %v8224 = vld [vmem:[#allocation24 + $0x10] sm:$0xf]
    %v8225 = vld [vmem:[#allocation24 + $0x14] sm:$0xf]
    %v8226 = vld [vmem:[#allocation24 + $0x18] sm:$0xf]
    %v8227 = vld [vmem:[#allocation24 + $0x1c] sm:$0xf]
    %v8228 = vld [vmem:[#allocation24 + $0x20] sm:$0xf]
    %v8229 = vld [vmem:[#allocation24 + $0x24] sm:$0xf]
    %v8230 = vld [vmem:[#allocation24 + $0x28] sm:$0xf]
    %v8231 = vld [vmem:[#allocation24 + $0x2c] sm:$0xf]
    %v8232 = vld [vmem:[#allocation24 + $0x30] sm:$0xf]
    %v8233 = vld [vmem:[#allocation24 + $0x34] sm:$0xf]
    %v8234 = vld [vmem:[#allocation24 + $0x38] sm:$0xf]
    %v8235 = vld [vmem:[#allocation24 + $0x3c] sm:$0xf]
    %v8236 = vpack.c.bf16 %v8218, %v8218
    %v8237 = vld [vmem:[#allocation24 + $0x40] sm:$0xf]
    %v8238 = vld [vmem:[#allocation24 + $0x44] sm:$0xf]
    %v8239 = vld [vmem:[#allocation24 + $0x48] sm:$0xf]
    %v8240 = vld [vmem:[#allocation24 + $0x4c] sm:$0xf]
    %v8241 = vld [vmem:[#allocation24 + $0x50] sm:$0xf]
    %v8242 = vld [vmem:[#allocation24 + $0x54] sm:$0xf]
    %v8243 = vld [vmem:[#allocation24 + $0x58] sm:$0xf]
    %v8244 = vld [vmem:[#allocation24 + $0x5c] sm:$0xf]
    %v8245 = vld [vmem:[#allocation24 + $0x60] sm:$0xf]
    %v8246 = vld [vmem:[#allocation24 + $0x64] sm:$0xf]
    %v8247 = vld [vmem:[#allocation24 + $0x68] sm:$0xf]
    %v8248 = vld [vmem:[#allocation24 + $0x6c] sm:$0xf]
    %v8249 = vld [vmem:[#allocation24 + $0x70] sm:$0xf]
    %v8250 = vld [vmem:[#allocation24 + $0x74] sm:$0xf]
    %v8251 = vld [vmem:[#allocation24 + $0x78] sm:$0xf]
    %v8252 = vld [vmem:[#allocation24 + $0x7c] sm:$0xf]
    %v8269 = vunpack.c.l.b16 %v8237
    %v8270 = vunpack.c.l.b16 %v8238
    %v8271 = vunpack.c.l.b16 %v8239
    %v8272 = vunpack.c.l.b16 %v8240
    %v8273 = vunpack.c.l.b16 %v8241
    %v8274 = vunpack.c.l.b16 %v8242
    %v8275 = vunpack.c.l.b16 %v8243
    %v8276 = vunpack.c.l.b16 %v8244
    %v8277 = vunpack.c.l.b16 %v8245
    %v8278 = vunpack.c.l.b16 %v8246
    %v8279 = vunpack.c.l.b16 %v8247
    %v8280 = vunpack.c.l.b16 %v8248
    %v8281 = vunpack.c.l.b16 %v8249
    %v8282 = vunpack.c.l.b16 %v8250
    %v8283 = vunpack.c.l.b16 %v8251
    %v8284 = vunpack.c.l.b16 %v8252
    %v8285 = vpack.c.b16 %v8270, %v8269
    %v8286 = vpack.c.b16 %v8272, %v8271
    %v8287 = vpack.c.b16 %v8274, %v8273
    %v8288 = vpack.c.b16 %v8276, %v8275
    %v8289 = vpack.c.b16 %v8278, %v8277
    %v8290 = vpack.c.b16 %v8280, %v8279
    %v8291 = vpack.c.b16 %v8282, %v8281
    %v8292 = vpack.c.b16 %v8284, %v8283
    %8301 = vmatpush.bf16.msra.mxu0 %v8292
    %8302 = vmatpush.bf16.msra.mxu0 %v8291
    %8303 = vmatpush.bf16.msra.mxu0 %v8290
    %8304 = vmatpush.bf16.msra.mxu0 %v8289
    %8305 = vmatpush.bf16.msra.mxu0 %v8288
    %8306 = vmatpush.bf16.msra.mxu0 %v8287
    %8307 = vmatpush.bf16.msra.mxu0 %v8286
    %8308 = vmatpush.bf16.msra.mxu0 %v8285
    %8309 = vmatmul.bf16.gmra.mxu0 %v8236
    %v8310 = vpop.f32.mrf.mxu0
    %v8311 = vadd.f32 0.0, %v8310
    %v8312 = vpop.f32.mrf.mxu0
    %8313 = vdwg.mxu0
    %v8330 = vunpack.c.l.b16 %v8220
    %v8331 = vunpack.c.l.b16 %v8221
    %v8332 = vunpack.c.l.b16 %v8222
    %v8333 = vunpack.c.l.b16 %v8223
    %v8334 = vunpack.c.l.b16 %v8224
    %v8335 = vunpack.c.l.b16 %v8225
    %v8336 = vunpack.c.l.b16 %v8226
    %v8337 = vunpack.c.l.b16 %v8227
    %v8338 = vunpack.c.l.b16 %v8228
    %v8339 = vunpack.c.l.b16 %v8229
    %v8340 = vunpack.c.l.b16 %v8230
    %v8341 = vunpack.c.l.b16 %v8231
    %v8342 = vunpack.c.l.b16 %v8232
    %v8343 = vunpack.c.l.b16 %v8233
    %v8344 = vunpack.c.l.b16 %v8234
    %v8345 = vunpack.c.l.b16 %v8235
    %v8346 = vpack.c.b16 %v8331, %v8330
    %v8347 = vpack.c.b16 %v8333, %v8332
    %v8348 = vpack.c.b16 %v8335, %v8334
    %v8349 = vpack.c.b16 %v8337, %v8336
    %v8350 = vpack.c.b16 %v8339, %v8338
    %v8351 = vpack.c.b16 %v8341, %v8340
    %v8352 = vpack.c.b16 %v8343, %v8342
    %v8353 = vpack.c.b16 %v8345, %v8344
    %8362 = vmatpush.bf16.msra.mxu0 %v8353
    %8363 = vmatpush.bf16.msra.mxu0 %v8352
    %8364 = vmatpush.bf16.msra.mxu0 %v8351
    %8365 = vmatpush.bf16.msra.mxu0 %v8350
    %8366 = vmatpush.bf16.msra.mxu0 %v8349
    %8367 = vmatpush.bf16.msra.mxu0 %v8348
    %8368 = vmatpush.bf16.msra.mxu0 %v8347
    %8369 = vmatpush.bf16.msra.mxu0 %v8346
    %8370 = vmatmul.bf16.gmra.mxu0 %v8219
    %v8371 = vpop.f32.mrf.mxu0
    %v8372 = vadd.f32 %v8311, %v8371
    %v8373 = vpop.f32.mrf.mxu0
    %8374 = vdwg.mxu0
    %v8375 = vld [vmem:[%s14] sm:$0x1]
    %v8377 = vperm.slane %v8375, 0
    %v8379 = vadd.f32 %v8372, %v8377
    %v8380 = vmax.f32 %v8379, 0.0
    %v8381 = vpack.c.bf16 %v8380, %v8380
    %v8382 = vld [vmem:[%s15] sm:$0xf]
    %v8383 = vld [vmem:[%s15 + $0x4] sm:$0xf]
    %v8384 = vld [vmem:[%s15 + $0x8] sm:$0xf]
    %v8385 = vld [vmem:[%s15 + $0xc] sm:$0xf]
    %v8386 = vld [vmem:[%s15 + $0x10] sm:$0xf]
    %v8387 = vld [vmem:[%s15 + $0x14] sm:$0xf]
    %v8388 = vld [vmem:[%s15 + $0x18] sm:$0xf]
    %v8389 = vld [vmem:[%s15 + $0x1c] sm:$0xf]
    %v8390 = vld [vmem:[%s15 + $0x20] sm:$0xf]
    %v8391 = vld [vmem:[%s15 + $0x24] sm:$0xf]
    %v8392 = vld [vmem:[%s15 + $0x28] sm:$0xf]
    %v8393 = vld [vmem:[%s15 + $0x2c] sm:$0xf]
    %v8394 = vld [vmem:[%s15 + $0x30] sm:$0xf]
    %v8395 = vld [vmem:[%s15 + $0x34] sm:$0xf]
    %v8396 = vld [vmem:[%s15 + $0x38] sm:$0xf]
    %v8397 = vld [vmem:[%s15 + $0x3c] sm:$0xf]
    %v8398 = vld [vmem:[%s16] sm:$0x1]
    %v8400 = vperm.slane %v8398, 0
    %v8418 = vunpack.c.l.b16 %v8382
    %v8419 = vunpack.c.l.b16 %v8383
    %v8420 = vunpack.c.l.b16 %v8384
    %v8421 = vunpack.c.l.b16 %v8385
    %v8422 = vunpack.c.l.b16 %v8386
    %v8423 = vunpack.c.l.b16 %v8387
    %v8424 = vunpack.c.l.b16 %v8388
    %v8425 = vunpack.c.l.b16 %v8389
    %v8426 = vunpack.c.l.b16 %v8390
    %v8427 = vunpack.c.l.b16 %v8391
    %v8428 = vunpack.c.l.b16 %v8392
    %v8429 = vunpack.c.l.b16 %v8393
    %v8430 = vunpack.c.l.b16 %v8394
    %v8431 = vunpack.c.l.b16 %v8395
    %v8432 = vunpack.c.l.b16 %v8396
    %v8433 = vunpack.c.l.b16 %v8397
    %v8434 = vpack.c.b16 %v8419, %v8418
    %v8435 = vpack.c.b16 %v8421, %v8420
    %v8436 = vpack.c.b16 %v8423, %v8422
    %v8437 = vpack.c.b16 %v8425, %v8424
    %v8438 = vpack.c.b16 %v8427, %v8426
    %v8439 = vpack.c.b16 %v8429, %v8428
    %v8440 = vpack.c.b16 %v8431, %v8430
    %v8441 = vpack.c.b16 %v8433, %v8432
    %8450 = vmatpush.bf16.msra.mxu0 %v8441
    %8451 = vmatpush.bf16.msra.mxu0 %v8440
    %8452 = vmatpush.bf16.msra.mxu0 %v8439
    %8453 = vmatpush.bf16.msra.mxu0 %v8438
    %8454 = vmatpush.bf16.msra.mxu0 %v8437
    %8455 = vmatpush.bf16.msra.mxu0 %v8436
    %8456 = vmatpush.bf16.msra.mxu0 %v8435
    %8457 = vmatpush.bf16.msra.mxu0 %v8434
    %8458 = vmatmul.bf16.gmra.mxu0 %v8381
    %v8459 = vpop.f32.mrf.mxu0
    %v8460 = vadd.f32 %v8400, %v8459
    %v8461 = vpop.f32.mrf.mxu0
    %8462 = vdwg.mxu0
    %8463 = vst [vmem:[#allocation26] sm:$0xff] %v8460
    // Predicated region
    $region118: #{tpu_custom_call.1} parent=1 // pred_check
      _
    $region119: #{tpu_custom_call.1} parent=1 // pred_check_branch
      %8465 = sbr.rel (0) target = $region121
    $region120: #{tpu_custom_call.1} parent=1 // pred_region
      %8467 = vsyncadd [#allocation8], 0
      %s8469 = sshll.u32 [#allocation26], 4
      %s8470 = int_to_ptr.vmem [resolvable:$true] %s8469
      %s8471 = sshll.u32 %s17, 4
      %s8472 = int_to_ptr.hbm [resolvable:$true] %s8471
      %8474 = dma.vmem_to_hbm [thread:$0]  %s8470, 128, %s8472, [#allocation8]
    $region121: #{tpu_custom_call.1} parent=1 // pred_fallthru
      _
    // Predicated region
    $region122: #{tpu_custom_call.1} parent=1 // pred_check
      _
    $region123: #{tpu_custom_call.1} parent=1 // pred_check_branch
      %8476 = sbr.rel (0) target = $region125
    $region124: #{tpu_custom_call.1} parent=1 // pred_region
      %8478 = dma.done [#allocation8], 128
    $region125: #{tpu_custom_call.1} parent=1 // pred_fallthru
      _
    %8479 = vsyncpa [#allocation7], 1
    %8480 = vsyncpa [#allocation10], 1
    %8481 = vsyncpa [#allocation13], 1
    %8482 = vsyncpa [#allocation16], 1
    %8483 = vsyncpa [#allocation19], 1
    %8484 = vsyncpa [#allocation22], 1
    %8485 = vsyncpa [#allocation25], 1
    %8486 = vsyncpa [#allocation8], 1

</llo_original>
